<compile_context>
chip_gen: v5e
topology: v5e:2x2
jax: 0.10.0
libtpu: 0.0.40
codegen_flags: <defaults>
</compile_context>

<pallas_src>
import math
from functools import partial

import numpy as np
import jax
import jax.numpy as jnp
from jax.experimental import pallas as pl
from jax.experimental.pallas import tpu as pltpu

# ---- hyper-parameters (the PyTorch file leaves these as globals; pick small ones) ----
D_MODEL = 32
H = 4
D_K = D_Q = D_V = D_MODEL // H          # 8
N = 2                                   # number of encoder / decoder blocks
P_DROPOUT = 0.1                         # unused at inference (dropout == identity)
N_WORDS_ENCODER = 50
N_WORDS_DECODER = 50
MAX_LEN = 64
LN_EPS = 1e-5
ATTN_SCALE = 1.0 / math.sqrt(D_K)


# ------------------------------------------------------------------------------------
# Constant row-permutation matrix reproducing the reference's buggy head merge:
#   nv (B, H, Sq, Dv) --.view()--> (B, Sq, H*Dv)  (row-major reinterpretation).
# With heads stacked head-major as NV (H*Sq, Dv), column block j of the viewed
# tensor, row s, equals NV[s*H + j].  So  (PERM @ NV)[j*Sq + s] = NV[s*H + j]
# and the viewed tensor is the lane-concat of the H row-blocks of PERM @ NV.
# ------------------------------------------------------------------------------------
def make_view_permutation(seq_q):
    perm = np.zeros((H * seq_q, H * seq_q), np.float32)
    for j in range(H):
        for s in range(seq_q):
            perm[j * seq_q + s, s * H + j] = 1.0
    return jnp.asarray(perm)


# ----------------------------- in-kernel building blocks -----------------------------

def _layernorm(x, g, b):
    mean = jnp.mean(x, axis=-1, keepdims=True)
    cent = x - mean
    var = jnp.mean(cent * cent, axis=-1, keepdims=True)      # biased, like torch LayerNorm
    return cent * jax.lax.rsqrt(var + LN_EPS) * g + b


def _attend_and_merge(q, k, v, sel, wo, bo, batch):
    """q: (batch*Sq, D); k, v: (batch*Skv, D)  ->  (batch*Sq, D).

    Per-head attention (scale already folded into Wq), then the buggy `.view`
    head merge via ONE permutation matmul + lane concat per batch element,
    then a single fused output projection over the folded rows.
    """
    sq = q.shape[0] // batch
    skv = k.shape[0] // batch
    viewed = []
    for b in range(batch):                                    # static unroll (B=2)
        qb = q[b * sq:(b + 1) * sq, :]
        kb = k[b * skv:(b + 1) * skv, :]
        vb = v[b * skv:(b + 1) * skv, :]
        heads = []
        for h in range(H):                                    # static unroll (H=4)
            qh = qb[:, h * D_K:(h + 1) * D_K]
            kh = kb[:, h * D_K:(h + 1) * D_K]
            vh = vb[:, h * D_V:(h + 1) * D_V]
            s = jax.lax.dot_general(qh, kh, (((1,), (1,)), ((), ())),
                                    preferred_element_type=jnp.float32)
            s = s - jnp.max(s, axis=-1, keepdims=True)
            p = jnp.exp(s)
            p = p * pl.reciprocal(jnp.sum(p, axis=-1, keepdims=True), approx=True)
            heads.append(jnp.dot(p, vh, preferred_element_type=jnp.float32))
        nv = jnp.concatenate(heads, axis=0)                        # (H*Sq, Dv) head-major
        g = jnp.dot(sel, nv, preferred_element_type=jnp.float32)   # row-permuted
        viewed.append(jnp.concatenate(
            [g[j * sq:(j + 1) * sq, :] for j in range(H)], axis=1))  # (Sq, H*Dv)
    nv_viewed = jnp.concatenate(viewed, axis=0)                    # (batch*Sq, H*Dv)
    return jnp.dot(nv_viewed, wo, preferred_element_type=jnp.float32) + bo


def _self_mha(x, sel, wqkv, bqkv, wo, bo, batch):
    qkv = jnp.dot(x, wqkv, preferred_element_type=jnp.float32) + bqkv   # (B*S, 3D)
    q = qkv[:, 0:D_MODEL]
    k = qkv[:, D_MODEL:2 * D_MODEL]
    v = qkv[:, 2 * D_MODEL:3 * D_MODEL]
    return _attend_and_merge(q, k, v, sel, wo, bo, batch)


def _cross_mha(xq, y, sel, wq, bq, wkv, bkv, wo, bo, batch):
    q = jnp.dot(xq, wq, preferred_element_type=jnp.float32) + bq        # (B*Sd, D)
    kv = jnp.dot(y, wkv, preferred_element_type=jnp.float32) + bkv      # (B*Se, 2D)
    k = kv[:, 0:D_MODEL]
    v = kv[:, D_MODEL:2 * D_MODEL]
    return _attend_and_merge(q, k, v, sel, wo, bo, batch)


# ----------------------------- the single fused kernel -----------------------------

def _transformer_kernel(batch,
                        xe_ref, xd_ref, sel_ref,
                        e_wqkv, e_bqkv, e_wo, e_bo, e_g, e_b,
                        e_w1, e_b1, e_w2, e_b2,
                        m_wqkv, m_bqkv, m_wo, m_bo,
                        c_wq, c_bq, c_wkv, c_bkv, c_wo, c_bo,
                        d_g, d_b, d_w1, d_b1, d_w2, d_b2,
                        wout, bout,
                        o_ref):
    sel = sel_ref[...]

    # ---------------- encoder stack ----------------
    x = xe_ref[...]                                            # (B*S, D) folded
    for n in range(N):                                         # static unroll over blocks
        attn = _self_mha(x, sel, e_wqkv[n], e_bqkv[n], e_wo[n], e_bo[n], batch)
        y = _layernorm(x + attn, e_g[n], e_b[n])               # dropout == identity (eval)
        z = jnp.maximum(
            jnp.dot(y, e_w1[n], preferred_element_type=jnp.float32) + e_b1[n], 0.0)
        z = jnp.dot(z, e_w2[n], preferred_element_type=jnp.float32) + e_b2[n]
        x = _layernorm(y + z, e_g[n], e_b[n])
    enc = x                                                    # stays resident in VMEM/vregs

    # ---------------- decoder stack ----------------
    x = xd_ref[...]
    for n in range(N):
        # "masked" self-attention: the reference never passes mask=True -> no mask.
        attn = _self_mha(x, sel, m_wqkv[n], m_bqkv[n], m_wo[n], m_bo[n], batch)
        x = _layernorm(x + attn, d_g[n], d_b[n])
        # cross-attention: xv = xk = encoder output, xq = decoder stream
        attn = _cross_mha(x, enc, sel, c_wq[n], c_bq[n], c_wkv[n], c_bkv[n],
                          c_wo[n], c_bo[n], batch)
        x = _layernorm(x + attn, d_g[n], d_b[n])
        z = jnp.maximum(
            jnp.dot(x, d_w1[n], preferred_element_type=jnp.float32) + d_b1[n], 0.0)
        z = jnp.dot(z, d_w2[n], preferred_element_type=jnp.float32) + d_b2[n]
        x = _layernorm(x + z, d_g[n], d_b[n])

    # final vocab projection + softmax (exact divide so rows sum to 1)
    logits = jnp.dot(x, wout[...], preferred_element_type=jnp.float32) + bout[...]
    logits = logits - jnp.max(logits, axis=-1, keepdims=True)
    expv = jnp.exp(logits)
    o_ref[...] = expv / jnp.sum(expv, axis=-1, keepdims=True)


# ----------------------------- pallas_call wrapper -----------------------------

def _transformer_forward(kp, enc_in, dec_in):
    B, S_enc = enc_in.shape
    _, S_dec = dec_in.shape
    assert S_enc == S_dec, "kernel shares one view-permutation matrix for enc/dec"

    # glue (outside the kernel): embedding gather + positional encoding + batch fold
    xe = (jnp.take(kp["enc_emb"], enc_in, axis=0)
          + kp["pe"][:S_enc, :]).reshape(B * S_enc, D_MODEL)
    xd = (jnp.take(kp["dec_emb"], dec_in, axis=0)
          + kp["pe"][:S_dec, :]).reshape(B * S_dec, D_MODEL)
    sel = make_view_permutation(S_dec)                         # trace-time constant

    args = [xe, xd, sel,
            kp["e_wqkv"], kp["e_bqkv"], kp["e_wo"], kp["e_bo"], kp["e_g"], kp["e_b"],
            kp["e_w1"], kp["e_b1"], kp["e_w2"], kp["e_b2"],
            kp["m_wqkv"], kp["m_bqkv"], kp["m_wo"], kp["m_bo"],
            kp["c_wq"], kp["c_bq"], kp["c_wkv"], kp["c_bkv"], kp["c_wo"], kp["c_bo"],
            kp["d_g"], kp["d_b"], kp["d_w1"], kp["d_b1"], kp["d_w2"], kp["d_b2"],
            kp["wout"], kp["bout"]]

    vmem_spec = pl.BlockSpec(memory_space=pltpu.MemorySpace.VMEM)
    out = pl.pallas_call(
        partial(_transformer_kernel, B),
        out_shape=jax.ShapeDtypeStruct((B * S_dec, N_WORDS_DECODER), jnp.float32),
        in_specs=[vmem_spec] * len(args),
        out_specs=vmem_spec,
    )(*args)
    return out.reshape(B, S_dec, N_WORDS_DECODER)


transformer_forward = jax.jit(_transformer_forward)


# ----------------------------- parameter init (PyTorch-like) -----------------------------

def init_linear(key, d_in, d_out):
    k1, k2 = jax.random.split(key)
    bound = 1.0 / math.sqrt(d_in)
    w = jax.random.uniform(k1, (d_in, d_out), jnp.float32, -bound, bound)
    b = jax.random.uniform(k2, (d_out,), jnp.float32, -bound, bound)
    return w, b


def init_mha_raw(key):
    kq, kk, kv, ko = jax.random.split(key, 4)
    wq, bq = init_linear(kq, D_MODEL, D_Q * H)
    wk, bk = init_linear(kk, D_MODEL, D_K * H)
    wv, bv = init_linear(kv, D_MODEL, D_V * H)
    wo, bo = init_linear(ko, D_V * H, D_MODEL)
    return dict(wq=wq, bq=bq, wk=wk, bk=bk, wv=wv, bv=bv, wo=wo, bo=bo)


def init_encoder_block(key):
    k1, k2, k3 = jax.random.split(key, 3)
    blk = dict(mha=init_mha_raw(k1))
    blk["w1"], blk["b1"] = init_linear(k2, D_MODEL, 4 * D_MODEL)
    blk["w2"], blk["b2"] = init_linear(k3, 4 * D_MODEL, D_MODEL)
    blk["ln_g"] = jnp.ones((D_MODEL,), jnp.float32)   # ONE shared LayerNorm per block
    blk["ln_b"] = jnp.zeros((D_MODEL,), jnp.float32)  # (faithful to the reference)
    return blk


def init_decoder_block(key):
    k1, k2, k3, k4 = jax.random.split(key, 4)
    blk = dict(mmha=init_mha_raw(k1), mha=init_mha_raw(k2))
    blk["w1"], blk["b1"] = init_linear(k3, D_MODEL, 4 * D_MODEL)
    blk["w2"], blk["b2"] = init_linear(k4, 4 * D_MODEL, D_MODEL)
    blk["ln_g"] = jnp.ones((D_MODEL,), jnp.float32)
    blk["ln_b"] = jnp.zeros((D_MODEL,), jnp.float32)
    return blk


def make_positional_encoding(max_len):
    pe = np.zeros((max_len, D_MODEL), np.float32)
    position = np.arange(0, max_len, dtype=np.float32)[:, None]
    div_term = np.exp(np.arange(0, D_MODEL, 2).astype(np.float32)
                      * (-math.log(10000.0) / D_MODEL))
    pe[:, 0::2] = np.sin(position * div_term)
    pe[:, 1::2] = np.cos(position * div_term)
    return jnp.asarray(pe)


def init_raw_params(key):
    k_ee, k_de, k_eb, k_db, k_out = jax.random.split(key, 5)
    enc_emb = jax.random.normal(k_ee, (N_WORDS_ENCODER, D_MODEL), jnp.float32)
    dec_emb = jax.random.normal(k_de, (N_WORDS_DECODER + 1, D_MODEL), jnp.float32)
    dec_emb = dec_emb.at[N_WORDS_DECODER].set(0.0)            # padding_idx row is zero
    wout, bout = init_linear(k_out, D_MODEL, N_WORDS_DECODER)
    return dict(
        pe=make_positional_encoding(MAX_LEN),
        enc_emb=enc_emb, dec_emb=dec_emb,
        enc_blocks=[init_encoder_block(k) for k in jax.random.split(k_eb, N)],
        dec_blocks=[init_decoder_block(k) for k in jax.random.split(k_db, N)],
        wout=wout, bout=bout)


def pack_kernel_params(raw):
    """One-time packing: fuse QKV, split cross-attn, fold 1/sqrt(D_K) into Wq, stack over N."""
    def fuse_self(m):
        wqkv = jnp.concatenate([m["wq"] * ATTN_SCALE, m["wk"], m["wv"]], axis=1)
        bqkv = jnp.concatenate([m["bq"] * ATTN_SCALE, m["bk"], m["bv"]], axis=0)[None, :]
        return wqkv, bqkv, m["wo"], m["bo"][None, :]

    def fuse_cross(m):
        wq = m["wq"] * ATTN_SCALE
        bq = (m["bq"] * ATTN_SCALE)[None, :]
        wkv = jnp.concatenate([m["wk"], m["wv"]], axis=1)
        bkv = jnp.concatenate([m["bk"], m["bv"]], axis=0)[None, :]
        return wq, bq, wkv, bkv, m["wo"], m["bo"][None, :]

    kp = dict(pe=raw["pe"], enc_emb=raw["enc_emb"], dec_emb=raw["dec_emb"],
              wout=raw["wout"], bout=raw["bout"][None, :])

    e = raw["enc_blocks"]
    kp["e_wqkv"], kp["e_bqkv"], kp["e_wo"], kp["e_bo"] = [
        jnp.stack(t) for t in zip(*(fuse_self(b["mha"]) for b in e))]
    kp["e_w1"] = jnp.stack([b["w1"] for b in e])
    kp["e_b1"] = jnp.stack([b["b1"][None, :] for b in e])
    kp["e_w2"] = jnp.stack([b["w2"] for b in e])
    kp["e_b2"] = jnp.stack([b["b2"][None, :] for b in e])
    kp["e_g"] = jnp.stack([b["ln_g"][None, :] for b in e])
    kp["e_b"] = jnp.stack([b["ln_b"][None, :] for b in e])

    d = raw["dec_blocks"]
    kp["m_wqkv"], kp["m_bqkv"], kp["m_wo"], kp["m_bo"] = [
        jnp.stack(t) for t in zip(*(fuse_self(b["mmha"]) for b in d))]
    kp["c_wq"], kp["c_bq"], kp["c_wkv"], kp["c_bkv"], kp["c_wo"], kp["c_bo"] = [
        jnp.stack(t) for t in zip(*(fuse_cross(b["mha"]) for b in d))]
    kp["d_w1"] = jnp.stack([b["w1"] for b in d])
    kp["d_b1"] = jnp.stack([b["b1"][None, :] for b in d])
    kp["d_w2"] = jnp.stack([b["w2"] for b in d])
    kp["d_b2"] = jnp.stack([b["b2"][None, :] for b in d])
    kp["d_g"] = jnp.stack([b["ln_g"][None, :] for b in d])
    kp["d_b"] = jnp.stack([b["ln_b"][None, :] for b in d])
    return kp


# ----------------------------- pure-JAX reference (sanity check) -----------------------------

def _ref_layernorm(x, g, b):
    mean = jnp.mean(x, axis=-1, keepdims=True)
    var = jnp.mean((x - mean) ** 2, axis=-1, keepdims=True)
    return (x - mean) / jnp.sqrt(var + LN_EPS) * g + b


def _ref_mha(m, xv, xk, xq):
    B, Sq, _ = xq.shape
    Skv = xk.shape[1]
    v = (xv @ m["wv"] + m["bv"]).reshape(B, Skv, H, D_V).transpose(0, 2, 1, 3)
    k = (xk @ m["wk"] + m["bk"]).reshape(B, Skv, H, D_K).transpose(0, 2, 1, 3)
    q = (xq @ m["wq"] + m["bq"]).reshape(B, Sq, H, D_Q).transpose(0, 2, 1, 3)
    att = jax.nn.softmax((q @ jnp.swapaxes(k, -1, -2)) / np.sqrt(D_K), axis=-1)
    nv = att @ v                                  # (B, H, Sq, Dv)
    nv = nv.reshape(B, Sq, H * D_V)               # row-major reinterpretation == torch .view
    return nv @ m["wo"] + m["bo"]


def _ref_forward(raw, enc_in, dec_in):
    pe = raw["pe"]
    x = jnp.take(raw["enc_emb"], enc_in, axis=0) + pe[:enc_in.shape[1]]
    for blk in raw["enc_blocks"]:
        y = _ref_layernorm(x + _ref_mha(blk["mha"], x, x, x), blk["ln_g"], blk["ln_b"])
        z = jax.nn.relu(y @ blk["w1"] + blk["b1"]) @ blk["w2"] + blk["b2"]
        x = _ref_layernorm(y + z, blk["ln_g"], blk["ln_b"])
    enc_out = x
    x = jnp.take(raw["dec_emb"], dec_in, axis=0) + pe[:dec_in.shape[1]]
    for blk in raw["dec_blocks"]:
        x = _ref_layernorm(x + _ref_mha(blk["mmha"], x, x, x), blk["ln_g"], blk["ln_b"])
        x = _ref_layernorm(x + _ref_mha(blk["mha"], enc_out, enc_out, x),
                           blk["ln_g"], blk["ln_b"])
        z = jax.nn.relu(x @ blk["w1"] + blk["b1"]) @ blk["w2"] + blk["b2"]
        x = _ref_layernorm(x + z, blk["ln_g"], blk["ln_b"])
    return jax.nn.softmax(x @ raw["wout"] + raw["bout"], axis=-1)


# ----------------------------------- main -----------------------------------

if __name__ == "__main__":
    key = jax.random.PRNGKey(0)
    k_params, k_enc_in, k_dec_in = jax.random.split(key, 3)

    raw_params = init_raw_params(k_params)
    kernel_params = pack_kernel_params(raw_params)

    B, S = 2, 8
    encoder_input = jax.random.randint(k_enc_in, (B, S), 0, N_WORDS_ENCODER, dtype=jnp.int32)
    decoder_input = jax.random.randint(k_dec_in, (B, S), 0, N_WORDS_DECODER, dtype=jnp.int32)

    out = transformer_forward(kernel_params, encoder_input, decoder_input)
    out = jax.block_until_ready(out)

    assert out.shape == (B, S, N_WORDS_DECODER), out.shape
    assert bool(jnp.all(jnp.isfinite(out)))
    # rows of the final softmax sum to 1
    assert bool(jnp.allclose(jnp.sum(out, axis=-1), 1.0, atol=1e-4))
    # agree with a pure-JAX reference of the same math
    # (loose tol: MXU f32 precision + approx-reciprocal attention softmax)
    ref = _ref_forward(raw_params, encoder_input, decoder_input)
    assert bool(jnp.allclose(out, ref, atol=1e-2, rtol=1e-2))

    print("KERNEL_OK")
</pallas_src>

<mosaic_0001>
module attributes {stable_mosaic.version = 11 : i64} {
  func.func @_transformer_kernel(%arg0: memref<16x32xf32, #tpu.memory_space<vmem>>, %arg1: memref<16x32xf32, #tpu.memory_space<vmem>>, %arg2: memref<32x32xf32, #tpu.memory_space<vmem>>, %arg3: memref<2x32x96xf32, #tpu.memory_space<vmem>>, %arg4: memref<2x1x96xf32, #tpu.memory_space<vmem>>, %arg5: memref<2x32x32xf32, #tpu.memory_space<vmem>>, %arg6: memref<2x1x32xf32, #tpu.memory_space<vmem>>, %arg7: memref<2x1x32xf32, #tpu.memory_space<vmem>>, %arg8: memref<2x1x32xf32, #tpu.memory_space<vmem>>, %arg9: memref<2x32x128xf32, #tpu.memory_space<vmem>>, %arg10: memref<2x1x128xf32, #tpu.memory_space<vmem>>, %arg11: memref<2x128x32xf32, #tpu.memory_space<vmem>>, %arg12: memref<2x1x32xf32, #tpu.memory_space<vmem>>, %arg13: memref<2x32x96xf32, #tpu.memory_space<vmem>>, %arg14: memref<2x1x96xf32, #tpu.memory_space<vmem>>, %arg15: memref<2x32x32xf32, #tpu.memory_space<vmem>>, %arg16: memref<2x1x32xf32, #tpu.memory_space<vmem>>, %arg17: memref<2x32x32xf32, #tpu.memory_space<vmem>>, %arg18: memref<2x1x32xf32, #tpu.memory_space<vmem>>, %arg19: memref<2x32x64xf32, #tpu.memory_space<vmem>>, %arg20: memref<2x1x64xf32, #tpu.memory_space<vmem>>, %arg21: memref<2x32x32xf32, #tpu.memory_space<vmem>>, %arg22: memref<2x1x32xf32, #tpu.memory_space<vmem>>, %arg23: memref<2x1x32xf32, #tpu.memory_space<vmem>>, %arg24: memref<2x1x32xf32, #tpu.memory_space<vmem>>, %arg25: memref<2x32x128xf32, #tpu.memory_space<vmem>>, %arg26: memref<2x1x128xf32, #tpu.memory_space<vmem>>, %arg27: memref<2x128x32xf32, #tpu.memory_space<vmem>>, %arg28: memref<2x1x32xf32, #tpu.memory_space<vmem>>, %arg29: memref<32x50xf32, #tpu.memory_space<vmem>>, %arg30: memref<1x50xf32, #tpu.memory_space<vmem>>, %arg31: memref<16x50xf32, #tpu.memory_space<vmem>>) attributes {dimension_semantics = [], scalar_prefetch = 0 : i64, scratch_operands = 0 : i64, tpu.core_type = #tpu.core_type<tc>} {
    %c0 = arith.constant 0 : index
    %c0_0 = arith.constant 0 : index
    %0 = vector.load %arg2[%c0, %c0_0] : memref<32x32xf32, #tpu.memory_space<vmem>>, vector<32x32xf32>
    %c0_1 = arith.constant 0 : index
    %c0_2 = arith.constant 0 : index
    %1 = vector.load %arg0[%c0_1, %c0_2] : memref<16x32xf32, #tpu.memory_space<vmem>>, vector<16x32xf32>
    %c0_3 = arith.constant 0 : index
    %c0_4 = arith.constant 0 : index
    %c0_5 = arith.constant 0 : index
    %2 = vector.load %arg3[%c0_3, %c0_4, %c0_5] : memref<2x32x96xf32, #tpu.memory_space<vmem>>, vector<1x32x96xf32>
    %3 = vector.shape_cast %2 : vector<1x32x96xf32> to vector<32x96xf32>
    %c0_6 = arith.constant 0 : index
    %c0_7 = arith.constant 0 : index
    %c0_8 = arith.constant 0 : index
    %4 = vector.load %arg4[%c0_6, %c0_7, %c0_8] : memref<2x1x96xf32, #tpu.memory_space<vmem>>, vector<1x1x96xf32>
    %5 = vector.shape_cast %4 : vector<1x1x96xf32> to vector<1x96xf32>
    %c0_9 = arith.constant 0 : index
    %c0_10 = arith.constant 0 : index
    %c0_11 = arith.constant 0 : index
    %6 = vector.load %arg5[%c0_9, %c0_10, %c0_11] : memref<2x32x32xf32, #tpu.memory_space<vmem>>, vector<1x32x32xf32>
    %7 = vector.shape_cast %6 : vector<1x32x32xf32> to vector<32x32xf32>
    %c0_12 = arith.constant 0 : index
    %c0_13 = arith.constant 0 : index
    %c0_14 = arith.constant 0 : index
    %8 = vector.load %arg6[%c0_12, %c0_13, %c0_14] : memref<2x1x32xf32, #tpu.memory_space<vmem>>, vector<1x1x32xf32>
    %9 = vector.shape_cast %8 : vector<1x1x32xf32> to vector<1x32xf32>
    %cst = arith.constant dense<0.000000e+00> : vector<16x96xf32>
    %10 = tpu.matmul %1, %3, %cst {dimension_numbers = #tpu.dot_dimension_numbers<[1], [0], [0], [1], [0, 0, 1, 1], [], []>} : vector<16x32xf32>, vector<32x96xf32>, vector<16x96xf32> -> vector<16x96xf32>
    %11 = vector.broadcast %5 : vector<1x96xf32> to vector<16x96xf32>
    %12 = arith.addf %10, %11 : vector<16x96xf32>
    %13 = vector.extract_strided_slice %12 {offsets = [0, 0], sizes = [16, 32], strides = [1, 1]} : vector<16x96xf32> to vector<16x32xf32>
    %14 = vector.extract_strided_slice %12 {offsets = [0, 32], sizes = [16, 32], strides = [1, 1]} : vector<16x96xf32> to vector<16x32xf32>
    %15 = vector.extract_strided_slice %12 {offsets = [0, 64], sizes = [16, 32], strides = [1, 1]} : vector<16x96xf32> to vector<16x32xf32>
    %16 = vector.extract_strided_slice %13 {offsets = [0, 0], sizes = [8, 32], strides = [1, 1]} : vector<16x32xf32> to vector<8x32xf32>
    %17 = vector.extract_strided_slice %14 {offsets = [0, 0], sizes = [8, 32], strides = [1, 1]} : vector<16x32xf32> to vector<8x32xf32>
    %18 = vector.extract_strided_slice %15 {offsets = [0, 0], sizes = [8, 32], strides = [1, 1]} : vector<16x32xf32> to vector<8x32xf32>
    %19 = vector.extract_strided_slice %16 {offsets = [0, 0], sizes = [8, 8], strides = [1, 1]} : vector<8x32xf32> to vector<8x8xf32>
    %20 = vector.extract_strided_slice %17 {offsets = [0, 0], sizes = [8, 8], strides = [1, 1]} : vector<8x32xf32> to vector<8x8xf32>
    %21 = vector.extract_strided_slice %18 {offsets = [0, 0], sizes = [8, 8], strides = [1, 1]} : vector<8x32xf32> to vector<8x8xf32>
    %cst_15 = arith.constant dense<0.000000e+00> : vector<8x8xf32>
    %22 = tpu.matmul %19, %20, %cst_15 {dimension_numbers = #tpu.dot_dimension_numbers<[1], [1], [0], [0], [0, 0, 1, 0], [], []>} : vector<8x8xf32>, vector<8x8xf32>, vector<8x8xf32> -> vector<8x8xf32>
    %cst_16 = arith.constant dense<0xFF800000> : vector<8xf32>
    %23 = vector.multi_reduction <maximumf>, %22, %cst_16 [1] : vector<8x8xf32> to vector<8xf32>
    %24 = vector.shape_cast %23 : vector<8xf32> to vector<8x1xf32>
    %25 = vector.broadcast %24 : vector<8x1xf32> to vector<8x8xf32>
    %26 = arith.subf %22, %25 : vector<8x8xf32>
    %27 = math.exp %26 : vector<8x8xf32>
    %cst_17 = arith.constant dense<0.000000e+00> : vector<8xf32>
    %28 = vector.multi_reduction <add>, %27, %cst_17 [1] : vector<8x8xf32> to vector<8xf32>
    %29 = vector.shape_cast %28 : vector<8xf32> to vector<8x1xf32>
    %30 = tpu.reciprocal %29 {approx = true} : vector<8x1xf32> -> vector<8x1xf32>
    %31 = vector.broadcast %30 : vector<8x1xf32> to vector<8x8xf32>
    %32 = arith.mulf %27, %31 : vector<8x8xf32>
    %cst_18 = arith.constant dense<0.000000e+00> : vector<8x8xf32>
    %33 = tpu.matmul %32, %21, %cst_18 {dimension_numbers = #tpu.dot_dimension_numbers<[1], [0], [0], [1], [0, 0, 1, 1], [], []>} : vector<8x8xf32>, vector<8x8xf32>, vector<8x8xf32> -> vector<8x8xf32>
    %34 = vector.extract_strided_slice %16 {offsets = [0, 8], sizes = [8, 8], strides = [1, 1]} : vector<8x32xf32> to vector<8x8xf32>
    %35 = vector.extract_strided_slice %17 {offsets = [0, 8], sizes = [8, 8], strides = [1, 1]} : vector<8x32xf32> to vector<8x8xf32>
    %36 = vector.extract_strided_slice %18 {offsets = [0, 8], sizes = [8, 8], strides = [1, 1]} : vector<8x32xf32> to vector<8x8xf32>
    %cst_19 = arith.constant dense<0.000000e+00> : vector<8x8xf32>
    %37 = tpu.matmul %34, %35, %cst_19 {dimension_numbers = #tpu.dot_dimension_numbers<[1], [1], [0], [0], [0, 0, 1, 0], [], []>} : vector<8x8xf32>, vector<8x8xf32>, vector<8x8xf32> -> vector<8x8xf32>
    %cst_20 = arith.constant dense<0xFF800000> : vector<8xf32>
    %38 = vector.multi_reduction <maximumf>, %37, %cst_20 [1] : vector<8x8xf32> to vector<8xf32>
    %39 = vector.shape_cast %38 : vector<8xf32> to vector<8x1xf32>
    %40 = vector.broadcast %39 : vector<8x1xf32> to vector<8x8xf32>
    %41 = arith.subf %37, %40 : vector<8x8xf32>
    %42 = math.exp %41 : vector<8x8xf32>
    %cst_21 = arith.constant dense<0.000000e+00> : vector<8xf32>
    %43 = vector.multi_reduction <add>, %42, %cst_21 [1] : vector<8x8xf32> to vector<8xf32>
    %44 = vector.shape_cast %43 : vector<8xf32> to vector<8x1xf32>
    %45 = tpu.reciprocal %44 {approx = true} : vector<8x1xf32> -> vector<8x1xf32>
    %46 = vector.broadcast %45 : vector<8x1xf32> to vector<8x8xf32>
    %47 = arith.mulf %42, %46 : vector<8x8xf32>
    %cst_22 = arith.constant dense<0.000000e+00> : vector<8x8xf32>
    %48 = tpu.matmul %47, %36, %cst_22 {dimension_numbers = #tpu.dot_dimension_numbers<[1], [0], [0], [1], [0, 0, 1, 1], [], []>} : vector<8x8xf32>, vector<8x8xf32>, vector<8x8xf32> -> vector<8x8xf32>
    %49 = vector.extract_strided_slice %16 {offsets = [0, 16], sizes = [8, 8], strides = [1, 1]} : vector<8x32xf32> to vector<8x8xf32>
    %50 = vector.extract_strided_slice %17 {offsets = [0, 16], sizes = [8, 8], strides = [1, 1]} : vector<8x32xf32> to vector<8x8xf32>
    %51 = vector.extract_strided_slice %18 {offsets = [0, 16], sizes = [8, 8], strides = [1, 1]} : vector<8x32xf32> to vector<8x8xf32>
    %cst_23 = arith.constant dense<0.000000e+00> : vector<8x8xf32>
    %52 = tpu.matmul %49, %50, %cst_23 {dimension_numbers = #tpu.dot_dimension_numbers<[1], [1], [0], [0], [0, 0, 1, 0], [], []>} : vector<8x8xf32>, vector<8x8xf32>, vector<8x8xf32> -> vector<8x8xf32>
    %cst_24 = arith.constant dense<0xFF800000> : vector<8xf32>
    %53 = vector.multi_reduction <maximumf>, %52, %cst_24 [1] : vector<8x8xf32> to vector<8xf32>
    %54 = vector.shape_cast %53 : vector<8xf32> to vector<8x1xf32>
    %55 = vector.broadcast %54 : vector<8x1xf32> to vector<8x8xf32>
    %56 = arith.subf %52, %55 : vector<8x8xf32>
    %57 = math.exp %56 : vector<8x8xf32>
    %cst_25 = arith.constant dense<0.000000e+00> : vector<8xf32>
    %58 = vector.multi_reduction <add>, %57, %cst_25 [1] : vector<8x8xf32> to vector<8xf32>
    %59 = vector.shape_cast %58 : vector<8xf32> to vector<8x1xf32>
    %60 = tpu.reciprocal %59 {approx = true} : vector<8x1xf32> -> vector<8x1xf32>
    %61 = vector.broadcast %60 : vector<8x1xf32> to vector<8x8xf32>
    %62 = arith.mulf %57, %61 : vector<8x8xf32>
    %cst_26 = arith.constant dense<0.000000e+00> : vector<8x8xf32>
    %63 = tpu.matmul %62, %51, %cst_26 {dimension_numbers = #tpu.dot_dimension_numbers<[1], [0], [0], [1], [0, 0, 1, 1], [], []>} : vector<8x8xf32>, vector<8x8xf32>, vector<8x8xf32> -> vector<8x8xf32>
    %64 = vector.extract_strided_slice %16 {offsets = [0, 24], sizes = [8, 8], strides = [1, 1]} : vector<8x32xf32> to vector<8x8xf32>
    %65 = vector.extract_strided_slice %17 {offsets = [0, 24], sizes = [8, 8], strides = [1, 1]} : vector<8x32xf32> to vector<8x8xf32>
    %66 = vector.extract_strided_slice %18 {offsets = [0, 24], sizes = [8, 8], strides = [1, 1]} : vector<8x32xf32> to vector<8x8xf32>
    %cst_27 = arith.constant dense<0.000000e+00> : vector<8x8xf32>
    %67 = tpu.matmul %64, %65, %cst_27 {dimension_numbers = #tpu.dot_dimension_numbers<[1], [1], [0], [0], [0, 0, 1, 0], [], []>} : vector<8x8xf32>, vector<8x8xf32>, vector<8x8xf32> -> vector<8x8xf32>
    %cst_28 = arith.constant dense<0xFF800000> : vector<8xf32>
    %68 = vector.multi_reduction <maximumf>, %67, %cst_28 [1] : vector<8x8xf32> to vector<8xf32>
    %69 = vector.shape_cast %68 : vector<8xf32> to vector<8x1xf32>
    %70 = vector.broadcast %69 : vector<8x1xf32> to vector<8x8xf32>
    %71 = arith.subf %67, %70 : vector<8x8xf32>
    %72 = math.exp %71 : vector<8x8xf32>
    %cst_29 = arith.constant dense<0.000000e+00> : vector<8xf32>
    %73 = vector.multi_reduction <add>, %72, %cst_29 [1] : vector<8x8xf32> to vector<8xf32>
    %74 = vector.shape_cast %73 : vector<8xf32> to vector<8x1xf32>
    %75 = tpu.reciprocal %74 {approx = true} : vector<8x1xf32> -> vector<8x1xf32>
    %76 = vector.broadcast %75 : vector<8x1xf32> to vector<8x8xf32>
    %77 = arith.mulf %72, %76 : vector<8x8xf32>
    %cst_30 = arith.constant dense<0.000000e+00> : vector<8x8xf32>
    %78 = tpu.matmul %77, %66, %cst_30 {dimension_numbers = #tpu.dot_dimension_numbers<[1], [0], [0], [1], [0, 0, 1, 1], [], []>} : vector<8x8xf32>, vector<8x8xf32>, vector<8x8xf32> -> vector<8x8xf32>
    %79 = tpu.concatenate %33, %48, %63, %78 in 0 : vector<8x8xf32>, vector<8x8xf32>, vector<8x8xf32>, vector<8x8xf32> -> vector<32x8xf32>
    %cst_31 = arith.constant dense<0.000000e+00> : vector<32x8xf32>
    %80 = tpu.matmul %0, %79, %cst_31 {dimension_numbers = #tpu.dot_dimension_numbers<[1], [0], [0], [1], [0, 0, 1, 1], [], []>} : vector<32x32xf32>, vector<32x8xf32>, vector<32x8xf32> -> vector<32x8xf32>
    %81 = vector.extract_strided_slice %80 {offsets = [0, 0], sizes = [8, 8], strides = [1, 1]} : vector<32x8xf32> to vector<8x8xf32>
    %82 = vector.extract_strided_slice %80 {offsets = [8, 0], sizes = [8, 8], strides = [1, 1]} : vector<32x8xf32> to vector<8x8xf32>
    %83 = vector.extract_strided_slice %80 {offsets = [16, 0], sizes = [8, 8], strides = [1, 1]} : vector<32x8xf32> to vector<8x8xf32>
    %84 = vector.extract_strided_slice %80 {offsets = [24, 0], sizes = [8, 8], strides = [1, 1]} : vector<32x8xf32> to vector<8x8xf32>
    %85 = tpu.concatenate %81, %82, %83, %84 in 1 : vector<8x8xf32>, vector<8x8xf32>, vector<8x8xf32>, vector<8x8xf32> -> vector<8x32xf32>
    %86 = vector.extract_strided_slice %13 {offsets = [8, 0], sizes = [8, 32], strides = [1, 1]} : vector<16x32xf32> to vector<8x32xf32>
    %87 = vector.extract_strided_slice %14 {offsets = [8, 0], sizes = [8, 32], strides = [1, 1]} : vector<16x32xf32> to vector<8x32xf32>
    %88 = vector.extract_strided_slice %15 {offsets = [8, 0], sizes = [8, 32], strides = [1, 1]} : vector<16x32xf32> to vector<8x32xf32>
    %89 = vector.extract_strided_slice %86 {offsets = [0, 0], sizes = [8, 8], strides = [1, 1]} : vector<8x32xf32> to vector<8x8xf32>
    %90 = vector.extract_strided_slice %87 {offsets = [0, 0], sizes = [8, 8], strides = [1, 1]} : vector<8x32xf32> to vector<8x8xf32>
    %91 = vector.extract_strided_slice %88 {offsets = [0, 0], sizes = [8, 8], strides = [1, 1]} : vector<8x32xf32> to vector<8x8xf32>
    %cst_32 = arith.constant dense<0.000000e+00> : vector<8x8xf32>
    %92 = tpu.matmul %89, %90, %cst_32 {dimension_numbers = #tpu.dot_dimension_numbers<[1], [1], [0], [0], [0, 0, 1, 0], [], []>} : vector<8x8xf32>, vector<8x8xf32>, vector<8x8xf32> -> vector<8x8xf32>
    %cst_33 = arith.constant dense<0xFF800000> : vector<8xf32>
    %93 = vector.multi_reduction <maximumf>, %92, %cst_33 [1] : vector<8x8xf32> to vector<8xf32>
    %94 = vector.shape_cast %93 : vector<8xf32> to vector<8x1xf32>
    %95 = vector.broadcast %94 : vector<8x1xf32> to vector<8x8xf32>
    %96 = arith.subf %92, %95 : vector<8x8xf32>
    %97 = math.exp %96 : vector<8x8xf32>
    %cst_34 = arith.constant dense<0.000000e+00> : vector<8xf32>
    %98 = vector.multi_reduction <add>, %97, %cst_34 [1] : vector<8x8xf32> to vector<8xf32>
    %99 = vector.shape_cast %98 : vector<8xf32> to vector<8x1xf32>
    %100 = tpu.reciprocal %99 {approx = true} : vector<8x1xf32> -> vector<8x1xf32>
    %101 = vector.broadcast %100 : vector<8x1xf32> to vector<8x8xf32>
    %102 = arith.mulf %97, %101 : vector<8x8xf32>
    %cst_35 = arith.constant dense<0.000000e+00> : vector<8x8xf32>
    %103 = tpu.matmul %102, %91, %cst_35 {dimension_numbers = #tpu.dot_dimension_numbers<[1], [0], [0], [1], [0, 0, 1, 1], [], []>} : vector<8x8xf32>, vector<8x8xf32>, vector<8x8xf32> -> vector<8x8xf32>
    %104 = vector.extract_strided_slice %86 {offsets = [0, 8], sizes = [8, 8], strides = [1, 1]} : vector<8x32xf32> to vector<8x8xf32>
    %105 = vector.extract_strided_slice %87 {offsets = [0, 8], sizes = [8, 8], strides = [1, 1]} : vector<8x32xf32> to vector<8x8xf32>
    %106 = vector.extract_strided_slice %88 {offsets = [0, 8], sizes = [8, 8], strides = [1, 1]} : vector<8x32xf32> to vector<8x8xf32>
    %cst_36 = arith.constant dense<0.000000e+00> : vector<8x8xf32>
    %107 = tpu.matmul %104, %105, %cst_36 {dimension_numbers = #tpu.dot_dimension_numbers<[1], [1], [0], [0], [0, 0, 1, 0], [], []>} : vector<8x8xf32>, vector<8x8xf32>, vector<8x8xf32> -> vector<8x8xf32>
    %cst_37 = arith.constant dense<0xFF800000> : vector<8xf32>
    %108 = vector.multi_reduction <maximumf>, %107, %cst_37 [1] : vector<8x8xf32> to vector<8xf32>
    %109 = vector.shape_cast %108 : vector<8xf32> to vector<8x1xf32>
    %110 = vector.broadcast %109 : vector<8x1xf32> to vector<8x8xf32>
    %111 = arith.subf %107, %110 : vector<8x8xf32>
    %112 = math.exp %111 : vector<8x8xf32>
    %cst_38 = arith.constant dense<0.000000e+00> : vector<8xf32>
    %113 = vector.multi_reduction <add>, %112, %cst_38 [1] : vector<8x8xf32> to vector<8xf32>
    %114 = vector.shape_cast %113 : vector<8xf32> to vector<8x1xf32>
    %115 = tpu.reciprocal %114 {approx = true} : vector<8x1xf32> -> vector<8x1xf32>
    %116 = vector.broadcast %115 : vector<8x1xf32> to vector<8x8xf32>
    %117 = arith.mulf %112, %116 : vector<8x8xf32>
    %cst_39 = arith.constant dense<0.000000e+00> : vector<8x8xf32>
    %118 = tpu.matmul %117, %106, %cst_39 {dimension_numbers = #tpu.dot_dimension_numbers<[1], [0], [0], [1], [0, 0, 1, 1], [], []>} : vector<8x8xf32>, vector<8x8xf32>, vector<8x8xf32> -> vector<8x8xf32>
    %119 = vector.extract_strided_slice %86 {offsets = [0, 16], sizes = [8, 8], strides = [1, 1]} : vector<8x32xf32> to vector<8x8xf32>
    %120 = vector.extract_strided_slice %87 {offsets = [0, 16], sizes = [8, 8], strides = [1, 1]} : vector<8x32xf32> to vector<8x8xf32>
    %121 = vector.extract_strided_slice %88 {offsets = [0, 16], sizes = [8, 8], strides = [1, 1]} : vector<8x32xf32> to vector<8x8xf32>
    %cst_40 = arith.constant dense<0.000000e+00> : vector<8x8xf32>
    %122 = tpu.matmul %119, %120, %cst_40 {dimension_numbers = #tpu.dot_dimension_numbers<[1], [1], [0], [0], [0, 0, 1, 0], [], []>} : vector<8x8xf32>, vector<8x8xf32>, vector<8x8xf32> -> vector<8x8xf32>
    %cst_41 = arith.constant dense<0xFF800000> : vector<8xf32>
    %123 = vector.multi_reduction <maximumf>, %122, %cst_41 [1] : vector<8x8xf32> to vector<8xf32>
    %124 = vector.shape_cast %123 : vector<8xf32> to vector<8x1xf32>
    %125 = vector.broadcast %124 : vector<8x1xf32> to vector<8x8xf32>
    %126 = arith.subf %122, %125 : vector<8x8xf32>
    %127 = math.exp %126 : vector<8x8xf32>
    %cst_42 = arith.constant dense<0.000000e+00> : vector<8xf32>
    %128 = vector.multi_reduction <add>, %127, %cst_42 [1] : vector<8x8xf32> to vector<8xf32>
    %129 = vector.shape_cast %128 : vector<8xf32> to vector<8x1xf32>
    %130 = tpu.reciprocal %129 {approx = true} : vector<8x1xf32> -> vector<8x1xf32>
    %131 = vector.broadcast %130 : vector<8x1xf32> to vector<8x8xf32>
    %132 = arith.mulf %127, %131 : vector<8x8xf32>
    %cst_43 = arith.constant dense<0.000000e+00> : vector<8x8xf32>
    %133 = tpu.matmul %132, %121, %cst_43 {dimension_numbers = #tpu.dot_dimension_numbers<[1], [0], [0], [1], [0, 0, 1, 1], [], []>} : vector<8x8xf32>, vector<8x8xf32>, vector<8x8xf32> -> vector<8x8xf32>
    %134 = vector.extract_strided_slice %86 {offsets = [0, 24], sizes = [8, 8], strides = [1, 1]} : vector<8x32xf32> to vector<8x8xf32>
    %135 = vector.extract_strided_slice %87 {offsets = [0, 24], sizes = [8, 8], strides = [1, 1]} : vector<8x32xf32> to vector<8x8xf32>
    %136 = vector.extract_strided_slice %88 {offsets = [0, 24], sizes = [8, 8], strides = [1, 1]} : vector<8x32xf32> to vector<8x8xf32>
    %cst_44 = arith.constant dense<0.000000e+00> : vector<8x8xf32>
    %137 = tpu.matmul %134, %135, %cst_44 {dimension_numbers = #tpu.dot_dimension_numbers<[1], [1], [0], [0], [0, 0, 1, 0], [], []>} : vector<8x8xf32>, vector<8x8xf32>, vector<8x8xf32> -> vector<8x8xf32>
    %cst_45 = arith.constant dense<0xFF800000> : vector<8xf32>
    %138 = vector.multi_reduction <maximumf>, %137, %cst_45 [1] : vector<8x8xf32> to vector<8xf32>
    %139 = vector.shape_cast %138 : vector<8xf32> to vector<8x1xf32>
    %140 = vector.broadcast %139 : vector<8x1xf32> to vector<8x8xf32>
    %141 = arith.subf %137, %140 : vector<8x8xf32>
    %142 = math.exp %141 : vector<8x8xf32>
    %cst_46 = arith.constant dense<0.000000e+00> : vector<8xf32>
    %143 = vector.multi_reduction <add>, %142, %cst_46 [1] : vector<8x8xf32> to vector<8xf32>
    %144 = vector.shape_cast %143 : vector<8xf32> to vector<8x1xf32>
    %145 = tpu.reciprocal %144 {approx = true} : vector<8x1xf32> -> vector<8x1xf32>
    %146 = vector.broadcast %145 : vector<8x1xf32> to vector<8x8xf32>
    %147 = arith.mulf %142, %146 : vector<8x8xf32>
    %cst_47 = arith.constant dense<0.000000e+00> : vector<8x8xf32>
    %148 = tpu.matmul %147, %136, %cst_47 {dimension_numbers = #tpu.dot_dimension_numbers<[1], [0], [0], [1], [0, 0, 1, 1], [], []>} : vector<8x8xf32>, vector<8x8xf32>, vector<8x8xf32> -> vector<8x8xf32>
    %149 = tpu.concatenate %103, %118, %133, %148 in 0 : vector<8x8xf32>, vector<8x8xf32>, vector<8x8xf32>, vector<8x8xf32> -> vector<32x8xf32>
    %cst_48 = arith.constant dense<0.000000e+00> : vector<32x8xf32>
    %150 = tpu.matmul %0, %149, %cst_48 {dimension_numbers = #tpu.dot_dimension_numbers<[1], [0], [0], [1], [0, 0, 1, 1], [], []>} : vector<32x32xf32>, vector<32x8xf32>, vector<32x8xf32> -> vector<32x8xf32>
    %151 = vector.extract_strided_slice %150 {offsets = [0, 0], sizes = [8, 8], strides = [1, 1]} : vector<32x8xf32> to vector<8x8xf32>
    %152 = vector.extract_strided_slice %150 {offsets = [8, 0], sizes = [8, 8], strides = [1, 1]} : vector<32x8xf32> to vector<8x8xf32>
    %153 = vector.extract_strided_slice %150 {offsets = [16, 0], sizes = [8, 8], strides = [1, 1]} : vector<32x8xf32> to vector<8x8xf32>
    %154 = vector.extract_strided_slice %150 {offsets = [24, 0], sizes = [8, 8], strides = [1, 1]} : vector<32x8xf32> to vector<8x8xf32>
    %155 = tpu.concatenate %151, %152, %153, %154 in 1 : vector<8x8xf32>, vector<8x8xf32>, vector<8x8xf32>, vector<8x8xf32> -> vector<8x32xf32>
    %156 = tpu.concatenate %85, %155 in 0 : vector<8x32xf32>, vector<8x32xf32> -> vector<16x32xf32>
    %cst_49 = arith.constant dense<0.000000e+00> : vector<16x32xf32>
    %157 = tpu.matmul %156, %7, %cst_49 {dimension_numbers = #tpu.dot_dimension_numbers<[1], [0], [0], [1], [0, 0, 1, 1], [], []>} : vector<16x32xf32>, vector<32x32xf32>, vector<16x32xf32> -> vector<16x32xf32>
    %158 = vector.broadcast %9 : vector<1x32xf32> to vector<16x32xf32>
    %159 = arith.addf %157, %158 : vector<16x32xf32>
    %160 = arith.addf %1, %159 : vector<16x32xf32>
    %c0_50 = arith.constant 0 : index
    %c0_51 = arith.constant 0 : index
    %c0_52 = arith.constant 0 : index
    %161 = vector.load %arg7[%c0_50, %c0_51, %c0_52] : memref<2x1x32xf32, #tpu.memory_space<vmem>>, vector<1x1x32xf32>
    %162 = vector.shape_cast %161 : vector<1x1x32xf32> to vector<1x32xf32>
    %c0_53 = arith.constant 0 : index
    %c0_54 = arith.constant 0 : index
    %c0_55 = arith.constant 0 : index
    %163 = vector.load %arg8[%c0_53, %c0_54, %c0_55] : memref<2x1x32xf32, #tpu.memory_space<vmem>>, vector<1x1x32xf32>
    %164 = vector.shape_cast %163 : vector<1x1x32xf32> to vector<1x32xf32>
    %cst_56 = arith.constant dense<0.000000e+00> : vector<16xf32>
    %165 = vector.multi_reduction <add>, %160, %cst_56 [1] : vector<16x32xf32> to vector<16xf32>
    %166 = vector.shape_cast %165 : vector<16xf32> to vector<16x1xf32>
    %cst_57 = arith.constant 3.200000e+01 : f32
    %167 = vector.broadcast %cst_57 : f32 to vector<16x1xf32>
    %168 = arith.divf %166, %167 : vector<16x1xf32>
    %169 = vector.broadcast %168 : vector<16x1xf32> to vector<16x32xf32>
    %170 = arith.subf %160, %169 : vector<16x32xf32>
    %171 = arith.mulf %170, %170 : vector<16x32xf32>
    %cst_58 = arith.constant dense<0.000000e+00> : vector<16xf32>
    %172 = vector.multi_reduction <add>, %171, %cst_58 [1] : vector<16x32xf32> to vector<16xf32>
    %173 = vector.shape_cast %172 : vector<16xf32> to vector<16x1xf32>
    %cst_59 = arith.constant 3.200000e+01 : f32
    %174 = vector.broadcast %cst_59 : f32 to vector<16x1xf32>
    %175 = arith.divf %173, %174 : vector<16x1xf32>
    %cst_60 = arith.constant 9.99999974E-6 : f32
    %176 = vector.broadcast %cst_60 : f32 to vector<16x1xf32>
    %177 = arith.addf %175, %176 : vector<16x1xf32>
    %178 = math.rsqrt %177 : vector<16x1xf32>
    %179 = vector.broadcast %178 : vector<16x1xf32> to vector<16x32xf32>
    %180 = arith.mulf %170, %179 : vector<16x32xf32>
    %181 = vector.broadcast %162 : vector<1x32xf32> to vector<16x32xf32>
    %182 = arith.mulf %180, %181 : vector<16x32xf32>
    %183 = vector.broadcast %164 : vector<1x32xf32> to vector<16x32xf32>
    %184 = arith.addf %182, %183 : vector<16x32xf32>
    %c0_61 = arith.constant 0 : index
    %c0_62 = arith.constant 0 : index
    %c0_63 = arith.constant 0 : index
    %185 = vector.load %arg9[%c0_61, %c0_62, %c0_63] : memref<2x32x128xf32, #tpu.memory_space<vmem>>, vector<1x32x128xf32>
    %186 = vector.shape_cast %185 : vector<1x32x128xf32> to vector<32x128xf32>
    %cst_64 = arith.constant dense<0.000000e+00> : vector<16x128xf32>
    %187 = tpu.matmul %184, %186, %cst_64 {dimension_numbers = #tpu.dot_dimension_numbers<[1], [0], [0], [1], [0, 0, 1, 1], [], []>} : vector<16x32xf32>, vector<32x128xf32>, vector<16x128xf32> -> vector<16x128xf32>
    %c0_65 = arith.constant 0 : index
    %c0_66 = arith.constant 0 : index
    %c0_67 = arith.constant 0 : index
    %188 = vector.load %arg10[%c0_65, %c0_66, %c0_67] : memref<2x1x128xf32, #tpu.memory_space<vmem>>, vector<1x1x128xf32>
    %189 = vector.shape_cast %188 : vector<1x1x128xf32> to vector<1x128xf32>
    %190 = vector.broadcast %189 : vector<1x128xf32> to vector<16x128xf32>
    %191 = arith.addf %187, %190 : vector<16x128xf32>
    %cst_68 = arith.constant 0.000000e+00 : f32
    %192 = vector.broadcast %cst_68 : f32 to vector<16x128xf32>
    %193 = arith.maximumf %191, %192 : vector<16x128xf32>
    %c0_69 = arith.constant 0 : index
    %c0_70 = arith.constant 0 : index
    %c0_71 = arith.constant 0 : index
    %194 = vector.load %arg11[%c0_69, %c0_70, %c0_71] : memref<2x128x32xf32, #tpu.memory_space<vmem>>, vector<1x128x32xf32>
    %195 = vector.shape_cast %194 : vector<1x128x32xf32> to vector<128x32xf32>
    %cst_72 = arith.constant dense<0.000000e+00> : vector<16x32xf32>
    %196 = tpu.matmul %193, %195, %cst_72 {dimension_numbers = #tpu.dot_dimension_numbers<[1], [0], [0], [1], [0, 0, 1, 1], [], []>} : vector<16x128xf32>, vector<128x32xf32>, vector<16x32xf32> -> vector<16x32xf32>
    %c0_73 = arith.constant 0 : index
    %c0_74 = arith.constant 0 : index
    %c0_75 = arith.constant 0 : index
    %197 = vector.load %arg12[%c0_73, %c0_74, %c0_75] : memref<2x1x32xf32, #tpu.memory_space<vmem>>, vector<1x1x32xf32>
    %198 = vector.shape_cast %197 : vector<1x1x32xf32> to vector<1x32xf32>
    %199 = vector.broadcast %198 : vector<1x32xf32> to vector<16x32xf32>
    %200 = arith.addf %196, %199 : vector<16x32xf32>
    %201 = arith.addf %184, %200 : vector<16x32xf32>
    %c0_76 = arith.constant 0 : index
    %c0_77 = arith.constant 0 : index
    %c0_78 = arith.constant 0 : index
    %202 = vector.load %arg7[%c0_76, %c0_77, %c0_78] : memref<2x1x32xf32, #tpu.memory_space<vmem>>, vector<1x1x32xf32>
    %203 = vector.shape_cast %202 : vector<1x1x32xf32> to vector<1x32xf32>
    %c0_79 = arith.constant 0 : index
    %c0_80 = arith.constant 0 : index
    %c0_81 = arith.constant 0 : index
    %204 = vector.load %arg8[%c0_79, %c0_80, %c0_81] : memref<2x1x32xf32, #tpu.memory_space<vmem>>, vector<1x1x32xf32>
    %205 = vector.shape_cast %204 : vector<1x1x32xf32> to vector<1x32xf32>
    %cst_82 = arith.constant dense<0.000000e+00> : vector<16xf32>
    %206 = vector.multi_reduction <add>, %201, %cst_82 [1] : vector<16x32xf32> to vector<16xf32>
    %207 = vector.shape_cast %206 : vector<16xf32> to vector<16x1xf32>
    %cst_83 = arith.constant 3.200000e+01 : f32
    %208 = vector.broadcast %cst_83 : f32 to vector<16x1xf32>
    %209 = arith.divf %207, %208 : vector<16x1xf32>
    %210 = vector.broadcast %209 : vector<16x1xf32> to vector<16x32xf32>
    %211 = arith.subf %201, %210 : vector<16x32xf32>
    %212 = arith.mulf %211, %211 : vector<16x32xf32>
    %cst_84 = arith.constant dense<0.000000e+00> : vector<16xf32>
    %213 = vector.multi_reduction <add>, %212, %cst_84 [1] : vector<16x32xf32> to vector<16xf32>
    %214 = vector.shape_cast %213 : vector<16xf32> to vector<16x1xf32>
    %cst_85 = arith.constant 3.200000e+01 : f32
    %215 = vector.broadcast %cst_85 : f32 to vector<16x1xf32>
    %216 = arith.divf %214, %215 : vector<16x1xf32>
    %cst_86 = arith.constant 9.99999974E-6 : f32
    %217 = vector.broadcast %cst_86 : f32 to vector<16x1xf32>
    %218 = arith.addf %216, %217 : vector<16x1xf32>
    %219 = math.rsqrt %218 : vector<16x1xf32>
    %220 = vector.broadcast %219 : vector<16x1xf32> to vector<16x32xf32>
    %221 = arith.mulf %211, %220 : vector<16x32xf32>
    %222 = vector.broadcast %203 : vector<1x32xf32> to vector<16x32xf32>
    %223 = arith.mulf %221, %222 : vector<16x32xf32>
    %224 = vector.broadcast %205 : vector<1x32xf32> to vector<16x32xf32>
    %225 = arith.addf %223, %224 : vector<16x32xf32>
    %c1 = arith.constant 1 : index
    %c0_87 = arith.constant 0 : index
    %c0_88 = arith.constant 0 : index
    %226 = vector.load %arg3[%c1, %c0_87, %c0_88] : memref<2x32x96xf32, #tpu.memory_space<vmem>>, vector<1x32x96xf32>
    %227 = vector.shape_cast %226 : vector<1x32x96xf32> to vector<32x96xf32>
    %c1_89 = arith.constant 1 : index
    %c0_90 = arith.constant 0 : index
    %c0_91 = arith.constant 0 : index
    %228 = vector.load %arg4[%c1_89, %c0_90, %c0_91] : memref<2x1x96xf32, #tpu.memory_space<vmem>>, vector<1x1x96xf32>
    %229 = vector.shape_cast %228 : vector<1x1x96xf32> to vector<1x96xf32>
    %c1_92 = arith.constant 1 : index
    %c0_93 = arith.constant 0 : index
    %c0_94 = arith.constant 0 : index
    %230 = vector.load %arg5[%c1_92, %c0_93, %c0_94] : memref<2x32x32xf32, #tpu.memory_space<vmem>>, vector<1x32x32xf32>
    %231 = vector.shape_cast %230 : vector<1x32x32xf32> to vector<32x32xf32>
    %c1_95 = arith.constant 1 : index
    %c0_96 = arith.constant 0 : index
    %c0_97 = arith.constant 0 : index
    %232 = vector.load %arg6[%c1_95, %c0_96, %c0_97] : memref<2x1x32xf32, #tpu.memory_space<vmem>>, vector<1x1x32xf32>
    %233 = vector.shape_cast %232 : vector<1x1x32xf32> to vector<1x32xf32>
    %cst_98 = arith.constant dense<0.000000e+00> : vector<16x96xf32>
    %234 = tpu.matmul %225, %227, %cst_98 {dimension_numbers = #tpu.dot_dimension_numbers<[1], [0], [0], [1], [0, 0, 1, 1], [], []>} : vector<16x32xf32>, vector<32x96xf32>, vector<16x96xf32> -> vector<16x96xf32>
    %235 = vector.broadcast %229 : vector<1x96xf32> to vector<16x96xf32>
    %236 = arith.addf %234, %235 : vector<16x96xf32>
    %237 = vector.extract_strided_slice %236 {offsets = [0, 0], sizes = [16, 32], strides = [1, 1]} : vector<16x96xf32> to vector<16x32xf32>
    %238 = vector.extract_strided_slice %236 {offsets = [0, 32], sizes = [16, 32], strides = [1, 1]} : vector<16x96xf32> to vector<16x32xf32>
    %239 = vector.extract_strided_slice %236 {offsets = [0, 64], sizes = [16, 32], strides = [1, 1]} : vector<16x96xf32> to vector<16x32xf32>
    %240 = vector.extract_strided_slice %237 {offsets = [0, 0], sizes = [8, 32], strides = [1, 1]} : vector<16x32xf32> to vector<8x32xf32>
    %241 = vector.extract_strided_slice %238 {offsets = [0, 0], sizes = [8, 32], strides = [1, 1]} : vector<16x32xf32> to vector<8x32xf32>
    %242 = vector.extract_strided_slice %239 {offsets = [0, 0], sizes = [8, 32], strides = [1, 1]} : vector<16x32xf32> to vector<8x32xf32>
    %243 = vector.extract_strided_slice %240 {offsets = [0, 0], sizes = [8, 8], strides = [1, 1]} : vector<8x32xf32> to vector<8x8xf32>
    %244 = vector.extract_strided_slice %241 {offsets = [0, 0], sizes = [8, 8], strides = [1, 1]} : vector<8x32xf32> to vector<8x8xf32>
    %245 = vector.extract_strided_slice %242 {offsets = [0, 0], sizes = [8, 8], strides = [1, 1]} : vector<8x32xf32> to vector<8x8xf32>
    %cst_99 = arith.constant dense<0.000000e+00> : vector<8x8xf32>
    %246 = tpu.matmul %243, %244, %cst_99 {dimension_numbers = #tpu.dot_dimension_numbers<[1], [1], [0], [0], [0, 0, 1, 0], [], []>} : vector<8x8xf32>, vector<8x8xf32>, vector<8x8xf32> -> vector<8x8xf32>
    %cst_100 = arith.constant dense<0xFF800000> : vector<8xf32>
    %247 = vector.multi_reduction <maximumf>, %246, %cst_100 [1] : vector<8x8xf32> to vector<8xf32>
    %248 = vector.shape_cast %247 : vector<8xf32> to vector<8x1xf32>
    %249 = vector.broadcast %248 : vector<8x1xf32> to vector<8x8xf32>
    %250 = arith.subf %246, %249 : vector<8x8xf32>
    %251 = math.exp %250 : vector<8x8xf32>
    %cst_101 = arith.constant dense<0.000000e+00> : vector<8xf32>
    %252 = vector.multi_reduction <add>, %251, %cst_101 [1] : vector<8x8xf32> to vector<8xf32>
    %253 = vector.shape_cast %252 : vector<8xf32> to vector<8x1xf32>
    %254 = tpu.reciprocal %253 {approx = true} : vector<8x1xf32> -> vector<8x1xf32>
    %255 = vector.broadcast %254 : vector<8x1xf32> to vector<8x8xf32>
    %256 = arith.mulf %251, %255 : vector<8x8xf32>
    %cst_102 = arith.constant dense<0.000000e+00> : vector<8x8xf32>
    %257 = tpu.matmul %256, %245, %cst_102 {dimension_numbers = #tpu.dot_dimension_numbers<[1], [0], [0], [1], [0, 0, 1, 1], [], []>} : vector<8x8xf32>, vector<8x8xf32>, vector<8x8xf32> -> vector<8x8xf32>
    %258 = vector.extract_strided_slice %240 {offsets = [0, 8], sizes = [8, 8], strides = [1, 1]} : vector<8x32xf32> to vector<8x8xf32>
    %259 = vector.extract_strided_slice %241 {offsets = [0, 8], sizes = [8, 8], strides = [1, 1]} : vector<8x32xf32> to vector<8x8xf32>
    %260 = vector.extract_strided_slice %242 {offsets = [0, 8], sizes = [8, 8], strides = [1, 1]} : vector<8x32xf32> to vector<8x8xf32>
    %cst_103 = arith.constant dense<0.000000e+00> : vector<8x8xf32>
    %261 = tpu.matmul %258, %259, %cst_103 {dimension_numbers = #tpu.dot_dimension_numbers<[1], [1], [0], [0], [0, 0, 1, 0], [], []>} : vector<8x8xf32>, vector<8x8xf32>, vector<8x8xf32> -> vector<8x8xf32>
    %cst_104 = arith.constant dense<0xFF800000> : vector<8xf32>
    %262 = vector.multi_reduction <maximumf>, %261, %cst_104 [1] : vector<8x8xf32> to vector<8xf32>
    %263 = vector.shape_cast %262 : vector<8xf32> to vector<8x1xf32>
    %264 = vector.broadcast %263 : vector<8x1xf32> to vector<8x8xf32>
    %265 = arith.subf %261, %264 : vector<8x8xf32>
    %266 = math.exp %265 : vector<8x8xf32>
    %cst_105 = arith.constant dense<0.000000e+00> : vector<8xf32>
    %267 = vector.multi_reduction <add>, %266, %cst_105 [1] : vector<8x8xf32> to vector<8xf32>
    %268 = vector.shape_cast %267 : vector<8xf32> to vector<8x1xf32>
    %269 = tpu.reciprocal %268 {approx = true} : vector<8x1xf32> -> vector<8x1xf32>
    %270 = vector.broadcast %269 : vector<8x1xf32> to vector<8x8xf32>
    %271 = arith.mulf %266, %270 : vector<8x8xf32>
    %cst_106 = arith.constant dense<0.000000e+00> : vector<8x8xf32>
    %272 = tpu.matmul %271, %260, %cst_106 {dimension_numbers = #tpu.dot_dimension_numbers<[1], [0], [0], [1], [0, 0, 1, 1], [], []>} : vector<8x8xf32>, vector<8x8xf32>, vector<8x8xf32> -> vector<8x8xf32>
    %273 = vector.extract_strided_slice %240 {offsets = [0, 16], sizes = [8, 8], strides = [1, 1]} : vector<8x32xf32> to vector<8x8xf32>
    %274 = vector.extract_strided_slice %241 {offsets = [0, 16], sizes = [8, 8], strides = [1, 1]} : vector<8x32xf32> to vector<8x8xf32>
    %275 = vector.extract_strided_slice %242 {offsets = [0, 16], sizes = [8, 8], strides = [1, 1]} : vector<8x32xf32> to vector<8x8xf32>
    %cst_107 = arith.constant dense<0.000000e+00> : vector<8x8xf32>
    %276 = tpu.matmul %273, %274, %cst_107 {dimension_numbers = #tpu.dot_dimension_numbers<[1], [1], [0], [0], [0, 0, 1, 0], [], []>} : vector<8x8xf32>, vector<8x8xf32>, vector<8x8xf32> -> vector<8x8xf32>
    %cst_108 = arith.constant dense<0xFF800000> : vector<8xf32>
    %277 = vector.multi_reduction <maximumf>, %276, %cst_108 [1] : vector<8x8xf32> to vector<8xf32>
    %278 = vector.shape_cast %277 : vector<8xf32> to vector<8x1xf32>
    %279 = vector.broadcast %278 : vector<8x1xf32> to vector<8x8xf32>
    %280 = arith.subf %276, %279 : vector<8x8xf32>
    %281 = math.exp %280 : vector<8x8xf32>
    %cst_109 = arith.constant dense<0.000000e+00> : vector<8xf32>
    %282 = vector.multi_reduction <add>, %281, %cst_109 [1] : vector<8x8xf32> to vector<8xf32>
    %283 = vector.shape_cast %282 : vector<8xf32> to vector<8x1xf32>
    %284 = tpu.reciprocal %283 {approx = true} : vector<8x1xf32> -> vector<8x1xf32>
    %285 = vector.broadcast %284 : vector<8x1xf32> to vector<8x8xf32>
    %286 = arith.mulf %281, %285 : vector<8x8xf32>
    %cst_110 = arith.constant dense<0.000000e+00> : vector<8x8xf32>
    %287 = tpu.matmul %286, %275, %cst_110 {dimension_numbers = #tpu.dot_dimension_numbers<[1], [0], [0], [1], [0, 0, 1, 1], [], []>} : vector<8x8xf32>, vector<8x8xf32>, vector<8x8xf32> -> vector<8x8xf32>
    %288 = vector.extract_strided_slice %240 {offsets = [0, 24], sizes = [8, 8], strides = [1, 1]} : vector<8x32xf32> to vector<8x8xf32>
    %289 = vector.extract_strided_slice %241 {offsets = [0, 24], sizes = [8, 8], strides = [1, 1]} : vector<8x32xf32> to vector<8x8xf32>
    %290 = vector.extract_strided_slice %242 {offsets = [0, 24], sizes = [8, 8], strides = [1, 1]} : vector<8x32xf32> to vector<8x8xf32>
    %cst_111 = arith.constant dense<0.000000e+00> : vector<8x8xf32>
    %291 = tpu.matmul %288, %289, %cst_111 {dimension_numbers = #tpu.dot_dimension_numbers<[1], [1], [0], [0], [0, 0, 1, 0], [], []>} : vector<8x8xf32>, vector<8x8xf32>, vector<8x8xf32> -> vector<8x8xf32>
    %cst_112 = arith.constant dense<0xFF800000> : vector<8xf32>
    %292 = vector.multi_reduction <maximumf>, %291, %cst_112 [1] : vector<8x8xf32> to vector<8xf32>
    %293 = vector.shape_cast %292 : vector<8xf32> to vector<8x1xf32>
    %294 = vector.broadcast %293 : vector<8x1xf32> to vector<8x8xf32>
    %295 = arith.subf %291, %294 : vector<8x8xf32>
    %296 = math.exp %295 : vector<8x8xf32>
    %cst_113 = arith.constant dense<0.000000e+00> : vector<8xf32>
    %297 = vector.multi_reduction <add>, %296, %cst_113 [1] : vector<8x8xf32> to vector<8xf32>
    %298 = vector.shape_cast %297 : vector<8xf32> to vector<8x1xf32>
    %299 = tpu.reciprocal %298 {approx = true} : vector<8x1xf32> -> vector<8x1xf32>
    %300 = vector.broadcast %299 : vector<8x1xf32> to vector<8x8xf32>
    %301 = arith.mulf %296, %300 : vector<8x8xf32>
    %cst_114 = arith.constant dense<0.000000e+00> : vector<8x8xf32>
    %302 = tpu.matmul %301, %290, %cst_114 {dimension_numbers = #tpu.dot_dimension_numbers<[1], [0], [0], [1], [0, 0, 1, 1], [], []>} : vector<8x8xf32>, vector<8x8xf32>, vector<8x8xf32> -> vector<8x8xf32>
    %303 = tpu.concatenate %257, %272, %287, %302 in 0 : vector<8x8xf32>, vector<8x8xf32>, vector<8x8xf32>, vector<8x8xf32> -> vector<32x8xf32>
    %cst_115 = arith.constant dense<0.000000e+00> : vector<32x8xf32>
    %304 = tpu.matmul %0, %303, %cst_115 {dimension_numbers = #tpu.dot_dimension_numbers<[1], [0], [0], [1], [0, 0, 1, 1], [], []>} : vector<32x32xf32>, vector<32x8xf32>, vector<32x8xf32> -> vector<32x8xf32>
    %305 = vector.extract_strided_slice %304 {offsets = [0, 0], sizes = [8, 8], strides = [1, 1]} : vector<32x8xf32> to vector<8x8xf32>
    %306 = vector.extract_strided_slice %304 {offsets = [8, 0], sizes = [8, 8], strides = [1, 1]} : vector<32x8xf32> to vector<8x8xf32>
    %307 = vector.extract_strided_slice %304 {offsets = [16, 0], sizes = [8, 8], strides = [1, 1]} : vector<32x8xf32> to vector<8x8xf32>
    %308 = vector.extract_strided_slice %304 {offsets = [24, 0], sizes = [8, 8], strides = [1, 1]} : vector<32x8xf32> to vector<8x8xf32>
    %309 = tpu.concatenate %305, %306, %307, %308 in 1 : vector<8x8xf32>, vector<8x8xf32>, vector<8x8xf32>, vector<8x8xf32> -> vector<8x32xf32>
    %310 = vector.extract_strided_slice %237 {offsets = [8, 0], sizes = [8, 32], strides = [1, 1]} : vector<16x32xf32> to vector<8x32xf32>
    %311 = vector.extract_strided_slice %238 {offsets = [8, 0], sizes = [8, 32], strides = [1, 1]} : vector<16x32xf32> to vector<8x32xf32>
    %312 = vector.extract_strided_slice %239 {offsets = [8, 0], sizes = [8, 32], strides = [1, 1]} : vector<16x32xf32> to vector<8x32xf32>
    %313 = vector.extract_strided_slice %310 {offsets = [0, 0], sizes = [8, 8], strides = [1, 1]} : vector<8x32xf32> to vector<8x8xf32>
    %314 = vector.extract_strided_slice %311 {offsets = [0, 0], sizes = [8, 8], strides = [1, 1]} : vector<8x32xf32> to vector<8x8xf32>
    %315 = vector.extract_strided_slice %312 {offsets = [0, 0], sizes = [8, 8], strides = [1, 1]} : vector<8x32xf32> to vector<8x8xf32>
    %cst_116 = arith.constant dense<0.000000e+00> : vector<8x8xf32>
    %316 = tpu.matmul %313, %314, %cst_116 {dimension_numbers = #tpu.dot_dimension_numbers<[1], [1], [0], [0], [0, 0, 1, 0], [], []>} : vector<8x8xf32>, vector<8x8xf32>, vector<8x8xf32> -> vector<8x8xf32>
    %cst_117 = arith.constant dense<0xFF800000> : vector<8xf32>
    %317 = vector.multi_reduction <maximumf>, %316, %cst_117 [1] : vector<8x8xf32> to vector<8xf32>
    %318 = vector.shape_cast %317 : vector<8xf32> to vector<8x1xf32>
    %319 = vector.broadcast %318 : vector<8x1xf32> to vector<8x8xf32>
    %320 = arith.subf %316, %319 : vector<8x8xf32>
    %321 = math.exp %320 : vector<8x8xf32>
    %cst_118 = arith.constant dense<0.000000e+00> : vector<8xf32>
    %322 = vector.multi_reduction <add>, %321, %cst_118 [1] : vector<8x8xf32> to vector<8xf32>
    %323 = vector.shape_cast %322 : vector<8xf32> to vector<8x1xf32>
    %324 = tpu.reciprocal %323 {approx = true} : vector<8x1xf32> -> vector<8x1xf32>
    %325 = vector.broadcast %324 : vector<8x1xf32> to vector<8x8xf32>
    %326 = arith.mulf %321, %325 : vector<8x8xf32>
    %cst_119 = arith.constant dense<0.000000e+00> : vector<8x8xf32>
    %327 = tpu.matmul %326, %315, %cst_119 {dimension_numbers = #tpu.dot_dimension_numbers<[1], [0], [0], [1], [0, 0, 1, 1], [], []>} : vector<8x8xf32>, vector<8x8xf32>, vector<8x8xf32> -> vector<8x8xf32>
    %328 = vector.extract_strided_slice %310 {offsets = [0, 8], sizes = [8, 8], strides = [1, 1]} : vector<8x32xf32> to vector<8x8xf32>
    %329 = vector.extract_strided_slice %311 {offsets = [0, 8], sizes = [8, 8], strides = [1, 1]} : vector<8x32xf32> to vector<8x8xf32>
    %330 = vector.extract_strided_slice %312 {offsets = [0, 8], sizes = [8, 8], strides = [1, 1]} : vector<8x32xf32> to vector<8x8xf32>
    %cst_120 = arith.constant dense<0.000000e+00> : vector<8x8xf32>
    %331 = tpu.matmul %328, %329, %cst_120 {dimension_numbers = #tpu.dot_dimension_numbers<[1], [1], [0], [0], [0, 0, 1, 0], [], []>} : vector<8x8xf32>, vector<8x8xf32>, vector<8x8xf32> -> vector<8x8xf32>
    %cst_121 = arith.constant dense<0xFF800000> : vector<8xf32>
    %332 = vector.multi_reduction <maximumf>, %331, %cst_121 [1] : vector<8x8xf32> to vector<8xf32>
    %333 = vector.shape_cast %332 : vector<8xf32> to vector<8x1xf32>
    %334 = vector.broadcast %333 : vector<8x1xf32> to vector<8x8xf32>
    %335 = arith.subf %331, %334 : vector<8x8xf32>
    %336 = math.exp %335 : vector<8x8xf32>
    %cst_122 = arith.constant dense<0.000000e+00> : vector<8xf32>
    %337 = vector.multi_reduction <add>, %336, %cst_122 [1] : vector<8x8xf32> to vector<8xf32>
    %338 = vector.shape_cast %337 : vector<8xf32> to vector<8x1xf32>
    %339 = tpu.reciprocal %338 {approx = true} : vector<8x1xf32> -> vector<8x1xf32>
    %340 = vector.broadcast %339 : vector<8x1xf32> to vector<8x8xf32>
    %341 = arith.mulf %336, %340 : vector<8x8xf32>
    %cst_123 = arith.constant dense<0.000000e+00> : vector<8x8xf32>
    %342 = tpu.matmul %341, %330, %cst_123 {dimension_numbers = #tpu.dot_dimension_numbers<[1], [0], [0], [1], [0, 0, 1, 1], [], []>} : vector<8x8xf32>, vector<8x8xf32>, vector<8x8xf32> -> vector<8x8xf32>
    %343 = vector.extract_strided_slice %310 {offsets = [0, 16], sizes = [8, 8], strides = [1, 1]} : vector<8x32xf32> to vector<8x8xf32>
    %344 = vector.extract_strided_slice %311 {offsets = [0, 16], sizes = [8, 8], strides = [1, 1]} : vector<8x32xf32> to vector<8x8xf32>
    %345 = vector.extract_strided_slice %312 {offsets = [0, 16], sizes = [8, 8], strides = [1, 1]} : vector<8x32xf32> to vector<8x8xf32>
    %cst_124 = arith.constant dense<0.000000e+00> : vector<8x8xf32>
    %346 = tpu.matmul %343, %344, %cst_124 {dimension_numbers = #tpu.dot_dimension_numbers<[1], [1], [0], [0], [0, 0, 1, 0], [], []>} : vector<8x8xf32>, vector<8x8xf32>, vector<8x8xf32> -> vector<8x8xf32>
    %cst_125 = arith.constant dense<0xFF800000> : vector<8xf32>
    %347 = vector.multi_reduction <maximumf>, %346, %cst_125 [1] : vector<8x8xf32> to vector<8xf32>
    %348 = vector.shape_cast %347 : vector<8xf32> to vector<8x1xf32>
    %349 = vector.broadcast %348 : vector<8x1xf32> to vector<8x8xf32>
    %350 = arith.subf %346, %349 : vector<8x8xf32>
    %351 = math.exp %350 : vector<8x8xf32>
    %cst_126 = arith.constant dense<0.000000e+00> : vector<8xf32>
    %352 = vector.multi_reduction <add>, %351, %cst_126 [1] : vector<8x8xf32> to vector<8xf32>
    %353 = vector.shape_cast %352 : vector<8xf32> to vector<8x1xf32>
    %354 = tpu.reciprocal %353 {approx = true} : vector<8x1xf32> -> vector<8x1xf32>
    %355 = vector.broadcast %354 : vector<8x1xf32> to vector<8x8xf32>
    %356 = arith.mulf %351, %355 : vector<8x8xf32>
    %cst_127 = arith.constant dense<0.000000e+00> : vector<8x8xf32>
    %357 = tpu.matmul %356, %345, %cst_127 {dimension_numbers = #tpu.dot_dimension_numbers<[1], [0], [0], [1], [0, 0, 1, 1], [], []>} : vector<8x8xf32>, vector<8x8xf32>, vector<8x8xf32> -> vector<8x8xf32>
    %358 = vector.extract_strided_slice %310 {offsets = [0, 24], sizes = [8, 8], strides = [1, 1]} : vector<8x32xf32> to vector<8x8xf32>
    %359 = vector.extract_strided_slice %311 {offsets = [0, 24], sizes = [8, 8], strides = [1, 1]} : vector<8x32xf32> to vector<8x8xf32>
    %360 = vector.extract_strided_slice %312 {offsets = [0, 24], sizes = [8, 8], strides = [1, 1]} : vector<8x32xf32> to vector<8x8xf32>
    %cst_128 = arith.constant dense<0.000000e+00> : vector<8x8xf32>
    %361 = tpu.matmul %358, %359, %cst_128 {dimension_numbers = #tpu.dot_dimension_numbers<[1], [1], [0], [0], [0, 0, 1, 0], [], []>} : vector<8x8xf32>, vector<8x8xf32>, vector<8x8xf32> -> vector<8x8xf32>
    %cst_129 = arith.constant dense<0xFF800000> : vector<8xf32>
    %362 = vector.multi_reduction <maximumf>, %361, %cst_129 [1] : vector<8x8xf32> to vector<8xf32>
    %363 = vector.shape_cast %362 : vector<8xf32> to vector<8x1xf32>
    %364 = vector.broadcast %363 : vector<8x1xf32> to vector<8x8xf32>
    %365 = arith.subf %361, %364 : vector<8x8xf32>
    %366 = math.exp %365 : vector<8x8xf32>
    %cst_130 = arith.constant dense<0.000000e+00> : vector<8xf32>
    %367 = vector.multi_reduction <add>, %366, %cst_130 [1] : vector<8x8xf32> to vector<8xf32>
    %368 = vector.shape_cast %367 : vector<8xf32> to vector<8x1xf32>
    %369 = tpu.reciprocal %368 {approx = true} : vector<8x1xf32> -> vector<8x1xf32>
    %370 = vector.broadcast %369 : vector<8x1xf32> to vector<8x8xf32>
    %371 = arith.mulf %366, %370 : vector<8x8xf32>
    %cst_131 = arith.constant dense<0.000000e+00> : vector<8x8xf32>
    %372 = tpu.matmul %371, %360, %cst_131 {dimension_numbers = #tpu.dot_dimension_numbers<[1], [0], [0], [1], [0, 0, 1, 1], [], []>} : vector<8x8xf32>, vector<8x8xf32>, vector<8x8xf32> -> vector<8x8xf32>
    %373 = tpu.concatenate %327, %342, %357, %372 in 0 : vector<8x8xf32>, vector<8x8xf32>, vector<8x8xf32>, vector<8x8xf32> -> vector<32x8xf32>
    %cst_132 = arith.constant dense<0.000000e+00> : vector<32x8xf32>
    %374 = tpu.matmul %0, %373, %cst_132 {dimension_numbers = #tpu.dot_dimension_numbers<[1], [0], [0], [1], [0, 0, 1, 1], [], []>} : vector<32x32xf32>, vector<32x8xf32>, vector<32x8xf32> -> vector<32x8xf32>
    %375 = vector.extract_strided_slice %374 {offsets = [0, 0], sizes = [8, 8], strides = [1, 1]} : vector<32x8xf32> to vector<8x8xf32>
    %376 = vector.extract_strided_slice %374 {offsets = [8, 0], sizes = [8, 8], strides = [1, 1]} : vector<32x8xf32> to vector<8x8xf32>
    %377 = vector.extract_strided_slice %374 {offsets = [16, 0], sizes = [8, 8], strides = [1, 1]} : vector<32x8xf32> to vector<8x8xf32>
    %378 = vector.extract_strided_slice %374 {offsets = [24, 0], sizes = [8, 8], strides = [1, 1]} : vector<32x8xf32> to vector<8x8xf32>
    %379 = tpu.concatenate %375, %376, %377, %378 in 1 : vector<8x8xf32>, vector<8x8xf32>, vector<8x8xf32>, vector<8x8xf32> -> vector<8x32xf32>
    %380 = tpu.concatenate %309, %379 in 0 : vector<8x32xf32>, vector<8x32xf32> -> vector<16x32xf32>
    %cst_133 = arith.constant dense<0.000000e+00> : vector<16x32xf32>
    %381 = tpu.matmul %380, %231, %cst_133 {dimension_numbers = #tpu.dot_dimension_numbers<[1], [0], [0], [1], [0, 0, 1, 1], [], []>} : vector<16x32xf32>, vector<32x32xf32>, vector<16x32xf32> -> vector<16x32xf32>
    %382 = vector.broadcast %233 : vector<1x32xf32> to vector<16x32xf32>
    %383 = arith.addf %381, %382 : vector<16x32xf32>
    %384 = arith.addf %225, %383 : vector<16x32xf32>
    %c1_134 = arith.constant 1 : index
    %c0_135 = arith.constant 0 : index
    %c0_136 = arith.constant 0 : index
    %385 = vector.load %arg7[%c1_134, %c0_135, %c0_136] : memref<2x1x32xf32, #tpu.memory_space<vmem>>, vector<1x1x32xf32>
    %386 = vector.shape_cast %385 : vector<1x1x32xf32> to vector<1x32xf32>
    %c1_137 = arith.constant 1 : index
    %c0_138 = arith.constant 0 : index
    %c0_139 = arith.constant 0 : index
    %387 = vector.load %arg8[%c1_137, %c0_138, %c0_139] : memref<2x1x32xf32, #tpu.memory_space<vmem>>, vector<1x1x32xf32>
    %388 = vector.shape_cast %387 : vector<1x1x32xf32> to vector<1x32xf32>
    %cst_140 = arith.constant dense<0.000000e+00> : vector<16xf32>
    %389 = vector.multi_reduction <add>, %384, %cst_140 [1] : vector<16x32xf32> to vector<16xf32>
    %390 = vector.shape_cast %389 : vector<16xf32> to vector<16x1xf32>
    %cst_141 = arith.constant 3.200000e+01 : f32
    %391 = vector.broadcast %cst_141 : f32 to vector<16x1xf32>
    %392 = arith.divf %390, %391 : vector<16x1xf32>
    %393 = vector.broadcast %392 : vector<16x1xf32> to vector<16x32xf32>
    %394 = arith.subf %384, %393 : vector<16x32xf32>
    %395 = arith.mulf %394, %394 : vector<16x32xf32>
    %cst_142 = arith.constant dense<0.000000e+00> : vector<16xf32>
    %396 = vector.multi_reduction <add>, %395, %cst_142 [1] : vector<16x32xf32> to vector<16xf32>
    %397 = vector.shape_cast %396 : vector<16xf32> to vector<16x1xf32>
    %cst_143 = arith.constant 3.200000e+01 : f32
    %398 = vector.broadcast %cst_143 : f32 to vector<16x1xf32>
    %399 = arith.divf %397, %398 : vector<16x1xf32>
    %cst_144 = arith.constant 9.99999974E-6 : f32
    %400 = vector.broadcast %cst_144 : f32 to vector<16x1xf32>
    %401 = arith.addf %399, %400 : vector<16x1xf32>
    %402 = math.rsqrt %401 : vector<16x1xf32>
    %403 = vector.broadcast %402 : vector<16x1xf32> to vector<16x32xf32>
    %404 = arith.mulf %394, %403 : vector<16x32xf32>
    %405 = vector.broadcast %386 : vector<1x32xf32> to vector<16x32xf32>
    %406 = arith.mulf %404, %405 : vector<16x32xf32>
    %407 = vector.broadcast %388 : vector<1x32xf32> to vector<16x32xf32>
    %408 = arith.addf %406, %407 : vector<16x32xf32>
    %c1_145 = arith.constant 1 : index
    %c0_146 = arith.constant 0 : index
    %c0_147 = arith.constant 0 : index
    %409 = vector.load %arg9[%c1_145, %c0_146, %c0_147] : memref<2x32x128xf32, #tpu.memory_space<vmem>>, vector<1x32x128xf32>
    %410 = vector.shape_cast %409 : vector<1x32x128xf32> to vector<32x128xf32>
    %cst_148 = arith.constant dense<0.000000e+00> : vector<16x128xf32>
    %411 = tpu.matmul %408, %410, %cst_148 {dimension_numbers = #tpu.dot_dimension_numbers<[1], [0], [0], [1], [0, 0, 1, 1], [], []>} : vector<16x32xf32>, vector<32x128xf32>, vector<16x128xf32> -> vector<16x128xf32>
    %c1_149 = arith.constant 1 : index
    %c0_150 = arith.constant 0 : index
    %c0_151 = arith.constant 0 : index
    %412 = vector.load %arg10[%c1_149, %c0_150, %c0_151] : memref<2x1x128xf32, #tpu.memory_space<vmem>>, vector<1x1x128xf32>
    %413 = vector.shape_cast %412 : vector<1x1x128xf32> to vector<1x128xf32>
    %414 = vector.broadcast %413 : vector<1x128xf32> to vector<16x128xf32>
    %415 = arith.addf %411, %414 : vector<16x128xf32>
    %cst_152 = arith.constant 0.000000e+00 : f32
    %416 = vector.broadcast %cst_152 : f32 to vector<16x128xf32>
    %417 = arith.maximumf %415, %416 : vector<16x128xf32>
    %c1_153 = arith.constant 1 : index
    %c0_154 = arith.constant 0 : index
    %c0_155 = arith.constant 0 : index
    %418 = vector.load %arg11[%c1_153, %c0_154, %c0_155] : memref<2x128x32xf32, #tpu.memory_space<vmem>>, vector<1x128x32xf32>
    %419 = vector.shape_cast %418 : vector<1x128x32xf32> to vector<128x32xf32>
    %cst_156 = arith.constant dense<0.000000e+00> : vector<16x32xf32>
    %420 = tpu.matmul %417, %419, %cst_156 {dimension_numbers = #tpu.dot_dimension_numbers<[1], [0], [0], [1], [0, 0, 1, 1], [], []>} : vector<16x128xf32>, vector<128x32xf32>, vector<16x32xf32> -> vector<16x32xf32>
    %c1_157 = arith.constant 1 : index
    %c0_158 = arith.constant 0 : index
    %c0_159 = arith.constant 0 : index
    %421 = vector.load %arg12[%c1_157, %c0_158, %c0_159] : memref<2x1x32xf32, #tpu.memory_space<vmem>>, vector<1x1x32xf32>
    %422 = vector.shape_cast %421 : vector<1x1x32xf32> to vector<1x32xf32>
    %423 = vector.broadcast %422 : vector<1x32xf32> to vector<16x32xf32>
    %424 = arith.addf %420, %423 : vector<16x32xf32>
    %425 = arith.addf %408, %424 : vector<16x32xf32>
    %c1_160 = arith.constant 1 : index
    %c0_161 = arith.constant 0 : index
    %c0_162 = arith.constant 0 : index
    %426 = vector.load %arg7[%c1_160, %c0_161, %c0_162] : memref<2x1x32xf32, #tpu.memory_space<vmem>>, vector<1x1x32xf32>
    %427 = vector.shape_cast %426 : vector<1x1x32xf32> to vector<1x32xf32>
    %c1_163 = arith.constant 1 : index
    %c0_164 = arith.constant 0 : index
    %c0_165 = arith.constant 0 : index
    %428 = vector.load %arg8[%c1_163, %c0_164, %c0_165] : memref<2x1x32xf32, #tpu.memory_space<vmem>>, vector<1x1x32xf32>
    %429 = vector.shape_cast %428 : vector<1x1x32xf32> to vector<1x32xf32>
    %cst_166 = arith.constant dense<0.000000e+00> : vector<16xf32>
    %430 = vector.multi_reduction <add>, %425, %cst_166 [1] : vector<16x32xf32> to vector<16xf32>
    %431 = vector.shape_cast %430 : vector<16xf32> to vector<16x1xf32>
    %cst_167 = arith.constant 3.200000e+01 : f32
    %432 = vector.broadcast %cst_167 : f32 to vector<16x1xf32>
    %433 = arith.divf %431, %432 : vector<16x1xf32>
    %434 = vector.broadcast %433 : vector<16x1xf32> to vector<16x32xf32>
    %435 = arith.subf %425, %434 : vector<16x32xf32>
    %436 = arith.mulf %435, %435 : vector<16x32xf32>
    %cst_168 = arith.constant dense<0.000000e+00> : vector<16xf32>
    %437 = vector.multi_reduction <add>, %436, %cst_168 [1] : vector<16x32xf32> to vector<16xf32>
    %438 = vector.shape_cast %437 : vector<16xf32> to vector<16x1xf32>
    %cst_169 = arith.constant 3.200000e+01 : f32
    %439 = vector.broadcast %cst_169 : f32 to vector<16x1xf32>
    %440 = arith.divf %438, %439 : vector<16x1xf32>
    %cst_170 = arith.constant 9.99999974E-6 : f32
    %441 = vector.broadcast %cst_170 : f32 to vector<16x1xf32>
    %442 = arith.addf %440, %441 : vector<16x1xf32>
    %443 = math.rsqrt %442 : vector<16x1xf32>
    %444 = vector.broadcast %443 : vector<16x1xf32> to vector<16x32xf32>
    %445 = arith.mulf %435, %444 : vector<16x32xf32>
    %446 = vector.broadcast %427 : vector<1x32xf32> to vector<16x32xf32>
    %447 = arith.mulf %445, %446 : vector<16x32xf32>
    %448 = vector.broadcast %429 : vector<1x32xf32> to vector<16x32xf32>
    %449 = arith.addf %447, %448 : vector<16x32xf32>
    %c0_171 = arith.constant 0 : index
    %c0_172 = arith.constant 0 : index
    %450 = vector.load %arg1[%c0_171, %c0_172] : memref<16x32xf32, #tpu.memory_space<vmem>>, vector<16x32xf32>
    %c0_173 = arith.constant 0 : index
    %c0_174 = arith.constant 0 : index
    %c0_175 = arith.constant 0 : index
    %451 = vector.load %arg13[%c0_173, %c0_174, %c0_175] : memref<2x32x96xf32, #tpu.memory_space<vmem>>, vector<1x32x96xf32>
    %452 = vector.shape_cast %451 : vector<1x32x96xf32> to vector<32x96xf32>
    %c0_176 = arith.constant 0 : index
    %c0_177 = arith.constant 0 : index
    %c0_178 = arith.constant 0 : index
    %453 = vector.load %arg14[%c0_176, %c0_177, %c0_178] : memref<2x1x96xf32, #tpu.memory_space<vmem>>, vector<1x1x96xf32>
    %454 = vector.shape_cast %453 : vector<1x1x96xf32> to vector<1x96xf32>
    %c0_179 = arith.constant 0 : index
    %c0_180 = arith.constant 0 : index
    %c0_181 = arith.constant 0 : index
    %455 = vector.load %arg15[%c0_179, %c0_180, %c0_181] : memref<2x32x32xf32, #tpu.memory_space<vmem>>, vector<1x32x32xf32>
    %456 = vector.shape_cast %455 : vector<1x32x32xf32> to vector<32x32xf32>
    %c0_182 = arith.constant 0 : index
    %c0_183 = arith.constant 0 : index
    %c0_184 = arith.constant 0 : index
    %457 = vector.load %arg16[%c0_182, %c0_183, %c0_184] : memref<2x1x32xf32, #tpu.memory_space<vmem>>, vector<1x1x32xf32>
    %458 = vector.shape_cast %457 : vector<1x1x32xf32> to vector<1x32xf32>
    %cst_185 = arith.constant dense<0.000000e+00> : vector<16x96xf32>
    %459 = tpu.matmul %450, %452, %cst_185 {dimension_numbers = #tpu.dot_dimension_numbers<[1], [0], [0], [1], [0, 0, 1, 1], [], []>} : vector<16x32xf32>, vector<32x96xf32>, vector<16x96xf32> -> vector<16x96xf32>
    %460 = vector.broadcast %454 : vector<1x96xf32> to vector<16x96xf32>
    %461 = arith.addf %459, %460 : vector<16x96xf32>
    %462 = vector.extract_strided_slice %461 {offsets = [0, 0], sizes = [16, 32], strides = [1, 1]} : vector<16x96xf32> to vector<16x32xf32>
    %463 = vector.extract_strided_slice %461 {offsets = [0, 32], sizes = [16, 32], strides = [1, 1]} : vector<16x96xf32> to vector<16x32xf32>
    %464 = vector.extract_strided_slice %461 {offsets = [0, 64], sizes = [16, 32], strides = [1, 1]} : vector<16x96xf32> to vector<16x32xf32>
    %465 = vector.extract_strided_slice %462 {offsets = [0, 0], sizes = [8, 32], strides = [1, 1]} : vector<16x32xf32> to vector<8x32xf32>
    %466 = vector.extract_strided_slice %463 {offsets = [0, 0], sizes = [8, 32], strides = [1, 1]} : vector<16x32xf32> to vector<8x32xf32>
    %467 = vector.extract_strided_slice %464 {offsets = [0, 0], sizes = [8, 32], strides = [1, 1]} : vector<16x32xf32> to vector<8x32xf32>
    %468 = vector.extract_strided_slice %465 {offsets = [0, 0], sizes = [8, 8], strides = [1, 1]} : vector<8x32xf32> to vector<8x8xf32>
    %469 = vector.extract_strided_slice %466 {offsets = [0, 0], sizes = [8, 8], strides = [1, 1]} : vector<8x32xf32> to vector<8x8xf32>
    %470 = vector.extract_strided_slice %467 {offsets = [0, 0], sizes = [8, 8], strides = [1, 1]} : vector<8x32xf32> to vector<8x8xf32>
    %cst_186 = arith.constant dense<0.000000e+00> : vector<8x8xf32>
    %471 = tpu.matmul %468, %469, %cst_186 {dimension_numbers = #tpu.dot_dimension_numbers<[1], [1], [0], [0], [0, 0, 1, 0], [], []>} : vector<8x8xf32>, vector<8x8xf32>, vector<8x8xf32> -> vector<8x8xf32>
    %cst_187 = arith.constant dense<0xFF800000> : vector<8xf32>
    %472 = vector.multi_reduction <maximumf>, %471, %cst_187 [1] : vector<8x8xf32> to vector<8xf32>
    %473 = vector.shape_cast %472 : vector<8xf32> to vector<8x1xf32>
    %474 = vector.broadcast %473 : vector<8x1xf32> to vector<8x8xf32>
    %475 = arith.subf %471, %474 : vector<8x8xf32>
    %476 = math.exp %475 : vector<8x8xf32>
    %cst_188 = arith.constant dense<0.000000e+00> : vector<8xf32>
    %477 = vector.multi_reduction <add>, %476, %cst_188 [1] : vector<8x8xf32> to vector<8xf32>
    %478 = vector.shape_cast %477 : vector<8xf32> to vector<8x1xf32>
    %479 = tpu.reciprocal %478 {approx = true} : vector<8x1xf32> -> vector<8x1xf32>
    %480 = vector.broadcast %479 : vector<8x1xf32> to vector<8x8xf32>
    %481 = arith.mulf %476, %480 : vector<8x8xf32>
    %cst_189 = arith.constant dense<0.000000e+00> : vector<8x8xf32>
    %482 = tpu.matmul %481, %470, %cst_189 {dimension_numbers = #tpu.dot_dimension_numbers<[1], [0], [0], [1], [0, 0, 1, 1], [], []>} : vector<8x8xf32>, vector<8x8xf32>, vector<8x8xf32> -> vector<8x8xf32>
    %483 = vector.extract_strided_slice %465 {offsets = [0, 8], sizes = [8, 8], strides = [1, 1]} : vector<8x32xf32> to vector<8x8xf32>
    %484 = vector.extract_strided_slice %466 {offsets = [0, 8], sizes = [8, 8], strides = [1, 1]} : vector<8x32xf32> to vector<8x8xf32>
    %485 = vector.extract_strided_slice %467 {offsets = [0, 8], sizes = [8, 8], strides = [1, 1]} : vector<8x32xf32> to vector<8x8xf32>
    %cst_190 = arith.constant dense<0.000000e+00> : vector<8x8xf32>
    %486 = tpu.matmul %483, %484, %cst_190 {dimension_numbers = #tpu.dot_dimension_numbers<[1], [1], [0], [0], [0, 0, 1, 0], [], []>} : vector<8x8xf32>, vector<8x8xf32>, vector<8x8xf32> -> vector<8x8xf32>
    %cst_191 = arith.constant dense<0xFF800000> : vector<8xf32>
    %487 = vector.multi_reduction <maximumf>, %486, %cst_191 [1] : vector<8x8xf32> to vector<8xf32>
    %488 = vector.shape_cast %487 : vector<8xf32> to vector<8x1xf32>
    %489 = vector.broadcast %488 : vector<8x1xf32> to vector<8x8xf32>
    %490 = arith.subf %486, %489 : vector<8x8xf32>
    %491 = math.exp %490 : vector<8x8xf32>
    %cst_192 = arith.constant dense<0.000000e+00> : vector<8xf32>
    %492 = vector.multi_reduction <add>, %491, %cst_192 [1] : vector<8x8xf32> to vector<8xf32>
    %493 = vector.shape_cast %492 : vector<8xf32> to vector<8x1xf32>
    %494 = tpu.reciprocal %493 {approx = true} : vector<8x1xf32> -> vector<8x1xf32>
    %495 = vector.broadcast %494 : vector<8x1xf32> to vector<8x8xf32>
    %496 = arith.mulf %491, %495 : vector<8x8xf32>
    %cst_193 = arith.constant dense<0.000000e+00> : vector<8x8xf32>
    %497 = tpu.matmul %496, %485, %cst_193 {dimension_numbers = #tpu.dot_dimension_numbers<[1], [0], [0], [1], [0, 0, 1, 1], [], []>} : vector<8x8xf32>, vector<8x8xf32>, vector<8x8xf32> -> vector<8x8xf32>
    %498 = vector.extract_strided_slice %465 {offsets = [0, 16], sizes = [8, 8], strides = [1, 1]} : vector<8x32xf32> to vector<8x8xf32>
    %499 = vector.extract_strided_slice %466 {offsets = [0, 16], sizes = [8, 8], strides = [1, 1]} : vector<8x32xf32> to vector<8x8xf32>
    %500 = vector.extract_strided_slice %467 {offsets = [0, 16], sizes = [8, 8], strides = [1, 1]} : vector<8x32xf32> to vector<8x8xf32>
    %cst_194 = arith.constant dense<0.000000e+00> : vector<8x8xf32>
    %501 = tpu.matmul %498, %499, %cst_194 {dimension_numbers = #tpu.dot_dimension_numbers<[1], [1], [0], [0], [0, 0, 1, 0], [], []>} : vector<8x8xf32>, vector<8x8xf32>, vector<8x8xf32> -> vector<8x8xf32>
    %cst_195 = arith.constant dense<0xFF800000> : vector<8xf32>
    %502 = vector.multi_reduction <maximumf>, %501, %cst_195 [1] : vector<8x8xf32> to vector<8xf32>
    %503 = vector.shape_cast %502 : vector<8xf32> to vector<8x1xf32>
    %504 = vector.broadcast %503 : vector<8x1xf32> to vector<8x8xf32>
    %505 = arith.subf %501, %504 : vector<8x8xf32>
    %506 = math.exp %505 : vector<8x8xf32>
    %cst_196 = arith.constant dense<0.000000e+00> : vector<8xf32>
    %507 = vector.multi_reduction <add>, %506, %cst_196 [1] : vector<8x8xf32> to vector<8xf32>
    %508 = vector.shape_cast %507 : vector<8xf32> to vector<8x1xf32>
    %509 = tpu.reciprocal %508 {approx = true} : vector<8x1xf32> -> vector<8x1xf32>
    %510 = vector.broadcast %509 : vector<8x1xf32> to vector<8x8xf32>
    %511 = arith.mulf %506, %510 : vector<8x8xf32>
    %cst_197 = arith.constant dense<0.000000e+00> : vector<8x8xf32>
    %512 = tpu.matmul %511, %500, %cst_197 {dimension_numbers = #tpu.dot_dimension_numbers<[1], [0], [0], [1], [0, 0, 1, 1], [], []>} : vector<8x8xf32>, vector<8x8xf32>, vector<8x8xf32> -> vector<8x8xf32>
    %513 = vector.extract_strided_slice %465 {offsets = [0, 24], sizes = [8, 8], strides = [1, 1]} : vector<8x32xf32> to vector<8x8xf32>
    %514 = vector.extract_strided_slice %466 {offsets = [0, 24], sizes = [8, 8], strides = [1, 1]} : vector<8x32xf32> to vector<8x8xf32>
    %515 = vector.extract_strided_slice %467 {offsets = [0, 24], sizes = [8, 8], strides = [1, 1]} : vector<8x32xf32> to vector<8x8xf32>
    %cst_198 = arith.constant dense<0.000000e+00> : vector<8x8xf32>
    %516 = tpu.matmul %513, %514, %cst_198 {dimension_numbers = #tpu.dot_dimension_numbers<[1], [1], [0], [0], [0, 0, 1, 0], [], []>} : vector<8x8xf32>, vector<8x8xf32>, vector<8x8xf32> -> vector<8x8xf32>
    %cst_199 = arith.constant dense<0xFF800000> : vector<8xf32>
    %517 = vector.multi_reduction <maximumf>, %516, %cst_199 [1] : vector<8x8xf32> to vector<8xf32>
    %518 = vector.shape_cast %517 : vector<8xf32> to vector<8x1xf32>
    %519 = vector.broadcast %518 : vector<8x1xf32> to vector<8x8xf32>
    %520 = arith.subf %516, %519 : vector<8x8xf32>
    %521 = math.exp %520 : vector<8x8xf32>
    %cst_200 = arith.constant dense<0.000000e+00> : vector<8xf32>
    %522 = vector.multi_reduction <add>, %521, %cst_200 [1] : vector<8x8xf32> to vector<8xf32>
    %523 = vector.shape_cast %522 : vector<8xf32> to vector<8x1xf32>
    %524 = tpu.reciprocal %523 {approx = true} : vector<8x1xf32> -> vector<8x1xf32>
    %525 = vector.broadcast %524 : vector<8x1xf32> to vector<8x8xf32>
    %526 = arith.mulf %521, %525 : vector<8x8xf32>
    %cst_201 = arith.constant dense<0.000000e+00> : vector<8x8xf32>
    %527 = tpu.matmul %526, %515, %cst_201 {dimension_numbers = #tpu.dot_dimension_numbers<[1], [0], [0], [1], [0, 0, 1, 1], [], []>} : vector<8x8xf32>, vector<8x8xf32>, vector<8x8xf32> -> vector<8x8xf32>
    %528 = tpu.concatenate %482, %497, %512, %527 in 0 : vector<8x8xf32>, vector<8x8xf32>, vector<8x8xf32>, vector<8x8xf32> -> vector<32x8xf32>
    %cst_202 = arith.constant dense<0.000000e+00> : vector<32x8xf32>
    %529 = tpu.matmul %0, %528, %cst_202 {dimension_numbers = #tpu.dot_dimension_numbers<[1], [0], [0], [1], [0, 0, 1, 1], [], []>} : vector<32x32xf32>, vector<32x8xf32>, vector<32x8xf32> -> vector<32x8xf32>
    %530 = vector.extract_strided_slice %529 {offsets = [0, 0], sizes = [8, 8], strides = [1, 1]} : vector<32x8xf32> to vector<8x8xf32>
    %531 = vector.extract_strided_slice %529 {offsets = [8, 0], sizes = [8, 8], strides = [1, 1]} : vector<32x8xf32> to vector<8x8xf32>
    %532 = vector.extract_strided_slice %529 {offsets = [16, 0], sizes = [8, 8], strides = [1, 1]} : vector<32x8xf32> to vector<8x8xf32>
    %533 = vector.extract_strided_slice %529 {offsets = [24, 0], sizes = [8, 8], strides = [1, 1]} : vector<32x8xf32> to vector<8x8xf32>
    %534 = tpu.concatenate %530, %531, %532, %533 in 1 : vector<8x8xf32>, vector<8x8xf32>, vector<8x8xf32>, vector<8x8xf32> -> vector<8x32xf32>
    %535 = vector.extract_strided_slice %462 {offsets = [8, 0], sizes = [8, 32], strides = [1, 1]} : vector<16x32xf32> to vector<8x32xf32>
    %536 = vector.extract_strided_slice %463 {offsets = [8, 0], sizes = [8, 32], strides = [1, 1]} : vector<16x32xf32> to vector<8x32xf32>
    %537 = vector.extract_strided_slice %464 {offsets = [8, 0], sizes = [8, 32], strides = [1, 1]} : vector<16x32xf32> to vector<8x32xf32>
    %538 = vector.extract_strided_slice %535 {offsets = [0, 0], sizes = [8, 8], strides = [1, 1]} : vector<8x32xf32> to vector<8x8xf32>
    %539 = vector.extract_strided_slice %536 {offsets = [0, 0], sizes = [8, 8], strides = [1, 1]} : vector<8x32xf32> to vector<8x8xf32>
    %540 = vector.extract_strided_slice %537 {offsets = [0, 0], sizes = [8, 8], strides = [1, 1]} : vector<8x32xf32> to vector<8x8xf32>
    %cst_203 = arith.constant dense<0.000000e+00> : vector<8x8xf32>
    %541 = tpu.matmul %538, %539, %cst_203 {dimension_numbers = #tpu.dot_dimension_numbers<[1], [1], [0], [0], [0, 0, 1, 0], [], []>} : vector<8x8xf32>, vector<8x8xf32>, vector<8x8xf32> -> vector<8x8xf32>
    %cst_204 = arith.constant dense<0xFF800000> : vector<8xf32>
    %542 = vector.multi_reduction <maximumf>, %541, %cst_204 [1] : vector<8x8xf32> to vector<8xf32>
    %543 = vector.shape_cast %542 : vector<8xf32> to vector<8x1xf32>
    %544 = vector.broadcast %543 : vector<8x1xf32> to vector<8x8xf32>
    %545 = arith.subf %541, %544 : vector<8x8xf32>
    %546 = math.exp %545 : vector<8x8xf32>
    %cst_205 = arith.constant dense<0.000000e+00> : vector<8xf32>
    %547 = vector.multi_reduction <add>, %546, %cst_205 [1] : vector<8x8xf32> to vector<8xf32>
    %548 = vector.shape_cast %547 : vector<8xf32> to vector<8x1xf32>
    %549 = tpu.reciprocal %548 {approx = true} : vector<8x1xf32> -> vector<8x1xf32>
    %550 = vector.broadcast %549 : vector<8x1xf32> to vector<8x8xf32>
    %551 = arith.mulf %546, %550 : vector<8x8xf32>
    %cst_206 = arith.constant dense<0.000000e+00> : vector<8x8xf32>
    %552 = tpu.matmul %551, %540, %cst_206 {dimension_numbers = #tpu.dot_dimension_numbers<[1], [0], [0], [1], [0, 0, 1, 1], [], []>} : vector<8x8xf32>, vector<8x8xf32>, vector<8x8xf32> -> vector<8x8xf32>
    %553 = vector.extract_strided_slice %535 {offsets = [0, 8], sizes = [8, 8], strides = [1, 1]} : vector<8x32xf32> to vector<8x8xf32>
    %554 = vector.extract_strided_slice %536 {offsets = [0, 8], sizes = [8, 8], strides = [1, 1]} : vector<8x32xf32> to vector<8x8xf32>
    %555 = vector.extract_strided_slice %537 {offsets = [0, 8], sizes = [8, 8], strides = [1, 1]} : vector<8x32xf32> to vector<8x8xf32>
    %cst_207 = arith.constant dense<0.000000e+00> : vector<8x8xf32>
    %556 = tpu.matmul %553, %554, %cst_207 {dimension_numbers = #tpu.dot_dimension_numbers<[1], [1], [0], [0], [0, 0, 1, 0], [], []>} : vector<8x8xf32>, vector<8x8xf32>, vector<8x8xf32> -> vector<8x8xf32>
    %cst_208 = arith.constant dense<0xFF800000> : vector<8xf32>
    %557 = vector.multi_reduction <maximumf>, %556, %cst_208 [1] : vector<8x8xf32> to vector<8xf32>
    %558 = vector.shape_cast %557 : vector<8xf32> to vector<8x1xf32>
    %559 = vector.broadcast %558 : vector<8x1xf32> to vector<8x8xf32>
    %560 = arith.subf %556, %559 : vector<8x8xf32>
    %561 = math.exp %560 : vector<8x8xf32>
    %cst_209 = arith.constant dense<0.000000e+00> : vector<8xf32>
    %562 = vector.multi_reduction <add>, %561, %cst_209 [1] : vector<8x8xf32> to vector<8xf32>
    %563 = vector.shape_cast %562 : vector<8xf32> to vector<8x1xf32>
    %564 = tpu.reciprocal %563 {approx = true} : vector<8x1xf32> -> vector<8x1xf32>
    %565 = vector.broadcast %564 : vector<8x1xf32> to vector<8x8xf32>
    %566 = arith.mulf %561, %565 : vector<8x8xf32>
    %cst_210 = arith.constant dense<0.000000e+00> : vector<8x8xf32>
    %567 = tpu.matmul %566, %555, %cst_210 {dimension_numbers = #tpu.dot_dimension_numbers<[1], [0], [0], [1], [0, 0, 1, 1], [], []>} : vector<8x8xf32>, vector<8x8xf32>, vector<8x8xf32> -> vector<8x8xf32>
    %568 = vector.extract_strided_slice %535 {offsets = [0, 16], sizes = [8, 8], strides = [1, 1]} : vector<8x32xf32> to vector<8x8xf32>
    %569 = vector.extract_strided_slice %536 {offsets = [0, 16], sizes = [8, 8], strides = [1, 1]} : vector<8x32xf32> to vector<8x8xf32>
    %570 = vector.extract_strided_slice %537 {offsets = [0, 16], sizes = [8, 8], strides = [1, 1]} : vector<8x32xf32> to vector<8x8xf32>
    %cst_211 = arith.constant dense<0.000000e+00> : vector<8x8xf32>
    %571 = tpu.matmul %568, %569, %cst_211 {dimension_numbers = #tpu.dot_dimension_numbers<[1], [1], [0], [0], [0, 0, 1, 0], [], []>} : vector<8x8xf32>, vector<8x8xf32>, vector<8x8xf32> -> vector<8x8xf32>
    %cst_212 = arith.constant dense<0xFF800000> : vector<8xf32>
    %572 = vector.multi_reduction <maximumf>, %571, %cst_212 [1] : vector<8x8xf32> to vector<8xf32>
    %573 = vector.shape_cast %572 : vector<8xf32> to vector<8x1xf32>
    %574 = vector.broadcast %573 : vector<8x1xf32> to vector<8x8xf32>
    %575 = arith.subf %571, %574 : vector<8x8xf32>
    %576 = math.exp %575 : vector<8x8xf32>
    %cst_213 = arith.constant dense<0.000000e+00> : vector<8xf32>
    %577 = vector.multi_reduction <add>, %576, %cst_213 [1] : vector<8x8xf32> to vector<8xf32>
    %578 = vector.shape_cast %577 : vector<8xf32> to vector<8x1xf32>
    %579 = tpu.reciprocal %578 {approx = true} : vector<8x1xf32> -> vector<8x1xf32>
    %580 = vector.broadcast %579 : vector<8x1xf32> to vector<8x8xf32>
    %581 = arith.mulf %576, %580 : vector<8x8xf32>
    %cst_214 = arith.constant dense<0.000000e+00> : vector<8x8xf32>
    %582 = tpu.matmul %581, %570, %cst_214 {dimension_numbers = #tpu.dot_dimension_numbers<[1], [0], [0], [1], [0, 0, 1, 1], [], []>} : vector<8x8xf32>, vector<8x8xf32>, vector<8x8xf32> -> vector<8x8xf32>
    %583 = vector.extract_strided_slice %535 {offsets = [0, 24], sizes = [8, 8], strides = [1, 1]} : vector<8x32xf32> to vector<8x8xf32>
    %584 = vector.extract_strided_slice %536 {offsets = [0, 24], sizes = [8, 8], strides = [1, 1]} : vector<8x32xf32> to vector<8x8xf32>
    %585 = vector.extract_strided_slice %537 {offsets = [0, 24], sizes = [8, 8], strides = [1, 1]} : vector<8x32xf32> to vector<8x8xf32>
    %cst_215 = arith.constant dense<0.000000e+00> : vector<8x8xf32>
    %586 = tpu.matmul %583, %584, %cst_215 {dimension_numbers = #tpu.dot_dimension_numbers<[1], [1], [0], [0], [0, 0, 1, 0], [], []>} : vector<8x8xf32>, vector<8x8xf32>, vector<8x8xf32> -> vector<8x8xf32>
    %cst_216 = arith.constant dense<0xFF800000> : vector<8xf32>
    %587 = vector.multi_reduction <maximumf>, %586, %cst_216 [1] : vector<8x8xf32> to vector<8xf32>
    %588 = vector.shape_cast %587 : vector<8xf32> to vector<8x1xf32>
    %589 = vector.broadcast %588 : vector<8x1xf32> to vector<8x8xf32>
    %590 = arith.subf %586, %589 : vector<8x8xf32>
    %591 = math.exp %590 : vector<8x8xf32>
    %cst_217 = arith.constant dense<0.000000e+00> : vector<8xf32>
    %592 = vector.multi_reduction <add>, %591, %cst_217 [1] : vector<8x8xf32> to vector<8xf32>
    %593 = vector.shape_cast %592 : vector<8xf32> to vector<8x1xf32>
    %594 = tpu.reciprocal %593 {approx = true} : vector<8x1xf32> -> vector<8x1xf32>
    %595 = vector.broadcast %594 : vector<8x1xf32> to vector<8x8xf32>
    %596 = arith.mulf %591, %595 : vector<8x8xf32>
    %cst_218 = arith.constant dense<0.000000e+00> : vector<8x8xf32>
    %597 = tpu.matmul %596, %585, %cst_218 {dimension_numbers = #tpu.dot_dimension_numbers<[1], [0], [0], [1], [0, 0, 1, 1], [], []>} : vector<8x8xf32>, vector<8x8xf32>, vector<8x8xf32> -> vector<8x8xf32>
    %598 = tpu.concatenate %552, %567, %582, %597 in 0 : vector<8x8xf32>, vector<8x8xf32>, vector<8x8xf32>, vector<8x8xf32> -> vector<32x8xf32>
    %cst_219 = arith.constant dense<0.000000e+00> : vector<32x8xf32>
    %599 = tpu.matmul %0, %598, %cst_219 {dimension_numbers = #tpu.dot_dimension_numbers<[1], [0], [0], [1], [0, 0, 1, 1], [], []>} : vector<32x32xf32>, vector<32x8xf32>, vector<32x8xf32> -> vector<32x8xf32>
    %600 = vector.extract_strided_slice %599 {offsets = [0, 0], sizes = [8, 8], strides = [1, 1]} : vector<32x8xf32> to vector<8x8xf32>
    %601 = vector.extract_strided_slice %599 {offsets = [8, 0], sizes = [8, 8], strides = [1, 1]} : vector<32x8xf32> to vector<8x8xf32>
    %602 = vector.extract_strided_slice %599 {offsets = [16, 0], sizes = [8, 8], strides = [1, 1]} : vector<32x8xf32> to vector<8x8xf32>
    %603 = vector.extract_strided_slice %599 {offsets = [24, 0], sizes = [8, 8], strides = [1, 1]} : vector<32x8xf32> to vector<8x8xf32>
    %604 = tpu.concatenate %600, %601, %602, %603 in 1 : vector<8x8xf32>, vector<8x8xf32>, vector<8x8xf32>, vector<8x8xf32> -> vector<8x32xf32>
    %605 = tpu.concatenate %534, %604 in 0 : vector<8x32xf32>, vector<8x32xf32> -> vector<16x32xf32>
    %cst_220 = arith.constant dense<0.000000e+00> : vector<16x32xf32>
    %606 = tpu.matmul %605, %456, %cst_220 {dimension_numbers = #tpu.dot_dimension_numbers<[1], [0], [0], [1], [0, 0, 1, 1], [], []>} : vector<16x32xf32>, vector<32x32xf32>, vector<16x32xf32> -> vector<16x32xf32>
    %607 = vector.broadcast %458 : vector<1x32xf32> to vector<16x32xf32>
    %608 = arith.addf %606, %607 : vector<16x32xf32>
    %609 = arith.addf %450, %608 : vector<16x32xf32>
    %c0_221 = arith.constant 0 : index
    %c0_222 = arith.constant 0 : index
    %c0_223 = arith.constant 0 : index
    %610 = vector.load %arg23[%c0_221, %c0_222, %c0_223] : memref<2x1x32xf32, #tpu.memory_space<vmem>>, vector<1x1x32xf32>
    %611 = vector.shape_cast %610 : vector<1x1x32xf32> to vector<1x32xf32>
    %c0_224 = arith.constant 0 : index
    %c0_225 = arith.constant 0 : index
    %c0_226 = arith.constant 0 : index
    %612 = vector.load %arg24[%c0_224, %c0_225, %c0_226] : memref<2x1x32xf32, #tpu.memory_space<vmem>>, vector<1x1x32xf32>
    %613 = vector.shape_cast %612 : vector<1x1x32xf32> to vector<1x32xf32>
    %cst_227 = arith.constant dense<0.000000e+00> : vector<16xf32>
    %614 = vector.multi_reduction <add>, %609, %cst_227 [1] : vector<16x32xf32> to vector<16xf32>
    %615 = vector.shape_cast %614 : vector<16xf32> to vector<16x1xf32>
    %cst_228 = arith.constant 3.200000e+01 : f32
    %616 = vector.broadcast %cst_228 : f32 to vector<16x1xf32>
    %617 = arith.divf %615, %616 : vector<16x1xf32>
    %618 = vector.broadcast %617 : vector<16x1xf32> to vector<16x32xf32>
    %619 = arith.subf %609, %618 : vector<16x32xf32>
    %620 = arith.mulf %619, %619 : vector<16x32xf32>
    %cst_229 = arith.constant dense<0.000000e+00> : vector<16xf32>
    %621 = vector.multi_reduction <add>, %620, %cst_229 [1] : vector<16x32xf32> to vector<16xf32>
    %622 = vector.shape_cast %621 : vector<16xf32> to vector<16x1xf32>
    %cst_230 = arith.constant 3.200000e+01 : f32
    %623 = vector.broadcast %cst_230 : f32 to vector<16x1xf32>
    %624 = arith.divf %622, %623 : vector<16x1xf32>
    %cst_231 = arith.constant 9.99999974E-6 : f32
    %625 = vector.broadcast %cst_231 : f32 to vector<16x1xf32>
    %626 = arith.addf %624, %625 : vector<16x1xf32>
    %627 = math.rsqrt %626 : vector<16x1xf32>
    %628 = vector.broadcast %627 : vector<16x1xf32> to vector<16x32xf32>
    %629 = arith.mulf %619, %628 : vector<16x32xf32>
    %630 = vector.broadcast %611 : vector<1x32xf32> to vector<16x32xf32>
    %631 = arith.mulf %629, %630 : vector<16x32xf32>
    %632 = vector.broadcast %613 : vector<1x32xf32> to vector<16x32xf32>
    %633 = arith.addf %631, %632 : vector<16x32xf32>
    %c0_232 = arith.constant 0 : index
    %c0_233 = arith.constant 0 : index
    %c0_234 = arith.constant 0 : index
    %634 = vector.load %arg17[%c0_232, %c0_233, %c0_234] : memref<2x32x32xf32, #tpu.memory_space<vmem>>, vector<1x32x32xf32>
    %635 = vector.shape_cast %634 : vector<1x32x32xf32> to vector<32x32xf32>
    %c0_235 = arith.constant 0 : index
    %c0_236 = arith.constant 0 : index
    %c0_237 = arith.constant 0 : index
    %636 = vector.load %arg18[%c0_235, %c0_236, %c0_237] : memref<2x1x32xf32, #tpu.memory_space<vmem>>, vector<1x1x32xf32>
    %637 = vector.shape_cast %636 : vector<1x1x32xf32> to vector<1x32xf32>
    %c0_238 = arith.constant 0 : index
    %c0_239 = arith.constant 0 : index
    %c0_240 = arith.constant 0 : index
    %638 = vector.load %arg19[%c0_238, %c0_239, %c0_240] : memref<2x32x64xf32, #tpu.memory_space<vmem>>, vector<1x32x64xf32>
    %639 = vector.shape_cast %638 : vector<1x32x64xf32> to vector<32x64xf32>
    %c0_241 = arith.constant 0 : index
    %c0_242 = arith.constant 0 : index
    %c0_243 = arith.constant 0 : index
    %640 = vector.load %arg20[%c0_241, %c0_242, %c0_243] : memref<2x1x64xf32, #tpu.memory_space<vmem>>, vector<1x1x64xf32>
    %641 = vector.shape_cast %640 : vector<1x1x64xf32> to vector<1x64xf32>
    %c0_244 = arith.constant 0 : index
    %c0_245 = arith.constant 0 : index
    %c0_246 = arith.constant 0 : index
    %642 = vector.load %arg21[%c0_244, %c0_245, %c0_246] : memref<2x32x32xf32, #tpu.memory_space<vmem>>, vector<1x32x32xf32>
    %643 = vector.shape_cast %642 : vector<1x32x32xf32> to vector<32x32xf32>
    %c0_247 = arith.constant 0 : index
    %c0_248 = arith.constant 0 : index
    %c0_249 = arith.constant 0 : index
    %644 = vector.load %arg22[%c0_247, %c0_248, %c0_249] : memref<2x1x32xf32, #tpu.memory_space<vmem>>, vector<1x1x32xf32>
    %645 = vector.shape_cast %644 : vector<1x1x32xf32> to vector<1x32xf32>
    %cst_250 = arith.constant dense<0.000000e+00> : vector<16x32xf32>
    %646 = tpu.matmul %633, %635, %cst_250 {dimension_numbers = #tpu.dot_dimension_numbers<[1], [0], [0], [1], [0, 0, 1, 1], [], []>} : vector<16x32xf32>, vector<32x32xf32>, vector<16x32xf32> -> vector<16x32xf32>
    %647 = vector.broadcast %637 : vector<1x32xf32> to vector<16x32xf32>
    %648 = arith.addf %646, %647 : vector<16x32xf32>
    %cst_251 = arith.constant dense<0.000000e+00> : vector<16x64xf32>
    %649 = tpu.matmul %449, %639, %cst_251 {dimension_numbers = #tpu.dot_dimension_numbers<[1], [0], [0], [1], [0, 0, 1, 1], [], []>} : vector<16x32xf32>, vector<32x64xf32>, vector<16x64xf32> -> vector<16x64xf32>
    %650 = vector.broadcast %641 : vector<1x64xf32> to vector<16x64xf32>
    %651 = arith.addf %649, %650 : vector<16x64xf32>
    %652 = vector.extract_strided_slice %651 {offsets = [0, 0], sizes = [16, 32], strides = [1, 1]} : vector<16x64xf32> to vector<16x32xf32>
    %653 = vector.extract_strided_slice %651 {offsets = [0, 32], sizes = [16, 32], strides = [1, 1]} : vector<16x64xf32> to vector<16x32xf32>
    %654 = vector.extract_strided_slice %648 {offsets = [0, 0], sizes = [8, 32], strides = [1, 1]} : vector<16x32xf32> to vector<8x32xf32>
    %655 = vector.extract_strided_slice %652 {offsets = [0, 0], sizes = [8, 32], strides = [1, 1]} : vector<16x32xf32> to vector<8x32xf32>
    %656 = vector.extract_strided_slice %653 {offsets = [0, 0], sizes = [8, 32], strides = [1, 1]} : vector<16x32xf32> to vector<8x32xf32>
    %657 = vector.extract_strided_slice %654 {offsets = [0, 0], sizes = [8, 8], strides = [1, 1]} : vector<8x32xf32> to vector<8x8xf32>
    %658 = vector.extract_strided_slice %655 {offsets = [0, 0], sizes = [8, 8], strides = [1, 1]} : vector<8x32xf32> to vector<8x8xf32>
    %659 = vector.extract_strided_slice %656 {offsets = [0, 0], sizes = [8, 8], strides = [1, 1]} : vector<8x32xf32> to vector<8x8xf32>
    %cst_252 = arith.constant dense<0.000000e+00> : vector<8x8xf32>
    %660 = tpu.matmul %657, %658, %cst_252 {dimension_numbers = #tpu.dot_dimension_numbers<[1], [1], [0], [0], [0, 0, 1, 0], [], []>} : vector<8x8xf32>, vector<8x8xf32>, vector<8x8xf32> -> vector<8x8xf32>
    %cst_253 = arith.constant dense<0xFF800000> : vector<8xf32>
    %661 = vector.multi_reduction <maximumf>, %660, %cst_253 [1] : vector<8x8xf32> to vector<8xf32>
    %662 = vector.shape_cast %661 : vector<8xf32> to vector<8x1xf32>
    %663 = vector.broadcast %662 : vector<8x1xf32> to vector<8x8xf32>
    %664 = arith.subf %660, %663 : vector<8x8xf32>
    %665 = math.exp %664 : vector<8x8xf32>
    %cst_254 = arith.constant dense<0.000000e+00> : vector<8xf32>
    %666 = vector.multi_reduction <add>, %665, %cst_254 [1] : vector<8x8xf32> to vector<8xf32>
    %667 = vector.shape_cast %666 : vector<8xf32> to vector<8x1xf32>
    %668 = tpu.reciprocal %667 {approx = true} : vector<8x1xf32> -> vector<8x1xf32>
    %669 = vector.broadcast %668 : vector<8x1xf32> to vector<8x8xf32>
    %670 = arith.mulf %665, %669 : vector<8x8xf32>
    %cst_255 = arith.constant dense<0.000000e+00> : vector<8x8xf32>
    %671 = tpu.matmul %670, %659, %cst_255 {dimension_numbers = #tpu.dot_dimension_numbers<[1], [0], [0], [1], [0, 0, 1, 1], [], []>} : vector<8x8xf32>, vector<8x8xf32>, vector<8x8xf32> -> vector<8x8xf32>
    %672 = vector.extract_strided_slice %654 {offsets = [0, 8], sizes = [8, 8], strides = [1, 1]} : vector<8x32xf32> to vector<8x8xf32>
    %673 = vector.extract_strided_slice %655 {offsets = [0, 8], sizes = [8, 8], strides = [1, 1]} : vector<8x32xf32> to vector<8x8xf32>
    %674 = vector.extract_strided_slice %656 {offsets = [0, 8], sizes = [8, 8], strides = [1, 1]} : vector<8x32xf32> to vector<8x8xf32>
    %cst_256 = arith.constant dense<0.000000e+00> : vector<8x8xf32>
    %675 = tpu.matmul %672, %673, %cst_256 {dimension_numbers = #tpu.dot_dimension_numbers<[1], [1], [0], [0], [0, 0, 1, 0], [], []>} : vector<8x8xf32>, vector<8x8xf32>, vector<8x8xf32> -> vector<8x8xf32>
    %cst_257 = arith.constant dense<0xFF800000> : vector<8xf32>
    %676 = vector.multi_reduction <maximumf>, %675, %cst_257 [1] : vector<8x8xf32> to vector<8xf32>
    %677 = vector.shape_cast %676 : vector<8xf32> to vector<8x1xf32>
    %678 = vector.broadcast %677 : vector<8x1xf32> to vector<8x8xf32>
    %679 = arith.subf %675, %678 : vector<8x8xf32>
    %680 = math.exp %679 : vector<8x8xf32>
    %cst_258 = arith.constant dense<0.000000e+00> : vector<8xf32>
    %681 = vector.multi_reduction <add>, %680, %cst_258 [1] : vector<8x8xf32> to vector<8xf32>
    %682 = vector.shape_cast %681 : vector<8xf32> to vector<8x1xf32>
    %683 = tpu.reciprocal %682 {approx = true} : vector<8x1xf32> -> vector<8x1xf32>
    %684 = vector.broadcast %683 : vector<8x1xf32> to vector<8x8xf32>
    %685 = arith.mulf %680, %684 : vector<8x8xf32>
    %cst_259 = arith.constant dense<0.000000e+00> : vector<8x8xf32>
    %686 = tpu.matmul %685, %674, %cst_259 {dimension_numbers = #tpu.dot_dimension_numbers<[1], [0], [0], [1], [0, 0, 1, 1], [], []>} : vector<8x8xf32>, vector<8x8xf32>, vector<8x8xf32> -> vector<8x8xf32>
    %687 = vector.extract_strided_slice %654 {offsets = [0, 16], sizes = [8, 8], strides = [1, 1]} : vector<8x32xf32> to vector<8x8xf32>
    %688 = vector.extract_strided_slice %655 {offsets = [0, 16], sizes = [8, 8], strides = [1, 1]} : vector<8x32xf32> to vector<8x8xf32>
    %689 = vector.extract_strided_slice %656 {offsets = [0, 16], sizes = [8, 8], strides = [1, 1]} : vector<8x32xf32> to vector<8x8xf32>
    %cst_260 = arith.constant dense<0.000000e+00> : vector<8x8xf32>
    %690 = tpu.matmul %687, %688, %cst_260 {dimension_numbers = #tpu.dot_dimension_numbers<[1], [1], [0], [0], [0, 0, 1, 0], [], []>} : vector<8x8xf32>, vector<8x8xf32>, vector<8x8xf32> -> vector<8x8xf32>
    %cst_261 = arith.constant dense<0xFF800000> : vector<8xf32>
    %691 = vector.multi_reduction <maximumf>, %690, %cst_261 [1] : vector<8x8xf32> to vector<8xf32>
    %692 = vector.shape_cast %691 : vector<8xf32> to vector<8x1xf32>
    %693 = vector.broadcast %692 : vector<8x1xf32> to vector<8x8xf32>
    %694 = arith.subf %690, %693 : vector<8x8xf32>
    %695 = math.exp %694 : vector<8x8xf32>
    %cst_262 = arith.constant dense<0.000000e+00> : vector<8xf32>
    %696 = vector.multi_reduction <add>, %695, %cst_262 [1] : vector<8x8xf32> to vector<8xf32>
    %697 = vector.shape_cast %696 : vector<8xf32> to vector<8x1xf32>
    %698 = tpu.reciprocal %697 {approx = true} : vector<8x1xf32> -> vector<8x1xf32>
    %699 = vector.broadcast %698 : vector<8x1xf32> to vector<8x8xf32>
    %700 = arith.mulf %695, %699 : vector<8x8xf32>
    %cst_263 = arith.constant dense<0.000000e+00> : vector<8x8xf32>
    %701 = tpu.matmul %700, %689, %cst_263 {dimension_numbers = #tpu.dot_dimension_numbers<[1], [0], [0], [1], [0, 0, 1, 1], [], []>} : vector<8x8xf32>, vector<8x8xf32>, vector<8x8xf32> -> vector<8x8xf32>
    %702 = vector.extract_strided_slice %654 {offsets = [0, 24], sizes = [8, 8], strides = [1, 1]} : vector<8x32xf32> to vector<8x8xf32>
    %703 = vector.extract_strided_slice %655 {offsets = [0, 24], sizes = [8, 8], strides = [1, 1]} : vector<8x32xf32> to vector<8x8xf32>
    %704 = vector.extract_strided_slice %656 {offsets = [0, 24], sizes = [8, 8], strides = [1, 1]} : vector<8x32xf32> to vector<8x8xf32>
    %cst_264 = arith.constant dense<0.000000e+00> : vector<8x8xf32>
    %705 = tpu.matmul %702, %703, %cst_264 {dimension_numbers = #tpu.dot_dimension_numbers<[1], [1], [0], [0], [0, 0, 1, 0], [], []>} : vector<8x8xf32>, vector<8x8xf32>, vector<8x8xf32> -> vector<8x8xf32>
    %cst_265 = arith.constant dense<0xFF800000> : vector<8xf32>
    %706 = vector.multi_reduction <maximumf>, %705, %cst_265 [1] : vector<8x8xf32> to vector<8xf32>
    %707 = vector.shape_cast %706 : vector<8xf32> to vector<8x1xf32>
    %708 = vector.broadcast %707 : vector<8x1xf32> to vector<8x8xf32>
    %709 = arith.subf %705, %708 : vector<8x8xf32>
    %710 = math.exp %709 : vector<8x8xf32>
    %cst_266 = arith.constant dense<0.000000e+00> : vector<8xf32>
    %711 = vector.multi_reduction <add>, %710, %cst_266 [1] : vector<8x8xf32> to vector<8xf32>
    %712 = vector.shape_cast %711 : vector<8xf32> to vector<8x1xf32>
    %713 = tpu.reciprocal %712 {approx = true} : vector<8x1xf32> -> vector<8x1xf32>
    %714 = vector.broadcast %713 : vector<8x1xf32> to vector<8x8xf32>
    %715 = arith.mulf %710, %714 : vector<8x8xf32>
    %cst_267 = arith.constant dense<0.000000e+00> : vector<8x8xf32>
    %716 = tpu.matmul %715, %704, %cst_267 {dimension_numbers = #tpu.dot_dimension_numbers<[1], [0], [0], [1], [0, 0, 1, 1], [], []>} : vector<8x8xf32>, vector<8x8xf32>, vector<8x8xf32> -> vector<8x8xf32>
    %717 = tpu.concatenate %671, %686, %701, %716 in 0 : vector<8x8xf32>, vector<8x8xf32>, vector<8x8xf32>, vector<8x8xf32> -> vector<32x8xf32>
    %cst_268 = arith.constant dense<0.000000e+00> : vector<32x8xf32>
    %718 = tpu.matmul %0, %717, %cst_268 {dimension_numbers = #tpu.dot_dimension_numbers<[1], [0], [0], [1], [0, 0, 1, 1], [], []>} : vector<32x32xf32>, vector<32x8xf32>, vector<32x8xf32> -> vector<32x8xf32>
    %719 = vector.extract_strided_slice %718 {offsets = [0, 0], sizes = [8, 8], strides = [1, 1]} : vector<32x8xf32> to vector<8x8xf32>
    %720 = vector.extract_strided_slice %718 {offsets = [8, 0], sizes = [8, 8], strides = [1, 1]} : vector<32x8xf32> to vector<8x8xf32>
    %721 = vector.extract_strided_slice %718 {offsets = [16, 0], sizes = [8, 8], strides = [1, 1]} : vector<32x8xf32> to vector<8x8xf32>
    %722 = vector.extract_strided_slice %718 {offsets = [24, 0], sizes = [8, 8], strides = [1, 1]} : vector<32x8xf32> to vector<8x8xf32>
    %723 = tpu.concatenate %719, %720, %721, %722 in 1 : vector<8x8xf32>, vector<8x8xf32>, vector<8x8xf32>, vector<8x8xf32> -> vector<8x32xf32>
    %724 = vector.extract_strided_slice %648 {offsets = [8, 0], sizes = [8, 32], strides = [1, 1]} : vector<16x32xf32> to vector<8x32xf32>
    %725 = vector.extract_strided_slice %652 {offsets = [8, 0], sizes = [8, 32], strides = [1, 1]} : vector<16x32xf32> to vector<8x32xf32>
    %726 = vector.extract_strided_slice %653 {offsets = [8, 0], sizes = [8, 32], strides = [1, 1]} : vector<16x32xf32> to vector<8x32xf32>
    %727 = vector.extract_strided_slice %724 {offsets = [0, 0], sizes = [8, 8], strides = [1, 1]} : vector<8x32xf32> to vector<8x8xf32>
    %728 = vector.extract_strided_slice %725 {offsets = [0, 0], sizes = [8, 8], strides = [1, 1]} : vector<8x32xf32> to vector<8x8xf32>
    %729 = vector.extract_strided_slice %726 {offsets = [0, 0], sizes = [8, 8], strides = [1, 1]} : vector<8x32xf32> to vector<8x8xf32>
    %cst_269 = arith.constant dense<0.000000e+00> : vector<8x8xf32>
    %730 = tpu.matmul %727, %728, %cst_269 {dimension_numbers = #tpu.dot_dimension_numbers<[1], [1], [0], [0], [0, 0, 1, 0], [], []>} : vector<8x8xf32>, vector<8x8xf32>, vector<8x8xf32> -> vector<8x8xf32>
    %cst_270 = arith.constant dense<0xFF800000> : vector<8xf32>
    %731 = vector.multi_reduction <maximumf>, %730, %cst_270 [1] : vector<8x8xf32> to vector<8xf32>
    %732 = vector.shape_cast %731 : vector<8xf32> to vector<8x1xf32>
    %733 = vector.broadcast %732 : vector<8x1xf32> to vector<8x8xf32>
    %734 = arith.subf %730, %733 : vector<8x8xf32>
    %735 = math.exp %734 : vector<8x8xf32>
    %cst_271 = arith.constant dense<0.000000e+00> : vector<8xf32>
    %736 = vector.multi_reduction <add>, %735, %cst_271 [1] : vector<8x8xf32> to vector<8xf32>
    %737 = vector.shape_cast %736 : vector<8xf32> to vector<8x1xf32>
    %738 = tpu.reciprocal %737 {approx = true} : vector<8x1xf32> -> vector<8x1xf32>
    %739 = vector.broadcast %738 : vector<8x1xf32> to vector<8x8xf32>
    %740 = arith.mulf %735, %739 : vector<8x8xf32>
    %cst_272 = arith.constant dense<0.000000e+00> : vector<8x8xf32>
    %741 = tpu.matmul %740, %729, %cst_272 {dimension_numbers = #tpu.dot_dimension_numbers<[1], [0], [0], [1], [0, 0, 1, 1], [], []>} : vector<8x8xf32>, vector<8x8xf32>, vector<8x8xf32> -> vector<8x8xf32>
    %742 = vector.extract_strided_slice %724 {offsets = [0, 8], sizes = [8, 8], strides = [1, 1]} : vector<8x32xf32> to vector<8x8xf32>
    %743 = vector.extract_strided_slice %725 {offsets = [0, 8], sizes = [8, 8], strides = [1, 1]} : vector<8x32xf32> to vector<8x8xf32>
    %744 = vector.extract_strided_slice %726 {offsets = [0, 8], sizes = [8, 8], strides = [1, 1]} : vector<8x32xf32> to vector<8x8xf32>
    %cst_273 = arith.constant dense<0.000000e+00> : vector<8x8xf32>
    %745 = tpu.matmul %742, %743, %cst_273 {dimension_numbers = #tpu.dot_dimension_numbers<[1], [1], [0], [0], [0, 0, 1, 0], [], []>} : vector<8x8xf32>, vector<8x8xf32>, vector<8x8xf32> -> vector<8x8xf32>
    %cst_274 = arith.constant dense<0xFF800000> : vector<8xf32>
    %746 = vector.multi_reduction <maximumf>, %745, %cst_274 [1] : vector<8x8xf32> to vector<8xf32>
    %747 = vector.shape_cast %746 : vector<8xf32> to vector<8x1xf32>
    %748 = vector.broadcast %747 : vector<8x1xf32> to vector<8x8xf32>
    %749 = arith.subf %745, %748 : vector<8x8xf32>
    %750 = math.exp %749 : vector<8x8xf32>
    %cst_275 = arith.constant dense<0.000000e+00> : vector<8xf32>
    %751 = vector.multi_reduction <add>, %750, %cst_275 [1] : vector<8x8xf32> to vector<8xf32>
    %752 = vector.shape_cast %751 : vector<8xf32> to vector<8x1xf32>
    %753 = tpu.reciprocal %752 {approx = true} : vector<8x1xf32> -> vector<8x1xf32>
    %754 = vector.broadcast %753 : vector<8x1xf32> to vector<8x8xf32>
    %755 = arith.mulf %750, %754 : vector<8x8xf32>
    %cst_276 = arith.constant dense<0.000000e+00> : vector<8x8xf32>
    %756 = tpu.matmul %755, %744, %cst_276 {dimension_numbers = #tpu.dot_dimension_numbers<[1], [0], [0], [1], [0, 0, 1, 1], [], []>} : vector<8x8xf32>, vector<8x8xf32>, vector<8x8xf32> -> vector<8x8xf32>
    %757 = vector.extract_strided_slice %724 {offsets = [0, 16], sizes = [8, 8], strides = [1, 1]} : vector<8x32xf32> to vector<8x8xf32>
    %758 = vector.extract_strided_slice %725 {offsets = [0, 16], sizes = [8, 8], strides = [1, 1]} : vector<8x32xf32> to vector<8x8xf32>
    %759 = vector.extract_strided_slice %726 {offsets = [0, 16], sizes = [8, 8], strides = [1, 1]} : vector<8x32xf32> to vector<8x8xf32>
    %cst_277 = arith.constant dense<0.000000e+00> : vector<8x8xf32>
    %760 = tpu.matmul %757, %758, %cst_277 {dimension_numbers = #tpu.dot_dimension_numbers<[1], [1], [0], [0], [0, 0, 1, 0], [], []>} : vector<8x8xf32>, vector<8x8xf32>, vector<8x8xf32> -> vector<8x8xf32>
    %cst_278 = arith.constant dense<0xFF800000> : vector<8xf32>
    %761 = vector.multi_reduction <maximumf>, %760, %cst_278 [1] : vector<8x8xf32> to vector<8xf32>
    %762 = vector.shape_cast %761 : vector<8xf32> to vector<8x1xf32>
    %763 = vector.broadcast %762 : vector<8x1xf32> to vector<8x8xf32>
    %764 = arith.subf %760, %763 : vector<8x8xf32>
    %765 = math.exp %764 : vector<8x8xf32>
    %cst_279 = arith.constant dense<0.000000e+00> : vector<8xf32>
    %766 = vector.multi_reduction <add>, %765, %cst_279 [1] : vector<8x8xf32> to vector<8xf32>
    %767 = vector.shape_cast %766 : vector<8xf32> to vector<8x1xf32>
    %768 = tpu.reciprocal %767 {approx = true} : vector<8x1xf32> -> vector<8x1xf32>
    %769 = vector.broadcast %768 : vector<8x1xf32> to vector<8x8xf32>
    %770 = arith.mulf %765, %769 : vector<8x8xf32>
    %cst_280 = arith.constant dense<0.000000e+00> : vector<8x8xf32>
    %771 = tpu.matmul %770, %759, %cst_280 {dimension_numbers = #tpu.dot_dimension_numbers<[1], [0], [0], [1], [0, 0, 1, 1], [], []>} : vector<8x8xf32>, vector<8x8xf32>, vector<8x8xf32> -> vector<8x8xf32>
    %772 = vector.extract_strided_slice %724 {offsets = [0, 24], sizes = [8, 8], strides = [1, 1]} : vector<8x32xf32> to vector<8x8xf32>
    %773 = vector.extract_strided_slice %725 {offsets = [0, 24], sizes = [8, 8], strides = [1, 1]} : vector<8x32xf32> to vector<8x8xf32>
    %774 = vector.extract_strided_slice %726 {offsets = [0, 24], sizes = [8, 8], strides = [1, 1]} : vector<8x32xf32> to vector<8x8xf32>
    %cst_281 = arith.constant dense<0.000000e+00> : vector<8x8xf32>
    %775 = tpu.matmul %772, %773, %cst_281 {dimension_numbers = #tpu.dot_dimension_numbers<[1], [1], [0], [0], [0, 0, 1, 0], [], []>} : vector<8x8xf32>, vector<8x8xf32>, vector<8x8xf32> -> vector<8x8xf32>
    %cst_282 = arith.constant dense<0xFF800000> : vector<8xf32>
    %776 = vector.multi_reduction <maximumf>, %775, %cst_282 [1] : vector<8x8xf32> to vector<8xf32>
    %777 = vector.shape_cast %776 : vector<8xf32> to vector<8x1xf32>
    %778 = vector.broadcast %777 : vector<8x1xf32> to vector<8x8xf32>
    %779 = arith.subf %775, %778 : vector<8x8xf32>
    %780 = math.exp %779 : vector<8x8xf32>
    %cst_283 = arith.constant dense<0.000000e+00> : vector<8xf32>
    %781 = vector.multi_reduction <add>, %780, %cst_283 [1] : vector<8x8xf32> to vector<8xf32>
    %782 = vector.shape_cast %781 : vector<8xf32> to vector<8x1xf32>
    %783 = tpu.reciprocal %782 {approx = true} : vector<8x1xf32> -> vector<8x1xf32>
    %784 = vector.broadcast %783 : vector<8x1xf32> to vector<8x8xf32>
    %785 = arith.mulf %780, %784 : vector<8x8xf32>
    %cst_284 = arith.constant dense<0.000000e+00> : vector<8x8xf32>
    %786 = tpu.matmul %785, %774, %cst_284 {dimension_numbers = #tpu.dot_dimension_numbers<[1], [0], [0], [1], [0, 0, 1, 1], [], []>} : vector<8x8xf32>, vector<8x8xf32>, vector<8x8xf32> -> vector<8x8xf32>
    %787 = tpu.concatenate %741, %756, %771, %786 in 0 : vector<8x8xf32>, vector<8x8xf32>, vector<8x8xf32>, vector<8x8xf32> -> vector<32x8xf32>
    %cst_285 = arith.constant dense<0.000000e+00> : vector<32x8xf32>
    %788 = tpu.matmul %0, %787, %cst_285 {dimension_numbers = #tpu.dot_dimension_numbers<[1], [0], [0], [1], [0, 0, 1, 1], [], []>} : vector<32x32xf32>, vector<32x8xf32>, vector<32x8xf32> -> vector<32x8xf32>
    %789 = vector.extract_strided_slice %788 {offsets = [0, 0], sizes = [8, 8], strides = [1, 1]} : vector<32x8xf32> to vector<8x8xf32>
    %790 = vector.extract_strided_slice %788 {offsets = [8, 0], sizes = [8, 8], strides = [1, 1]} : vector<32x8xf32> to vector<8x8xf32>
    %791 = vector.extract_strided_slice %788 {offsets = [16, 0], sizes = [8, 8], strides = [1, 1]} : vector<32x8xf32> to vector<8x8xf32>
    %792 = vector.extract_strided_slice %788 {offsets = [24, 0], sizes = [8, 8], strides = [1, 1]} : vector<32x8xf32> to vector<8x8xf32>
    %793 = tpu.concatenate %789, %790, %791, %792 in 1 : vector<8x8xf32>, vector<8x8xf32>, vector<8x8xf32>, vector<8x8xf32> -> vector<8x32xf32>
    %794 = tpu.concatenate %723, %793 in 0 : vector<8x32xf32>, vector<8x32xf32> -> vector<16x32xf32>
    %cst_286 = arith.constant dense<0.000000e+00> : vector<16x32xf32>
    %795 = tpu.matmul %794, %643, %cst_286 {dimension_numbers = #tpu.dot_dimension_numbers<[1], [0], [0], [1], [0, 0, 1, 1], [], []>} : vector<16x32xf32>, vector<32x32xf32>, vector<16x32xf32> -> vector<16x32xf32>
    %796 = vector.broadcast %645 : vector<1x32xf32> to vector<16x32xf32>
    %797 = arith.addf %795, %796 : vector<16x32xf32>
    %798 = arith.addf %633, %797 : vector<16x32xf32>
    %c0_287 = arith.constant 0 : index
    %c0_288 = arith.constant 0 : index
    %c0_289 = arith.constant 0 : index
    %799 = vector.load %arg23[%c0_287, %c0_288, %c0_289] : memref<2x1x32xf32, #tpu.memory_space<vmem>>, vector<1x1x32xf32>
    %800 = vector.shape_cast %799 : vector<1x1x32xf32> to vector<1x32xf32>
    %c0_290 = arith.constant 0 : index
    %c0_291 = arith.constant 0 : index
    %c0_292 = arith.constant 0 : index
    %801 = vector.load %arg24[%c0_290, %c0_291, %c0_292] : memref<2x1x32xf32, #tpu.memory_space<vmem>>, vector<1x1x32xf32>
    %802 = vector.shape_cast %801 : vector<1x1x32xf32> to vector<1x32xf32>
    %cst_293 = arith.constant dense<0.000000e+00> : vector<16xf32>
    %803 = vector.multi_reduction <add>, %798, %cst_293 [1] : vector<16x32xf32> to vector<16xf32>
    %804 = vector.shape_cast %803 : vector<16xf32> to vector<16x1xf32>
    %cst_294 = arith.constant 3.200000e+01 : f32
    %805 = vector.broadcast %cst_294 : f32 to vector<16x1xf32>
    %806 = arith.divf %804, %805 : vector<16x1xf32>
    %807 = vector.broadcast %806 : vector<16x1xf32> to vector<16x32xf32>
    %808 = arith.subf %798, %807 : vector<16x32xf32>
    %809 = arith.mulf %808, %808 : vector<16x32xf32>
    %cst_295 = arith.constant dense<0.000000e+00> : vector<16xf32>
    %810 = vector.multi_reduction <add>, %809, %cst_295 [1] : vector<16x32xf32> to vector<16xf32>
    %811 = vector.shape_cast %810 : vector<16xf32> to vector<16x1xf32>
    %cst_296 = arith.constant 3.200000e+01 : f32
    %812 = vector.broadcast %cst_296 : f32 to vector<16x1xf32>
    %813 = arith.divf %811, %812 : vector<16x1xf32>
    %cst_297 = arith.constant 9.99999974E-6 : f32
    %814 = vector.broadcast %cst_297 : f32 to vector<16x1xf32>
    %815 = arith.addf %813, %814 : vector<16x1xf32>
    %816 = math.rsqrt %815 : vector<16x1xf32>
    %817 = vector.broadcast %816 : vector<16x1xf32> to vector<16x32xf32>
    %818 = arith.mulf %808, %817 : vector<16x32xf32>
    %819 = vector.broadcast %800 : vector<1x32xf32> to vector<16x32xf32>
    %820 = arith.mulf %818, %819 : vector<16x32xf32>
    %821 = vector.broadcast %802 : vector<1x32xf32> to vector<16x32xf32>
    %822 = arith.addf %820, %821 : vector<16x32xf32>
    %c0_298 = arith.constant 0 : index
    %c0_299 = arith.constant 0 : index
    %c0_300 = arith.constant 0 : index
    %823 = vector.load %arg25[%c0_298, %c0_299, %c0_300] : memref<2x32x128xf32, #tpu.memory_space<vmem>>, vector<1x32x128xf32>
    %824 = vector.shape_cast %823 : vector<1x32x128xf32> to vector<32x128xf32>
    %cst_301 = arith.constant dense<0.000000e+00> : vector<16x128xf32>
    %825 = tpu.matmul %822, %824, %cst_301 {dimension_numbers = #tpu.dot_dimension_numbers<[1], [0], [0], [1], [0, 0, 1, 1], [], []>} : vector<16x32xf32>, vector<32x128xf32>, vector<16x128xf32> -> vector<16x128xf32>
    %c0_302 = arith.constant 0 : index
    %c0_303 = arith.constant 0 : index
    %c0_304 = arith.constant 0 : index
    %826 = vector.load %arg26[%c0_302, %c0_303, %c0_304] : memref<2x1x128xf32, #tpu.memory_space<vmem>>, vector<1x1x128xf32>
    %827 = vector.shape_cast %826 : vector<1x1x128xf32> to vector<1x128xf32>
    %828 = vector.broadcast %827 : vector<1x128xf32> to vector<16x128xf32>
    %829 = arith.addf %825, %828 : vector<16x128xf32>
    %cst_305 = arith.constant 0.000000e+00 : f32
    %830 = vector.broadcast %cst_305 : f32 to vector<16x128xf32>
    %831 = arith.maximumf %829, %830 : vector<16x128xf32>
    %c0_306 = arith.constant 0 : index
    %c0_307 = arith.constant 0 : index
    %c0_308 = arith.constant 0 : index
    %832 = vector.load %arg27[%c0_306, %c0_307, %c0_308] : memref<2x128x32xf32, #tpu.memory_space<vmem>>, vector<1x128x32xf32>
    %833 = vector.shape_cast %832 : vector<1x128x32xf32> to vector<128x32xf32>
    %cst_309 = arith.constant dense<0.000000e+00> : vector<16x32xf32>
    %834 = tpu.matmul %831, %833, %cst_309 {dimension_numbers = #tpu.dot_dimension_numbers<[1], [0], [0], [1], [0, 0, 1, 1], [], []>} : vector<16x128xf32>, vector<128x32xf32>, vector<16x32xf32> -> vector<16x32xf32>
    %c0_310 = arith.constant 0 : index
    %c0_311 = arith.constant 0 : index
    %c0_312 = arith.constant 0 : index
    %835 = vector.load %arg28[%c0_310, %c0_311, %c0_312] : memref<2x1x32xf32, #tpu.memory_space<vmem>>, vector<1x1x32xf32>
    %836 = vector.shape_cast %835 : vector<1x1x32xf32> to vector<1x32xf32>
    %837 = vector.broadcast %836 : vector<1x32xf32> to vector<16x32xf32>
    %838 = arith.addf %834, %837 : vector<16x32xf32>
    %839 = arith.addf %822, %838 : vector<16x32xf32>
    %c0_313 = arith.constant 0 : index
    %c0_314 = arith.constant 0 : index
    %c0_315 = arith.constant 0 : index
    %840 = vector.load %arg23[%c0_313, %c0_314, %c0_315] : memref<2x1x32xf32, #tpu.memory_space<vmem>>, vector<1x1x32xf32>
    %841 = vector.shape_cast %840 : vector<1x1x32xf32> to vector<1x32xf32>
    %c0_316 = arith.constant 0 : index
    %c0_317 = arith.constant 0 : index
    %c0_318 = arith.constant 0 : index
    %842 = vector.load %arg24[%c0_316, %c0_317, %c0_318] : memref<2x1x32xf32, #tpu.memory_space<vmem>>, vector<1x1x32xf32>
    %843 = vector.shape_cast %842 : vector<1x1x32xf32> to vector<1x32xf32>
    %cst_319 = arith.constant dense<0.000000e+00> : vector<16xf32>
    %844 = vector.multi_reduction <add>, %839, %cst_319 [1] : vector<16x32xf32> to vector<16xf32>
    %845 = vector.shape_cast %844 : vector<16xf32> to vector<16x1xf32>
    %cst_320 = arith.constant 3.200000e+01 : f32
    %846 = vector.broadcast %cst_320 : f32 to vector<16x1xf32>
    %847 = arith.divf %845, %846 : vector<16x1xf32>
    %848 = vector.broadcast %847 : vector<16x1xf32> to vector<16x32xf32>
    %849 = arith.subf %839, %848 : vector<16x32xf32>
    %850 = arith.mulf %849, %849 : vector<16x32xf32>
    %cst_321 = arith.constant dense<0.000000e+00> : vector<16xf32>
    %851 = vector.multi_reduction <add>, %850, %cst_321 [1] : vector<16x32xf32> to vector<16xf32>
    %852 = vector.shape_cast %851 : vector<16xf32> to vector<16x1xf32>
    %cst_322 = arith.constant 3.200000e+01 : f32
    %853 = vector.broadcast %cst_322 : f32 to vector<16x1xf32>
    %854 = arith.divf %852, %853 : vector<16x1xf32>
    %cst_323 = arith.constant 9.99999974E-6 : f32
    %855 = vector.broadcast %cst_323 : f32 to vector<16x1xf32>
    %856 = arith.addf %854, %855 : vector<16x1xf32>
    %857 = math.rsqrt %856 : vector<16x1xf32>
    %858 = vector.broadcast %857 : vector<16x1xf32> to vector<16x32xf32>
    %859 = arith.mulf %849, %858 : vector<16x32xf32>
    %860 = vector.broadcast %841 : vector<1x32xf32> to vector<16x32xf32>
    %861 = arith.mulf %859, %860 : vector<16x32xf32>
    %862 = vector.broadcast %843 : vector<1x32xf32> to vector<16x32xf32>
    %863 = arith.addf %861, %862 : vector<16x32xf32>
    %c1_324 = arith.constant 1 : index
    %c0_325 = arith.constant 0 : index
    %c0_326 = arith.constant 0 : index
    %864 = vector.load %arg13[%c1_324, %c0_325, %c0_326] : memref<2x32x96xf32, #tpu.memory_space<vmem>>, vector<1x32x96xf32>
    %865 = vector.shape_cast %864 : vector<1x32x96xf32> to vector<32x96xf32>
    %c1_327 = arith.constant 1 : index
    %c0_328 = arith.constant 0 : index
    %c0_329 = arith.constant 0 : index
    %866 = vector.load %arg14[%c1_327, %c0_328, %c0_329] : memref<2x1x96xf32, #tpu.memory_space<vmem>>, vector<1x1x96xf32>
    %867 = vector.shape_cast %866 : vector<1x1x96xf32> to vector<1x96xf32>
    %c1_330 = arith.constant 1 : index
    %c0_331 = arith.constant 0 : index
    %c0_332 = arith.constant 0 : index
    %868 = vector.load %arg15[%c1_330, %c0_331, %c0_332] : memref<2x32x32xf32, #tpu.memory_space<vmem>>, vector<1x32x32xf32>
    %869 = vector.shape_cast %868 : vector<1x32x32xf32> to vector<32x32xf32>
    %c1_333 = arith.constant 1 : index
    %c0_334 = arith.constant 0 : index
    %c0_335 = arith.constant 0 : index
    %870 = vector.load %arg16[%c1_333, %c0_334, %c0_335] : memref<2x1x32xf32, #tpu.memory_space<vmem>>, vector<1x1x32xf32>
    %871 = vector.shape_cast %870 : vector<1x1x32xf32> to vector<1x32xf32>
    %cst_336 = arith.constant dense<0.000000e+00> : vector<16x96xf32>
    %872 = tpu.matmul %863, %865, %cst_336 {dimension_numbers = #tpu.dot_dimension_numbers<[1], [0], [0], [1], [0, 0, 1, 1], [], []>} : vector<16x32xf32>, vector<32x96xf32>, vector<16x96xf32> -> vector<16x96xf32>
    %873 = vector.broadcast %867 : vector<1x96xf32> to vector<16x96xf32>
    %874 = arith.addf %872, %873 : vector<16x96xf32>
    %875 = vector.extract_strided_slice %874 {offsets = [0, 0], sizes = [16, 32], strides = [1, 1]} : vector<16x96xf32> to vector<16x32xf32>
    %876 = vector.extract_strided_slice %874 {offsets = [0, 32], sizes = [16, 32], strides = [1, 1]} : vector<16x96xf32> to vector<16x32xf32>
    %877 = vector.extract_strided_slice %874 {offsets = [0, 64], sizes = [16, 32], strides = [1, 1]} : vector<16x96xf32> to vector<16x32xf32>
    %878 = vector.extract_strided_slice %875 {offsets = [0, 0], sizes = [8, 32], strides = [1, 1]} : vector<16x32xf32> to vector<8x32xf32>
    %879 = vector.extract_strided_slice %876 {offsets = [0, 0], sizes = [8, 32], strides = [1, 1]} : vector<16x32xf32> to vector<8x32xf32>
    %880 = vector.extract_strided_slice %877 {offsets = [0, 0], sizes = [8, 32], strides = [1, 1]} : vector<16x32xf32> to vector<8x32xf32>
    %881 = vector.extract_strided_slice %878 {offsets = [0, 0], sizes = [8, 8], strides = [1, 1]} : vector<8x32xf32> to vector<8x8xf32>
    %882 = vector.extract_strided_slice %879 {offsets = [0, 0], sizes = [8, 8], strides = [1, 1]} : vector<8x32xf32> to vector<8x8xf32>
    %883 = vector.extract_strided_slice %880 {offsets = [0, 0], sizes = [8, 8], strides = [1, 1]} : vector<8x32xf32> to vector<8x8xf32>
    %cst_337 = arith.constant dense<0.000000e+00> : vector<8x8xf32>
    %884 = tpu.matmul %881, %882, %cst_337 {dimension_numbers = #tpu.dot_dimension_numbers<[1], [1], [0], [0], [0, 0, 1, 0], [], []>} : vector<8x8xf32>, vector<8x8xf32>, vector<8x8xf32> -> vector<8x8xf32>
    %cst_338 = arith.constant dense<0xFF800000> : vector<8xf32>
    %885 = vector.multi_reduction <maximumf>, %884, %cst_338 [1] : vector<8x8xf32> to vector<8xf32>
    %886 = vector.shape_cast %885 : vector<8xf32> to vector<8x1xf32>
    %887 = vector.broadcast %886 : vector<8x1xf32> to vector<8x8xf32>
    %888 = arith.subf %884, %887 : vector<8x8xf32>
    %889 = math.exp %888 : vector<8x8xf32>
    %cst_339 = arith.constant dense<0.000000e+00> : vector<8xf32>
    %890 = vector.multi_reduction <add>, %889, %cst_339 [1] : vector<8x8xf32> to vector<8xf32>
    %891 = vector.shape_cast %890 : vector<8xf32> to vector<8x1xf32>
    %892 = tpu.reciprocal %891 {approx = true} : vector<8x1xf32> -> vector<8x1xf32>
    %893 = vector.broadcast %892 : vector<8x1xf32> to vector<8x8xf32>
    %894 = arith.mulf %889, %893 : vector<8x8xf32>
    %cst_340 = arith.constant dense<0.000000e+00> : vector<8x8xf32>
    %895 = tpu.matmul %894, %883, %cst_340 {dimension_numbers = #tpu.dot_dimension_numbers<[1], [0], [0], [1], [0, 0, 1, 1], [], []>} : vector<8x8xf32>, vector<8x8xf32>, vector<8x8xf32> -> vector<8x8xf32>
    %896 = vector.extract_strided_slice %878 {offsets = [0, 8], sizes = [8, 8], strides = [1, 1]} : vector<8x32xf32> to vector<8x8xf32>
    %897 = vector.extract_strided_slice %879 {offsets = [0, 8], sizes = [8, 8], strides = [1, 1]} : vector<8x32xf32> to vector<8x8xf32>
    %898 = vector.extract_strided_slice %880 {offsets = [0, 8], sizes = [8, 8], strides = [1, 1]} : vector<8x32xf32> to vector<8x8xf32>
    %cst_341 = arith.constant dense<0.000000e+00> : vector<8x8xf32>
    %899 = tpu.matmul %896, %897, %cst_341 {dimension_numbers = #tpu.dot_dimension_numbers<[1], [1], [0], [0], [0, 0, 1, 0], [], []>} : vector<8x8xf32>, vector<8x8xf32>, vector<8x8xf32> -> vector<8x8xf32>
    %cst_342 = arith.constant dense<0xFF800000> : vector<8xf32>
    %900 = vector.multi_reduction <maximumf>, %899, %cst_342 [1] : vector<8x8xf32> to vector<8xf32>
    %901 = vector.shape_cast %900 : vector<8xf32> to vector<8x1xf32>
    %902 = vector.broadcast %901 : vector<8x1xf32> to vector<8x8xf32>
    %903 = arith.subf %899, %902 : vector<8x8xf32>
    %904 = math.exp %903 : vector<8x8xf32>
    %cst_343 = arith.constant dense<0.000000e+00> : vector<8xf32>
    %905 = vector.multi_reduction <add>, %904, %cst_343 [1] : vector<8x8xf32> to vector<8xf32>
    %906 = vector.shape_cast %905 : vector<8xf32> to vector<8x1xf32>
    %907 = tpu.reciprocal %906 {approx = true} : vector<8x1xf32> -> vector<8x1xf32>
    %908 = vector.broadcast %907 : vector<8x1xf32> to vector<8x8xf32>
    %909 = arith.mulf %904, %908 : vector<8x8xf32>
    %cst_344 = arith.constant dense<0.000000e+00> : vector<8x8xf32>
    %910 = tpu.matmul %909, %898, %cst_344 {dimension_numbers = #tpu.dot_dimension_numbers<[1], [0], [0], [1], [0, 0, 1, 1], [], []>} : vector<8x8xf32>, vector<8x8xf32>, vector<8x8xf32> -> vector<8x8xf32>
    %911 = vector.extract_strided_slice %878 {offsets = [0, 16], sizes = [8, 8], strides = [1, 1]} : vector<8x32xf32> to vector<8x8xf32>
    %912 = vector.extract_strided_slice %879 {offsets = [0, 16], sizes = [8, 8], strides = [1, 1]} : vector<8x32xf32> to vector<8x8xf32>
    %913 = vector.extract_strided_slice %880 {offsets = [0, 16], sizes = [8, 8], strides = [1, 1]} : vector<8x32xf32> to vector<8x8xf32>
    %cst_345 = arith.constant dense<0.000000e+00> : vector<8x8xf32>
    %914 = tpu.matmul %911, %912, %cst_345 {dimension_numbers = #tpu.dot_dimension_numbers<[1], [1], [0], [0], [0, 0, 1, 0], [], []>} : vector<8x8xf32>, vector<8x8xf32>, vector<8x8xf32> -> vector<8x8xf32>
    %cst_346 = arith.constant dense<0xFF800000> : vector<8xf32>
    %915 = vector.multi_reduction <maximumf>, %914, %cst_346 [1] : vector<8x8xf32> to vector<8xf32>
    %916 = vector.shape_cast %915 : vector<8xf32> to vector<8x1xf32>
    %917 = vector.broadcast %916 : vector<8x1xf32> to vector<8x8xf32>
    %918 = arith.subf %914, %917 : vector<8x8xf32>
    %919 = math.exp %918 : vector<8x8xf32>
    %cst_347 = arith.constant dense<0.000000e+00> : vector<8xf32>
    %920 = vector.multi_reduction <add>, %919, %cst_347 [1] : vector<8x8xf32> to vector<8xf32>
    %921 = vector.shape_cast %920 : vector<8xf32> to vector<8x1xf32>
    %922 = tpu.reciprocal %921 {approx = true} : vector<8x1xf32> -> vector<8x1xf32>
    %923 = vector.broadcast %922 : vector<8x1xf32> to vector<8x8xf32>
    %924 = arith.mulf %919, %923 : vector<8x8xf32>
    %cst_348 = arith.constant dense<0.000000e+00> : vector<8x8xf32>
    %925 = tpu.matmul %924, %913, %cst_348 {dimension_numbers = #tpu.dot_dimension_numbers<[1], [0], [0], [1], [0, 0, 1, 1], [], []>} : vector<8x8xf32>, vector<8x8xf32>, vector<8x8xf32> -> vector<8x8xf32>
    %926 = vector.extract_strided_slice %878 {offsets = [0, 24], sizes = [8, 8], strides = [1, 1]} : vector<8x32xf32> to vector<8x8xf32>
    %927 = vector.extract_strided_slice %879 {offsets = [0, 24], sizes = [8, 8], strides = [1, 1]} : vector<8x32xf32> to vector<8x8xf32>
    %928 = vector.extract_strided_slice %880 {offsets = [0, 24], sizes = [8, 8], strides = [1, 1]} : vector<8x32xf32> to vector<8x8xf32>
    %cst_349 = arith.constant dense<0.000000e+00> : vector<8x8xf32>
    %929 = tpu.matmul %926, %927, %cst_349 {dimension_numbers = #tpu.dot_dimension_numbers<[1], [1], [0], [0], [0, 0, 1, 0], [], []>} : vector<8x8xf32>, vector<8x8xf32>, vector<8x8xf32> -> vector<8x8xf32>
    %cst_350 = arith.constant dense<0xFF800000> : vector<8xf32>
    %930 = vector.multi_reduction <maximumf>, %929, %cst_350 [1] : vector<8x8xf32> to vector<8xf32>
    %931 = vector.shape_cast %930 : vector<8xf32> to vector<8x1xf32>
    %932 = vector.broadcast %931 : vector<8x1xf32> to vector<8x8xf32>
    %933 = arith.subf %929, %932 : vector<8x8xf32>
    %934 = math.exp %933 : vector<8x8xf32>
    %cst_351 = arith.constant dense<0.000000e+00> : vector<8xf32>
    %935 = vector.multi_reduction <add>, %934, %cst_351 [1] : vector<8x8xf32> to vector<8xf32>
    %936 = vector.shape_cast %935 : vector<8xf32> to vector<8x1xf32>
    %937 = tpu.reciprocal %936 {approx = true} : vector<8x1xf32> -> vector<8x1xf32>
    %938 = vector.broadcast %937 : vector<8x1xf32> to vector<8x8xf32>
    %939 = arith.mulf %934, %938 : vector<8x8xf32>
    %cst_352 = arith.constant dense<0.000000e+00> : vector<8x8xf32>
    %940 = tpu.matmul %939, %928, %cst_352 {dimension_numbers = #tpu.dot_dimension_numbers<[1], [0], [0], [1], [0, 0, 1, 1], [], []>} : vector<8x8xf32>, vector<8x8xf32>, vector<8x8xf32> -> vector<8x8xf32>
    %941 = tpu.concatenate %895, %910, %925, %940 in 0 : vector<8x8xf32>, vector<8x8xf32>, vector<8x8xf32>, vector<8x8xf32> -> vector<32x8xf32>
    %cst_353 = arith.constant dense<0.000000e+00> : vector<32x8xf32>
    %942 = tpu.matmul %0, %941, %cst_353 {dimension_numbers = #tpu.dot_dimension_numbers<[1], [0], [0], [1], [0, 0, 1, 1], [], []>} : vector<32x32xf32>, vector<32x8xf32>, vector<32x8xf32> -> vector<32x8xf32>
    %943 = vector.extract_strided_slice %942 {offsets = [0, 0], sizes = [8, 8], strides = [1, 1]} : vector<32x8xf32> to vector<8x8xf32>
    %944 = vector.extract_strided_slice %942 {offsets = [8, 0], sizes = [8, 8], strides = [1, 1]} : vector<32x8xf32> to vector<8x8xf32>
    %945 = vector.extract_strided_slice %942 {offsets = [16, 0], sizes = [8, 8], strides = [1, 1]} : vector<32x8xf32> to vector<8x8xf32>
    %946 = vector.extract_strided_slice %942 {offsets = [24, 0], sizes = [8, 8], strides = [1, 1]} : vector<32x8xf32> to vector<8x8xf32>
    %947 = tpu.concatenate %943, %944, %945, %946 in 1 : vector<8x8xf32>, vector<8x8xf32>, vector<8x8xf32>, vector<8x8xf32> -> vector<8x32xf32>
    %948 = vector.extract_strided_slice %875 {offsets = [8, 0], sizes = [8, 32], strides = [1, 1]} : vector<16x32xf32> to vector<8x32xf32>
    %949 = vector.extract_strided_slice %876 {offsets = [8, 0], sizes = [8, 32], strides = [1, 1]} : vector<16x32xf32> to vector<8x32xf32>
    %950 = vector.extract_strided_slice %877 {offsets = [8, 0], sizes = [8, 32], strides = [1, 1]} : vector<16x32xf32> to vector<8x32xf32>
    %951 = vector.extract_strided_slice %948 {offsets = [0, 0], sizes = [8, 8], strides = [1, 1]} : vector<8x32xf32> to vector<8x8xf32>
    %952 = vector.extract_strided_slice %949 {offsets = [0, 0], sizes = [8, 8], strides = [1, 1]} : vector<8x32xf32> to vector<8x8xf32>
    %953 = vector.extract_strided_slice %950 {offsets = [0, 0], sizes = [8, 8], strides = [1, 1]} : vector<8x32xf32> to vector<8x8xf32>
    %cst_354 = arith.constant dense<0.000000e+00> : vector<8x8xf32>
    %954 = tpu.matmul %951, %952, %cst_354 {dimension_numbers = #tpu.dot_dimension_numbers<[1], [1], [0], [0], [0, 0, 1, 0], [], []>} : vector<8x8xf32>, vector<8x8xf32>, vector<8x8xf32> -> vector<8x8xf32>
    %cst_355 = arith.constant dense<0xFF800000> : vector<8xf32>
    %955 = vector.multi_reduction <maximumf>, %954, %cst_355 [1] : vector<8x8xf32> to vector<8xf32>
    %956 = vector.shape_cast %955 : vector<8xf32> to vector<8x1xf32>
    %957 = vector.broadcast %956 : vector<8x1xf32> to vector<8x8xf32>
    %958 = arith.subf %954, %957 : vector<8x8xf32>
    %959 = math.exp %958 : vector<8x8xf32>
    %cst_356 = arith.constant dense<0.000000e+00> : vector<8xf32>
    %960 = vector.multi_reduction <add>, %959, %cst_356 [1] : vector<8x8xf32> to vector<8xf32>
    %961 = vector.shape_cast %960 : vector<8xf32> to vector<8x1xf32>
    %962 = tpu.reciprocal %961 {approx = true} : vector<8x1xf32> -> vector<8x1xf32>
    %963 = vector.broadcast %962 : vector<8x1xf32> to vector<8x8xf32>
    %964 = arith.mulf %959, %963 : vector<8x8xf32>
    %cst_357 = arith.constant dense<0.000000e+00> : vector<8x8xf32>
    %965 = tpu.matmul %964, %953, %cst_357 {dimension_numbers = #tpu.dot_dimension_numbers<[1], [0], [0], [1], [0, 0, 1, 1], [], []>} : vector<8x8xf32>, vector<8x8xf32>, vector<8x8xf32> -> vector<8x8xf32>
    %966 = vector.extract_strided_slice %948 {offsets = [0, 8], sizes = [8, 8], strides = [1, 1]} : vector<8x32xf32> to vector<8x8xf32>
    %967 = vector.extract_strided_slice %949 {offsets = [0, 8], sizes = [8, 8], strides = [1, 1]} : vector<8x32xf32> to vector<8x8xf32>
    %968 = vector.extract_strided_slice %950 {offsets = [0, 8], sizes = [8, 8], strides = [1, 1]} : vector<8x32xf32> to vector<8x8xf32>
    %cst_358 = arith.constant dense<0.000000e+00> : vector<8x8xf32>
    %969 = tpu.matmul %966, %967, %cst_358 {dimension_numbers = #tpu.dot_dimension_numbers<[1], [1], [0], [0], [0, 0, 1, 0], [], []>} : vector<8x8xf32>, vector<8x8xf32>, vector<8x8xf32> -> vector<8x8xf32>
    %cst_359 = arith.constant dense<0xFF800000> : vector<8xf32>
    %970 = vector.multi_reduction <maximumf>, %969, %cst_359 [1] : vector<8x8xf32> to vector<8xf32>
    %971 = vector.shape_cast %970 : vector<8xf32> to vector<8x1xf32>
    %972 = vector.broadcast %971 : vector<8x1xf32> to vector<8x8xf32>
    %973 = arith.subf %969, %972 : vector<8x8xf32>
    %974 = math.exp %973 : vector<8x8xf32>
    %cst_360 = arith.constant dense<0.000000e+00> : vector<8xf32>
    %975 = vector.multi_reduction <add>, %974, %cst_360 [1] : vector<8x8xf32> to vector<8xf32>
    %976 = vector.shape_cast %975 : vector<8xf32> to vector<8x1xf32>
    %977 = tpu.reciprocal %976 {approx = true} : vector<8x1xf32> -> vector<8x1xf32>
    %978 = vector.broadcast %977 : vector<8x1xf32> to vector<8x8xf32>
    %979 = arith.mulf %974, %978 : vector<8x8xf32>
    %cst_361 = arith.constant dense<0.000000e+00> : vector<8x8xf32>
    %980 = tpu.matmul %979, %968, %cst_361 {dimension_numbers = #tpu.dot_dimension_numbers<[1], [0], [0], [1], [0, 0, 1, 1], [], []>} : vector<8x8xf32>, vector<8x8xf32>, vector<8x8xf32> -> vector<8x8xf32>
    %981 = vector.extract_strided_slice %948 {offsets = [0, 16], sizes = [8, 8], strides = [1, 1]} : vector<8x32xf32> to vector<8x8xf32>
    %982 = vector.extract_strided_slice %949 {offsets = [0, 16], sizes = [8, 8], strides = [1, 1]} : vector<8x32xf32> to vector<8x8xf32>
    %983 = vector.extract_strided_slice %950 {offsets = [0, 16], sizes = [8, 8], strides = [1, 1]} : vector<8x32xf32> to vector<8x8xf32>
    %cst_362 = arith.constant dense<0.000000e+00> : vector<8x8xf32>
    %984 = tpu.matmul %981, %982, %cst_362 {dimension_numbers = #tpu.dot_dimension_numbers<[1], [1], [0], [0], [0, 0, 1, 0], [], []>} : vector<8x8xf32>, vector<8x8xf32>, vector<8x8xf32> -> vector<8x8xf32>
    %cst_363 = arith.constant dense<0xFF800000> : vector<8xf32>
    %985 = vector.multi_reduction <maximumf>, %984, %cst_363 [1] : vector<8x8xf32> to vector<8xf32>
    %986 = vector.shape_cast %985 : vector<8xf32> to vector<8x1xf32>
    %987 = vector.broadcast %986 : vector<8x1xf32> to vector<8x8xf32>
    %988 = arith.subf %984, %987 : vector<8x8xf32>
    %989 = math.exp %988 : vector<8x8xf32>
    %cst_364 = arith.constant dense<0.000000e+00> : vector<8xf32>
    %990 = vector.multi_reduction <add>, %989, %cst_364 [1] : vector<8x8xf32> to vector<8xf32>
    %991 = vector.shape_cast %990 : vector<8xf32> to vector<8x1xf32>
    %992 = tpu.reciprocal %991 {approx = true} : vector<8x1xf32> -> vector<8x1xf32>
    %993 = vector.broadcast %992 : vector<8x1xf32> to vector<8x8xf32>
    %994 = arith.mulf %989, %993 : vector<8x8xf32>
    %cst_365 = arith.constant dense<0.000000e+00> : vector<8x8xf32>
    %995 = tpu.matmul %994, %983, %cst_365 {dimension_numbers = #tpu.dot_dimension_numbers<[1], [0], [0], [1], [0, 0, 1, 1], [], []>} : vector<8x8xf32>, vector<8x8xf32>, vector<8x8xf32> -> vector<8x8xf32>
    %996 = vector.extract_strided_slice %948 {offsets = [0, 24], sizes = [8, 8], strides = [1, 1]} : vector<8x32xf32> to vector<8x8xf32>
    %997 = vector.extract_strided_slice %949 {offsets = [0, 24], sizes = [8, 8], strides = [1, 1]} : vector<8x32xf32> to vector<8x8xf32>
    %998 = vector.extract_strided_slice %950 {offsets = [0, 24], sizes = [8, 8], strides = [1, 1]} : vector<8x32xf32> to vector<8x8xf32>
    %cst_366 = arith.constant dense<0.000000e+00> : vector<8x8xf32>
    %999 = tpu.matmul %996, %997, %cst_366 {dimension_numbers = #tpu.dot_dimension_numbers<[1], [1], [0], [0], [0, 0, 1, 0], [], []>} : vector<8x8xf32>, vector<8x8xf32>, vector<8x8xf32> -> vector<8x8xf32>
    %cst_367 = arith.constant dense<0xFF800000> : vector<8xf32>
    %1000 = vector.multi_reduction <maximumf>, %999, %cst_367 [1] : vector<8x8xf32> to vector<8xf32>
    %1001 = vector.shape_cast %1000 : vector<8xf32> to vector<8x1xf32>
    %1002 = vector.broadcast %1001 : vector<8x1xf32> to vector<8x8xf32>
    %1003 = arith.subf %999, %1002 : vector<8x8xf32>
    %1004 = math.exp %1003 : vector<8x8xf32>
    %cst_368 = arith.constant dense<0.000000e+00> : vector<8xf32>
    %1005 = vector.multi_reduction <add>, %1004, %cst_368 [1] : vector<8x8xf32> to vector<8xf32>
    %1006 = vector.shape_cast %1005 : vector<8xf32> to vector<8x1xf32>
    %1007 = tpu.reciprocal %1006 {approx = true} : vector<8x1xf32> -> vector<8x1xf32>
    %1008 = vector.broadcast %1007 : vector<8x1xf32> to vector<8x8xf32>
    %1009 = arith.mulf %1004, %1008 : vector<8x8xf32>
    %cst_369 = arith.constant dense<0.000000e+00> : vector<8x8xf32>
    %1010 = tpu.matmul %1009, %998, %cst_369 {dimension_numbers = #tpu.dot_dimension_numbers<[1], [0], [0], [1], [0, 0, 1, 1], [], []>} : vector<8x8xf32>, vector<8x8xf32>, vector<8x8xf32> -> vector<8x8xf32>
    %1011 = tpu.concatenate %965, %980, %995, %1010 in 0 : vector<8x8xf32>, vector<8x8xf32>, vector<8x8xf32>, vector<8x8xf32> -> vector<32x8xf32>
    %cst_370 = arith.constant dense<0.000000e+00> : vector<32x8xf32>
    %1012 = tpu.matmul %0, %1011, %cst_370 {dimension_numbers = #tpu.dot_dimension_numbers<[1], [0], [0], [1], [0, 0, 1, 1], [], []>} : vector<32x32xf32>, vector<32x8xf32>, vector<32x8xf32> -> vector<32x8xf32>
    %1013 = vector.extract_strided_slice %1012 {offsets = [0, 0], sizes = [8, 8], strides = [1, 1]} : vector<32x8xf32> to vector<8x8xf32>
    %1014 = vector.extract_strided_slice %1012 {offsets = [8, 0], sizes = [8, 8], strides = [1, 1]} : vector<32x8xf32> to vector<8x8xf32>
    %1015 = vector.extract_strided_slice %1012 {offsets = [16, 0], sizes = [8, 8], strides = [1, 1]} : vector<32x8xf32> to vector<8x8xf32>
    %1016 = vector.extract_strided_slice %1012 {offsets = [24, 0], sizes = [8, 8], strides = [1, 1]} : vector<32x8xf32> to vector<8x8xf32>
    %1017 = tpu.concatenate %1013, %1014, %1015, %1016 in 1 : vector<8x8xf32>, vector<8x8xf32>, vector<8x8xf32>, vector<8x8xf32> -> vector<8x32xf32>
    %1018 = tpu.concatenate %947, %1017 in 0 : vector<8x32xf32>, vector<8x32xf32> -> vector<16x32xf32>
    %cst_371 = arith.constant dense<0.000000e+00> : vector<16x32xf32>
    %1019 = tpu.matmul %1018, %869, %cst_371 {dimension_numbers = #tpu.dot_dimension_numbers<[1], [0], [0], [1], [0, 0, 1, 1], [], []>} : vector<16x32xf32>, vector<32x32xf32>, vector<16x32xf32> -> vector<16x32xf32>
    %1020 = vector.broadcast %871 : vector<1x32xf32> to vector<16x32xf32>
    %1021 = arith.addf %1019, %1020 : vector<16x32xf32>
    %1022 = arith.addf %863, %1021 : vector<16x32xf32>
    %c1_372 = arith.constant 1 : index
    %c0_373 = arith.constant 0 : index
    %c0_374 = arith.constant 0 : index
    %1023 = vector.load %arg23[%c1_372, %c0_373, %c0_374] : memref<2x1x32xf32, #tpu.memory_space<vmem>>, vector<1x1x32xf32>
    %1024 = vector.shape_cast %1023 : vector<1x1x32xf32> to vector<1x32xf32>
    %c1_375 = arith.constant 1 : index
    %c0_376 = arith.constant 0 : index
    %c0_377 = arith.constant 0 : index
    %1025 = vector.load %arg24[%c1_375, %c0_376, %c0_377] : memref<2x1x32xf32, #tpu.memory_space<vmem>>, vector<1x1x32xf32>
    %1026 = vector.shape_cast %1025 : vector<1x1x32xf32> to vector<1x32xf32>
    %cst_378 = arith.constant dense<0.000000e+00> : vector<16xf32>
    %1027 = vector.multi_reduction <add>, %1022, %cst_378 [1] : vector<16x32xf32> to vector<16xf32>
    %1028 = vector.shape_cast %1027 : vector<16xf32> to vector<16x1xf32>
    %cst_379 = arith.constant 3.200000e+01 : f32
    %1029 = vector.broadcast %cst_379 : f32 to vector<16x1xf32>
    %1030 = arith.divf %1028, %1029 : vector<16x1xf32>
    %1031 = vector.broadcast %1030 : vector<16x1xf32> to vector<16x32xf32>
    %1032 = arith.subf %1022, %1031 : vector<16x32xf32>
    %1033 = arith.mulf %1032, %1032 : vector<16x32xf32>
    %cst_380 = arith.constant dense<0.000000e+00> : vector<16xf32>
    %1034 = vector.multi_reduction <add>, %1033, %cst_380 [1] : vector<16x32xf32> to vector<16xf32>
    %1035 = vector.shape_cast %1034 : vector<16xf32> to vector<16x1xf32>
    %cst_381 = arith.constant 3.200000e+01 : f32
    %1036 = vector.broadcast %cst_381 : f32 to vector<16x1xf32>
    %1037 = arith.divf %1035, %1036 : vector<16x1xf32>
    %cst_382 = arith.constant 9.99999974E-6 : f32
    %1038 = vector.broadcast %cst_382 : f32 to vector<16x1xf32>
    %1039 = arith.addf %1037, %1038 : vector<16x1xf32>
    %1040 = math.rsqrt %1039 : vector<16x1xf32>
    %1041 = vector.broadcast %1040 : vector<16x1xf32> to vector<16x32xf32>
    %1042 = arith.mulf %1032, %1041 : vector<16x32xf32>
    %1043 = vector.broadcast %1024 : vector<1x32xf32> to vector<16x32xf32>
    %1044 = arith.mulf %1042, %1043 : vector<16x32xf32>
    %1045 = vector.broadcast %1026 : vector<1x32xf32> to vector<16x32xf32>
    %1046 = arith.addf %1044, %1045 : vector<16x32xf32>
    %c1_383 = arith.constant 1 : index
    %c0_384 = arith.constant 0 : index
    %c0_385 = arith.constant 0 : index
    %1047 = vector.load %arg17[%c1_383, %c0_384, %c0_385] : memref<2x32x32xf32, #tpu.memory_space<vmem>>, vector<1x32x32xf32>
    %1048 = vector.shape_cast %1047 : vector<1x32x32xf32> to vector<32x32xf32>
    %c1_386 = arith.constant 1 : index
    %c0_387 = arith.constant 0 : index
    %c0_388 = arith.constant 0 : index
    %1049 = vector.load %arg18[%c1_386, %c0_387, %c0_388] : memref<2x1x32xf32, #tpu.memory_space<vmem>>, vector<1x1x32xf32>
    %1050 = vector.shape_cast %1049 : vector<1x1x32xf32> to vector<1x32xf32>
    %c1_389 = arith.constant 1 : index
    %c0_390 = arith.constant 0 : index
    %c0_391 = arith.constant 0 : index
    %1051 = vector.load %arg19[%c1_389, %c0_390, %c0_391] : memref<2x32x64xf32, #tpu.memory_space<vmem>>, vector<1x32x64xf32>
    %1052 = vector.shape_cast %1051 : vector<1x32x64xf32> to vector<32x64xf32>
    %c1_392 = arith.constant 1 : index
    %c0_393 = arith.constant 0 : index
    %c0_394 = arith.constant 0 : index
    %1053 = vector.load %arg20[%c1_392, %c0_393, %c0_394] : memref<2x1x64xf32, #tpu.memory_space<vmem>>, vector<1x1x64xf32>
    %1054 = vector.shape_cast %1053 : vector<1x1x64xf32> to vector<1x64xf32>
    %c1_395 = arith.constant 1 : index
    %c0_396 = arith.constant 0 : index
    %c0_397 = arith.constant 0 : index
    %1055 = vector.load %arg21[%c1_395, %c0_396, %c0_397] : memref<2x32x32xf32, #tpu.memory_space<vmem>>, vector<1x32x32xf32>
    %1056 = vector.shape_cast %1055 : vector<1x32x32xf32> to vector<32x32xf32>
    %c1_398 = arith.constant 1 : index
    %c0_399 = arith.constant 0 : index
    %c0_400 = arith.constant 0 : index
    %1057 = vector.load %arg22[%c1_398, %c0_399, %c0_400] : memref<2x1x32xf32, #tpu.memory_space<vmem>>, vector<1x1x32xf32>
    %1058 = vector.shape_cast %1057 : vector<1x1x32xf32> to vector<1x32xf32>
    %cst_401 = arith.constant dense<0.000000e+00> : vector<16x32xf32>
    %1059 = tpu.matmul %1046, %1048, %cst_401 {dimension_numbers = #tpu.dot_dimension_numbers<[1], [0], [0], [1], [0, 0, 1, 1], [], []>} : vector<16x32xf32>, vector<32x32xf32>, vector<16x32xf32> -> vector<16x32xf32>
    %1060 = vector.broadcast %1050 : vector<1x32xf32> to vector<16x32xf32>
    %1061 = arith.addf %1059, %1060 : vector<16x32xf32>
    %cst_402 = arith.constant dense<0.000000e+00> : vector<16x64xf32>
    %1062 = tpu.matmul %449, %1052, %cst_402 {dimension_numbers = #tpu.dot_dimension_numbers<[1], [0], [0], [1], [0, 0, 1, 1], [], []>} : vector<16x32xf32>, vector<32x64xf32>, vector<16x64xf32> -> vector<16x64xf32>
    %1063 = vector.broadcast %1054 : vector<1x64xf32> to vector<16x64xf32>
    %1064 = arith.addf %1062, %1063 : vector<16x64xf32>
    %1065 = vector.extract_strided_slice %1064 {offsets = [0, 0], sizes = [16, 32], strides = [1, 1]} : vector<16x64xf32> to vector<16x32xf32>
    %1066 = vector.extract_strided_slice %1064 {offsets = [0, 32], sizes = [16, 32], strides = [1, 1]} : vector<16x64xf32> to vector<16x32xf32>
    %1067 = vector.extract_strided_slice %1061 {offsets = [0, 0], sizes = [8, 32], strides = [1, 1]} : vector<16x32xf32> to vector<8x32xf32>
    %1068 = vector.extract_strided_slice %1065 {offsets = [0, 0], sizes = [8, 32], strides = [1, 1]} : vector<16x32xf32> to vector<8x32xf32>
    %1069 = vector.extract_strided_slice %1066 {offsets = [0, 0], sizes = [8, 32], strides = [1, 1]} : vector<16x32xf32> to vector<8x32xf32>
    %1070 = vector.extract_strided_slice %1067 {offsets = [0, 0], sizes = [8, 8], strides = [1, 1]} : vector<8x32xf32> to vector<8x8xf32>
    %1071 = vector.extract_strided_slice %1068 {offsets = [0, 0], sizes = [8, 8], strides = [1, 1]} : vector<8x32xf32> to vector<8x8xf32>
    %1072 = vector.extract_strided_slice %1069 {offsets = [0, 0], sizes = [8, 8], strides = [1, 1]} : vector<8x32xf32> to vector<8x8xf32>
    %cst_403 = arith.constant dense<0.000000e+00> : vector<8x8xf32>
    %1073 = tpu.matmul %1070, %1071, %cst_403 {dimension_numbers = #tpu.dot_dimension_numbers<[1], [1], [0], [0], [0, 0, 1, 0], [], []>} : vector<8x8xf32>, vector<8x8xf32>, vector<8x8xf32> -> vector<8x8xf32>
    %cst_404 = arith.constant dense<0xFF800000> : vector<8xf32>
    %1074 = vector.multi_reduction <maximumf>, %1073, %cst_404 [1] : vector<8x8xf32> to vector<8xf32>
    %1075 = vector.shape_cast %1074 : vector<8xf32> to vector<8x1xf32>
    %1076 = vector.broadcast %1075 : vector<8x1xf32> to vector<8x8xf32>
    %1077 = arith.subf %1073, %1076 : vector<8x8xf32>
    %1078 = math.exp %1077 : vector<8x8xf32>
    %cst_405 = arith.constant dense<0.000000e+00> : vector<8xf32>
    %1079 = vector.multi_reduction <add>, %1078, %cst_405 [1] : vector<8x8xf32> to vector<8xf32>
    %1080 = vector.shape_cast %1079 : vector<8xf32> to vector<8x1xf32>
    %1081 = tpu.reciprocal %1080 {approx = true} : vector<8x1xf32> -> vector<8x1xf32>
    %1082 = vector.broadcast %1081 : vector<8x1xf32> to vector<8x8xf32>
    %1083 = arith.mulf %1078, %1082 : vector<8x8xf32>
    %cst_406 = arith.constant dense<0.000000e+00> : vector<8x8xf32>
    %1084 = tpu.matmul %1083, %1072, %cst_406 {dimension_numbers = #tpu.dot_dimension_numbers<[1], [0], [0], [1], [0, 0, 1, 1], [], []>} : vector<8x8xf32>, vector<8x8xf32>, vector<8x8xf32> -> vector<8x8xf32>
    %1085 = vector.extract_strided_slice %1067 {offsets = [0, 8], sizes = [8, 8], strides = [1, 1]} : vector<8x32xf32> to vector<8x8xf32>
    %1086 = vector.extract_strided_slice %1068 {offsets = [0, 8], sizes = [8, 8], strides = [1, 1]} : vector<8x32xf32> to vector<8x8xf32>
    %1087 = vector.extract_strided_slice %1069 {offsets = [0, 8], sizes = [8, 8], strides = [1, 1]} : vector<8x32xf32> to vector<8x8xf32>
    %cst_407 = arith.constant dense<0.000000e+00> : vector<8x8xf32>
    %1088 = tpu.matmul %1085, %1086, %cst_407 {dimension_numbers = #tpu.dot_dimension_numbers<[1], [1], [0], [0], [0, 0, 1, 0], [], []>} : vector<8x8xf32>, vector<8x8xf32>, vector<8x8xf32> -> vector<8x8xf32>
    %cst_408 = arith.constant dense<0xFF800000> : vector<8xf32>
    %1089 = vector.multi_reduction <maximumf>, %1088, %cst_408 [1] : vector<8x8xf32> to vector<8xf32>
    %1090 = vector.shape_cast %1089 : vector<8xf32> to vector<8x1xf32>
    %1091 = vector.broadcast %1090 : vector<8x1xf32> to vector<8x8xf32>
    %1092 = arith.subf %1088, %1091 : vector<8x8xf32>
    %1093 = math.exp %1092 : vector<8x8xf32>
    %cst_409 = arith.constant dense<0.000000e+00> : vector<8xf32>
    %1094 = vector.multi_reduction <add>, %1093, %cst_409 [1] : vector<8x8xf32> to vector<8xf32>
    %1095 = vector.shape_cast %1094 : vector<8xf32> to vector<8x1xf32>
    %1096 = tpu.reciprocal %1095 {approx = true} : vector<8x1xf32> -> vector<8x1xf32>
    %1097 = vector.broadcast %1096 : vector<8x1xf32> to vector<8x8xf32>
    %1098 = arith.mulf %1093, %1097 : vector<8x8xf32>
    %cst_410 = arith.constant dense<0.000000e+00> : vector<8x8xf32>
    %1099 = tpu.matmul %1098, %1087, %cst_410 {dimension_numbers = #tpu.dot_dimension_numbers<[1], [0], [0], [1], [0, 0, 1, 1], [], []>} : vector<8x8xf32>, vector<8x8xf32>, vector<8x8xf32> -> vector<8x8xf32>
    %1100 = vector.extract_strided_slice %1067 {offsets = [0, 16], sizes = [8, 8], strides = [1, 1]} : vector<8x32xf32> to vector<8x8xf32>
    %1101 = vector.extract_strided_slice %1068 {offsets = [0, 16], sizes = [8, 8], strides = [1, 1]} : vector<8x32xf32> to vector<8x8xf32>
    %1102 = vector.extract_strided_slice %1069 {offsets = [0, 16], sizes = [8, 8], strides = [1, 1]} : vector<8x32xf32> to vector<8x8xf32>
    %cst_411 = arith.constant dense<0.000000e+00> : vector<8x8xf32>
    %1103 = tpu.matmul %1100, %1101, %cst_411 {dimension_numbers = #tpu.dot_dimension_numbers<[1], [1], [0], [0], [0, 0, 1, 0], [], []>} : vector<8x8xf32>, vector<8x8xf32>, vector<8x8xf32> -> vector<8x8xf32>
    %cst_412 = arith.constant dense<0xFF800000> : vector<8xf32>
    %1104 = vector.multi_reduction <maximumf>, %1103, %cst_412 [1] : vector<8x8xf32> to vector<8xf32>
    %1105 = vector.shape_cast %1104 : vector<8xf32> to vector<8x1xf32>
    %1106 = vector.broadcast %1105 : vector<8x1xf32> to vector<8x8xf32>
    %1107 = arith.subf %1103, %1106 : vector<8x8xf32>
    %1108 = math.exp %1107 : vector<8x8xf32>
    %cst_413 = arith.constant dense<0.000000e+00> : vector<8xf32>
    %1109 = vector.multi_reduction <add>, %1108, %cst_413 [1] : vector<8x8xf32> to vector<8xf32>
    %1110 = vector.shape_cast %1109 : vector<8xf32> to vector<8x1xf32>
    %1111 = tpu.reciprocal %1110 {approx = true} : vector<8x1xf32> -> vector<8x1xf32>
    %1112 = vector.broadcast %1111 : vector<8x1xf32> to vector<8x8xf32>
    %1113 = arith.mulf %1108, %1112 : vector<8x8xf32>
    %cst_414 = arith.constant dense<0.000000e+00> : vector<8x8xf32>
    %1114 = tpu.matmul %1113, %1102, %cst_414 {dimension_numbers = #tpu.dot_dimension_numbers<[1], [0], [0], [1], [0, 0, 1, 1], [], []>} : vector<8x8xf32>, vector<8x8xf32>, vector<8x8xf32> -> vector<8x8xf32>
    %1115 = vector.extract_strided_slice %1067 {offsets = [0, 24], sizes = [8, 8], strides = [1, 1]} : vector<8x32xf32> to vector<8x8xf32>
    %1116 = vector.extract_strided_slice %1068 {offsets = [0, 24], sizes = [8, 8], strides = [1, 1]} : vector<8x32xf32> to vector<8x8xf32>
    %1117 = vector.extract_strided_slice %1069 {offsets = [0, 24], sizes = [8, 8], strides = [1, 1]} : vector<8x32xf32> to vector<8x8xf32>
    %cst_415 = arith.constant dense<0.000000e+00> : vector<8x8xf32>
    %1118 = tpu.matmul %1115, %1116, %cst_415 {dimension_numbers = #tpu.dot_dimension_numbers<[1], [1], [0], [0], [0, 0, 1, 0], [], []>} : vector<8x8xf32>, vector<8x8xf32>, vector<8x8xf32> -> vector<8x8xf32>
    %cst_416 = arith.constant dense<0xFF800000> : vector<8xf32>
    %1119 = vector.multi_reduction <maximumf>, %1118, %cst_416 [1] : vector<8x8xf32> to vector<8xf32>
    %1120 = vector.shape_cast %1119 : vector<8xf32> to vector<8x1xf32>
    %1121 = vector.broadcast %1120 : vector<8x1xf32> to vector<8x8xf32>
    %1122 = arith.subf %1118, %1121 : vector<8x8xf32>
    %1123 = math.exp %1122 : vector<8x8xf32>
    %cst_417 = arith.constant dense<0.000000e+00> : vector<8xf32>
    %1124 = vector.multi_reduction <add>, %1123, %cst_417 [1] : vector<8x8xf32> to vector<8xf32>
    %1125 = vector.shape_cast %1124 : vector<8xf32> to vector<8x1xf32>
    %1126 = tpu.reciprocal %1125 {approx = true} : vector<8x1xf32> -> vector<8x1xf32>
    %1127 = vector.broadcast %1126 : vector<8x1xf32> to vector<8x8xf32>
    %1128 = arith.mulf %1123, %1127 : vector<8x8xf32>
    %cst_418 = arith.constant dense<0.000000e+00> : vector<8x8xf32>
    %1129 = tpu.matmul %1128, %1117, %cst_418 {dimension_numbers = #tpu.dot_dimension_numbers<[1], [0], [0], [1], [0, 0, 1, 1], [], []>} : vector<8x8xf32>, vector<8x8xf32>, vector<8x8xf32> -> vector<8x8xf32>
    %1130 = tpu.concatenate %1084, %1099, %1114, %1129 in 0 : vector<8x8xf32>, vector<8x8xf32>, vector<8x8xf32>, vector<8x8xf32> -> vector<32x8xf32>
    %cst_419 = arith.constant dense<0.000000e+00> : vector<32x8xf32>
    %1131 = tpu.matmul %0, %1130, %cst_419 {dimension_numbers = #tpu.dot_dimension_numbers<[1], [0], [0], [1], [0, 0, 1, 1], [], []>} : vector<32x32xf32>, vector<32x8xf32>, vector<32x8xf32> -> vector<32x8xf32>
    %1132 = vector.extract_strided_slice %1131 {offsets = [0, 0], sizes = [8, 8], strides = [1, 1]} : vector<32x8xf32> to vector<8x8xf32>
    %1133 = vector.extract_strided_slice %1131 {offsets = [8, 0], sizes = [8, 8], strides = [1, 1]} : vector<32x8xf32> to vector<8x8xf32>
    %1134 = vector.extract_strided_slice %1131 {offsets = [16, 0], sizes = [8, 8], strides = [1, 1]} : vector<32x8xf32> to vector<8x8xf32>
    %1135 = vector.extract_strided_slice %1131 {offsets = [24, 0], sizes = [8, 8], strides = [1, 1]} : vector<32x8xf32> to vector<8x8xf32>
    %1136 = tpu.concatenate %1132, %1133, %1134, %1135 in 1 : vector<8x8xf32>, vector<8x8xf32>, vector<8x8xf32>, vector<8x8xf32> -> vector<8x32xf32>
    %1137 = vector.extract_strided_slice %1061 {offsets = [8, 0], sizes = [8, 32], strides = [1, 1]} : vector<16x32xf32> to vector<8x32xf32>
    %1138 = vector.extract_strided_slice %1065 {offsets = [8, 0], sizes = [8, 32], strides = [1, 1]} : vector<16x32xf32> to vector<8x32xf32>
    %1139 = vector.extract_strided_slice %1066 {offsets = [8, 0], sizes = [8, 32], strides = [1, 1]} : vector<16x32xf32> to vector<8x32xf32>
    %1140 = vector.extract_strided_slice %1137 {offsets = [0, 0], sizes = [8, 8], strides = [1, 1]} : vector<8x32xf32> to vector<8x8xf32>
    %1141 = vector.extract_strided_slice %1138 {offsets = [0, 0], sizes = [8, 8], strides = [1, 1]} : vector<8x32xf32> to vector<8x8xf32>
    %1142 = vector.extract_strided_slice %1139 {offsets = [0, 0], sizes = [8, 8], strides = [1, 1]} : vector<8x32xf32> to vector<8x8xf32>
    %cst_420 = arith.constant dense<0.000000e+00> : vector<8x8xf32>
    %1143 = tpu.matmul %1140, %1141, %cst_420 {dimension_numbers = #tpu.dot_dimension_numbers<[1], [1], [0], [0], [0, 0, 1, 0], [], []>} : vector<8x8xf32>, vector<8x8xf32>, vector<8x8xf32> -> vector<8x8xf32>
    %cst_421 = arith.constant dense<0xFF800000> : vector<8xf32>
    %1144 = vector.multi_reduction <maximumf>, %1143, %cst_421 [1] : vector<8x8xf32> to vector<8xf32>
    %1145 = vector.shape_cast %1144 : vector<8xf32> to vector<8x1xf32>
    %1146 = vector.broadcast %1145 : vector<8x1xf32> to vector<8x8xf32>
    %1147 = arith.subf %1143, %1146 : vector<8x8xf32>
    %1148 = math.exp %1147 : vector<8x8xf32>
    %cst_422 = arith.constant dense<0.000000e+00> : vector<8xf32>
    %1149 = vector.multi_reduction <add>, %1148, %cst_422 [1] : vector<8x8xf32> to vector<8xf32>
    %1150 = vector.shape_cast %1149 : vector<8xf32> to vector<8x1xf32>
    %1151 = tpu.reciprocal %1150 {approx = true} : vector<8x1xf32> -> vector<8x1xf32>
    %1152 = vector.broadcast %1151 : vector<8x1xf32> to vector<8x8xf32>
    %1153 = arith.mulf %1148, %1152 : vector<8x8xf32>
    %cst_423 = arith.constant dense<0.000000e+00> : vector<8x8xf32>
    %1154 = tpu.matmul %1153, %1142, %cst_423 {dimension_numbers = #tpu.dot_dimension_numbers<[1], [0], [0], [1], [0, 0, 1, 1], [], []>} : vector<8x8xf32>, vector<8x8xf32>, vector<8x8xf32> -> vector<8x8xf32>
    %1155 = vector.extract_strided_slice %1137 {offsets = [0, 8], sizes = [8, 8], strides = [1, 1]} : vector<8x32xf32> to vector<8x8xf32>
    %1156 = vector.extract_strided_slice %1138 {offsets = [0, 8], sizes = [8, 8], strides = [1, 1]} : vector<8x32xf32> to vector<8x8xf32>
    %1157 = vector.extract_strided_slice %1139 {offsets = [0, 8], sizes = [8, 8], strides = [1, 1]} : vector<8x32xf32> to vector<8x8xf32>
    %cst_424 = arith.constant dense<0.000000e+00> : vector<8x8xf32>
    %1158 = tpu.matmul %1155, %1156, %cst_424 {dimension_numbers = #tpu.dot_dimension_numbers<[1], [1], [0], [0], [0, 0, 1, 0], [], []>} : vector<8x8xf32>, vector<8x8xf32>, vector<8x8xf32> -> vector<8x8xf32>
    %cst_425 = arith.constant dense<0xFF800000> : vector<8xf32>
    %1159 = vector.multi_reduction <maximumf>, %1158, %cst_425 [1] : vector<8x8xf32> to vector<8xf32>
    %1160 = vector.shape_cast %1159 : vector<8xf32> to vector<8x1xf32>
    %1161 = vector.broadcast %1160 : vector<8x1xf32> to vector<8x8xf32>
    %1162 = arith.subf %1158, %1161 : vector<8x8xf32>
    %1163 = math.exp %1162 : vector<8x8xf32>
    %cst_426 = arith.constant dense<0.000000e+00> : vector<8xf32>
    %1164 = vector.multi_reduction <add>, %1163, %cst_426 [1] : vector<8x8xf32> to vector<8xf32>
    %1165 = vector.shape_cast %1164 : vector<8xf32> to vector<8x1xf32>
    %1166 = tpu.reciprocal %1165 {approx = true} : vector<8x1xf32> -> vector<8x1xf32>
    %1167 = vector.broadcast %1166 : vector<8x1xf32> to vector<8x8xf32>
    %1168 = arith.mulf %1163, %1167 : vector<8x8xf32>
    %cst_427 = arith.constant dense<0.000000e+00> : vector<8x8xf32>
    %1169 = tpu.matmul %1168, %1157, %cst_427 {dimension_numbers = #tpu.dot_dimension_numbers<[1], [0], [0], [1], [0, 0, 1, 1], [], []>} : vector<8x8xf32>, vector<8x8xf32>, vector<8x8xf32> -> vector<8x8xf32>
    %1170 = vector.extract_strided_slice %1137 {offsets = [0, 16], sizes = [8, 8], strides = [1, 1]} : vector<8x32xf32> to vector<8x8xf32>
    %1171 = vector.extract_strided_slice %1138 {offsets = [0, 16], sizes = [8, 8], strides = [1, 1]} : vector<8x32xf32> to vector<8x8xf32>
    %1172 = vector.extract_strided_slice %1139 {offsets = [0, 16], sizes = [8, 8], strides = [1, 1]} : vector<8x32xf32> to vector<8x8xf32>
    %cst_428 = arith.constant dense<0.000000e+00> : vector<8x8xf32>
    %1173 = tpu.matmul %1170, %1171, %cst_428 {dimension_numbers = #tpu.dot_dimension_numbers<[1], [1], [0], [0], [0, 0, 1, 0], [], []>} : vector<8x8xf32>, vector<8x8xf32>, vector<8x8xf32> -> vector<8x8xf32>
    %cst_429 = arith.constant dense<0xFF800000> : vector<8xf32>
    %1174 = vector.multi_reduction <maximumf>, %1173, %cst_429 [1] : vector<8x8xf32> to vector<8xf32>
    %1175 = vector.shape_cast %1174 : vector<8xf32> to vector<8x1xf32>
    %1176 = vector.broadcast %1175 : vector<8x1xf32> to vector<8x8xf32>
    %1177 = arith.subf %1173, %1176 : vector<8x8xf32>
    %1178 = math.exp %1177 : vector<8x8xf32>
    %cst_430 = arith.constant dense<0.000000e+00> : vector<8xf32>
    %1179 = vector.multi_reduction <add>, %1178, %cst_430 [1] : vector<8x8xf32> to vector<8xf32>
    %1180 = vector.shape_cast %1179 : vector<8xf32> to vector<8x1xf32>
    %1181 = tpu.reciprocal %1180 {approx = true} : vector<8x1xf32> -> vector<8x1xf32>
    %1182 = vector.broadcast %1181 : vector<8x1xf32> to vector<8x8xf32>
    %1183 = arith.mulf %1178, %1182 : vector<8x8xf32>
    %cst_431 = arith.constant dense<0.000000e+00> : vector<8x8xf32>
    %1184 = tpu.matmul %1183, %1172, %cst_431 {dimension_numbers = #tpu.dot_dimension_numbers<[1], [0], [0], [1], [0, 0, 1, 1], [], []>} : vector<8x8xf32>, vector<8x8xf32>, vector<8x8xf32> -> vector<8x8xf32>
    %1185 = vector.extract_strided_slice %1137 {offsets = [0, 24], sizes = [8, 8], strides = [1, 1]} : vector<8x32xf32> to vector<8x8xf32>
    %1186 = vector.extract_strided_slice %1138 {offsets = [0, 24], sizes = [8, 8], strides = [1, 1]} : vector<8x32xf32> to vector<8x8xf32>
    %1187 = vector.extract_strided_slice %1139 {offsets = [0, 24], sizes = [8, 8], strides = [1, 1]} : vector<8x32xf32> to vector<8x8xf32>
    %cst_432 = arith.constant dense<0.000000e+00> : vector<8x8xf32>
    %1188 = tpu.matmul %1185, %1186, %cst_432 {dimension_numbers = #tpu.dot_dimension_numbers<[1], [1], [0], [0], [0, 0, 1, 0], [], []>} : vector<8x8xf32>, vector<8x8xf32>, vector<8x8xf32> -> vector<8x8xf32>
    %cst_433 = arith.constant dense<0xFF800000> : vector<8xf32>
    %1189 = vector.multi_reduction <maximumf>, %1188, %cst_433 [1] : vector<8x8xf32> to vector<8xf32>
    %1190 = vector.shape_cast %1189 : vector<8xf32> to vector<8x1xf32>
    %1191 = vector.broadcast %1190 : vector<8x1xf32> to vector<8x8xf32>
    %1192 = arith.subf %1188, %1191 : vector<8x8xf32>
    %1193 = math.exp %1192 : vector<8x8xf32>
    %cst_434 = arith.constant dense<0.000000e+00> : vector<8xf32>
    %1194 = vector.multi_reduction <add>, %1193, %cst_434 [1] : vector<8x8xf32> to vector<8xf32>
    %1195 = vector.shape_cast %1194 : vector<8xf32> to vector<8x1xf32>
    %1196 = tpu.reciprocal %1195 {approx = true} : vector<8x1xf32> -> vector<8x1xf32>
    %1197 = vector.broadcast %1196 : vector<8x1xf32> to vector<8x8xf32>
    %1198 = arith.mulf %1193, %1197 : vector<8x8xf32>
    %cst_435 = arith.constant dense<0.000000e+00> : vector<8x8xf32>
    %1199 = tpu.matmul %1198, %1187, %cst_435 {dimension_numbers = #tpu.dot_dimension_numbers<[1], [0], [0], [1], [0, 0, 1, 1], [], []>} : vector<8x8xf32>, vector<8x8xf32>, vector<8x8xf32> -> vector<8x8xf32>
    %1200 = tpu.concatenate %1154, %1169, %1184, %1199 in 0 : vector<8x8xf32>, vector<8x8xf32>, vector<8x8xf32>, vector<8x8xf32> -> vector<32x8xf32>
    %cst_436 = arith.constant dense<0.000000e+00> : vector<32x8xf32>
    %1201 = tpu.matmul %0, %1200, %cst_436 {dimension_numbers = #tpu.dot_dimension_numbers<[1], [0], [0], [1], [0, 0, 1, 1], [], []>} : vector<32x32xf32>, vector<32x8xf32>, vector<32x8xf32> -> vector<32x8xf32>
    %1202 = vector.extract_strided_slice %1201 {offsets = [0, 0], sizes = [8, 8], strides = [1, 1]} : vector<32x8xf32> to vector<8x8xf32>
    %1203 = vector.extract_strided_slice %1201 {offsets = [8, 0], sizes = [8, 8], strides = [1, 1]} : vector<32x8xf32> to vector<8x8xf32>
    %1204 = vector.extract_strided_slice %1201 {offsets = [16, 0], sizes = [8, 8], strides = [1, 1]} : vector<32x8xf32> to vector<8x8xf32>
    %1205 = vector.extract_strided_slice %1201 {offsets = [24, 0], sizes = [8, 8], strides = [1, 1]} : vector<32x8xf32> to vector<8x8xf32>
    %1206 = tpu.concatenate %1202, %1203, %1204, %1205 in 1 : vector<8x8xf32>, vector<8x8xf32>, vector<8x8xf32>, vector<8x8xf32> -> vector<8x32xf32>
    %1207 = tpu.concatenate %1136, %1206 in 0 : vector<8x32xf32>, vector<8x32xf32> -> vector<16x32xf32>
    %cst_437 = arith.constant dense<0.000000e+00> : vector<16x32xf32>
    %1208 = tpu.matmul %1207, %1056, %cst_437 {dimension_numbers = #tpu.dot_dimension_numbers<[1], [0], [0], [1], [0, 0, 1, 1], [], []>} : vector<16x32xf32>, vector<32x32xf32>, vector<16x32xf32> -> vector<16x32xf32>
    %1209 = vector.broadcast %1058 : vector<1x32xf32> to vector<16x32xf32>
    %1210 = arith.addf %1208, %1209 : vector<16x32xf32>
    %1211 = arith.addf %1046, %1210 : vector<16x32xf32>
    %c1_438 = arith.constant 1 : index
    %c0_439 = arith.constant 0 : index
    %c0_440 = arith.constant 0 : index
    %1212 = vector.load %arg23[%c1_438, %c0_439, %c0_440] : memref<2x1x32xf32, #tpu.memory_space<vmem>>, vector<1x1x32xf32>
    %1213 = vector.shape_cast %1212 : vector<1x1x32xf32> to vector<1x32xf32>
    %c1_441 = arith.constant 1 : index
    %c0_442 = arith.constant 0 : index
    %c0_443 = arith.constant 0 : index
    %1214 = vector.load %arg24[%c1_441, %c0_442, %c0_443] : memref<2x1x32xf32, #tpu.memory_space<vmem>>, vector<1x1x32xf32>
    %1215 = vector.shape_cast %1214 : vector<1x1x32xf32> to vector<1x32xf32>
    %cst_444 = arith.constant dense<0.000000e+00> : vector<16xf32>
    %1216 = vector.multi_reduction <add>, %1211, %cst_444 [1] : vector<16x32xf32> to vector<16xf32>
    %1217 = vector.shape_cast %1216 : vector<16xf32> to vector<16x1xf32>
    %cst_445 = arith.constant 3.200000e+01 : f32
    %1218 = vector.broadcast %cst_445 : f32 to vector<16x1xf32>
    %1219 = arith.divf %1217, %1218 : vector<16x1xf32>
    %1220 = vector.broadcast %1219 : vector<16x1xf32> to vector<16x32xf32>
    %1221 = arith.subf %1211, %1220 : vector<16x32xf32>
    %1222 = arith.mulf %1221, %1221 : vector<16x32xf32>
    %cst_446 = arith.constant dense<0.000000e+00> : vector<16xf32>
    %1223 = vector.multi_reduction <add>, %1222, %cst_446 [1] : vector<16x32xf32> to vector<16xf32>
    %1224 = vector.shape_cast %1223 : vector<16xf32> to vector<16x1xf32>
    %cst_447 = arith.constant 3.200000e+01 : f32
    %1225 = vector.broadcast %cst_447 : f32 to vector<16x1xf32>
    %1226 = arith.divf %1224, %1225 : vector<16x1xf32>
    %cst_448 = arith.constant 9.99999974E-6 : f32
    %1227 = vector.broadcast %cst_448 : f32 to vector<16x1xf32>
    %1228 = arith.addf %1226, %1227 : vector<16x1xf32>
    %1229 = math.rsqrt %1228 : vector<16x1xf32>
    %1230 = vector.broadcast %1229 : vector<16x1xf32> to vector<16x32xf32>
    %1231 = arith.mulf %1221, %1230 : vector<16x32xf32>
    %1232 = vector.broadcast %1213 : vector<1x32xf32> to vector<16x32xf32>
    %1233 = arith.mulf %1231, %1232 : vector<16x32xf32>
    %1234 = vector.broadcast %1215 : vector<1x32xf32> to vector<16x32xf32>
    %1235 = arith.addf %1233, %1234 : vector<16x32xf32>
    %c1_449 = arith.constant 1 : index
    %c0_450 = arith.constant 0 : index
    %c0_451 = arith.constant 0 : index
    %1236 = vector.load %arg25[%c1_449, %c0_450, %c0_451] : memref<2x32x128xf32, #tpu.memory_space<vmem>>, vector<1x32x128xf32>
    %1237 = vector.shape_cast %1236 : vector<1x32x128xf32> to vector<32x128xf32>
    %cst_452 = arith.constant dense<0.000000e+00> : vector<16x128xf32>
    %1238 = tpu.matmul %1235, %1237, %cst_452 {dimension_numbers = #tpu.dot_dimension_numbers<[1], [0], [0], [1], [0, 0, 1, 1], [], []>} : vector<16x32xf32>, vector<32x128xf32>, vector<16x128xf32> -> vector<16x128xf32>
    %c1_453 = arith.constant 1 : index
    %c0_454 = arith.constant 0 : index
    %c0_455 = arith.constant 0 : index
    %1239 = vector.load %arg26[%c1_453, %c0_454, %c0_455] : memref<2x1x128xf32, #tpu.memory_space<vmem>>, vector<1x1x128xf32>
    %1240 = vector.shape_cast %1239 : vector<1x1x128xf32> to vector<1x128xf32>
    %1241 = vector.broadcast %1240 : vector<1x128xf32> to vector<16x128xf32>
    %1242 = arith.addf %1238, %1241 : vector<16x128xf32>
    %cst_456 = arith.constant 0.000000e+00 : f32
    %1243 = vector.broadcast %cst_456 : f32 to vector<16x128xf32>
    %1244 = arith.maximumf %1242, %1243 : vector<16x128xf32>
    %c1_457 = arith.constant 1 : index
    %c0_458 = arith.constant 0 : index
    %c0_459 = arith.constant 0 : index
    %1245 = vector.load %arg27[%c1_457, %c0_458, %c0_459] : memref<2x128x32xf32, #tpu.memory_space<vmem>>, vector<1x128x32xf32>
    %1246 = vector.shape_cast %1245 : vector<1x128x32xf32> to vector<128x32xf32>
    %cst_460 = arith.constant dense<0.000000e+00> : vector<16x32xf32>
    %1247 = tpu.matmul %1244, %1246, %cst_460 {dimension_numbers = #tpu.dot_dimension_numbers<[1], [0], [0], [1], [0, 0, 1, 1], [], []>} : vector<16x128xf32>, vector<128x32xf32>, vector<16x32xf32> -> vector<16x32xf32>
    %c1_461 = arith.constant 1 : index
    %c0_462 = arith.constant 0 : index
    %c0_463 = arith.constant 0 : index
    %1248 = vector.load %arg28[%c1_461, %c0_462, %c0_463] : memref<2x1x32xf32, #tpu.memory_space<vmem>>, vector<1x1x32xf32>
    %1249 = vector.shape_cast %1248 : vector<1x1x32xf32> to vector<1x32xf32>
    %1250 = vector.broadcast %1249 : vector<1x32xf32> to vector<16x32xf32>
    %1251 = arith.addf %1247, %1250 : vector<16x32xf32>
    %1252 = arith.addf %1235, %1251 : vector<16x32xf32>
    %c1_464 = arith.constant 1 : index
    %c0_465 = arith.constant 0 : index
    %c0_466 = arith.constant 0 : index
    %1253 = vector.load %arg23[%c1_464, %c0_465, %c0_466] : memref<2x1x32xf32, #tpu.memory_space<vmem>>, vector<1x1x32xf32>
    %1254 = vector.shape_cast %1253 : vector<1x1x32xf32> to vector<1x32xf32>
    %c1_467 = arith.constant 1 : index
    %c0_468 = arith.constant 0 : index
    %c0_469 = arith.constant 0 : index
    %1255 = vector.load %arg24[%c1_467, %c0_468, %c0_469] : memref<2x1x32xf32, #tpu.memory_space<vmem>>, vector<1x1x32xf32>
    %1256 = vector.shape_cast %1255 : vector<1x1x32xf32> to vector<1x32xf32>
    %cst_470 = arith.constant dense<0.000000e+00> : vector<16xf32>
    %1257 = vector.multi_reduction <add>, %1252, %cst_470 [1] : vector<16x32xf32> to vector<16xf32>
    %1258 = vector.shape_cast %1257 : vector<16xf32> to vector<16x1xf32>
    %cst_471 = arith.constant 3.200000e+01 : f32
    %1259 = vector.broadcast %cst_471 : f32 to vector<16x1xf32>
    %1260 = arith.divf %1258, %1259 : vector<16x1xf32>
    %1261 = vector.broadcast %1260 : vector<16x1xf32> to vector<16x32xf32>
    %1262 = arith.subf %1252, %1261 : vector<16x32xf32>
    %1263 = arith.mulf %1262, %1262 : vector<16x32xf32>
    %cst_472 = arith.constant dense<0.000000e+00> : vector<16xf32>
    %1264 = vector.multi_reduction <add>, %1263, %cst_472 [1] : vector<16x32xf32> to vector<16xf32>
    %1265 = vector.shape_cast %1264 : vector<16xf32> to vector<16x1xf32>
    %cst_473 = arith.constant 3.200000e+01 : f32
    %1266 = vector.broadcast %cst_473 : f32 to vector<16x1xf32>
    %1267 = arith.divf %1265, %1266 : vector<16x1xf32>
    %cst_474 = arith.constant 9.99999974E-6 : f32
    %1268 = vector.broadcast %cst_474 : f32 to vector<16x1xf32>
    %1269 = arith.addf %1267, %1268 : vector<16x1xf32>
    %1270 = math.rsqrt %1269 : vector<16x1xf32>
    %1271 = vector.broadcast %1270 : vector<16x1xf32> to vector<16x32xf32>
    %1272 = arith.mulf %1262, %1271 : vector<16x32xf32>
    %1273 = vector.broadcast %1254 : vector<1x32xf32> to vector<16x32xf32>
    %1274 = arith.mulf %1272, %1273 : vector<16x32xf32>
    %1275 = vector.broadcast %1256 : vector<1x32xf32> to vector<16x32xf32>
    %1276 = arith.addf %1274, %1275 : vector<16x32xf32>
    %c0_475 = arith.constant 0 : index
    %c0_476 = arith.constant 0 : index
    %1277 = vector.load %arg29[%c0_475, %c0_476] : memref<32x50xf32, #tpu.memory_space<vmem>>, vector<32x50xf32>
    %cst_477 = arith.constant dense<0.000000e+00> : vector<16x50xf32>
    %1278 = tpu.matmul %1276, %1277, %cst_477 {dimension_numbers = #tpu.dot_dimension_numbers<[1], [0], [0], [1], [0, 0, 1, 1], [], []>} : vector<16x32xf32>, vector<32x50xf32>, vector<16x50xf32> -> vector<16x50xf32>
    %c0_478 = arith.constant 0 : index
    %c0_479 = arith.constant 0 : index
    %1279 = vector.load %arg30[%c0_478, %c0_479] : memref<1x50xf32, #tpu.memory_space<vmem>>, vector<1x50xf32>
    %1280 = vector.broadcast %1279 : vector<1x50xf32> to vector<16x50xf32>
    %1281 = arith.addf %1278, %1280 : vector<16x50xf32>
    %cst_480 = arith.constant dense<0xFF800000> : vector<16xf32>
    %1282 = vector.multi_reduction <maximumf>, %1281, %cst_480 [1] : vector<16x50xf32> to vector<16xf32>
    %1283 = vector.shape_cast %1282 : vector<16xf32> to vector<16x1xf32>
    %1284 = vector.broadcast %1283 : vector<16x1xf32> to vector<16x50xf32>
    %1285 = arith.subf %1281, %1284 : vector<16x50xf32>
    %1286 = math.exp %1285 : vector<16x50xf32>
    %cst_481 = arith.constant dense<0.000000e+00> : vector<16xf32>
    %1287 = vector.multi_reduction <add>, %1286, %cst_481 [1] : vector<16x50xf32> to vector<16xf32>
    %1288 = vector.shape_cast %1287 : vector<16xf32> to vector<16x1xf32>
    %1289 = vector.broadcast %1288 : vector<16x1xf32> to vector<16x50xf32>
    %1290 = arith.divf %1286, %1289 : vector<16x50xf32>
    %c0_482 = arith.constant 0 : index
    %c0_483 = arith.constant 0 : index
    %1291 = vector.load %arg31[%c0_482, %c0_483] : memref<16x50xf32, #tpu.memory_space<vmem>>, vector<16x50xf32>
    tpu.vector_store %arg31[%c0_482, %c0_483], %1290 {strides = array<i32>} : memref<16x50xf32, #tpu.memory_space<vmem>>, vector<16x50xf32>,
    return
  }
}

</mosaic_0001>

<llo_original>
// kernel: _transformer_forward.1
$region0: #{_transformer_forward.1}
  #allocation0 [shape = 'u32[]', space=smem, size = 0x4, offset = 0x4, fixed_abs, tag = 'smem constant byte address 0x4 - core index']
  #allocation1 [shape = 'u32[72,128]{1,0:T(1,128)}', space=vmem, size = 0x9000, scoped, tag = 'internal scratch']
  %s0 = inlined_call_operand.smem [shape: u32[32], index: -1, kind: input, shape index: {}]
  %s1 = sld [smem:[%s0]]
  %s2 = scalar_lea.smem %s0, 1
  %s3 = sld [smem:[%s2]]
  %s4 = scalar_lea.smem %s0, 2
  %s5 = sld [smem:[%s4]]
  %s6 = scalar_lea.smem %s0, 3
  %s7 = sld [smem:[%s6]]
  %s8 = scalar_lea.smem %s0, 4
  %s9 = sld [smem:[%s8]]
  %s10 = scalar_lea.smem %s0, 5
  %s11 = sld [smem:[%s10]]
  %s12 = scalar_lea.smem %s0, 6
  %s13 = sld [smem:[%s12]]
  %s14 = scalar_lea.smem %s0, 7
  %s15 = sld [smem:[%s14]]
  %s16 = scalar_lea.smem %s0, 8
  %s17 = sld [smem:[%s16]]
  %s18 = scalar_lea.smem %s0, 9
  %s19 = sld [smem:[%s18]]
  %s20 = scalar_lea.smem %s0, 10
  %s21 = sld [smem:[%s20]]
  %s22 = scalar_lea.smem %s0, 11
  %s23 = sld [smem:[%s22]]
  %s24 = scalar_lea.smem %s0, 12
  %s25 = sld [smem:[%s24]]
  %s26 = scalar_lea.smem %s0, 13
  %s27 = sld [smem:[%s26]]
  %s28 = scalar_lea.smem %s0, 14
  %s29 = sld [smem:[%s28]]
  %s30 = scalar_lea.smem %s0, 15
  %s31 = sld [smem:[%s30]]
  %s32 = scalar_lea.smem %s0, 16
  %s33 = sld [smem:[%s32]]
  %s34 = scalar_lea.smem %s0, 17
  %s35 = sld [smem:[%s34]]
  %s36 = scalar_lea.smem %s0, 18
  %s37 = sld [smem:[%s36]]
  %s38 = scalar_lea.smem %s0, 19
  %s39 = sld [smem:[%s38]]
  %s40 = scalar_lea.smem %s0, 20
  %s41 = sld [smem:[%s40]]
  %s42 = scalar_lea.smem %s0, 21
  %s43 = sld [smem:[%s42]]
  %s44 = scalar_lea.smem %s0, 22
  %s45 = sld [smem:[%s44]]
  %s46 = scalar_lea.smem %s0, 23
  %s47 = sld [smem:[%s46]]
  %s48 = scalar_lea.smem %s0, 24
  %s49 = sld [smem:[%s48]]
  %s50 = scalar_lea.smem %s0, 25
  %s51 = sld [smem:[%s50]]
  %s52 = scalar_lea.smem %s0, 26
  %s53 = sld [smem:[%s52]]
  %s54 = scalar_lea.smem %s0, 27
  %s55 = sld [smem:[%s54]]
  %s56 = scalar_lea.smem %s0, 28
  %s57 = sld [smem:[%s56]]
  %s58 = scalar_lea.smem %s0, 29
  %s59 = sld [smem:[%s58]]
  %s60 = scalar_lea.smem %s0, 30
  %s61 = sld [smem:[%s60]]
  %s62 = scalar_lea.smem %s0, 31
  %s63 = sld [smem:[%s62]]
  %s64 = sld [smem:[#allocation0]]
  $region134: #{_transformer_forward.1} parent=0
    _
  %s66 = ssub.s32 1, %s64
  %s67 = scalar_select 0, %s66, %s64
  $region1: #{_transformer_forward.1} parent=0
    #allocation2 [shape = 'u8[8192]{0}', space=vmem, size = 0x2000, scoped, tag = 'output window, operand 0, single buffered']
    #allocation3 [shape = 's32[1]{0}', space=sflag, size = 0x4, scoped, tag = 'scoped memory for _transformer_forward.1']
    %68 = vsyncpa [#allocation3], 0
    // Predicated region
    $region2: #{_transformer_forward.1} parent=1 // pred_check
      _
    $region3: #{_transformer_forward.1} parent=1 // pred_check_branch
      %70 = sbr.rel (0) target = $region5
    $region4: #{_transformer_forward.1} parent=1 // pred_region
      _
    $region5: #{_transformer_forward.1} parent=1 // pred_fallthru
      _
    // Predicated region
    $region6: #{_transformer_forward.1} parent=1 // pred_check
      _
    $region7: #{_transformer_forward.1} parent=1 // pred_check_branch
      %72 = sbr.rel (0) target = $region9
    $region8: #{_transformer_forward.1} parent=1 // pred_region
      _
    $region9: #{_transformer_forward.1} parent=1 // pred_fallthru
      _
    // Predicated region
    $region10: #{_transformer_forward.1} parent=1 // pred_check
      _
    $region11: #{_transformer_forward.1} parent=1 // pred_check_branch
      %74 = sbr.rel (0) target = $region13
    $region12: #{_transformer_forward.1} parent=1 // pred_region
      _
    $region13: #{_transformer_forward.1} parent=1 // pred_fallthru
      _
    // Predicated region
    $region14: #{_transformer_forward.1} parent=1 // pred_check
      _
    $region15: #{_transformer_forward.1} parent=1 // pred_check_branch
      %76 = sbr.rel (0) target = $region17
    $region16: #{_transformer_forward.1} parent=1 // pred_region
      _
    $region17: #{_transformer_forward.1} parent=1 // pred_fallthru
      _
    // Predicated region
    $region18: #{_transformer_forward.1} parent=1 // pred_check
      _
    $region19: #{_transformer_forward.1} parent=1 // pred_check_branch
      %78 = sbr.rel (0) target = $region21
    $region20: #{_transformer_forward.1} parent=1 // pred_region
      _
    $region21: #{_transformer_forward.1} parent=1 // pred_fallthru
      _
    // Predicated region
    $region22: #{_transformer_forward.1} parent=1 // pred_check
      _
    $region23: #{_transformer_forward.1} parent=1 // pred_check_branch
      %80 = sbr.rel (0) target = $region25
    $region24: #{_transformer_forward.1} parent=1 // pred_region
      _
    $region25: #{_transformer_forward.1} parent=1 // pred_fallthru
      _
    // Predicated region
    $region26: #{_transformer_forward.1} parent=1 // pred_check
      _
    $region27: #{_transformer_forward.1} parent=1 // pred_check_branch
      %82 = sbr.rel (0) target = $region29
    $region28: #{_transformer_forward.1} parent=1 // pred_region
      _
    $region29: #{_transformer_forward.1} parent=1 // pred_fallthru
      _
    // Predicated region
    $region30: #{_transformer_forward.1} parent=1 // pred_check
      _
    $region31: #{_transformer_forward.1} parent=1 // pred_check_branch
      %84 = sbr.rel (0) target = $region33
    $region32: #{_transformer_forward.1} parent=1 // pred_region
      _
    $region33: #{_transformer_forward.1} parent=1 // pred_fallthru
      _
    // Predicated region
    $region34: #{_transformer_forward.1} parent=1 // pred_check
      _
    $region35: #{_transformer_forward.1} parent=1 // pred_check_branch
      %86 = sbr.rel (0) target = $region37
    $region36: #{_transformer_forward.1} parent=1 // pred_region
      _
    $region37: #{_transformer_forward.1} parent=1 // pred_fallthru
      _
    // Predicated region
    $region38: #{_transformer_forward.1} parent=1 // pred_check
      _
    $region39: #{_transformer_forward.1} parent=1 // pred_check_branch
      %88 = sbr.rel (0) target = $region41
    $region40: #{_transformer_forward.1} parent=1 // pred_region
      _
    $region41: #{_transformer_forward.1} parent=1 // pred_fallthru
      _
    // Predicated region
    $region42: #{_transformer_forward.1} parent=1 // pred_check
      _
    $region43: #{_transformer_forward.1} parent=1 // pred_check_branch
      %90 = sbr.rel (0) target = $region45
    $region44: #{_transformer_forward.1} parent=1 // pred_region
      _
    $region45: #{_transformer_forward.1} parent=1 // pred_fallthru
      _
    // Predicated region
    $region46: #{_transformer_forward.1} parent=1 // pred_check
      _
    $region47: #{_transformer_forward.1} parent=1 // pred_check_branch
      %92 = sbr.rel (0) target = $region49
    $region48: #{_transformer_forward.1} parent=1 // pred_region
      _
    $region49: #{_transformer_forward.1} parent=1 // pred_fallthru
      _
    // Predicated region
    $region50: #{_transformer_forward.1} parent=1 // pred_check
      _
    $region51: #{_transformer_forward.1} parent=1 // pred_check_branch
      %94 = sbr.rel (0) target = $region53
    $region52: #{_transformer_forward.1} parent=1 // pred_region
      _
    $region53: #{_transformer_forward.1} parent=1 // pred_fallthru
      _
    // Predicated region
    $region54: #{_transformer_forward.1} parent=1 // pred_check
      _
    $region55: #{_transformer_forward.1} parent=1 // pred_check_branch
      %96 = sbr.rel (0) target = $region57
    $region56: #{_transformer_forward.1} parent=1 // pred_region
      _
    $region57: #{_transformer_forward.1} parent=1 // pred_fallthru
      _
    // Predicated region
    $region58: #{_transformer_forward.1} parent=1 // pred_check
      _
    $region59: #{_transformer_forward.1} parent=1 // pred_check_branch
      %98 = sbr.rel (0) target = $region61
    $region60: #{_transformer_forward.1} parent=1 // pred_region
      _
    $region61: #{_transformer_forward.1} parent=1 // pred_fallthru
      _
    // Predicated region
    $region62: #{_transformer_forward.1} parent=1 // pred_check
      _
    $region63: #{_transformer_forward.1} parent=1 // pred_check_branch
      %100 = sbr.rel (0) target = $region65
    $region64: #{_transformer_forward.1} parent=1 // pred_region
      _
    $region65: #{_transformer_forward.1} parent=1 // pred_fallthru
      _
    // Predicated region
    $region66: #{_transformer_forward.1} parent=1 // pred_check
      _
    $region67: #{_transformer_forward.1} parent=1 // pred_check_branch
      %102 = sbr.rel (0) target = $region69
    $region68: #{_transformer_forward.1} parent=1 // pred_region
      _
    $region69: #{_transformer_forward.1} parent=1 // pred_fallthru
      _
    // Predicated region
    $region70: #{_transformer_forward.1} parent=1 // pred_check
      _
    $region71: #{_transformer_forward.1} parent=1 // pred_check_branch
      %104 = sbr.rel (0) target = $region73
    $region72: #{_transformer_forward.1} parent=1 // pred_region
      _
    $region73: #{_transformer_forward.1} parent=1 // pred_fallthru
      _
    // Predicated region
    $region74: #{_transformer_forward.1} parent=1 // pred_check
      _
    $region75: #{_transformer_forward.1} parent=1 // pred_check_branch
      %106 = sbr.rel (0) target = $region77
    $region76: #{_transformer_forward.1} parent=1 // pred_region
      _
    $region77: #{_transformer_forward.1} parent=1 // pred_fallthru
      _
    // Predicated region
    $region78: #{_transformer_forward.1} parent=1 // pred_check
      _
    $region79: #{_transformer_forward.1} parent=1 // pred_check_branch
      %108 = sbr.rel (0) target = $region81
    $region80: #{_transformer_forward.1} parent=1 // pred_region
      _
    $region81: #{_transformer_forward.1} parent=1 // pred_fallthru
      _
    // Predicated region
    $region82: #{_transformer_forward.1} parent=1 // pred_check
      _
    $region83: #{_transformer_forward.1} parent=1 // pred_check_branch
      %110 = sbr.rel (0) target = $region85
    $region84: #{_transformer_forward.1} parent=1 // pred_region
      _
    $region85: #{_transformer_forward.1} parent=1 // pred_fallthru
      _
    // Predicated region
    $region86: #{_transformer_forward.1} parent=1 // pred_check
      _
    $region87: #{_transformer_forward.1} parent=1 // pred_check_branch
      %112 = sbr.rel (0) target = $region89
    $region88: #{_transformer_forward.1} parent=1 // pred_region
      _
    $region89: #{_transformer_forward.1} parent=1 // pred_fallthru
      _
    // Predicated region
    $region90: #{_transformer_forward.1} parent=1 // pred_check
      _
    $region91: #{_transformer_forward.1} parent=1 // pred_check_branch
      %114 = sbr.rel (0) target = $region93
    $region92: #{_transformer_forward.1} parent=1 // pred_region
      _
    $region93: #{_transformer_forward.1} parent=1 // pred_fallthru
      _
    // Predicated region
    $region94: #{_transformer_forward.1} parent=1 // pred_check
      _
    $region95: #{_transformer_forward.1} parent=1 // pred_check_branch
      %116 = sbr.rel (0) target = $region97
    $region96: #{_transformer_forward.1} parent=1 // pred_region
      _
    $region97: #{_transformer_forward.1} parent=1 // pred_fallthru
      _
    // Predicated region
    $region98: #{_transformer_forward.1} parent=1 // pred_check
      _
    $region99: #{_transformer_forward.1} parent=1 // pred_check_branch
      %118 = sbr.rel (0) target = $region101
    $region100: #{_transformer_forward.1} parent=1 // pred_region
      _
    $region101: #{_transformer_forward.1} parent=1 // pred_fallthru
      _
    // Predicated region
    $region102: #{_transformer_forward.1} parent=1 // pred_check
      _
    $region103: #{_transformer_forward.1} parent=1 // pred_check_branch
      %120 = sbr.rel (0) target = $region105
    $region104: #{_transformer_forward.1} parent=1 // pred_region
      _
    $region105: #{_transformer_forward.1} parent=1 // pred_fallthru
      _
    // Predicated region
    $region106: #{_transformer_forward.1} parent=1 // pred_check
      _
    $region107: #{_transformer_forward.1} parent=1 // pred_check_branch
      %122 = sbr.rel (0) target = $region109
    $region108: #{_transformer_forward.1} parent=1 // pred_region
      _
    $region109: #{_transformer_forward.1} parent=1 // pred_fallthru
      _
    // Predicated region
    $region110: #{_transformer_forward.1} parent=1 // pred_check
      _
    $region111: #{_transformer_forward.1} parent=1 // pred_check_branch
      %124 = sbr.rel (0) target = $region113
    $region112: #{_transformer_forward.1} parent=1 // pred_region
      _
    $region113: #{_transformer_forward.1} parent=1 // pred_fallthru
      _
    // Predicated region
    $region114: #{_transformer_forward.1} parent=1 // pred_check
      _
    $region115: #{_transformer_forward.1} parent=1 // pred_check_branch
      %126 = sbr.rel (0) target = $region117
    $region116: #{_transformer_forward.1} parent=1 // pred_region
      _
    $region117: #{_transformer_forward.1} parent=1 // pred_fallthru
      _
    // Predicated region
    $region118: #{_transformer_forward.1} parent=1 // pred_check
      _
    $region119: #{_transformer_forward.1} parent=1 // pred_check_branch
      %128 = sbr.rel (0) target = $region121
    $region120: #{_transformer_forward.1} parent=1 // pred_region
      _
    $region121: #{_transformer_forward.1} parent=1 // pred_fallthru
      _
    // Predicated region
    $region122: #{_transformer_forward.1} parent=1 // pred_check
      _
    $region123: #{_transformer_forward.1} parent=1 // pred_check_branch
      %130 = sbr.rel (0) target = $region125
    $region124: #{_transformer_forward.1} parent=1 // pred_region
      _
    $region125: #{_transformer_forward.1} parent=1 // pred_fallthru
      _
    %v131 = vld [vmem:[%s5] sm:$0xff]
    %v132 = vld [vmem:[%s5 + $0x8] sm:$0xff]
    %v133 = vld [vmem:[%s5 + $0x10] sm:$0xff]
    %v134 = vld [vmem:[%s5 + $0x18] sm:$0xff]
    %v135 = vld [vmem:[%s1] sm:$0xff]
    %v136 = vld [vmem:[%s1 + $0x8] sm:$0xff]
    %v137 = vld [vmem:[%s7] sm:$0xff]
    %v138 = vld [vmem:[%s7 + $0x8] sm:$0xff]
    %v139 = vld [vmem:[%s7 + $0x10] sm:$0xff]
    %v140 = vld [vmem:[%s7 + $0x18] sm:$0xff]
    %v141 = vld [vmem:[%s9] sm:$0x1]
    %v142 = vld [vmem:[%s11] sm:$0xff]
    %v143 = vld [vmem:[%s11 + $0x8] sm:$0xff]
    %v144 = vld [vmem:[%s11 + $0x10] sm:$0xff]
    %v145 = vld [vmem:[%s11 + $0x18] sm:$0xff]
    %v146 = vld [vmem:[%s13] sm:$0x1]
    %v148 = vperm.slane %v141, 0
    %vm150 = vcmask 261120
    %v152 = vsel %vm150, %v135, 0
    %v155 = vsel %vm150, %v136, 0
    %157 = vmatpush.msra.mxu0 0.0
    %158 = vmatpush.msra.mxu0 0.0
    %159 = vmatpush.msra.mxu0 0.0
    %160 = vmatpush.msra.mxu0 0.0
    %161 = vmatpush.msra.mxu0 0.0
    %162 = vmatpush.msra.mxu0 0.0
    %163 = vmatpush.msra.mxu0 0.0
    %164 = vmatpush.msra.mxu0 0.0
    %165 = vmatpush.msra.mxu0 0.0
    %166 = vmatpush.msra.mxu0 0.0
    %167 = vmatpush.msra.mxu0 0.0
    %168 = vmatpush.msra.mxu0 0.0
    %169 = vmatpush.msra.mxu0 %v140
    %170 = vmatpush.msra.mxu0 %v139
    %171 = vmatpush.msra.mxu0 %v138
    %172 = vmatpush.msra.mxu0 %v137
    %173 = vmatmul.f32.gmra.mxu0 %v152
    %v174 = vpop.f32.mrf.mxu0
    %v175 = vadd.f32 %v148, %v174
    %176 = vmatmul.f32.gmra.mxu0 %v155
    %v177 = vpop.f32.mrf.mxu0
    %v178 = vadd.f32 %v148, %v177
    %179 = vdwg.mxu0
    %181 = vrot.lane.b32.xlu0 %v175, 96
    %v182 = vpop.permute.xlu0 %181
    %vm183 = vcmask 64512
    %v184 = vsel %vm183, %v175, 0
    %v186 = vsel %vm183, %v182, 0
    %188 = vmatpush.xpose.msra.mxu0 0.0
    %189 = vmatpush.xpose.msra.mxu0 0.0
    %190 = vmatpush.xpose.msra.mxu0 0.0
    %191 = vmatpush.xpose.msra.mxu0 0.0
    %192 = vmatpush.xpose.msra.mxu0 0.0
    %193 = vmatpush.xpose.msra.mxu0 0.0
    %194 = vmatpush.xpose.msra.mxu0 0.0
    %195 = vmatpush.xpose.msra.mxu0 0.0
    %196 = vmatpush.xpose.msra.mxu0 0.0
    %197 = vmatpush.xpose.msra.mxu0 0.0
    %198 = vmatpush.xpose.msra.mxu0 0.0
    %199 = vmatpush.xpose.msra.mxu0 0.0
    %200 = vmatpush.xpose.msra.mxu0 0.0
    %201 = vmatpush.xpose.msra.mxu0 0.0
    %202 = vmatpush.xpose.msra.mxu0 0.0
    %203 = vmatpush.xpose.msra.mxu0 %v186
    %204 = vmatmul.f32.gmra.mxu0 %v184
    %v205 = vpop.f32.mrf.mxu0
    %v206 = vadd.f32 0.0, %v205
    %207 = vdwg.mxu0
    %v208 = vsel %vm183, %v206, -inf
    %209 = vmax.xlane.f32.xlu0 %v208
    %v210 = vpop.xlane.xlu0 %209
    %v211 = vsub.f32 %v206, %v210
    %v212 = vmul.f32 %v211, 1.442695
    %v213 = vpow.pop %v212
    %v214 = vsel %vm183, %v213, 0.0
    %215 = vadd.xlane.f32.xlu0 %v214
    %v216 = vpop.xlane.xlu0 %215
    %v217 = vrcp.pop %v216
    %v218 = vmul.f32 %v213, %v217
    %219 = vrot.lane.b32.xlu0 %v175, 64
    %v220 = vpop.permute.xlu0 %219
    %v223 = vsel %vm183, %v218, 0
    %225 = vmatpush.msra.mxu0 0.0
    %226 = vmatpush.msra.mxu0 0.0
    %227 = vmatpush.msra.mxu0 0.0
    %228 = vmatpush.msra.mxu0 0.0
    %229 = vmatpush.msra.mxu0 0.0
    %230 = vmatpush.msra.mxu0 0.0
    %231 = vmatpush.msra.mxu0 0.0
    %232 = vmatpush.msra.mxu0 0.0
    %233 = vmatpush.msra.mxu0 0.0
    %234 = vmatpush.msra.mxu0 0.0
    %235 = vmatpush.msra.mxu0 0.0
    %236 = vmatpush.msra.mxu0 0.0
    %237 = vmatpush.msra.mxu0 0.0
    %238 = vmatpush.msra.mxu0 0.0
    %239 = vmatpush.msra.mxu0 0.0
    %240 = vmatpush.msra.mxu0 %v220
    %241 = vmatmul.f32.gmra.mxu0 %v223
    %v242 = vpop.f32.mrf.mxu0
    %v243 = vadd.f32 0.0, %v242
    %244 = vdwg.mxu0
    %245 = vrot.lane.b32.xlu0 %v175, 120
    %v246 = vpop.permute.xlu0 %245
    %247 = vrot.lane.b32.xlu0 %v175, 88
    %v248 = vpop.permute.xlu0 %247
    %v249 = vsel %vm183, %v246, 0
    %v251 = vsel %vm183, %v248, 0
    %253 = vmatpush.xpose.msra.mxu0 0.0
    %254 = vmatpush.xpose.msra.mxu0 0.0
    %255 = vmatpush.xpose.msra.mxu0 0.0
    %256 = vmatpush.xpose.msra.mxu0 0.0
    %257 = vmatpush.xpose.msra.mxu0 0.0
    %258 = vmatpush.xpose.msra.mxu0 0.0
    %259 = vmatpush.xpose.msra.mxu0 0.0
    %260 = vmatpush.xpose.msra.mxu0 0.0
    %261 = vmatpush.xpose.msra.mxu0 0.0
    %262 = vmatpush.xpose.msra.mxu0 0.0
    %263 = vmatpush.xpose.msra.mxu0 0.0
    %264 = vmatpush.xpose.msra.mxu0 0.0
    %265 = vmatpush.xpose.msra.mxu0 0.0
    %266 = vmatpush.xpose.msra.mxu0 0.0
    %267 = vmatpush.xpose.msra.mxu0 0.0
    %268 = vmatpush.xpose.msra.mxu0 %v251
    %269 = vmatmul.f32.gmra.mxu0 %v249
    %v270 = vpop.f32.mrf.mxu0
    %v271 = vadd.f32 0.0, %v270
    %272 = vdwg.mxu0
    %v273 = vsel %vm183, %v271, -inf
    %274 = vmax.xlane.f32.xlu0 %v273
    %v275 = vpop.xlane.xlu0 %274
    %v276 = vsub.f32 %v271, %v275
    %v277 = vmul.f32 %v276, 1.442695
    %v278 = vpow.pop %v277
    %v279 = vsel %vm183, %v278, 0.0
    %280 = vadd.xlane.f32.xlu0 %v279
    %v281 = vpop.xlane.xlu0 %280
    %v282 = vrcp.pop %v281
    %v283 = vmul.f32 %v278, %v282
    %284 = vrot.lane.b32.xlu0 %v175, 56
    %v285 = vpop.permute.xlu0 %284
    %v288 = vsel %vm183, %v283, 0
    %290 = vmatpush.msra.mxu0 0.0
    %291 = vmatpush.msra.mxu0 0.0
    %292 = vmatpush.msra.mxu0 0.0
    %293 = vmatpush.msra.mxu0 0.0
    %294 = vmatpush.msra.mxu0 0.0
    %295 = vmatpush.msra.mxu0 0.0
    %296 = vmatpush.msra.mxu0 0.0
    %297 = vmatpush.msra.mxu0 0.0
    %298 = vmatpush.msra.mxu0 0.0
    %299 = vmatpush.msra.mxu0 0.0
    %300 = vmatpush.msra.mxu0 0.0
    %301 = vmatpush.msra.mxu0 0.0
    %302 = vmatpush.msra.mxu0 0.0
    %303 = vmatpush.msra.mxu0 0.0
    %304 = vmatpush.msra.mxu0 0.0
    %305 = vmatpush.msra.mxu0 %v285
    %306 = vmatmul.f32.gmra.mxu0 %v288
    %v307 = vpop.f32.mrf.mxu0
    %v308 = vadd.f32 0.0, %v307
    %309 = vdwg.mxu0
    %310 = vrot.lane.b32.xlu0 %v175, 112
    %v311 = vpop.permute.xlu0 %310
    %312 = vrot.lane.b32.xlu0 %v175, 80
    %v313 = vpop.permute.xlu0 %312
    %v314 = vsel %vm183, %v311, 0
    %v316 = vsel %vm183, %v313, 0
    %318 = vmatpush.xpose.msra.mxu0 0.0
    %319 = vmatpush.xpose.msra.mxu0 0.0
    %320 = vmatpush.xpose.msra.mxu0 0.0
    %321 = vmatpush.xpose.msra.mxu0 0.0
    %322 = vmatpush.xpose.msra.mxu0 0.0
    %323 = vmatpush.xpose.msra.mxu0 0.0
    %324 = vmatpush.xpose.msra.mxu0 0.0
    %325 = vmatpush.xpose.msra.mxu0 0.0
    %326 = vmatpush.xpose.msra.mxu0 0.0
    %327 = vmatpush.xpose.msra.mxu0 0.0
    %328 = vmatpush.xpose.msra.mxu0 0.0
    %329 = vmatpush.xpose.msra.mxu0 0.0
    %330 = vmatpush.xpose.msra.mxu0 0.0
    %331 = vmatpush.xpose.msra.mxu0 0.0
    %332 = vmatpush.xpose.msra.mxu0 0.0
    %333 = vmatpush.xpose.msra.mxu0 %v316
    %334 = vmatmul.f32.gmra.mxu0 %v314
    %v335 = vpop.f32.mrf.mxu0
    %v336 = vadd.f32 0.0, %v335
    %337 = vdwg.mxu0
    %v338 = vsel %vm183, %v336, -inf
    %339 = vmax.xlane.f32.xlu0 %v338
    %v340 = vpop.xlane.xlu0 %339
    %v341 = vsub.f32 %v336, %v340
    %v342 = vmul.f32 %v341, 1.442695
    %v343 = vpow.pop %v342
    %v344 = vsel %vm183, %v343, 0.0
    %345 = vadd.xlane.f32.xlu0 %v344
    %v346 = vpop.xlane.xlu0 %345
    %v347 = vrcp.pop %v346
    %v348 = vmul.f32 %v343, %v347
    %349 = vrot.lane.b32.xlu0 %v175, 48
    %v350 = vpop.permute.xlu0 %349
    %v353 = vsel %vm183, %v348, 0
    %355 = vmatpush.msra.mxu0 0.0
    %356 = vmatpush.msra.mxu0 0.0
    %357 = vmatpush.msra.mxu0 0.0
    %358 = vmatpush.msra.mxu0 0.0
    %359 = vmatpush.msra.mxu0 0.0
    %360 = vmatpush.msra.mxu0 0.0
    %361 = vmatpush.msra.mxu0 0.0
    %362 = vmatpush.msra.mxu0 0.0
    %363 = vmatpush.msra.mxu0 0.0
    %364 = vmatpush.msra.mxu0 0.0
    %365 = vmatpush.msra.mxu0 0.0
    %366 = vmatpush.msra.mxu0 0.0
    %367 = vmatpush.msra.mxu0 0.0
    %368 = vmatpush.msra.mxu0 0.0
    %369 = vmatpush.msra.mxu0 0.0
    %370 = vmatpush.msra.mxu0 %v350
    %371 = vmatmul.f32.gmra.mxu0 %v353
    %v372 = vpop.f32.mrf.mxu0
    %v373 = vadd.f32 0.0, %v372
    %374 = vdwg.mxu0
    %375 = vrot.lane.b32.xlu0 %v175, 104
    %v376 = vpop.permute.xlu0 %375
    %377 = vrot.lane.b32.xlu0 %v175, 72
    %v378 = vpop.permute.xlu0 %377
    %v379 = vsel %vm183, %v376, 0
    %v381 = vsel %vm183, %v378, 0
    %383 = vmatpush.xpose.msra.mxu0 0.0
    %384 = vmatpush.xpose.msra.mxu0 0.0
    %385 = vmatpush.xpose.msra.mxu0 0.0
    %386 = vmatpush.xpose.msra.mxu0 0.0
    %387 = vmatpush.xpose.msra.mxu0 0.0
    %388 = vmatpush.xpose.msra.mxu0 0.0
    %389 = vmatpush.xpose.msra.mxu0 0.0
    %390 = vmatpush.xpose.msra.mxu0 0.0
    %391 = vmatpush.xpose.msra.mxu0 0.0
    %392 = vmatpush.xpose.msra.mxu0 0.0
    %393 = vmatpush.xpose.msra.mxu0 0.0
    %394 = vmatpush.xpose.msra.mxu0 0.0
    %395 = vmatpush.xpose.msra.mxu0 0.0
    %396 = vmatpush.xpose.msra.mxu0 0.0
    %397 = vmatpush.xpose.msra.mxu0 0.0
    %398 = vmatpush.xpose.msra.mxu0 %v381
    %399 = vmatmul.f32.gmra.mxu0 %v379
    %v400 = vpop.f32.mrf.mxu0
    %v401 = vadd.f32 0.0, %v400
    %402 = vdwg.mxu0
    %v403 = vsel %vm183, %v401, -inf
    %404 = vmax.xlane.f32.xlu0 %v403
    %v405 = vpop.xlane.xlu0 %404
    %v406 = vsub.f32 %v401, %v405
    %v407 = vmul.f32 %v406, 1.442695
    %v408 = vpow.pop %v407
    %v409 = vsel %vm183, %v408, 0.0
    %410 = vadd.xlane.f32.xlu0 %v409
    %v411 = vpop.xlane.xlu0 %410
    %v412 = vrcp.pop %v411
    %v413 = vmul.f32 %v408, %v412
    %414 = vrot.lane.b32.xlu0 %v175, 40
    %v415 = vpop.permute.xlu0 %414
    %v418 = vsel %vm183, %v413, 0
    %420 = vmatpush.msra.mxu0 0.0
    %421 = vmatpush.msra.mxu0 0.0
    %422 = vmatpush.msra.mxu0 0.0
    %423 = vmatpush.msra.mxu0 0.0
    %424 = vmatpush.msra.mxu0 0.0
    %425 = vmatpush.msra.mxu0 0.0
    %426 = vmatpush.msra.mxu0 0.0
    %427 = vmatpush.msra.mxu0 0.0
    %428 = vmatpush.msra.mxu0 0.0
    %429 = vmatpush.msra.mxu0 0.0
    %430 = vmatpush.msra.mxu0 0.0
    %431 = vmatpush.msra.mxu0 0.0
    %432 = vmatpush.msra.mxu0 0.0
    %433 = vmatpush.msra.mxu0 0.0
    %434 = vmatpush.msra.mxu0 0.0
    %435 = vmatpush.msra.mxu0 %v415
    %436 = vmatmul.f32.gmra.mxu0 %v418
    %v437 = vpop.f32.mrf.mxu0
    %v438 = vadd.f32 0.0, %v437
    %439 = vdwg.mxu0
    %v441 = vsel %vm150, %v131, 0
    %v444 = vsel %vm150, %v132, 0
    %v447 = vsel %vm150, %v133, 0
    %v450 = vsel %vm150, %v134, 0
    %452 = vmatpush.msra.mxu0 0.0
    %453 = vmatpush.msra.mxu0 0.0
    %454 = vmatpush.msra.mxu0 0.0
    %455 = vmatpush.msra.mxu0 0.0
    %456 = vmatpush.msra.mxu0 0.0
    %457 = vmatpush.msra.mxu0 0.0
    %458 = vmatpush.msra.mxu0 0.0
    %459 = vmatpush.msra.mxu0 0.0
    %460 = vmatpush.msra.mxu0 0.0
    %461 = vmatpush.msra.mxu0 0.0
    %462 = vmatpush.msra.mxu0 0.0
    %463 = vmatpush.msra.mxu0 0.0
    %464 = vmatpush.msra.mxu0 %v438
    %465 = vmatpush.msra.mxu0 %v373
    %466 = vmatpush.msra.mxu0 %v308
    %467 = vmatpush.msra.mxu0 %v243
    %468 = vmatmul.f32.gmra.mxu0 %v441
    %v469 = vpop.f32.mrf.mxu0
    %v470 = vadd.f32 0.0, %v469
    %471 = vmatmul.f32.gmra.mxu0 %v444
    %v472 = vpop.f32.mrf.mxu0
    %v473 = vadd.f32 0.0, %v472
    %474 = vmatmul.f32.gmra.mxu0 %v447
    %v475 = vpop.f32.mrf.mxu0
    %v476 = vadd.f32 0.0, %v475
    %477 = vmatmul.f32.gmra.mxu0 %v450
    %v478 = vpop.f32.mrf.mxu0
    %v479 = vadd.f32 0.0, %v478
    %480 = vdwg.mxu0
    %482 = vrot.lane.b32.xlu0 %v473, 8
    %v483 = vpop.permute.xlu0 %482
    %486 = vrot.lane.b32.xlu0 %v476, 16
    %v487 = vpop.permute.xlu0 %486
    %490 = vrot.lane.b32.xlu0 %v479, 24
    %v491 = vpop.permute.xlu0 %490
    %v493 = vsel %vm183, %v470, %v483
    %vm494 = vcmask 130048
    %v495 = vsel %vm494, %v493, %v487
    %vm496 = vcmask 195584
    %v497 = vsel %vm496, %v495, %v491
    %499 = vrot.lane.b32.xlu0 %v178, 96
    %v500 = vpop.permute.xlu0 %499
    %v501 = vsel %vm183, %v178, 0
    %v503 = vsel %vm183, %v500, 0
    %505 = vmatpush.xpose.msra.mxu0 0.0
    %506 = vmatpush.xpose.msra.mxu0 0.0
    %507 = vmatpush.xpose.msra.mxu0 0.0
    %508 = vmatpush.xpose.msra.mxu0 0.0
    %509 = vmatpush.xpose.msra.mxu0 0.0
    %510 = vmatpush.xpose.msra.mxu0 0.0
    %511 = vmatpush.xpose.msra.mxu0 0.0
    %512 = vmatpush.xpose.msra.mxu0 0.0
    %513 = vmatpush.xpose.msra.mxu0 0.0
    %514 = vmatpush.xpose.msra.mxu0 0.0
    %515 = vmatpush.xpose.msra.mxu0 0.0
    %516 = vmatpush.xpose.msra.mxu0 0.0
    %517 = vmatpush.xpose.msra.mxu0 0.0
    %518 = vmatpush.xpose.msra.mxu0 0.0
    %519 = vmatpush.xpose.msra.mxu0 0.0
    %520 = vmatpush.xpose.msra.mxu0 %v503
    %521 = vmatmul.f32.gmra.mxu0 %v501
    %v522 = vpop.f32.mrf.mxu0
    %v523 = vadd.f32 0.0, %v522
    %524 = vdwg.mxu0
    %v525 = vsel %vm183, %v523, -inf
    %526 = vmax.xlane.f32.xlu0 %v525
    %v527 = vpop.xlane.xlu0 %526
    %v528 = vsub.f32 %v523, %v527
    %v529 = vmul.f32 %v528, 1.442695
    %v530 = vpow.pop %v529
    %v531 = vsel %vm183, %v530, 0.0
    %532 = vadd.xlane.f32.xlu0 %v531
    %v533 = vpop.xlane.xlu0 %532
    %v534 = vrcp.pop %v533
    %v535 = vmul.f32 %v530, %v534
    %536 = vrot.lane.b32.xlu0 %v178, 64
    %v537 = vpop.permute.xlu0 %536
    %v540 = vsel %vm183, %v535, 0
    %542 = vmatpush.msra.mxu0 0.0
    %543 = vmatpush.msra.mxu0 0.0
    %544 = vmatpush.msra.mxu0 0.0
    %545 = vmatpush.msra.mxu0 0.0
    %546 = vmatpush.msra.mxu0 0.0
    %547 = vmatpush.msra.mxu0 0.0
    %548 = vmatpush.msra.mxu0 0.0
    %549 = vmatpush.msra.mxu0 0.0
    %550 = vmatpush.msra.mxu0 0.0
    %551 = vmatpush.msra.mxu0 0.0
    %552 = vmatpush.msra.mxu0 0.0
    %553 = vmatpush.msra.mxu0 0.0
    %554 = vmatpush.msra.mxu0 0.0
    %555 = vmatpush.msra.mxu0 0.0
    %556 = vmatpush.msra.mxu0 0.0
    %557 = vmatpush.msra.mxu0 %v537
    %558 = vmatmul.f32.gmra.mxu0 %v540
    %v559 = vpop.f32.mrf.mxu0
    %v560 = vadd.f32 0.0, %v559
    %561 = vdwg.mxu0
    %562 = vrot.lane.b32.xlu0 %v178, 120
    %v563 = vpop.permute.xlu0 %562
    %564 = vrot.lane.b32.xlu0 %v178, 88
    %v565 = vpop.permute.xlu0 %564
    %v566 = vsel %vm183, %v563, 0
    %v568 = vsel %vm183, %v565, 0
    %570 = vmatpush.xpose.msra.mxu0 0.0
    %571 = vmatpush.xpose.msra.mxu0 0.0
    %572 = vmatpush.xpose.msra.mxu0 0.0
    %573 = vmatpush.xpose.msra.mxu0 0.0
    %574 = vmatpush.xpose.msra.mxu0 0.0
    %575 = vmatpush.xpose.msra.mxu0 0.0
    %576 = vmatpush.xpose.msra.mxu0 0.0
    %577 = vmatpush.xpose.msra.mxu0 0.0
    %578 = vmatpush.xpose.msra.mxu0 0.0
    %579 = vmatpush.xpose.msra.mxu0 0.0
    %580 = vmatpush.xpose.msra.mxu0 0.0
    %581 = vmatpush.xpose.msra.mxu0 0.0
    %582 = vmatpush.xpose.msra.mxu0 0.0
    %583 = vmatpush.xpose.msra.mxu0 0.0
    %584 = vmatpush.xpose.msra.mxu0 0.0
    %585 = vmatpush.xpose.msra.mxu0 %v568
    %586 = vmatmul.f32.gmra.mxu0 %v566
    %v587 = vpop.f32.mrf.mxu0
    %v588 = vadd.f32 0.0, %v587
    %589 = vdwg.mxu0
    %v590 = vsel %vm183, %v588, -inf
    %591 = vmax.xlane.f32.xlu0 %v590
    %v592 = vpop.xlane.xlu0 %591
    %v593 = vsub.f32 %v588, %v592
    %v594 = vmul.f32 %v593, 1.442695
    %v595 = vpow.pop %v594
    %v596 = vsel %vm183, %v595, 0.0
    %597 = vadd.xlane.f32.xlu0 %v596
    %v598 = vpop.xlane.xlu0 %597
    %v599 = vrcp.pop %v598
    %v600 = vmul.f32 %v595, %v599
    %601 = vrot.lane.b32.xlu0 %v178, 56
    %v602 = vpop.permute.xlu0 %601
    %v605 = vsel %vm183, %v600, 0
    %607 = vmatpush.msra.mxu0 0.0
    %608 = vmatpush.msra.mxu0 0.0
    %609 = vmatpush.msra.mxu0 0.0
    %610 = vmatpush.msra.mxu0 0.0
    %611 = vmatpush.msra.mxu0 0.0
    %612 = vmatpush.msra.mxu0 0.0
    %613 = vmatpush.msra.mxu0 0.0
    %614 = vmatpush.msra.mxu0 0.0
    %615 = vmatpush.msra.mxu0 0.0
    %616 = vmatpush.msra.mxu0 0.0
    %617 = vmatpush.msra.mxu0 0.0
    %618 = vmatpush.msra.mxu0 0.0
    %619 = vmatpush.msra.mxu0 0.0
    %620 = vmatpush.msra.mxu0 0.0
    %621 = vmatpush.msra.mxu0 0.0
    %622 = vmatpush.msra.mxu0 %v602
    %623 = vmatmul.f32.gmra.mxu0 %v605
    %v624 = vpop.f32.mrf.mxu0
    %v625 = vadd.f32 0.0, %v624
    %626 = vdwg.mxu0
    %627 = vrot.lane.b32.xlu0 %v178, 112
    %v628 = vpop.permute.xlu0 %627
    %629 = vrot.lane.b32.xlu0 %v178, 80
    %v630 = vpop.permute.xlu0 %629
    %v631 = vsel %vm183, %v628, 0
    %v633 = vsel %vm183, %v630, 0
    %635 = vmatpush.xpose.msra.mxu0 0.0
    %636 = vmatpush.xpose.msra.mxu0 0.0
    %637 = vmatpush.xpose.msra.mxu0 0.0
    %638 = vmatpush.xpose.msra.mxu0 0.0
    %639 = vmatpush.xpose.msra.mxu0 0.0
    %640 = vmatpush.xpose.msra.mxu0 0.0
    %641 = vmatpush.xpose.msra.mxu0 0.0
    %642 = vmatpush.xpose.msra.mxu0 0.0
    %643 = vmatpush.xpose.msra.mxu0 0.0
    %644 = vmatpush.xpose.msra.mxu0 0.0
    %645 = vmatpush.xpose.msra.mxu0 0.0
    %646 = vmatpush.xpose.msra.mxu0 0.0
    %647 = vmatpush.xpose.msra.mxu0 0.0
    %648 = vmatpush.xpose.msra.mxu0 0.0
    %649 = vmatpush.xpose.msra.mxu0 0.0
    %650 = vmatpush.xpose.msra.mxu0 %v633
    %651 = vmatmul.f32.gmra.mxu0 %v631
    %v652 = vpop.f32.mrf.mxu0
    %v653 = vadd.f32 0.0, %v652
    %654 = vdwg.mxu0
    %v655 = vsel %vm183, %v653, -inf
    %656 = vmax.xlane.f32.xlu0 %v655
    %v657 = vpop.xlane.xlu0 %656
    %v658 = vsub.f32 %v653, %v657
    %v659 = vmul.f32 %v658, 1.442695
    %v660 = vpow.pop %v659
    %v661 = vsel %vm183, %v660, 0.0
    %662 = vadd.xlane.f32.xlu0 %v661
    %v663 = vpop.xlane.xlu0 %662
    %v664 = vrcp.pop %v663
    %v665 = vmul.f32 %v660, %v664
    %666 = vrot.lane.b32.xlu0 %v178, 48
    %v667 = vpop.permute.xlu0 %666
    %v670 = vsel %vm183, %v665, 0
    %672 = vmatpush.msra.mxu0 0.0
    %673 = vmatpush.msra.mxu0 0.0
    %674 = vmatpush.msra.mxu0 0.0
    %675 = vmatpush.msra.mxu0 0.0
    %676 = vmatpush.msra.mxu0 0.0
    %677 = vmatpush.msra.mxu0 0.0
    %678 = vmatpush.msra.mxu0 0.0
    %679 = vmatpush.msra.mxu0 0.0
    %680 = vmatpush.msra.mxu0 0.0
    %681 = vmatpush.msra.mxu0 0.0
    %682 = vmatpush.msra.mxu0 0.0
    %683 = vmatpush.msra.mxu0 0.0
    %684 = vmatpush.msra.mxu0 0.0
    %685 = vmatpush.msra.mxu0 0.0
    %686 = vmatpush.msra.mxu0 0.0
    %687 = vmatpush.msra.mxu0 %v667
    %688 = vmatmul.f32.gmra.mxu0 %v670
    %v689 = vpop.f32.mrf.mxu0
    %v690 = vadd.f32 0.0, %v689
    %691 = vdwg.mxu0
    %692 = vrot.lane.b32.xlu0 %v178, 104
    %v693 = vpop.permute.xlu0 %692
    %694 = vrot.lane.b32.xlu0 %v178, 72
    %v695 = vpop.permute.xlu0 %694
    %v696 = vsel %vm183, %v693, 0
    %v698 = vsel %vm183, %v695, 0
    %700 = vmatpush.xpose.msra.mxu0 0.0
    %701 = vmatpush.xpose.msra.mxu0 0.0
    %702 = vmatpush.xpose.msra.mxu0 0.0
    %703 = vmatpush.xpose.msra.mxu0 0.0
    %704 = vmatpush.xpose.msra.mxu0 0.0
    %705 = vmatpush.xpose.msra.mxu0 0.0
    %706 = vmatpush.xpose.msra.mxu0 0.0
    %707 = vmatpush.xpose.msra.mxu0 0.0
    %708 = vmatpush.xpose.msra.mxu0 0.0
    %709 = vmatpush.xpose.msra.mxu0 0.0
    %710 = vmatpush.xpose.msra.mxu0 0.0
    %711 = vmatpush.xpose.msra.mxu0 0.0
    %712 = vmatpush.xpose.msra.mxu0 0.0
    %713 = vmatpush.xpose.msra.mxu0 0.0
    %714 = vmatpush.xpose.msra.mxu0 0.0
    %715 = vmatpush.xpose.msra.mxu0 %v698
    %716 = vmatmul.f32.gmra.mxu0 %v696
    %v717 = vpop.f32.mrf.mxu0
    %v718 = vadd.f32 0.0, %v717
    %719 = vdwg.mxu0
    %v720 = vsel %vm183, %v718, -inf
    %721 = vmax.xlane.f32.xlu0 %v720
    %v722 = vpop.xlane.xlu0 %721
    %v723 = vsub.f32 %v718, %v722
    %v724 = vmul.f32 %v723, 1.442695
    %v725 = vpow.pop %v724
    %v726 = vsel %vm183, %v725, 0.0
    %727 = vadd.xlane.f32.xlu0 %v726
    %v728 = vpop.xlane.xlu0 %727
    %v729 = vrcp.pop %v728
    %v730 = vmul.f32 %v725, %v729
    %731 = vrot.lane.b32.xlu0 %v178, 40
    %v732 = vpop.permute.xlu0 %731
    %v735 = vsel %vm183, %v730, 0
    %737 = vmatpush.msra.mxu0 0.0
    %738 = vmatpush.msra.mxu0 0.0
    %739 = vmatpush.msra.mxu0 0.0
    %740 = vmatpush.msra.mxu0 0.0
    %741 = vmatpush.msra.mxu0 0.0
    %742 = vmatpush.msra.mxu0 0.0
    %743 = vmatpush.msra.mxu0 0.0
    %744 = vmatpush.msra.mxu0 0.0
    %745 = vmatpush.msra.mxu0 0.0
    %746 = vmatpush.msra.mxu0 0.0
    %747 = vmatpush.msra.mxu0 0.0
    %748 = vmatpush.msra.mxu0 0.0
    %749 = vmatpush.msra.mxu0 0.0
    %750 = vmatpush.msra.mxu0 0.0
    %751 = vmatpush.msra.mxu0 0.0
    %752 = vmatpush.msra.mxu0 %v732
    %753 = vmatmul.f32.gmra.mxu0 %v735
    %v754 = vpop.f32.mrf.mxu0
    %v755 = vadd.f32 0.0, %v754
    %756 = vdwg.mxu0
    %757 = vmatpush.msra.mxu0 0.0
    %758 = vmatpush.msra.mxu0 0.0
    %759 = vmatpush.msra.mxu0 0.0
    %760 = vmatpush.msra.mxu0 0.0
    %761 = vmatpush.msra.mxu0 0.0
    %762 = vmatpush.msra.mxu0 0.0
    %763 = vmatpush.msra.mxu0 0.0
    %764 = vmatpush.msra.mxu0 0.0
    %765 = vmatpush.msra.mxu0 0.0
    %766 = vmatpush.msra.mxu0 0.0
    %767 = vmatpush.msra.mxu0 0.0
    %768 = vmatpush.msra.mxu0 0.0
    %769 = vmatpush.msra.mxu0 %v755
    %770 = vmatpush.msra.mxu0 %v690
    %771 = vmatpush.msra.mxu0 %v625
    %772 = vmatpush.msra.mxu0 %v560
    %773 = vmatmul.f32.gmra.mxu0 %v441
    %v774 = vpop.f32.mrf.mxu0
    %v775 = vadd.f32 0.0, %v774
    %776 = vmatmul.f32.gmra.mxu0 %v444
    %v777 = vpop.f32.mrf.mxu0
    %v778 = vadd.f32 0.0, %v777
    %779 = vmatmul.f32.gmra.mxu0 %v447
    %v780 = vpop.f32.mrf.mxu0
    %v781 = vadd.f32 0.0, %v780
    %782 = vmatmul.f32.gmra.mxu0 %v450
    %v783 = vpop.f32.mrf.mxu0
    %v784 = vadd.f32 0.0, %v783
    %785 = vdwg.mxu0
    %787 = vrot.lane.b32.xlu0 %v778, 8
    %v788 = vpop.permute.xlu0 %787
    %791 = vrot.lane.b32.xlu0 %v781, 16
    %v792 = vpop.permute.xlu0 %791
    %795 = vrot.lane.b32.xlu0 %v784, 24
    %v796 = vpop.permute.xlu0 %795
    %v798 = vsel %vm183, %v775, %v788
    %v799 = vsel %vm494, %v798, %v792
    %v800 = vsel %vm496, %v799, %v796
    %v802 = vperm.slane %v146, 0
    %v805 = vsel %vm150, %v497, 0
    %v808 = vsel %vm150, %v800, 0
    %810 = vmatpush.msra.mxu0 0.0
    %811 = vmatpush.msra.mxu0 0.0
    %812 = vmatpush.msra.mxu0 0.0
    %813 = vmatpush.msra.mxu0 0.0
    %814 = vmatpush.msra.mxu0 0.0
    %815 = vmatpush.msra.mxu0 0.0
    %816 = vmatpush.msra.mxu0 0.0
    %817 = vmatpush.msra.mxu0 0.0
    %818 = vmatpush.msra.mxu0 0.0
    %819 = vmatpush.msra.mxu0 0.0
    %820 = vmatpush.msra.mxu0 0.0
    %821 = vmatpush.msra.mxu0 0.0
    %822 = vmatpush.msra.mxu0 %v145
    %823 = vmatpush.msra.mxu0 %v144
    %824 = vmatpush.msra.mxu0 %v143
    %825 = vmatpush.msra.mxu0 %v142
    %826 = vmatmul.f32.gmra.mxu0 %v805
    %v827 = vpop.f32.mrf.mxu0
    %v828 = vadd.f32 %v802, %v827
    %829 = vmatmul.f32.gmra.mxu0 %v808
    %v830 = vpop.f32.mrf.mxu0
    %v831 = vadd.f32 %v802, %v830
    %832 = vdwg.mxu0
    %v833 = vadd.f32 %v135, %v828
    %v834 = vadd.f32 %v136, %v831
    %v835 = vld [vmem:[%s15] sm:$0x1]
    %v836 = vld [vmem:[%s17] sm:$0x1]
    %v837 = vsel %vm150, %v833, 0.0
    %838 = vadd.xlane.f32.xlu0 %v837
    %v839 = vpop.xlane.xlu0 %838
    %v840 = vsel %vm150, %v834, 0.0
    %841 = vadd.xlane.f32.xlu0 %v840
    %v842 = vpop.xlane.xlu0 %841
    %v843 = vrcp.pop 32.0
    %v844 = vmul.f32 32.0, %v843
    %v845 = vsub.f32 1.0, %v844
    %v846 = vmul.f32 %v843, %v845
    %v847 = vadd.f32 %v843, %v846
    %vm848 = vweird.f32 %v843
    %v849 = vsel %vm848, %v843, %v847
    %v850 = vmul.f32 %v839, %v849
    %v851 = vmul.f32 %v842, %v849
    %v852 = vsub.f32 %v833, %v850
    %v853 = vsub.f32 %v834, %v851
    %v854 = vmul.f32 %v852, %v852
    %v855 = vmul.f32 %v853, %v853
    %v856 = vsel %vm150, %v854, 0.0
    %857 = vadd.xlane.f32.xlu0 %v856
    %v858 = vpop.xlane.xlu0 %857
    %v859 = vsel %vm150, %v855, 0.0
    %860 = vadd.xlane.f32.xlu0 %v859
    %v861 = vpop.xlane.xlu0 %860
    %v862 = vmul.f32 %v858, %v849
    %v863 = vmul.f32 %v861, %v849
    %v864 = vadd.f32 %v862, 1e-05
    %v865 = vadd.f32 %v863, 1e-05
    %v866 = vrsqrt.pop %v864
    %v867 = vmul.f32 %v866, %v864
    %v868 = vmul.f32 %v867, %v866
    %v869 = vmul.f32 0.5, %v868
    %v870 = vsub.f32 1.5, %v869
    %v871 = vmul.f32 %v866, %v870
    %vm872 = vweird.f32 %v864
    %vm873 = vweird.f32 %v866
    %vm874 = vmor %vm872, %vm873
    %v875 = vsel %vm874, %v866, %v871
    %v876 = vrsqrt.pop %v865
    %v877 = vmul.f32 %v876, %v865
    %v878 = vmul.f32 %v877, %v876
    %v879 = vmul.f32 0.5, %v878
    %v880 = vsub.f32 1.5, %v879
    %v881 = vmul.f32 %v876, %v880
    %vm882 = vweird.f32 %v865
    %vm883 = vweird.f32 %v876
    %vm884 = vmor %vm882, %vm883
    %v885 = vsel %vm884, %v876, %v881
    %v886 = vmul.f32 %v852, %v875
    %v887 = vmul.f32 %v853, %v885
    %v889 = vperm.slane %v835, 0
    %v891 = vmul.f32 %v886, %v889
    %v892 = vmul.f32 %v887, %v889
    %v894 = vperm.slane %v836, 0
    %v896 = vadd.f32 %v891, %v894
    %v897 = vadd.f32 %v892, %v894
    %v898 = vld [vmem:[%s19] sm:$0xff]
    %v899 = vld [vmem:[%s19 + $0x8] sm:$0xff]
    %v900 = vld [vmem:[%s19 + $0x10] sm:$0xff]
    %v901 = vld [vmem:[%s19 + $0x18] sm:$0xff]
    %v902 = vld [vmem:[%s21] sm:$0x1]
    %v904 = vperm.slane %v902, 0
    %v907 = vsel %vm150, %v896, 0
    %v910 = vsel %vm150, %v897, 0
    %912 = vmatpush.msra.mxu0 0.0
    %913 = vmatpush.msra.mxu0 0.0
    %914 = vmatpush.msra.mxu0 0.0
    %915 = vmatpush.msra.mxu0 0.0
    %916 = vmatpush.msra.mxu0 0.0
    %917 = vmatpush.msra.mxu0 0.0
    %918 = vmatpush.msra.mxu0 0.0
    %919 = vmatpush.msra.mxu0 0.0
    %920 = vmatpush.msra.mxu0 0.0
    %921 = vmatpush.msra.mxu0 0.0
    %922 = vmatpush.msra.mxu0 0.0
    %923 = vmatpush.msra.mxu0 0.0
    %924 = vmatpush.msra.mxu0 %v901
    %925 = vmatpush.msra.mxu0 %v900
    %926 = vmatpush.msra.mxu0 %v899
    %927 = vmatpush.msra.mxu0 %v898
    %928 = vmatmul.f32.gmra.mxu0 %v907
    %v929 = vpop.f32.mrf.mxu0
    %v930 = vadd.f32 %v904, %v929
    %931 = vmatmul.f32.gmra.mxu0 %v910
    %v932 = vpop.f32.mrf.mxu0
    %v933 = vadd.f32 %v904, %v932
    %934 = vdwg.mxu0
    %v935 = vmax.f32 %v930, 0.0
    %v936 = vmax.f32 %v933, 0.0
    %v937 = vld [vmem:[%s23] sm:$0xff]
    %v938 = vld [vmem:[%s23 + $0x8] sm:$0xff]
    %v939 = vld [vmem:[%s23 + $0x10] sm:$0xff]
    %v940 = vld [vmem:[%s23 + $0x18] sm:$0xff]
    %v941 = vld [vmem:[%s23 + $0x20] sm:$0xff]
    %v942 = vld [vmem:[%s23 + $0x28] sm:$0xff]
    %v943 = vld [vmem:[%s23 + $0x30] sm:$0xff]
    %v944 = vld [vmem:[%s23 + $0x38] sm:$0xff]
    %v945 = vld [vmem:[%s23 + $0x40] sm:$0xff]
    %v946 = vld [vmem:[%s23 + $0x48] sm:$0xff]
    %v947 = vld [vmem:[%s23 + $0x50] sm:$0xff]
    %v948 = vld [vmem:[%s23 + $0x58] sm:$0xff]
    %v949 = vld [vmem:[%s23 + $0x60] sm:$0xff]
    %v950 = vld [vmem:[%s23 + $0x68] sm:$0xff]
    %v951 = vld [vmem:[%s23 + $0x70] sm:$0xff]
    %v952 = vld [vmem:[%s23 + $0x78] sm:$0xff]
    %v953 = vld [vmem:[%s25] sm:$0x1]
    %v955 = vperm.slane %v953, 0
    %957 = vmatpush.msra.mxu0 %v952
    %958 = vmatpush.msra.mxu0 %v951
    %959 = vmatpush.msra.mxu0 %v950
    %960 = vmatpush.msra.mxu0 %v949
    %961 = vmatpush.msra.mxu0 %v948
    %962 = vmatpush.msra.mxu0 %v947
    %963 = vmatpush.msra.mxu0 %v946
    %964 = vmatpush.msra.mxu0 %v945
    %965 = vmatpush.msra.mxu0 %v944
    %966 = vmatpush.msra.mxu0 %v943
    %967 = vmatpush.msra.mxu0 %v942
    %968 = vmatpush.msra.mxu0 %v941
    %969 = vmatpush.msra.mxu0 %v940
    %970 = vmatpush.msra.mxu0 %v939
    %971 = vmatpush.msra.mxu0 %v938
    %972 = vmatpush.msra.mxu0 %v937
    %973 = vmatmul.f32.gmra.mxu0 %v935
    %v974 = vpop.f32.mrf.mxu0
    %v975 = vadd.f32 %v955, %v974
    %976 = vmatmul.f32.gmra.mxu0 %v936
    %v977 = vpop.f32.mrf.mxu0
    %v978 = vadd.f32 %v955, %v977
    %979 = vdwg.mxu0
    %v980 = vadd.f32 %v896, %v975
    %v981 = vadd.f32 %v897, %v978
    %v982 = vsel %vm150, %v980, 0.0
    %983 = vadd.xlane.f32.xlu0 %v982
    %v984 = vpop.xlane.xlu0 %983
    %v985 = vsel %vm150, %v981, 0.0
    %986 = vadd.xlane.f32.xlu0 %v985
    %v987 = vpop.xlane.xlu0 %986
    %v988 = vmul.f32 %v984, %v849
    %v989 = vmul.f32 %v987, %v849
    %v990 = vsub.f32 %v980, %v988
    %v991 = vsub.f32 %v981, %v989
    %v992 = vmul.f32 %v990, %v990
    %v993 = vmul.f32 %v991, %v991
    %v994 = vsel %vm150, %v992, 0.0
    %995 = vadd.xlane.f32.xlu0 %v994
    %v996 = vpop.xlane.xlu0 %995
    %v997 = vsel %vm150, %v993, 0.0
    %998 = vadd.xlane.f32.xlu0 %v997
    %v999 = vpop.xlane.xlu0 %998
    %v1000 = vmul.f32 %v996, %v849
    %v1001 = vmul.f32 %v999, %v849
    %v1002 = vadd.f32 %v1000, 1e-05
    %v1003 = vadd.f32 %v1001, 1e-05
    %v1004 = vrsqrt.pop %v1002
    %v1005 = vmul.f32 %v1004, %v1002
    %v1006 = vmul.f32 %v1005, %v1004
    %v1007 = vmul.f32 0.5, %v1006
    %v1008 = vsub.f32 1.5, %v1007
    %v1009 = vmul.f32 %v1004, %v1008
    %vm1010 = vweird.f32 %v1002
    %vm1011 = vweird.f32 %v1004
    %vm1012 = vmor %vm1010, %vm1011
    %v1013 = vsel %vm1012, %v1004, %v1009
    %v1014 = vrsqrt.pop %v1003
    %v1015 = vmul.f32 %v1014, %v1003
    %v1016 = vmul.f32 %v1015, %v1014
    %v1017 = vmul.f32 0.5, %v1016
    %v1018 = vsub.f32 1.5, %v1017
    %v1019 = vmul.f32 %v1014, %v1018
    %vm1020 = vweird.f32 %v1003
    %vm1021 = vweird.f32 %v1014
    %vm1022 = vmor %vm1020, %vm1021
    %v1023 = vsel %vm1022, %v1014, %v1019
    %v1024 = vmul.f32 %v990, %v1013
    %v1025 = vmul.f32 %v991, %v1023
    %v1026 = vmul.f32 %v1024, %v889
    %v1027 = vmul.f32 %v1025, %v889
    %v1028 = vadd.f32 %v1026, %v894
    %v1029 = vadd.f32 %v1027, %v894
    %s1030 = scalar_lea.vmem %s7, 32
    %v1031 = vld [vmem:[%s1030] sm:$0xff]
    %v1032 = vld [vmem:[%s1030 + $0x8] sm:$0xff]
    %v1033 = vld [vmem:[%s1030 + $0x10] sm:$0xff]
    %v1034 = vld [vmem:[%s1030 + $0x18] sm:$0xff]
    %s1035 = scalar_lea.vmem %s9, 1
    %v1036 = vld [vmem:[%s1035] sm:$0x1]
    %s1037 = scalar_lea.vmem %s11, 32
    %v1038 = vld [vmem:[%s1037] sm:$0xff]
    %v1039 = vld [vmem:[%s1037 + $0x8] sm:$0xff]
    %v1040 = vld [vmem:[%s1037 + $0x10] sm:$0xff]
    %v1041 = vld [vmem:[%s1037 + $0x18] sm:$0xff]
    %s1042 = scalar_lea.vmem %s13, 1
    %v1043 = vld [vmem:[%s1042] sm:$0x1]
    %v1045 = vperm.slane %v1036, 0
    %v1048 = vsel %vm150, %v1028, 0
    %v1051 = vsel %vm150, %v1029, 0
    %1053 = vmatpush.msra.mxu0 0.0
    %1054 = vmatpush.msra.mxu0 0.0
    %1055 = vmatpush.msra.mxu0 0.0
    %1056 = vmatpush.msra.mxu0 0.0
    %1057 = vmatpush.msra.mxu0 0.0
    %1058 = vmatpush.msra.mxu0 0.0
    %1059 = vmatpush.msra.mxu0 0.0
    %1060 = vmatpush.msra.mxu0 0.0
    %1061 = vmatpush.msra.mxu0 0.0
    %1062 = vmatpush.msra.mxu0 0.0
    %1063 = vmatpush.msra.mxu0 0.0
    %1064 = vmatpush.msra.mxu0 0.0
    %1065 = vmatpush.msra.mxu0 %v1034
    %1066 = vmatpush.msra.mxu0 %v1033
    %1067 = vmatpush.msra.mxu0 %v1032
    %1068 = vmatpush.msra.mxu0 %v1031
    %1069 = vmatmul.f32.gmra.mxu0 %v1048
    %v1070 = vpop.f32.mrf.mxu0
    %v1071 = vadd.f32 %v1045, %v1070
    %1072 = vmatmul.f32.gmra.mxu0 %v1051
    %v1073 = vpop.f32.mrf.mxu0
    %v1074 = vadd.f32 %v1045, %v1073
    %1075 = vdwg.mxu0
    %1077 = vrot.lane.b32.xlu0 %v1071, 96
    %v1078 = vpop.permute.xlu0 %1077
    %v1079 = vsel %vm183, %v1071, 0
    %v1081 = vsel %vm183, %v1078, 0
    %1083 = vmatpush.xpose.msra.mxu0 0.0
    %1084 = vmatpush.xpose.msra.mxu0 0.0
    %1085 = vmatpush.xpose.msra.mxu0 0.0
    %1086 = vmatpush.xpose.msra.mxu0 0.0
    %1087 = vmatpush.xpose.msra.mxu0 0.0
    %1088 = vmatpush.xpose.msra.mxu0 0.0
    %1089 = vmatpush.xpose.msra.mxu0 0.0
    %1090 = vmatpush.xpose.msra.mxu0 0.0
    %1091 = vmatpush.xpose.msra.mxu0 0.0
    %1092 = vmatpush.xpose.msra.mxu0 0.0
    %1093 = vmatpush.xpose.msra.mxu0 0.0
    %1094 = vmatpush.xpose.msra.mxu0 0.0
    %1095 = vmatpush.xpose.msra.mxu0 0.0
    %1096 = vmatpush.xpose.msra.mxu0 0.0
    %1097 = vmatpush.xpose.msra.mxu0 0.0
    %1098 = vmatpush.xpose.msra.mxu0 %v1081
    %1099 = vmatmul.f32.gmra.mxu0 %v1079
    %v1100 = vpop.f32.mrf.mxu0
    %v1101 = vadd.f32 0.0, %v1100
    %1102 = vdwg.mxu0
    %v1103 = vsel %vm183, %v1101, -inf
    %1104 = vmax.xlane.f32.xlu0 %v1103
    %v1105 = vpop.xlane.xlu0 %1104
    %v1106 = vsub.f32 %v1101, %v1105
    %v1107 = vmul.f32 %v1106, 1.442695
    %v1108 = vpow.pop %v1107
    %v1109 = vsel %vm183, %v1108, 0.0
    %1110 = vadd.xlane.f32.xlu0 %v1109
    %v1111 = vpop.xlane.xlu0 %1110
    %v1112 = vrcp.pop %v1111
    %v1113 = vmul.f32 %v1108, %v1112
    %1114 = vrot.lane.b32.xlu0 %v1071, 64
    %v1115 = vpop.permute.xlu0 %1114
    %v1118 = vsel %vm183, %v1113, 0
    %1120 = vmatpush.msra.mxu0 0.0
    %1121 = vmatpush.msra.mxu0 0.0
    %1122 = vmatpush.msra.mxu0 0.0
    %1123 = vmatpush.msra.mxu0 0.0
    %1124 = vmatpush.msra.mxu0 0.0
    %1125 = vmatpush.msra.mxu0 0.0
    %1126 = vmatpush.msra.mxu0 0.0
    %1127 = vmatpush.msra.mxu0 0.0
    %1128 = vmatpush.msra.mxu0 0.0
    %1129 = vmatpush.msra.mxu0 0.0
    %1130 = vmatpush.msra.mxu0 0.0
    %1131 = vmatpush.msra.mxu0 0.0
    %1132 = vmatpush.msra.mxu0 0.0
    %1133 = vmatpush.msra.mxu0 0.0
    %1134 = vmatpush.msra.mxu0 0.0
    %1135 = vmatpush.msra.mxu0 %v1115
    %1136 = vmatmul.f32.gmra.mxu0 %v1118
    %v1137 = vpop.f32.mrf.mxu0
    %v1138 = vadd.f32 0.0, %v1137
    %1139 = vdwg.mxu0
    %1140 = vrot.lane.b32.xlu0 %v1071, 120
    %v1141 = vpop.permute.xlu0 %1140
    %1142 = vrot.lane.b32.xlu0 %v1071, 88
    %v1143 = vpop.permute.xlu0 %1142
    %v1144 = vsel %vm183, %v1141, 0
    %v1146 = vsel %vm183, %v1143, 0
    %1148 = vmatpush.xpose.msra.mxu0 0.0
    %1149 = vmatpush.xpose.msra.mxu0 0.0
    %1150 = vmatpush.xpose.msra.mxu0 0.0
    %1151 = vmatpush.xpose.msra.mxu0 0.0
    %1152 = vmatpush.xpose.msra.mxu0 0.0
    %1153 = vmatpush.xpose.msra.mxu0 0.0
    %1154 = vmatpush.xpose.msra.mxu0 0.0
    %1155 = vmatpush.xpose.msra.mxu0 0.0
    %1156 = vmatpush.xpose.msra.mxu0 0.0
    %1157 = vmatpush.xpose.msra.mxu0 0.0
    %1158 = vmatpush.xpose.msra.mxu0 0.0
    %1159 = vmatpush.xpose.msra.mxu0 0.0
    %1160 = vmatpush.xpose.msra.mxu0 0.0
    %1161 = vmatpush.xpose.msra.mxu0 0.0
    %1162 = vmatpush.xpose.msra.mxu0 0.0
    %1163 = vmatpush.xpose.msra.mxu0 %v1146
    %1164 = vmatmul.f32.gmra.mxu0 %v1144
    %v1165 = vpop.f32.mrf.mxu0
    %v1166 = vadd.f32 0.0, %v1165
    %1167 = vdwg.mxu0
    %v1168 = vsel %vm183, %v1166, -inf
    %1169 = vmax.xlane.f32.xlu0 %v1168
    %v1170 = vpop.xlane.xlu0 %1169
    %v1171 = vsub.f32 %v1166, %v1170
    %v1172 = vmul.f32 %v1171, 1.442695
    %v1173 = vpow.pop %v1172
    %v1174 = vsel %vm183, %v1173, 0.0
    %1175 = vadd.xlane.f32.xlu0 %v1174
    %v1176 = vpop.xlane.xlu0 %1175
    %v1177 = vrcp.pop %v1176
    %v1178 = vmul.f32 %v1173, %v1177
    %1179 = vrot.lane.b32.xlu0 %v1071, 56
    %v1180 = vpop.permute.xlu0 %1179
    %v1183 = vsel %vm183, %v1178, 0
    %1185 = vmatpush.msra.mxu0 0.0
    %1186 = vmatpush.msra.mxu0 0.0
    %1187 = vmatpush.msra.mxu0 0.0
    %1188 = vmatpush.msra.mxu0 0.0
    %1189 = vmatpush.msra.mxu0 0.0
    %1190 = vmatpush.msra.mxu0 0.0
    %1191 = vmatpush.msra.mxu0 0.0
    %1192 = vmatpush.msra.mxu0 0.0
    %1193 = vmatpush.msra.mxu0 0.0
    %1194 = vmatpush.msra.mxu0 0.0
    %1195 = vmatpush.msra.mxu0 0.0
    %1196 = vmatpush.msra.mxu0 0.0
    %1197 = vmatpush.msra.mxu0 0.0
    %1198 = vmatpush.msra.mxu0 0.0
    %1199 = vmatpush.msra.mxu0 0.0
    %1200 = vmatpush.msra.mxu0 %v1180
    %1201 = vmatmul.f32.gmra.mxu0 %v1183
    %v1202 = vpop.f32.mrf.mxu0
    %v1203 = vadd.f32 0.0, %v1202
    %1204 = vdwg.mxu0
    %1205 = vrot.lane.b32.xlu0 %v1071, 112
    %v1206 = vpop.permute.xlu0 %1205
    %1207 = vrot.lane.b32.xlu0 %v1071, 80
    %v1208 = vpop.permute.xlu0 %1207
    %v1209 = vsel %vm183, %v1206, 0
    %v1211 = vsel %vm183, %v1208, 0
    %1213 = vmatpush.xpose.msra.mxu0 0.0
    %1214 = vmatpush.xpose.msra.mxu0 0.0
    %1215 = vmatpush.xpose.msra.mxu0 0.0
    %1216 = vmatpush.xpose.msra.mxu0 0.0
    %1217 = vmatpush.xpose.msra.mxu0 0.0
    %1218 = vmatpush.xpose.msra.mxu0 0.0
    %1219 = vmatpush.xpose.msra.mxu0 0.0
    %1220 = vmatpush.xpose.msra.mxu0 0.0
    %1221 = vmatpush.xpose.msra.mxu0 0.0
    %1222 = vmatpush.xpose.msra.mxu0 0.0
    %1223 = vmatpush.xpose.msra.mxu0 0.0
    %1224 = vmatpush.xpose.msra.mxu0 0.0
    %1225 = vmatpush.xpose.msra.mxu0 0.0
    %1226 = vmatpush.xpose.msra.mxu0 0.0
    %1227 = vmatpush.xpose.msra.mxu0 0.0
    %1228 = vmatpush.xpose.msra.mxu0 %v1211
    %1229 = vmatmul.f32.gmra.mxu0 %v1209
    %v1230 = vpop.f32.mrf.mxu0
    %v1231 = vadd.f32 0.0, %v1230
    %1232 = vdwg.mxu0
    %v1233 = vsel %vm183, %v1231, -inf
    %1234 = vmax.xlane.f32.xlu0 %v1233
    %v1235 = vpop.xlane.xlu0 %1234
    %v1236 = vsub.f32 %v1231, %v1235
    %v1237 = vmul.f32 %v1236, 1.442695
    %v1238 = vpow.pop %v1237
    %v1239 = vsel %vm183, %v1238, 0.0
    %1240 = vadd.xlane.f32.xlu0 %v1239
    %v1241 = vpop.xlane.xlu0 %1240
    %v1242 = vrcp.pop %v1241
    %v1243 = vmul.f32 %v1238, %v1242
    %1244 = vrot.lane.b32.xlu0 %v1071, 48
    %v1245 = vpop.permute.xlu0 %1244
    %v1248 = vsel %vm183, %v1243, 0
    %1250 = vmatpush.msra.mxu0 0.0
    %1251 = vmatpush.msra.mxu0 0.0
    %1252 = vmatpush.msra.mxu0 0.0
    %1253 = vmatpush.msra.mxu0 0.0
    %1254 = vmatpush.msra.mxu0 0.0
    %1255 = vmatpush.msra.mxu0 0.0
    %1256 = vmatpush.msra.mxu0 0.0
    %1257 = vmatpush.msra.mxu0 0.0
    %1258 = vmatpush.msra.mxu0 0.0
    %1259 = vmatpush.msra.mxu0 0.0
    %1260 = vmatpush.msra.mxu0 0.0
    %1261 = vmatpush.msra.mxu0 0.0
    %1262 = vmatpush.msra.mxu0 0.0
    %1263 = vmatpush.msra.mxu0 0.0
    %1264 = vmatpush.msra.mxu0 0.0
    %1265 = vmatpush.msra.mxu0 %v1245
    %1266 = vmatmul.f32.gmra.mxu0 %v1248
    %v1267 = vpop.f32.mrf.mxu0
    %v1268 = vadd.f32 0.0, %v1267
    %1269 = vdwg.mxu0
    %1270 = vrot.lane.b32.xlu0 %v1071, 104
    %v1271 = vpop.permute.xlu0 %1270
    %1272 = vrot.lane.b32.xlu0 %v1071, 72
    %v1273 = vpop.permute.xlu0 %1272
    %v1274 = vsel %vm183, %v1271, 0
    %v1276 = vsel %vm183, %v1273, 0
    %1278 = vmatpush.xpose.msra.mxu0 0.0
    %1279 = vmatpush.xpose.msra.mxu0 0.0
    %1280 = vmatpush.xpose.msra.mxu0 0.0
    %1281 = vmatpush.xpose.msra.mxu0 0.0
    %1282 = vmatpush.xpose.msra.mxu0 0.0
    %1283 = vmatpush.xpose.msra.mxu0 0.0
    %1284 = vmatpush.xpose.msra.mxu0 0.0
    %1285 = vmatpush.xpose.msra.mxu0 0.0
    %1286 = vmatpush.xpose.msra.mxu0 0.0
    %1287 = vmatpush.xpose.msra.mxu0 0.0
    %1288 = vmatpush.xpose.msra.mxu0 0.0
    %1289 = vmatpush.xpose.msra.mxu0 0.0
    %1290 = vmatpush.xpose.msra.mxu0 0.0
    %1291 = vmatpush.xpose.msra.mxu0 0.0
    %1292 = vmatpush.xpose.msra.mxu0 0.0
    %1293 = vmatpush.xpose.msra.mxu0 %v1276
    %1294 = vmatmul.f32.gmra.mxu0 %v1274
    %v1295 = vpop.f32.mrf.mxu0
    %v1296 = vadd.f32 0.0, %v1295
    %1297 = vdwg.mxu0
    %v1298 = vsel %vm183, %v1296, -inf
    %1299 = vmax.xlane.f32.xlu0 %v1298
    %v1300 = vpop.xlane.xlu0 %1299
    %v1301 = vsub.f32 %v1296, %v1300
    %v1302 = vmul.f32 %v1301, 1.442695
    %v1303 = vpow.pop %v1302
    %v1304 = vsel %vm183, %v1303, 0.0
    %1305 = vadd.xlane.f32.xlu0 %v1304
    %v1306 = vpop.xlane.xlu0 %1305
    %v1307 = vrcp.pop %v1306
    %v1308 = vmul.f32 %v1303, %v1307
    %1309 = vrot.lane.b32.xlu0 %v1071, 40
    %v1310 = vpop.permute.xlu0 %1309
    %v1313 = vsel %vm183, %v1308, 0
    %1315 = vmatpush.msra.mxu0 0.0
    %1316 = vmatpush.msra.mxu0 0.0
    %1317 = vmatpush.msra.mxu0 0.0
    %1318 = vmatpush.msra.mxu0 0.0
    %1319 = vmatpush.msra.mxu0 0.0
    %1320 = vmatpush.msra.mxu0 0.0
    %1321 = vmatpush.msra.mxu0 0.0
    %1322 = vmatpush.msra.mxu0 0.0
    %1323 = vmatpush.msra.mxu0 0.0
    %1324 = vmatpush.msra.mxu0 0.0
    %1325 = vmatpush.msra.mxu0 0.0
    %1326 = vmatpush.msra.mxu0 0.0
    %1327 = vmatpush.msra.mxu0 0.0
    %1328 = vmatpush.msra.mxu0 0.0
    %1329 = vmatpush.msra.mxu0 0.0
    %1330 = vmatpush.msra.mxu0 %v1310
    %1331 = vmatmul.f32.gmra.mxu0 %v1313
    %v1332 = vpop.f32.mrf.mxu0
    %v1333 = vadd.f32 0.0, %v1332
    %1334 = vdwg.mxu0
    %1335 = vmatpush.msra.mxu0 0.0
    %1336 = vmatpush.msra.mxu0 0.0
    %1337 = vmatpush.msra.mxu0 0.0
    %1338 = vmatpush.msra.mxu0 0.0
    %1339 = vmatpush.msra.mxu0 0.0
    %1340 = vmatpush.msra.mxu0 0.0
    %1341 = vmatpush.msra.mxu0 0.0
    %1342 = vmatpush.msra.mxu0 0.0
    %1343 = vmatpush.msra.mxu0 0.0
    %1344 = vmatpush.msra.mxu0 0.0
    %1345 = vmatpush.msra.mxu0 0.0
    %1346 = vmatpush.msra.mxu0 0.0
    %1347 = vmatpush.msra.mxu0 %v1333
    %1348 = vmatpush.msra.mxu0 %v1268
    %1349 = vmatpush.msra.mxu0 %v1203
    %1350 = vmatpush.msra.mxu0 %v1138
    %1351 = vmatmul.f32.gmra.mxu0 %v441
    %v1352 = vpop.f32.mrf.mxu0
    %v1353 = vadd.f32 0.0, %v1352
    %1354 = vmatmul.f32.gmra.mxu0 %v444
    %v1355 = vpop.f32.mrf.mxu0
    %v1356 = vadd.f32 0.0, %v1355
    %1357 = vmatmul.f32.gmra.mxu0 %v447
    %v1358 = vpop.f32.mrf.mxu0
    %v1359 = vadd.f32 0.0, %v1358
    %1360 = vmatmul.f32.gmra.mxu0 %v450
    %v1361 = vpop.f32.mrf.mxu0
    %v1362 = vadd.f32 0.0, %v1361
    %1363 = vdwg.mxu0
    %1365 = vrot.lane.b32.xlu0 %v1356, 8
    %v1366 = vpop.permute.xlu0 %1365
    %1369 = vrot.lane.b32.xlu0 %v1359, 16
    %v1370 = vpop.permute.xlu0 %1369
    %1373 = vrot.lane.b32.xlu0 %v1362, 24
    %v1374 = vpop.permute.xlu0 %1373
    %v1376 = vsel %vm183, %v1353, %v1366
    %v1377 = vsel %vm494, %v1376, %v1370
    %v1378 = vsel %vm496, %v1377, %v1374
    %1380 = vrot.lane.b32.xlu0 %v1074, 96
    %v1381 = vpop.permute.xlu0 %1380
    %v1382 = vsel %vm183, %v1074, 0
    %v1384 = vsel %vm183, %v1381, 0
    %1386 = vmatpush.xpose.msra.mxu0 0.0
    %1387 = vmatpush.xpose.msra.mxu0 0.0
    %1388 = vmatpush.xpose.msra.mxu0 0.0
    %1389 = vmatpush.xpose.msra.mxu0 0.0
    %1390 = vmatpush.xpose.msra.mxu0 0.0
    %1391 = vmatpush.xpose.msra.mxu0 0.0
    %1392 = vmatpush.xpose.msra.mxu0 0.0
    %1393 = vmatpush.xpose.msra.mxu0 0.0
    %1394 = vmatpush.xpose.msra.mxu0 0.0
    %1395 = vmatpush.xpose.msra.mxu0 0.0
    %1396 = vmatpush.xpose.msra.mxu0 0.0
    %1397 = vmatpush.xpose.msra.mxu0 0.0
    %1398 = vmatpush.xpose.msra.mxu0 0.0
    %1399 = vmatpush.xpose.msra.mxu0 0.0
    %1400 = vmatpush.xpose.msra.mxu0 0.0
    %1401 = vmatpush.xpose.msra.mxu0 %v1384
    %1402 = vmatmul.f32.gmra.mxu0 %v1382
    %v1403 = vpop.f32.mrf.mxu0
    %v1404 = vadd.f32 0.0, %v1403
    %1405 = vdwg.mxu0
    %v1406 = vsel %vm183, %v1404, -inf
    %1407 = vmax.xlane.f32.xlu0 %v1406
    %v1408 = vpop.xlane.xlu0 %1407
    %v1409 = vsub.f32 %v1404, %v1408
    %v1410 = vmul.f32 %v1409, 1.442695
    %v1411 = vpow.pop %v1410
    %v1412 = vsel %vm183, %v1411, 0.0
    %1413 = vadd.xlane.f32.xlu0 %v1412
    %v1414 = vpop.xlane.xlu0 %1413
    %v1415 = vrcp.pop %v1414
    %v1416 = vmul.f32 %v1411, %v1415
    %1417 = vrot.lane.b32.xlu0 %v1074, 64
    %v1418 = vpop.permute.xlu0 %1417
    %v1421 = vsel %vm183, %v1416, 0
    %1423 = vmatpush.msra.mxu0 0.0
    %1424 = vmatpush.msra.mxu0 0.0
    %1425 = vmatpush.msra.mxu0 0.0
    %1426 = vmatpush.msra.mxu0 0.0
    %1427 = vmatpush.msra.mxu0 0.0
    %1428 = vmatpush.msra.mxu0 0.0
    %1429 = vmatpush.msra.mxu0 0.0
    %1430 = vmatpush.msra.mxu0 0.0
    %1431 = vmatpush.msra.mxu0 0.0
    %1432 = vmatpush.msra.mxu0 0.0
    %1433 = vmatpush.msra.mxu0 0.0
    %1434 = vmatpush.msra.mxu0 0.0
    %1435 = vmatpush.msra.mxu0 0.0
    %1436 = vmatpush.msra.mxu0 0.0
    %1437 = vmatpush.msra.mxu0 0.0
    %1438 = vmatpush.msra.mxu0 %v1418
    %1439 = vmatmul.f32.gmra.mxu0 %v1421
    %v1440 = vpop.f32.mrf.mxu0
    %v1441 = vadd.f32 0.0, %v1440
    %1442 = vdwg.mxu0
    %1443 = vrot.lane.b32.xlu0 %v1074, 120
    %v1444 = vpop.permute.xlu0 %1443
    %1445 = vrot.lane.b32.xlu0 %v1074, 88
    %v1446 = vpop.permute.xlu0 %1445
    %v1447 = vsel %vm183, %v1444, 0
    %v1449 = vsel %vm183, %v1446, 0
    %1451 = vmatpush.xpose.msra.mxu0 0.0
    %1452 = vmatpush.xpose.msra.mxu0 0.0
    %1453 = vmatpush.xpose.msra.mxu0 0.0
    %1454 = vmatpush.xpose.msra.mxu0 0.0
    %1455 = vmatpush.xpose.msra.mxu0 0.0
    %1456 = vmatpush.xpose.msra.mxu0 0.0
    %1457 = vmatpush.xpose.msra.mxu0 0.0
    %1458 = vmatpush.xpose.msra.mxu0 0.0
    %1459 = vmatpush.xpose.msra.mxu0 0.0
    %1460 = vmatpush.xpose.msra.mxu0 0.0
    %1461 = vmatpush.xpose.msra.mxu0 0.0
    %1462 = vmatpush.xpose.msra.mxu0 0.0
    %1463 = vmatpush.xpose.msra.mxu0 0.0
    %1464 = vmatpush.xpose.msra.mxu0 0.0
    %1465 = vmatpush.xpose.msra.mxu0 0.0
    %1466 = vmatpush.xpose.msra.mxu0 %v1449
    %1467 = vmatmul.f32.gmra.mxu0 %v1447
    %v1468 = vpop.f32.mrf.mxu0
    %v1469 = vadd.f32 0.0, %v1468
    %1470 = vdwg.mxu0
    %v1471 = vsel %vm183, %v1469, -inf
    %1472 = vmax.xlane.f32.xlu0 %v1471
    %v1473 = vpop.xlane.xlu0 %1472
    %v1474 = vsub.f32 %v1469, %v1473
    %v1475 = vmul.f32 %v1474, 1.442695
    %v1476 = vpow.pop %v1475
    %v1477 = vsel %vm183, %v1476, 0.0
    %1478 = vadd.xlane.f32.xlu0 %v1477
    %v1479 = vpop.xlane.xlu0 %1478
    %v1480 = vrcp.pop %v1479
    %v1481 = vmul.f32 %v1476, %v1480
    %1482 = vrot.lane.b32.xlu0 %v1074, 56
    %v1483 = vpop.permute.xlu0 %1482
    %v1486 = vsel %vm183, %v1481, 0
    %1488 = vmatpush.msra.mxu0 0.0
    %1489 = vmatpush.msra.mxu0 0.0
    %1490 = vmatpush.msra.mxu0 0.0
    %1491 = vmatpush.msra.mxu0 0.0
    %1492 = vmatpush.msra.mxu0 0.0
    %1493 = vmatpush.msra.mxu0 0.0
    %1494 = vmatpush.msra.mxu0 0.0
    %1495 = vmatpush.msra.mxu0 0.0
    %1496 = vmatpush.msra.mxu0 0.0
    %1497 = vmatpush.msra.mxu0 0.0
    %1498 = vmatpush.msra.mxu0 0.0
    %1499 = vmatpush.msra.mxu0 0.0
    %1500 = vmatpush.msra.mxu0 0.0
    %1501 = vmatpush.msra.mxu0 0.0
    %1502 = vmatpush.msra.mxu0 0.0
    %1503 = vmatpush.msra.mxu0 %v1483
    %1504 = vmatmul.f32.gmra.mxu0 %v1486
    %v1505 = vpop.f32.mrf.mxu0
    %v1506 = vadd.f32 0.0, %v1505
    %1507 = vdwg.mxu0
    %1508 = vrot.lane.b32.xlu0 %v1074, 112
    %v1509 = vpop.permute.xlu0 %1508
    %1510 = vrot.lane.b32.xlu0 %v1074, 80
    %v1511 = vpop.permute.xlu0 %1510
    %v1512 = vsel %vm183, %v1509, 0
    %v1514 = vsel %vm183, %v1511, 0
    %1516 = vmatpush.xpose.msra.mxu0 0.0
    %1517 = vmatpush.xpose.msra.mxu0 0.0
    %1518 = vmatpush.xpose.msra.mxu0 0.0
    %1519 = vmatpush.xpose.msra.mxu0 0.0
    %1520 = vmatpush.xpose.msra.mxu0 0.0
    %1521 = vmatpush.xpose.msra.mxu0 0.0
    %1522 = vmatpush.xpose.msra.mxu0 0.0
    %1523 = vmatpush.xpose.msra.mxu0 0.0
    %1524 = vmatpush.xpose.msra.mxu0 0.0
    %1525 = vmatpush.xpose.msra.mxu0 0.0
    %1526 = vmatpush.xpose.msra.mxu0 0.0
    %1527 = vmatpush.xpose.msra.mxu0 0.0
    %1528 = vmatpush.xpose.msra.mxu0 0.0
    %1529 = vmatpush.xpose.msra.mxu0 0.0
    %1530 = vmatpush.xpose.msra.mxu0 0.0
    %1531 = vmatpush.xpose.msra.mxu0 %v1514
    %1532 = vmatmul.f32.gmra.mxu0 %v1512
    %v1533 = vpop.f32.mrf.mxu0
    %v1534 = vadd.f32 0.0, %v1533
    %1535 = vdwg.mxu0
    %v1536 = vsel %vm183, %v1534, -inf
    %1537 = vmax.xlane.f32.xlu0 %v1536
    %v1538 = vpop.xlane.xlu0 %1537
    %v1539 = vsub.f32 %v1534, %v1538
    %v1540 = vmul.f32 %v1539, 1.442695
    %v1541 = vpow.pop %v1540
    %v1542 = vsel %vm183, %v1541, 0.0
    %1543 = vadd.xlane.f32.xlu0 %v1542
    %v1544 = vpop.xlane.xlu0 %1543
    %v1545 = vrcp.pop %v1544
    %v1546 = vmul.f32 %v1541, %v1545
    %1547 = vrot.lane.b32.xlu0 %v1074, 48
    %v1548 = vpop.permute.xlu0 %1547
    %v1551 = vsel %vm183, %v1546, 0
    %1553 = vmatpush.msra.mxu0 0.0
    %1554 = vmatpush.msra.mxu0 0.0
    %1555 = vmatpush.msra.mxu0 0.0
    %1556 = vmatpush.msra.mxu0 0.0
    %1557 = vmatpush.msra.mxu0 0.0
    %1558 = vmatpush.msra.mxu0 0.0
    %1559 = vmatpush.msra.mxu0 0.0
    %1560 = vmatpush.msra.mxu0 0.0
    %1561 = vmatpush.msra.mxu0 0.0
    %1562 = vmatpush.msra.mxu0 0.0
    %1563 = vmatpush.msra.mxu0 0.0
    %1564 = vmatpush.msra.mxu0 0.0
    %1565 = vmatpush.msra.mxu0 0.0
    %1566 = vmatpush.msra.mxu0 0.0
    %1567 = vmatpush.msra.mxu0 0.0
    %1568 = vmatpush.msra.mxu0 %v1548
    %1569 = vmatmul.f32.gmra.mxu0 %v1551
    %v1570 = vpop.f32.mrf.mxu0
    %v1571 = vadd.f32 0.0, %v1570
    %1572 = vdwg.mxu0
    %1573 = vrot.lane.b32.xlu0 %v1074, 104
    %v1574 = vpop.permute.xlu0 %1573
    %1575 = vrot.lane.b32.xlu0 %v1074, 72
    %v1576 = vpop.permute.xlu0 %1575
    %v1577 = vsel %vm183, %v1574, 0
    %v1579 = vsel %vm183, %v1576, 0
    %1581 = vmatpush.xpose.msra.mxu0 0.0
    %1582 = vmatpush.xpose.msra.mxu0 0.0
    %1583 = vmatpush.xpose.msra.mxu0 0.0
    %1584 = vmatpush.xpose.msra.mxu0 0.0
    %1585 = vmatpush.xpose.msra.mxu0 0.0
    %1586 = vmatpush.xpose.msra.mxu0 0.0
    %1587 = vmatpush.xpose.msra.mxu0 0.0
    %1588 = vmatpush.xpose.msra.mxu0 0.0
    %1589 = vmatpush.xpose.msra.mxu0 0.0
    %1590 = vmatpush.xpose.msra.mxu0 0.0
    %1591 = vmatpush.xpose.msra.mxu0 0.0
    %1592 = vmatpush.xpose.msra.mxu0 0.0
    %1593 = vmatpush.xpose.msra.mxu0 0.0
    %1594 = vmatpush.xpose.msra.mxu0 0.0
    %1595 = vmatpush.xpose.msra.mxu0 0.0
    %1596 = vmatpush.xpose.msra.mxu0 %v1579
    %1597 = vmatmul.f32.gmra.mxu0 %v1577
    %v1598 = vpop.f32.mrf.mxu0
    %v1599 = vadd.f32 0.0, %v1598
    %1600 = vdwg.mxu0
    %v1601 = vsel %vm183, %v1599, -inf
    %1602 = vmax.xlane.f32.xlu0 %v1601
    %v1603 = vpop.xlane.xlu0 %1602
    %v1604 = vsub.f32 %v1599, %v1603
    %v1605 = vmul.f32 %v1604, 1.442695
    %v1606 = vpow.pop %v1605
    %v1607 = vsel %vm183, %v1606, 0.0
    %1608 = vadd.xlane.f32.xlu0 %v1607
    %v1609 = vpop.xlane.xlu0 %1608
    %v1610 = vrcp.pop %v1609
    %v1611 = vmul.f32 %v1606, %v1610
    %1612 = vrot.lane.b32.xlu0 %v1074, 40
    %v1613 = vpop.permute.xlu0 %1612
    %v1616 = vsel %vm183, %v1611, 0
    %1618 = vmatpush.msra.mxu0 0.0
    %1619 = vmatpush.msra.mxu0 0.0
    %1620 = vmatpush.msra.mxu0 0.0
    %1621 = vmatpush.msra.mxu0 0.0
    %1622 = vmatpush.msra.mxu0 0.0
    %1623 = vmatpush.msra.mxu0 0.0
    %1624 = vmatpush.msra.mxu0 0.0
    %1625 = vmatpush.msra.mxu0 0.0
    %1626 = vmatpush.msra.mxu0 0.0
    %1627 = vmatpush.msra.mxu0 0.0
    %1628 = vmatpush.msra.mxu0 0.0
    %1629 = vmatpush.msra.mxu0 0.0
    %1630 = vmatpush.msra.mxu0 0.0
    %1631 = vmatpush.msra.mxu0 0.0
    %1632 = vmatpush.msra.mxu0 0.0
    %1633 = vmatpush.msra.mxu0 %v1613
    %1634 = vmatmul.f32.gmra.mxu0 %v1616
    %v1635 = vpop.f32.mrf.mxu0
    %v1636 = vadd.f32 0.0, %v1635
    %1637 = vdwg.mxu0
    %1638 = vmatpush.msra.mxu0 0.0
    %1639 = vmatpush.msra.mxu0 0.0
    %1640 = vmatpush.msra.mxu0 0.0
    %1641 = vmatpush.msra.mxu0 0.0
    %1642 = vmatpush.msra.mxu0 0.0
    %1643 = vmatpush.msra.mxu0 0.0
    %1644 = vmatpush.msra.mxu0 0.0
    %1645 = vmatpush.msra.mxu0 0.0
    %1646 = vmatpush.msra.mxu0 0.0
    %1647 = vmatpush.msra.mxu0 0.0
    %1648 = vmatpush.msra.mxu0 0.0
    %1649 = vmatpush.msra.mxu0 0.0
    %1650 = vmatpush.msra.mxu0 %v1636
    %1651 = vmatpush.msra.mxu0 %v1571
    %1652 = vmatpush.msra.mxu0 %v1506
    %1653 = vmatpush.msra.mxu0 %v1441
    %1654 = vmatmul.f32.gmra.mxu0 %v441
    %v1655 = vpop.f32.mrf.mxu0
    %v1656 = vadd.f32 0.0, %v1655
    %1657 = vmatmul.f32.gmra.mxu0 %v444
    %v1658 = vpop.f32.mrf.mxu0
    %v1659 = vadd.f32 0.0, %v1658
    %1660 = vmatmul.f32.gmra.mxu0 %v447
    %v1661 = vpop.f32.mrf.mxu0
    %v1662 = vadd.f32 0.0, %v1661
    %1663 = vmatmul.f32.gmra.mxu0 %v450
    %v1664 = vpop.f32.mrf.mxu0
    %v1665 = vadd.f32 0.0, %v1664
    %1666 = vdwg.mxu0
    %1668 = vrot.lane.b32.xlu0 %v1659, 8
    %v1669 = vpop.permute.xlu0 %1668
    %1672 = vrot.lane.b32.xlu0 %v1662, 16
    %v1673 = vpop.permute.xlu0 %1672
    %1676 = vrot.lane.b32.xlu0 %v1665, 24
    %v1677 = vpop.permute.xlu0 %1676
    %v1679 = vsel %vm183, %v1656, %v1669
    %v1680 = vsel %vm494, %v1679, %v1673
    %v1681 = vsel %vm496, %v1680, %v1677
    %v1683 = vperm.slane %v1043, 0
    %v1686 = vsel %vm150, %v1378, 0
    %v1689 = vsel %vm150, %v1681, 0
    %1691 = vmatpush.msra.mxu0 0.0
    %1692 = vmatpush.msra.mxu0 0.0
    %1693 = vmatpush.msra.mxu0 0.0
    %1694 = vmatpush.msra.mxu0 0.0
    %1695 = vmatpush.msra.mxu0 0.0
    %1696 = vmatpush.msra.mxu0 0.0
    %1697 = vmatpush.msra.mxu0 0.0
    %1698 = vmatpush.msra.mxu0 0.0
    %1699 = vmatpush.msra.mxu0 0.0
    %1700 = vmatpush.msra.mxu0 0.0
    %1701 = vmatpush.msra.mxu0 0.0
    %1702 = vmatpush.msra.mxu0 0.0
    %1703 = vmatpush.msra.mxu0 %v1041
    %1704 = vmatpush.msra.mxu0 %v1040
    %1705 = vmatpush.msra.mxu0 %v1039
    %1706 = vmatpush.msra.mxu0 %v1038
    %1707 = vmatmul.f32.gmra.mxu0 %v1686
    %v1708 = vpop.f32.mrf.mxu0
    %v1709 = vadd.f32 %v1683, %v1708
    %1710 = vmatmul.f32.gmra.mxu0 %v1689
    %v1711 = vpop.f32.mrf.mxu0
    %v1712 = vadd.f32 %v1683, %v1711
    %1713 = vdwg.mxu0
    %v1714 = vadd.f32 %v1028, %v1709
    %v1715 = vadd.f32 %v1029, %v1712
    %s1716 = scalar_lea.vmem %s15, 1
    %v1717 = vld [vmem:[%s1716] sm:$0x1]
    %s1718 = scalar_lea.vmem %s17, 1
    %v1719 = vld [vmem:[%s1718] sm:$0x1]
    %v1720 = vsel %vm150, %v1714, 0.0
    %1721 = vadd.xlane.f32.xlu0 %v1720
    %v1722 = vpop.xlane.xlu0 %1721
    %v1723 = vsel %vm150, %v1715, 0.0
    %1724 = vadd.xlane.f32.xlu0 %v1723
    %v1725 = vpop.xlane.xlu0 %1724
    %v1726 = vmul.f32 %v1722, %v849
    %v1727 = vmul.f32 %v1725, %v849
    %v1728 = vsub.f32 %v1714, %v1726
    %v1729 = vsub.f32 %v1715, %v1727
    %v1730 = vmul.f32 %v1728, %v1728
    %v1731 = vmul.f32 %v1729, %v1729
    %v1732 = vsel %vm150, %v1730, 0.0
    %1733 = vadd.xlane.f32.xlu0 %v1732
    %v1734 = vpop.xlane.xlu0 %1733
    %v1735 = vsel %vm150, %v1731, 0.0
    %1736 = vadd.xlane.f32.xlu0 %v1735
    %v1737 = vpop.xlane.xlu0 %1736
    %v1738 = vmul.f32 %v1734, %v849
    %v1739 = vmul.f32 %v1737, %v849
    %v1740 = vadd.f32 %v1738, 1e-05
    %v1741 = vadd.f32 %v1739, 1e-05
    %v1742 = vrsqrt.pop %v1740
    %v1743 = vmul.f32 %v1742, %v1740
    %v1744 = vmul.f32 %v1743, %v1742
    %v1745 = vmul.f32 0.5, %v1744
    %v1746 = vsub.f32 1.5, %v1745
    %v1747 = vmul.f32 %v1742, %v1746
    %vm1748 = vweird.f32 %v1740
    %vm1749 = vweird.f32 %v1742
    %vm1750 = vmor %vm1748, %vm1749
    %v1751 = vsel %vm1750, %v1742, %v1747
    %v1752 = vrsqrt.pop %v1741
    %v1753 = vmul.f32 %v1752, %v1741
    %v1754 = vmul.f32 %v1753, %v1752
    %v1755 = vmul.f32 0.5, %v1754
    %v1756 = vsub.f32 1.5, %v1755
    %v1757 = vmul.f32 %v1752, %v1756
    %vm1758 = vweird.f32 %v1741
    %vm1759 = vweird.f32 %v1752
    %vm1760 = vmor %vm1758, %vm1759
    %v1761 = vsel %vm1760, %v1752, %v1757
    %v1762 = vmul.f32 %v1728, %v1751
    %v1763 = vmul.f32 %v1729, %v1761
    %v1765 = vperm.slane %v1717, 0
    %v1767 = vmul.f32 %v1762, %v1765
    %v1768 = vmul.f32 %v1763, %v1765
    %v1770 = vperm.slane %v1719, 0
    %v1772 = vadd.f32 %v1767, %v1770
    %v1773 = vadd.f32 %v1768, %v1770
    %s1774 = scalar_lea.vmem %s19, 32
    %v1775 = vld [vmem:[%s1774] sm:$0xff]
    %v1776 = vld [vmem:[%s1774 + $0x8] sm:$0xff]
    %v1777 = vld [vmem:[%s1774 + $0x10] sm:$0xff]
    %v1778 = vld [vmem:[%s1774 + $0x18] sm:$0xff]
    %s1779 = scalar_lea.vmem %s21, 1
    %v1780 = vld [vmem:[%s1779] sm:$0x1]
    %v1782 = vperm.slane %v1780, 0
    %v1785 = vsel %vm150, %v1772, 0
    %v1788 = vsel %vm150, %v1773, 0
    %1790 = vmatpush.msra.mxu0 0.0
    %1791 = vmatpush.msra.mxu0 0.0
    %1792 = vmatpush.msra.mxu0 0.0
    %1793 = vmatpush.msra.mxu0 0.0
    %1794 = vmatpush.msra.mxu0 0.0
    %1795 = vmatpush.msra.mxu0 0.0
    %1796 = vmatpush.msra.mxu0 0.0
    %1797 = vmatpush.msra.mxu0 0.0
    %1798 = vmatpush.msra.mxu0 0.0
    %1799 = vmatpush.msra.mxu0 0.0
    %1800 = vmatpush.msra.mxu0 0.0
    %1801 = vmatpush.msra.mxu0 0.0
    %1802 = vmatpush.msra.mxu0 %v1778
    %1803 = vmatpush.msra.mxu0 %v1777
    %1804 = vmatpush.msra.mxu0 %v1776
    %1805 = vmatpush.msra.mxu0 %v1775
    %1806 = vmatmul.f32.gmra.mxu0 %v1785
    %v1807 = vpop.f32.mrf.mxu0
    %v1808 = vadd.f32 %v1782, %v1807
    %1809 = vmatmul.f32.gmra.mxu0 %v1788
    %v1810 = vpop.f32.mrf.mxu0
    %v1811 = vadd.f32 %v1782, %v1810
    %1812 = vdwg.mxu0
    %v1813 = vmax.f32 %v1808, 0.0
    %v1814 = vmax.f32 %v1811, 0.0
    %s1815 = scalar_lea.vmem %s23, 128
    %v1816 = vld [vmem:[%s1815] sm:$0xff]
    %v1817 = vld [vmem:[%s1815 + $0x8] sm:$0xff]
    %v1818 = vld [vmem:[%s1815 + $0x10] sm:$0xff]
    %v1819 = vld [vmem:[%s1815 + $0x18] sm:$0xff]
    %v1820 = vld [vmem:[%s1815 + $0x20] sm:$0xff]
    %v1821 = vld [vmem:[%s1815 + $0x28] sm:$0xff]
    %v1822 = vld [vmem:[%s1815 + $0x30] sm:$0xff]
    %v1823 = vld [vmem:[%s1815 + $0x38] sm:$0xff]
    %v1824 = vld [vmem:[%s1815 + $0x40] sm:$0xff]
    %v1825 = vld [vmem:[%s1815 + $0x48] sm:$0xff]
    %v1826 = vld [vmem:[%s1815 + $0x50] sm:$0xff]
    %v1827 = vld [vmem:[%s1815 + $0x58] sm:$0xff]
    %v1828 = vld [vmem:[%s1815 + $0x60] sm:$0xff]
    %v1829 = vld [vmem:[%s1815 + $0x68] sm:$0xff]
    %v1830 = vld [vmem:[%s1815 + $0x70] sm:$0xff]
    %v1831 = vld [vmem:[%s1815 + $0x78] sm:$0xff]
    %s1832 = scalar_lea.vmem %s25, 1
    %v1833 = vld [vmem:[%s1832] sm:$0x1]
    %v1835 = vperm.slane %v1833, 0
    %1837 = vmatpush.msra.mxu0 %v1831
    %1838 = vmatpush.msra.mxu0 %v1830
    %1839 = vmatpush.msra.mxu0 %v1829
    %1840 = vmatpush.msra.mxu0 %v1828
    %1841 = vmatpush.msra.mxu0 %v1827
    %1842 = vmatpush.msra.mxu0 %v1826
    %1843 = vmatpush.msra.mxu0 %v1825
    %1844 = vmatpush.msra.mxu0 %v1824
    %1845 = vmatpush.msra.mxu0 %v1823
    %1846 = vmatpush.msra.mxu0 %v1822
    %1847 = vmatpush.msra.mxu0 %v1821
    %1848 = vmatpush.msra.mxu0 %v1820
    %1849 = vmatpush.msra.mxu0 %v1819
    %1850 = vmatpush.msra.mxu0 %v1818
    %1851 = vmatpush.msra.mxu0 %v1817
    %1852 = vmatpush.msra.mxu0 %v1816
    %1853 = vmatmul.f32.gmra.mxu0 %v1813
    %v1854 = vpop.f32.mrf.mxu0
    %v1855 = vadd.f32 %v1835, %v1854
    %1856 = vmatmul.f32.gmra.mxu0 %v1814
    %v1857 = vpop.f32.mrf.mxu0
    %v1858 = vadd.f32 %v1835, %v1857
    %1859 = vdwg.mxu0
    %v1860 = vadd.f32 %v1772, %v1855
    %v1861 = vadd.f32 %v1773, %v1858
    %v1862 = vsel %vm150, %v1860, 0.0
    %1863 = vadd.xlane.f32.xlu0 %v1862
    %v1864 = vpop.xlane.xlu0 %1863
    %v1865 = vsel %vm150, %v1861, 0.0
    %1866 = vadd.xlane.f32.xlu0 %v1865
    %v1867 = vpop.xlane.xlu0 %1866
    %v1868 = vmul.f32 %v1864, %v849
    %v1869 = vmul.f32 %v1867, %v849
    %v1870 = vsub.f32 %v1860, %v1868
    %v1871 = vsub.f32 %v1861, %v1869
    %v1872 = vmul.f32 %v1870, %v1870
    %v1873 = vmul.f32 %v1871, %v1871
    %v1874 = vsel %vm150, %v1872, 0.0
    %1875 = vadd.xlane.f32.xlu0 %v1874
    %v1876 = vpop.xlane.xlu0 %1875
    %v1877 = vsel %vm150, %v1873, 0.0
    %1878 = vadd.xlane.f32.xlu0 %v1877
    %v1879 = vpop.xlane.xlu0 %1878
    %v1880 = vmul.f32 %v1876, %v849
    %v1881 = vmul.f32 %v1879, %v849
    %v1882 = vadd.f32 %v1880, 1e-05
    %v1883 = vadd.f32 %v1881, 1e-05
    %v1884 = vrsqrt.pop %v1882
    %v1885 = vmul.f32 %v1884, %v1882
    %v1886 = vmul.f32 %v1885, %v1884
    %v1887 = vmul.f32 0.5, %v1886
    %v1888 = vsub.f32 1.5, %v1887
    %v1889 = vmul.f32 %v1884, %v1888
    %vm1890 = vweird.f32 %v1882
    %vm1891 = vweird.f32 %v1884
    %vm1892 = vmor %vm1890, %vm1891
    %v1893 = vsel %vm1892, %v1884, %v1889
    %v1894 = vrsqrt.pop %v1883
    %v1895 = vmul.f32 %v1894, %v1883
    %v1896 = vmul.f32 %v1895, %v1894
    %v1897 = vmul.f32 0.5, %v1896
    %v1898 = vsub.f32 1.5, %v1897
    %v1899 = vmul.f32 %v1894, %v1898
    %vm1900 = vweird.f32 %v1883
    %vm1901 = vweird.f32 %v1894
    %vm1902 = vmor %vm1900, %vm1901
    %v1903 = vsel %vm1902, %v1894, %v1899
    %v1904 = vmul.f32 %v1870, %v1893
    %v1905 = vmul.f32 %v1871, %v1903
    %v1906 = vmul.f32 %v1904, %v1765
    %v1907 = vmul.f32 %v1905, %v1765
    %v1908 = vadd.f32 %v1906, %v1770
    %v1909 = vadd.f32 %v1907, %v1770
    %v1910 = vld [vmem:[%s3] sm:$0xff]
    %v1911 = vld [vmem:[%s3 + $0x8] sm:$0xff]
    %v1912 = vld [vmem:[%s27] sm:$0xff]
    %v1913 = vld [vmem:[%s27 + $0x8] sm:$0xff]
    %v1914 = vld [vmem:[%s27 + $0x10] sm:$0xff]
    %v1915 = vld [vmem:[%s27 + $0x18] sm:$0xff]
    %v1916 = vld [vmem:[%s29] sm:$0x1]
    %v1917 = vld [vmem:[%s31] sm:$0xff]
    %v1918 = vld [vmem:[%s31 + $0x8] sm:$0xff]
    %v1919 = vld [vmem:[%s31 + $0x10] sm:$0xff]
    %v1920 = vld [vmem:[%s31 + $0x18] sm:$0xff]
    %v1921 = vld [vmem:[%s33] sm:$0x1]
    %v1923 = vperm.slane %v1916, 0
    %v1926 = vsel %vm150, %v1910, 0
    %v1929 = vsel %vm150, %v1911, 0
    %1931 = vmatpush.msra.mxu0 0.0
    %1932 = vmatpush.msra.mxu0 0.0
    %1933 = vmatpush.msra.mxu0 0.0
    %1934 = vmatpush.msra.mxu0 0.0
    %1935 = vmatpush.msra.mxu0 0.0
    %1936 = vmatpush.msra.mxu0 0.0
    %1937 = vmatpush.msra.mxu0 0.0
    %1938 = vmatpush.msra.mxu0 0.0
    %1939 = vmatpush.msra.mxu0 0.0
    %1940 = vmatpush.msra.mxu0 0.0
    %1941 = vmatpush.msra.mxu0 0.0
    %1942 = vmatpush.msra.mxu0 0.0
    %1943 = vmatpush.msra.mxu0 %v1915
    %1944 = vmatpush.msra.mxu0 %v1914
    %1945 = vmatpush.msra.mxu0 %v1913
    %1946 = vmatpush.msra.mxu0 %v1912
    %1947 = vmatmul.f32.gmra.mxu0 %v1926
    %v1948 = vpop.f32.mrf.mxu0
    %v1949 = vadd.f32 %v1923, %v1948
    %1950 = vmatmul.f32.gmra.mxu0 %v1929
    %v1951 = vpop.f32.mrf.mxu0
    %v1952 = vadd.f32 %v1923, %v1951
    %1953 = vdwg.mxu0
    %1955 = vrot.lane.b32.xlu0 %v1949, 96
    %v1956 = vpop.permute.xlu0 %1955
    %v1957 = vsel %vm183, %v1949, 0
    %v1959 = vsel %vm183, %v1956, 0
    %1961 = vmatpush.xpose.msra.mxu0 0.0
    %1962 = vmatpush.xpose.msra.mxu0 0.0
    %1963 = vmatpush.xpose.msra.mxu0 0.0
    %1964 = vmatpush.xpose.msra.mxu0 0.0
    %1965 = vmatpush.xpose.msra.mxu0 0.0
    %1966 = vmatpush.xpose.msra.mxu0 0.0
    %1967 = vmatpush.xpose.msra.mxu0 0.0
    %1968 = vmatpush.xpose.msra.mxu0 0.0
    %1969 = vmatpush.xpose.msra.mxu0 0.0
    %1970 = vmatpush.xpose.msra.mxu0 0.0
    %1971 = vmatpush.xpose.msra.mxu0 0.0
    %1972 = vmatpush.xpose.msra.mxu0 0.0
    %1973 = vmatpush.xpose.msra.mxu0 0.0
    %1974 = vmatpush.xpose.msra.mxu0 0.0
    %1975 = vmatpush.xpose.msra.mxu0 0.0
    %1976 = vmatpush.xpose.msra.mxu0 %v1959
    %1977 = vmatmul.f32.gmra.mxu0 %v1957
    %v1978 = vpop.f32.mrf.mxu0
    %v1979 = vadd.f32 0.0, %v1978
    %1980 = vdwg.mxu0
    %v1981 = vsel %vm183, %v1979, -inf
    %1982 = vmax.xlane.f32.xlu0 %v1981
    %v1983 = vpop.xlane.xlu0 %1982
    %v1984 = vsub.f32 %v1979, %v1983
    %v1985 = vmul.f32 %v1984, 1.442695
    %v1986 = vpow.pop %v1985
    %v1987 = vsel %vm183, %v1986, 0.0
    %1988 = vadd.xlane.f32.xlu0 %v1987
    %v1989 = vpop.xlane.xlu0 %1988
    %v1990 = vrcp.pop %v1989
    %v1991 = vmul.f32 %v1986, %v1990
    %1992 = vrot.lane.b32.xlu0 %v1949, 64
    %v1993 = vpop.permute.xlu0 %1992
    %v1996 = vsel %vm183, %v1991, 0
    %1998 = vmatpush.msra.mxu0 0.0
    %1999 = vmatpush.msra.mxu0 0.0
    %2000 = vmatpush.msra.mxu0 0.0
    %2001 = vmatpush.msra.mxu0 0.0
    %2002 = vmatpush.msra.mxu0 0.0
    %2003 = vmatpush.msra.mxu0 0.0
    %2004 = vmatpush.msra.mxu0 0.0
    %2005 = vmatpush.msra.mxu0 0.0
    %2006 = vmatpush.msra.mxu0 0.0
    %2007 = vmatpush.msra.mxu0 0.0
    %2008 = vmatpush.msra.mxu0 0.0
    %2009 = vmatpush.msra.mxu0 0.0
    %2010 = vmatpush.msra.mxu0 0.0
    %2011 = vmatpush.msra.mxu0 0.0
    %2012 = vmatpush.msra.mxu0 0.0
    %2013 = vmatpush.msra.mxu0 %v1993
    %2014 = vmatmul.f32.gmra.mxu0 %v1996
    %v2015 = vpop.f32.mrf.mxu0
    %v2016 = vadd.f32 0.0, %v2015
    %2017 = vdwg.mxu0
    %2018 = vrot.lane.b32.xlu0 %v1949, 120
    %v2019 = vpop.permute.xlu0 %2018
    %2020 = vrot.lane.b32.xlu0 %v1949, 88
    %v2021 = vpop.permute.xlu0 %2020
    %v2022 = vsel %vm183, %v2019, 0
    %v2024 = vsel %vm183, %v2021, 0
    %2026 = vmatpush.xpose.msra.mxu0 0.0
    %2027 = vmatpush.xpose.msra.mxu0 0.0
    %2028 = vmatpush.xpose.msra.mxu0 0.0
    %2029 = vmatpush.xpose.msra.mxu0 0.0
    %2030 = vmatpush.xpose.msra.mxu0 0.0
    %2031 = vmatpush.xpose.msra.mxu0 0.0
    %2032 = vmatpush.xpose.msra.mxu0 0.0
    %2033 = vmatpush.xpose.msra.mxu0 0.0
    %2034 = vmatpush.xpose.msra.mxu0 0.0
    %2035 = vmatpush.xpose.msra.mxu0 0.0
    %2036 = vmatpush.xpose.msra.mxu0 0.0
    %2037 = vmatpush.xpose.msra.mxu0 0.0
    %2038 = vmatpush.xpose.msra.mxu0 0.0
    %2039 = vmatpush.xpose.msra.mxu0 0.0
    %2040 = vmatpush.xpose.msra.mxu0 0.0
    %2041 = vmatpush.xpose.msra.mxu0 %v2024
    %2042 = vmatmul.f32.gmra.mxu0 %v2022
    %v2043 = vpop.f32.mrf.mxu0
    %v2044 = vadd.f32 0.0, %v2043
    %2045 = vdwg.mxu0
    %v2046 = vsel %vm183, %v2044, -inf
    %2047 = vmax.xlane.f32.xlu0 %v2046
    %v2048 = vpop.xlane.xlu0 %2047
    %v2049 = vsub.f32 %v2044, %v2048
    %v2050 = vmul.f32 %v2049, 1.442695
    %v2051 = vpow.pop %v2050
    %v2052 = vsel %vm183, %v2051, 0.0
    %2053 = vadd.xlane.f32.xlu0 %v2052
    %v2054 = vpop.xlane.xlu0 %2053
    %v2055 = vrcp.pop %v2054
    %v2056 = vmul.f32 %v2051, %v2055
    %2057 = vrot.lane.b32.xlu0 %v1949, 56
    %v2058 = vpop.permute.xlu0 %2057
    %v2061 = vsel %vm183, %v2056, 0
    %2063 = vmatpush.msra.mxu0 0.0
    %2064 = vmatpush.msra.mxu0 0.0
    %2065 = vmatpush.msra.mxu0 0.0
    %2066 = vmatpush.msra.mxu0 0.0
    %2067 = vmatpush.msra.mxu0 0.0
    %2068 = vmatpush.msra.mxu0 0.0
    %2069 = vmatpush.msra.mxu0 0.0
    %2070 = vmatpush.msra.mxu0 0.0
    %2071 = vmatpush.msra.mxu0 0.0
    %2072 = vmatpush.msra.mxu0 0.0
    %2073 = vmatpush.msra.mxu0 0.0
    %2074 = vmatpush.msra.mxu0 0.0
    %2075 = vmatpush.msra.mxu0 0.0
    %2076 = vmatpush.msra.mxu0 0.0
    %2077 = vmatpush.msra.mxu0 0.0
    %2078 = vmatpush.msra.mxu0 %v2058
    %2079 = vmatmul.f32.gmra.mxu0 %v2061
    %v2080 = vpop.f32.mrf.mxu0
    %v2081 = vadd.f32 0.0, %v2080
    %2082 = vdwg.mxu0
    %2083 = vrot.lane.b32.xlu0 %v1949, 112
    %v2084 = vpop.permute.xlu0 %2083
    %2085 = vrot.lane.b32.xlu0 %v1949, 80
    %v2086 = vpop.permute.xlu0 %2085
    %v2087 = vsel %vm183, %v2084, 0
    %v2089 = vsel %vm183, %v2086, 0
    %2091 = vmatpush.xpose.msra.mxu0 0.0
    %2092 = vmatpush.xpose.msra.mxu0 0.0
    %2093 = vmatpush.xpose.msra.mxu0 0.0
    %2094 = vmatpush.xpose.msra.mxu0 0.0
    %2095 = vmatpush.xpose.msra.mxu0 0.0
    %2096 = vmatpush.xpose.msra.mxu0 0.0
    %2097 = vmatpush.xpose.msra.mxu0 0.0
    %2098 = vmatpush.xpose.msra.mxu0 0.0
    %2099 = vmatpush.xpose.msra.mxu0 0.0
    %2100 = vmatpush.xpose.msra.mxu0 0.0
    %2101 = vmatpush.xpose.msra.mxu0 0.0
    %2102 = vmatpush.xpose.msra.mxu0 0.0
    %2103 = vmatpush.xpose.msra.mxu0 0.0
    %2104 = vmatpush.xpose.msra.mxu0 0.0
    %2105 = vmatpush.xpose.msra.mxu0 0.0
    %2106 = vmatpush.xpose.msra.mxu0 %v2089
    %2107 = vmatmul.f32.gmra.mxu0 %v2087
    %v2108 = vpop.f32.mrf.mxu0
    %v2109 = vadd.f32 0.0, %v2108
    %2110 = vdwg.mxu0
    %v2111 = vsel %vm183, %v2109, -inf
    %2112 = vmax.xlane.f32.xlu0 %v2111
    %v2113 = vpop.xlane.xlu0 %2112
    %v2114 = vsub.f32 %v2109, %v2113
    %v2115 = vmul.f32 %v2114, 1.442695
    %v2116 = vpow.pop %v2115
    %v2117 = vsel %vm183, %v2116, 0.0
    %2118 = vadd.xlane.f32.xlu0 %v2117
    %v2119 = vpop.xlane.xlu0 %2118
    %v2120 = vrcp.pop %v2119
    %v2121 = vmul.f32 %v2116, %v2120
    %2122 = vrot.lane.b32.xlu0 %v1949, 48
    %v2123 = vpop.permute.xlu0 %2122
    %v2126 = vsel %vm183, %v2121, 0
    %2128 = vmatpush.msra.mxu0 0.0
    %2129 = vmatpush.msra.mxu0 0.0
    %2130 = vmatpush.msra.mxu0 0.0
    %2131 = vmatpush.msra.mxu0 0.0
    %2132 = vmatpush.msra.mxu0 0.0
    %2133 = vmatpush.msra.mxu0 0.0
    %2134 = vmatpush.msra.mxu0 0.0
    %2135 = vmatpush.msra.mxu0 0.0
    %2136 = vmatpush.msra.mxu0 0.0
    %2137 = vmatpush.msra.mxu0 0.0
    %2138 = vmatpush.msra.mxu0 0.0
    %2139 = vmatpush.msra.mxu0 0.0
    %2140 = vmatpush.msra.mxu0 0.0
    %2141 = vmatpush.msra.mxu0 0.0
    %2142 = vmatpush.msra.mxu0 0.0
    %2143 = vmatpush.msra.mxu0 %v2123
    %2144 = vmatmul.f32.gmra.mxu0 %v2126
    %v2145 = vpop.f32.mrf.mxu0
    %v2146 = vadd.f32 0.0, %v2145
    %2147 = vdwg.mxu0
    %2148 = vrot.lane.b32.xlu0 %v1949, 104
    %v2149 = vpop.permute.xlu0 %2148
    %2150 = vrot.lane.b32.xlu0 %v1949, 72
    %v2151 = vpop.permute.xlu0 %2150
    %v2152 = vsel %vm183, %v2149, 0
    %v2154 = vsel %vm183, %v2151, 0
    %2156 = vmatpush.xpose.msra.mxu0 0.0
    %2157 = vmatpush.xpose.msra.mxu0 0.0
    %2158 = vmatpush.xpose.msra.mxu0 0.0
    %2159 = vmatpush.xpose.msra.mxu0 0.0
    %2160 = vmatpush.xpose.msra.mxu0 0.0
    %2161 = vmatpush.xpose.msra.mxu0 0.0
    %2162 = vmatpush.xpose.msra.mxu0 0.0
    %2163 = vmatpush.xpose.msra.mxu0 0.0
    %2164 = vmatpush.xpose.msra.mxu0 0.0
    %2165 = vmatpush.xpose.msra.mxu0 0.0
    %2166 = vmatpush.xpose.msra.mxu0 0.0
    %2167 = vmatpush.xpose.msra.mxu0 0.0
    %2168 = vmatpush.xpose.msra.mxu0 0.0
    %2169 = vmatpush.xpose.msra.mxu0 0.0
    %2170 = vmatpush.xpose.msra.mxu0 0.0
    %2171 = vmatpush.xpose.msra.mxu0 %v2154
    %2172 = vmatmul.f32.gmra.mxu0 %v2152
    %v2173 = vpop.f32.mrf.mxu0
    %v2174 = vadd.f32 0.0, %v2173
    %2175 = vdwg.mxu0
    %v2176 = vsel %vm183, %v2174, -inf
    %2177 = vmax.xlane.f32.xlu0 %v2176
    %v2178 = vpop.xlane.xlu0 %2177
    %v2179 = vsub.f32 %v2174, %v2178
    %v2180 = vmul.f32 %v2179, 1.442695
    %v2181 = vpow.pop %v2180
    %v2182 = vsel %vm183, %v2181, 0.0
    %2183 = vadd.xlane.f32.xlu0 %v2182
    %v2184 = vpop.xlane.xlu0 %2183
    %v2185 = vrcp.pop %v2184
    %v2186 = vmul.f32 %v2181, %v2185
    %2187 = vrot.lane.b32.xlu0 %v1949, 40
    %v2188 = vpop.permute.xlu0 %2187
    %v2191 = vsel %vm183, %v2186, 0
    %2193 = vmatpush.msra.mxu0 0.0
    %2194 = vmatpush.msra.mxu0 0.0
    %2195 = vmatpush.msra.mxu0 0.0
    %2196 = vmatpush.msra.mxu0 0.0
    %2197 = vmatpush.msra.mxu0 0.0
    %2198 = vmatpush.msra.mxu0 0.0
    %2199 = vmatpush.msra.mxu0 0.0
    %2200 = vmatpush.msra.mxu0 0.0
    %2201 = vmatpush.msra.mxu0 0.0
    %2202 = vmatpush.msra.mxu0 0.0
    %2203 = vmatpush.msra.mxu0 0.0
    %2204 = vmatpush.msra.mxu0 0.0
    %2205 = vmatpush.msra.mxu0 0.0
    %2206 = vmatpush.msra.mxu0 0.0
    %2207 = vmatpush.msra.mxu0 0.0
    %2208 = vmatpush.msra.mxu0 %v2188
    %2209 = vmatmul.f32.gmra.mxu0 %v2191
    %v2210 = vpop.f32.mrf.mxu0
    %v2211 = vadd.f32 0.0, %v2210
    %2212 = vdwg.mxu0
    %2213 = vmatpush.msra.mxu0 0.0
    %2214 = vmatpush.msra.mxu0 0.0
    %2215 = vmatpush.msra.mxu0 0.0
    %2216 = vmatpush.msra.mxu0 0.0
    %2217 = vmatpush.msra.mxu0 0.0
    %2218 = vmatpush.msra.mxu0 0.0
    %2219 = vmatpush.msra.mxu0 0.0
    %2220 = vmatpush.msra.mxu0 0.0
    %2221 = vmatpush.msra.mxu0 0.0
    %2222 = vmatpush.msra.mxu0 0.0
    %2223 = vmatpush.msra.mxu0 0.0
    %2224 = vmatpush.msra.mxu0 0.0
    %2225 = vmatpush.msra.mxu0 %v2211
    %2226 = vmatpush.msra.mxu0 %v2146
    %2227 = vmatpush.msra.mxu0 %v2081
    %2228 = vmatpush.msra.mxu0 %v2016
    %2229 = vmatmul.f32.gmra.mxu0 %v441
    %v2230 = vpop.f32.mrf.mxu0
    %v2231 = vadd.f32 0.0, %v2230
    %2232 = vmatmul.f32.gmra.mxu0 %v444
    %v2233 = vpop.f32.mrf.mxu0
    %v2234 = vadd.f32 0.0, %v2233
    %2235 = vmatmul.f32.gmra.mxu0 %v447
    %v2236 = vpop.f32.mrf.mxu0
    %v2237 = vadd.f32 0.0, %v2236
    %2238 = vmatmul.f32.gmra.mxu0 %v450
    %v2239 = vpop.f32.mrf.mxu0
    %v2240 = vadd.f32 0.0, %v2239
    %2241 = vdwg.mxu0
    %2243 = vrot.lane.b32.xlu0 %v2234, 8
    %v2244 = vpop.permute.xlu0 %2243
    %2247 = vrot.lane.b32.xlu0 %v2237, 16
    %v2248 = vpop.permute.xlu0 %2247
    %2251 = vrot.lane.b32.xlu0 %v2240, 24
    %v2252 = vpop.permute.xlu0 %2251
    %v2254 = vsel %vm183, %v2231, %v2244
    %v2255 = vsel %vm494, %v2254, %v2248
    %v2256 = vsel %vm496, %v2255, %v2252
    %2258 = vrot.lane.b32.xlu0 %v1952, 96
    %v2259 = vpop.permute.xlu0 %2258
    %v2260 = vsel %vm183, %v1952, 0
    %v2262 = vsel %vm183, %v2259, 0
    %2264 = vmatpush.xpose.msra.mxu0 0.0
    %2265 = vmatpush.xpose.msra.mxu0 0.0
    %2266 = vmatpush.xpose.msra.mxu0 0.0
    %2267 = vmatpush.xpose.msra.mxu0 0.0
    %2268 = vmatpush.xpose.msra.mxu0 0.0
    %2269 = vmatpush.xpose.msra.mxu0 0.0
    %2270 = vmatpush.xpose.msra.mxu0 0.0
    %2271 = vmatpush.xpose.msra.mxu0 0.0
    %2272 = vmatpush.xpose.msra.mxu0 0.0
    %2273 = vmatpush.xpose.msra.mxu0 0.0
    %2274 = vmatpush.xpose.msra.mxu0 0.0
    %2275 = vmatpush.xpose.msra.mxu0 0.0
    %2276 = vmatpush.xpose.msra.mxu0 0.0
    %2277 = vmatpush.xpose.msra.mxu0 0.0
    %2278 = vmatpush.xpose.msra.mxu0 0.0
    %2279 = vmatpush.xpose.msra.mxu0 %v2262
    %2280 = vmatmul.f32.gmra.mxu0 %v2260
    %v2281 = vpop.f32.mrf.mxu0
    %v2282 = vadd.f32 0.0, %v2281
    %2283 = vdwg.mxu0
    %v2284 = vsel %vm183, %v2282, -inf
    %2285 = vmax.xlane.f32.xlu0 %v2284
    %v2286 = vpop.xlane.xlu0 %2285
    %v2287 = vsub.f32 %v2282, %v2286
    %v2288 = vmul.f32 %v2287, 1.442695
    %v2289 = vpow.pop %v2288
    %v2290 = vsel %vm183, %v2289, 0.0
    %2291 = vadd.xlane.f32.xlu0 %v2290
    %v2292 = vpop.xlane.xlu0 %2291
    %v2293 = vrcp.pop %v2292
    %v2294 = vmul.f32 %v2289, %v2293
    %2295 = vrot.lane.b32.xlu0 %v1952, 64
    %v2296 = vpop.permute.xlu0 %2295
    %v2299 = vsel %vm183, %v2294, 0
    %2301 = vmatpush.msra.mxu0 0.0
    %2302 = vmatpush.msra.mxu0 0.0
    %2303 = vmatpush.msra.mxu0 0.0
    %2304 = vmatpush.msra.mxu0 0.0
    %2305 = vmatpush.msra.mxu0 0.0
    %2306 = vmatpush.msra.mxu0 0.0
    %2307 = vmatpush.msra.mxu0 0.0
    %2308 = vmatpush.msra.mxu0 0.0
    %2309 = vmatpush.msra.mxu0 0.0
    %2310 = vmatpush.msra.mxu0 0.0
    %2311 = vmatpush.msra.mxu0 0.0
    %2312 = vmatpush.msra.mxu0 0.0
    %2313 = vmatpush.msra.mxu0 0.0
    %2314 = vmatpush.msra.mxu0 0.0
    %2315 = vmatpush.msra.mxu0 0.0
    %2316 = vmatpush.msra.mxu0 %v2296
    %2317 = vmatmul.f32.gmra.mxu0 %v2299
    %v2318 = vpop.f32.mrf.mxu0
    %v2319 = vadd.f32 0.0, %v2318
    %2320 = vdwg.mxu0
    %2321 = vrot.lane.b32.xlu0 %v1952, 120
    %v2322 = vpop.permute.xlu0 %2321
    %2323 = vrot.lane.b32.xlu0 %v1952, 88
    %v2324 = vpop.permute.xlu0 %2323
    %v2325 = vsel %vm183, %v2322, 0
    %v2327 = vsel %vm183, %v2324, 0
    %2329 = vmatpush.xpose.msra.mxu0 0.0
    %2330 = vmatpush.xpose.msra.mxu0 0.0
    %2331 = vmatpush.xpose.msra.mxu0 0.0
    %2332 = vmatpush.xpose.msra.mxu0 0.0
    %2333 = vmatpush.xpose.msra.mxu0 0.0
    %2334 = vmatpush.xpose.msra.mxu0 0.0
    %2335 = vmatpush.xpose.msra.mxu0 0.0
    %2336 = vmatpush.xpose.msra.mxu0 0.0
    %2337 = vmatpush.xpose.msra.mxu0 0.0
    %2338 = vmatpush.xpose.msra.mxu0 0.0
    %2339 = vmatpush.xpose.msra.mxu0 0.0
    %2340 = vmatpush.xpose.msra.mxu0 0.0
    %2341 = vmatpush.xpose.msra.mxu0 0.0
    %2342 = vmatpush.xpose.msra.mxu0 0.0
    %2343 = vmatpush.xpose.msra.mxu0 0.0
    %2344 = vmatpush.xpose.msra.mxu0 %v2327
    %2345 = vmatmul.f32.gmra.mxu0 %v2325
    %v2346 = vpop.f32.mrf.mxu0
    %v2347 = vadd.f32 0.0, %v2346
    %2348 = vdwg.mxu0
    %v2349 = vsel %vm183, %v2347, -inf
    %2350 = vmax.xlane.f32.xlu0 %v2349
    %v2351 = vpop.xlane.xlu0 %2350
    %v2352 = vsub.f32 %v2347, %v2351
    %v2353 = vmul.f32 %v2352, 1.442695
    %v2354 = vpow.pop %v2353
    %v2355 = vsel %vm183, %v2354, 0.0
    %2356 = vadd.xlane.f32.xlu0 %v2355
    %v2357 = vpop.xlane.xlu0 %2356
    %v2358 = vrcp.pop %v2357
    %v2359 = vmul.f32 %v2354, %v2358
    %2360 = vrot.lane.b32.xlu0 %v1952, 56
    %v2361 = vpop.permute.xlu0 %2360
    %v2364 = vsel %vm183, %v2359, 0
    %2366 = vmatpush.msra.mxu0 0.0
    %2367 = vmatpush.msra.mxu0 0.0
    %2368 = vmatpush.msra.mxu0 0.0
    %2369 = vmatpush.msra.mxu0 0.0
    %2370 = vmatpush.msra.mxu0 0.0
    %2371 = vmatpush.msra.mxu0 0.0
    %2372 = vmatpush.msra.mxu0 0.0
    %2373 = vmatpush.msra.mxu0 0.0
    %2374 = vmatpush.msra.mxu0 0.0
    %2375 = vmatpush.msra.mxu0 0.0
    %2376 = vmatpush.msra.mxu0 0.0
    %2377 = vmatpush.msra.mxu0 0.0
    %2378 = vmatpush.msra.mxu0 0.0
    %2379 = vmatpush.msra.mxu0 0.0
    %2380 = vmatpush.msra.mxu0 0.0
    %2381 = vmatpush.msra.mxu0 %v2361
    %2382 = vmatmul.f32.gmra.mxu0 %v2364
    %v2383 = vpop.f32.mrf.mxu0
    %v2384 = vadd.f32 0.0, %v2383
    %2385 = vdwg.mxu0
    %2386 = vrot.lane.b32.xlu0 %v1952, 112
    %v2387 = vpop.permute.xlu0 %2386
    %2388 = vrot.lane.b32.xlu0 %v1952, 80
    %v2389 = vpop.permute.xlu0 %2388
    %v2390 = vsel %vm183, %v2387, 0
    %v2392 = vsel %vm183, %v2389, 0
    %2394 = vmatpush.xpose.msra.mxu0 0.0
    %2395 = vmatpush.xpose.msra.mxu0 0.0
    %2396 = vmatpush.xpose.msra.mxu0 0.0
    %2397 = vmatpush.xpose.msra.mxu0 0.0
    %2398 = vmatpush.xpose.msra.mxu0 0.0
    %2399 = vmatpush.xpose.msra.mxu0 0.0
    %2400 = vmatpush.xpose.msra.mxu0 0.0
    %2401 = vmatpush.xpose.msra.mxu0 0.0
    %2402 = vmatpush.xpose.msra.mxu0 0.0
    %2403 = vmatpush.xpose.msra.mxu0 0.0
    %2404 = vmatpush.xpose.msra.mxu0 0.0
    %2405 = vmatpush.xpose.msra.mxu0 0.0
    %2406 = vmatpush.xpose.msra.mxu0 0.0
    %2407 = vmatpush.xpose.msra.mxu0 0.0
    %2408 = vmatpush.xpose.msra.mxu0 0.0
    %2409 = vmatpush.xpose.msra.mxu0 %v2392
    %2410 = vmatmul.f32.gmra.mxu0 %v2390
    %v2411 = vpop.f32.mrf.mxu0
    %v2412 = vadd.f32 0.0, %v2411
    %2413 = vdwg.mxu0
    %v2414 = vsel %vm183, %v2412, -inf
    %2415 = vmax.xlane.f32.xlu0 %v2414
    %v2416 = vpop.xlane.xlu0 %2415
    %v2417 = vsub.f32 %v2412, %v2416
    %v2418 = vmul.f32 %v2417, 1.442695
    %v2419 = vpow.pop %v2418
    %v2420 = vsel %vm183, %v2419, 0.0
    %2421 = vadd.xlane.f32.xlu0 %v2420
    %v2422 = vpop.xlane.xlu0 %2421
    %v2423 = vrcp.pop %v2422
    %v2424 = vmul.f32 %v2419, %v2423
    %2425 = vrot.lane.b32.xlu0 %v1952, 48
    %v2426 = vpop.permute.xlu0 %2425
    %v2429 = vsel %vm183, %v2424, 0
    %2431 = vmatpush.msra.mxu0 0.0
    %2432 = vmatpush.msra.mxu0 0.0
    %2433 = vmatpush.msra.mxu0 0.0
    %2434 = vmatpush.msra.mxu0 0.0
    %2435 = vmatpush.msra.mxu0 0.0
    %2436 = vmatpush.msra.mxu0 0.0
    %2437 = vmatpush.msra.mxu0 0.0
    %2438 = vmatpush.msra.mxu0 0.0
    %2439 = vmatpush.msra.mxu0 0.0
    %2440 = vmatpush.msra.mxu0 0.0
    %2441 = vmatpush.msra.mxu0 0.0
    %2442 = vmatpush.msra.mxu0 0.0
    %2443 = vmatpush.msra.mxu0 0.0
    %2444 = vmatpush.msra.mxu0 0.0
    %2445 = vmatpush.msra.mxu0 0.0
    %2446 = vmatpush.msra.mxu0 %v2426
    %2447 = vmatmul.f32.gmra.mxu0 %v2429
    %v2448 = vpop.f32.mrf.mxu0
    %v2449 = vadd.f32 0.0, %v2448
    %2450 = vdwg.mxu0
    %2451 = vrot.lane.b32.xlu0 %v1952, 104
    %v2452 = vpop.permute.xlu0 %2451
    %2453 = vrot.lane.b32.xlu0 %v1952, 72
    %v2454 = vpop.permute.xlu0 %2453
    %v2455 = vsel %vm183, %v2452, 0
    %v2457 = vsel %vm183, %v2454, 0
    %2459 = vmatpush.xpose.msra.mxu0 0.0
    %2460 = vmatpush.xpose.msra.mxu0 0.0
    %2461 = vmatpush.xpose.msra.mxu0 0.0
    %2462 = vmatpush.xpose.msra.mxu0 0.0
    %2463 = vmatpush.xpose.msra.mxu0 0.0
    %2464 = vmatpush.xpose.msra.mxu0 0.0
    %2465 = vmatpush.xpose.msra.mxu0 0.0
    %2466 = vmatpush.xpose.msra.mxu0 0.0
    %2467 = vmatpush.xpose.msra.mxu0 0.0
    %2468 = vmatpush.xpose.msra.mxu0 0.0
    %2469 = vmatpush.xpose.msra.mxu0 0.0
    %2470 = vmatpush.xpose.msra.mxu0 0.0
    %2471 = vmatpush.xpose.msra.mxu0 0.0
    %2472 = vmatpush.xpose.msra.mxu0 0.0
    %2473 = vmatpush.xpose.msra.mxu0 0.0
    %2474 = vmatpush.xpose.msra.mxu0 %v2457
    %2475 = vmatmul.f32.gmra.mxu0 %v2455
    %v2476 = vpop.f32.mrf.mxu0
    %v2477 = vadd.f32 0.0, %v2476
    %2478 = vdwg.mxu0
    %v2479 = vsel %vm183, %v2477, -inf
    %2480 = vmax.xlane.f32.xlu0 %v2479
    %v2481 = vpop.xlane.xlu0 %2480
    %v2482 = vsub.f32 %v2477, %v2481
    %v2483 = vmul.f32 %v2482, 1.442695
    %v2484 = vpow.pop %v2483
    %v2485 = vsel %vm183, %v2484, 0.0
    %2486 = vadd.xlane.f32.xlu0 %v2485
    %v2487 = vpop.xlane.xlu0 %2486
    %v2488 = vrcp.pop %v2487
    %v2489 = vmul.f32 %v2484, %v2488
    %2490 = vrot.lane.b32.xlu0 %v1952, 40
    %v2491 = vpop.permute.xlu0 %2490
    %v2494 = vsel %vm183, %v2489, 0
    %2496 = vmatpush.msra.mxu0 0.0
    %2497 = vmatpush.msra.mxu0 0.0
    %2498 = vmatpush.msra.mxu0 0.0
    %2499 = vmatpush.msra.mxu0 0.0
    %2500 = vmatpush.msra.mxu0 0.0
    %2501 = vmatpush.msra.mxu0 0.0
    %2502 = vmatpush.msra.mxu0 0.0
    %2503 = vmatpush.msra.mxu0 0.0
    %2504 = vmatpush.msra.mxu0 0.0
    %2505 = vmatpush.msra.mxu0 0.0
    %2506 = vmatpush.msra.mxu0 0.0
    %2507 = vmatpush.msra.mxu0 0.0
    %2508 = vmatpush.msra.mxu0 0.0
    %2509 = vmatpush.msra.mxu0 0.0
    %2510 = vmatpush.msra.mxu0 0.0
    %2511 = vmatpush.msra.mxu0 %v2491
    %2512 = vmatmul.f32.gmra.mxu0 %v2494
    %v2513 = vpop.f32.mrf.mxu0
    %v2514 = vadd.f32 0.0, %v2513
    %2515 = vdwg.mxu0
    %2516 = vmatpush.msra.mxu0 0.0
    %2517 = vmatpush.msra.mxu0 0.0
    %2518 = vmatpush.msra.mxu0 0.0
    %2519 = vmatpush.msra.mxu0 0.0
    %2520 = vmatpush.msra.mxu0 0.0
    %2521 = vmatpush.msra.mxu0 0.0
    %2522 = vmatpush.msra.mxu0 0.0
    %2523 = vmatpush.msra.mxu0 0.0
    %2524 = vmatpush.msra.mxu0 0.0
    %2525 = vmatpush.msra.mxu0 0.0
    %2526 = vmatpush.msra.mxu0 0.0
    %2527 = vmatpush.msra.mxu0 0.0
    %2528 = vmatpush.msra.mxu0 %v2514
    %2529 = vmatpush.msra.mxu0 %v2449
    %2530 = vmatpush.msra.mxu0 %v2384
    %2531 = vmatpush.msra.mxu0 %v2319
    %2532 = vmatmul.f32.gmra.mxu0 %v441
    %v2533 = vpop.f32.mrf.mxu0
    %v2534 = vadd.f32 0.0, %v2533
    %2535 = vmatmul.f32.gmra.mxu0 %v444
    %v2536 = vpop.f32.mrf.mxu0
    %v2537 = vadd.f32 0.0, %v2536
    %2538 = vmatmul.f32.gmra.mxu0 %v447
    %v2539 = vpop.f32.mrf.mxu0
    %v2540 = vadd.f32 0.0, %v2539
    %2541 = vmatmul.f32.gmra.mxu0 %v450
    %v2542 = vpop.f32.mrf.mxu0
    %v2543 = vadd.f32 0.0, %v2542
    %2544 = vdwg.mxu0
    %2546 = vrot.lane.b32.xlu0 %v2537, 8
    %v2547 = vpop.permute.xlu0 %2546
    %2550 = vrot.lane.b32.xlu0 %v2540, 16
    %v2551 = vpop.permute.xlu0 %2550
    %2554 = vrot.lane.b32.xlu0 %v2543, 24
    %v2555 = vpop.permute.xlu0 %2554
    %v2557 = vsel %vm183, %v2534, %v2547
    %v2558 = vsel %vm494, %v2557, %v2551
    %v2559 = vsel %vm496, %v2558, %v2555
    %v2561 = vperm.slane %v1921, 0
    %v2564 = vsel %vm150, %v2256, 0
    %v2567 = vsel %vm150, %v2559, 0
    %2569 = vmatpush.msra.mxu0 0.0
    %2570 = vmatpush.msra.mxu0 0.0
    %2571 = vmatpush.msra.mxu0 0.0
    %2572 = vmatpush.msra.mxu0 0.0
    %2573 = vmatpush.msra.mxu0 0.0
    %2574 = vmatpush.msra.mxu0 0.0
    %2575 = vmatpush.msra.mxu0 0.0
    %2576 = vmatpush.msra.mxu0 0.0
    %2577 = vmatpush.msra.mxu0 0.0
    %2578 = vmatpush.msra.mxu0 0.0
    %2579 = vmatpush.msra.mxu0 0.0
    %2580 = vmatpush.msra.mxu0 0.0
    %2581 = vmatpush.msra.mxu0 %v1920
    %2582 = vmatpush.msra.mxu0 %v1919
    %2583 = vmatpush.msra.mxu0 %v1918
    %2584 = vmatpush.msra.mxu0 %v1917
    %2585 = vmatmul.f32.gmra.mxu0 %v2564
    %v2586 = vpop.f32.mrf.mxu0
    %v2587 = vadd.f32 %v2561, %v2586
    %2588 = vmatmul.f32.gmra.mxu0 %v2567
    %v2589 = vpop.f32.mrf.mxu0
    %v2590 = vadd.f32 %v2561, %v2589
    %2591 = vdwg.mxu0
    %v2592 = vadd.f32 %v1910, %v2587
    %v2593 = vadd.f32 %v1911, %v2590
    %v2594 = vld [vmem:[%s47] sm:$0x1]
    %v2595 = vld [vmem:[%s49] sm:$0x1]
    %v2596 = vsel %vm150, %v2592, 0.0
    %2597 = vadd.xlane.f32.xlu0 %v2596
    %v2598 = vpop.xlane.xlu0 %2597
    %v2599 = vsel %vm150, %v2593, 0.0
    %2600 = vadd.xlane.f32.xlu0 %v2599
    %v2601 = vpop.xlane.xlu0 %2600
    %v2602 = vmul.f32 %v2598, %v849
    %v2603 = vmul.f32 %v2601, %v849
    %v2604 = vsub.f32 %v2592, %v2602
    %v2605 = vsub.f32 %v2593, %v2603
    %v2606 = vmul.f32 %v2604, %v2604
    %v2607 = vmul.f32 %v2605, %v2605
    %v2608 = vsel %vm150, %v2606, 0.0
    %2609 = vadd.xlane.f32.xlu0 %v2608
    %v2610 = vpop.xlane.xlu0 %2609
    %v2611 = vsel %vm150, %v2607, 0.0
    %2612 = vadd.xlane.f32.xlu0 %v2611
    %v2613 = vpop.xlane.xlu0 %2612
    %v2614 = vmul.f32 %v2610, %v849
    %v2615 = vmul.f32 %v2613, %v849
    %v2616 = vadd.f32 %v2614, 1e-05
    %v2617 = vadd.f32 %v2615, 1e-05
    %v2618 = vrsqrt.pop %v2616
    %v2619 = vmul.f32 %v2618, %v2616
    %v2620 = vmul.f32 %v2619, %v2618
    %v2621 = vmul.f32 0.5, %v2620
    %v2622 = vsub.f32 1.5, %v2621
    %v2623 = vmul.f32 %v2618, %v2622
    %vm2624 = vweird.f32 %v2616
    %vm2625 = vweird.f32 %v2618
    %vm2626 = vmor %vm2624, %vm2625
    %v2627 = vsel %vm2626, %v2618, %v2623
    %v2628 = vrsqrt.pop %v2617
    %v2629 = vmul.f32 %v2628, %v2617
    %v2630 = vmul.f32 %v2629, %v2628
    %v2631 = vmul.f32 0.5, %v2630
    %v2632 = vsub.f32 1.5, %v2631
    %v2633 = vmul.f32 %v2628, %v2632
    %vm2634 = vweird.f32 %v2617
    %vm2635 = vweird.f32 %v2628
    %vm2636 = vmor %vm2634, %vm2635
    %v2637 = vsel %vm2636, %v2628, %v2633
    %v2638 = vmul.f32 %v2604, %v2627
    %v2639 = vmul.f32 %v2605, %v2637
    %v2641 = vperm.slane %v2594, 0
    %v2643 = vmul.f32 %v2638, %v2641
    %v2644 = vmul.f32 %v2639, %v2641
    %v2646 = vperm.slane %v2595, 0
    %v2648 = vadd.f32 %v2643, %v2646
    %v2649 = vadd.f32 %v2644, %v2646
    %v2650 = vld [vmem:[%s35] sm:$0xff]
    %v2651 = vld [vmem:[%s35 + $0x8] sm:$0xff]
    %v2652 = vld [vmem:[%s35 + $0x10] sm:$0xff]
    %v2653 = vld [vmem:[%s35 + $0x18] sm:$0xff]
    %v2654 = vld [vmem:[%s37] sm:$0x1]
    %v2655 = vld [vmem:[%s39] sm:$0xff]
    %v2656 = vld [vmem:[%s39 + $0x8] sm:$0xff]
    %v2657 = vld [vmem:[%s39 + $0x10] sm:$0xff]
    %v2658 = vld [vmem:[%s39 + $0x18] sm:$0xff]
    %v2659 = vld [vmem:[%s41] sm:$0x1]
    %v2660 = vld [vmem:[%s43] sm:$0xff]
    %v2661 = vld [vmem:[%s43 + $0x8] sm:$0xff]
    %v2662 = vld [vmem:[%s43 + $0x10] sm:$0xff]
    %v2663 = vld [vmem:[%s43 + $0x18] sm:$0xff]
    %v2664 = vld [vmem:[%s45] sm:$0x1]
    %v2666 = vperm.slane %v2654, 0
    %v2669 = vsel %vm150, %v2648, 0
    %v2672 = vsel %vm150, %v2649, 0
    %2674 = vmatpush.msra.mxu0 0.0
    %2675 = vmatpush.msra.mxu0 0.0
    %2676 = vmatpush.msra.mxu0 0.0
    %2677 = vmatpush.msra.mxu0 0.0
    %2678 = vmatpush.msra.mxu0 0.0
    %2679 = vmatpush.msra.mxu0 0.0
    %2680 = vmatpush.msra.mxu0 0.0
    %2681 = vmatpush.msra.mxu0 0.0
    %2682 = vmatpush.msra.mxu0 0.0
    %2683 = vmatpush.msra.mxu0 0.0
    %2684 = vmatpush.msra.mxu0 0.0
    %2685 = vmatpush.msra.mxu0 0.0
    %2686 = vmatpush.msra.mxu0 %v2653
    %2687 = vmatpush.msra.mxu0 %v2652
    %2688 = vmatpush.msra.mxu0 %v2651
    %2689 = vmatpush.msra.mxu0 %v2650
    %2690 = vmatmul.f32.gmra.mxu0 %v2669
    %v2691 = vpop.f32.mrf.mxu0
    %v2692 = vadd.f32 %v2666, %v2691
    %2693 = vmatmul.f32.gmra.mxu0 %v2672
    %v2694 = vpop.f32.mrf.mxu0
    %v2695 = vadd.f32 %v2666, %v2694
    %2696 = vdwg.mxu0
    %v2698 = vperm.slane %v2659, 0
    %v2701 = vsel %vm150, %v1908, 0
    %v2704 = vsel %vm150, %v1909, 0
    %2706 = vmatpush.msra.mxu0 0.0
    %2707 = vmatpush.msra.mxu0 0.0
    %2708 = vmatpush.msra.mxu0 0.0
    %2709 = vmatpush.msra.mxu0 0.0
    %2710 = vmatpush.msra.mxu0 0.0
    %2711 = vmatpush.msra.mxu0 0.0
    %2712 = vmatpush.msra.mxu0 0.0
    %2713 = vmatpush.msra.mxu0 0.0
    %2714 = vmatpush.msra.mxu0 0.0
    %2715 = vmatpush.msra.mxu0 0.0
    %2716 = vmatpush.msra.mxu0 0.0
    %2717 = vmatpush.msra.mxu0 0.0
    %2718 = vmatpush.msra.mxu0 %v2658
    %2719 = vmatpush.msra.mxu0 %v2657
    %2720 = vmatpush.msra.mxu0 %v2656
    %2721 = vmatpush.msra.mxu0 %v2655
    %2722 = vmatmul.f32.gmra.mxu0 %v2701
    %v2723 = vpop.f32.mrf.mxu0
    %v2724 = vadd.f32 %v2698, %v2723
    %2725 = vmatmul.f32.gmra.mxu0 %v2704
    %v2726 = vpop.f32.mrf.mxu0
    %v2727 = vadd.f32 %v2698, %v2726
    %2728 = vdwg.mxu0
    %v2730 = vsel %vm183, %v2692, 0
    %v2733 = vsel %vm183, %v2724, 0
    %2735 = vmatpush.xpose.msra.mxu0 0.0
    %2736 = vmatpush.xpose.msra.mxu0 0.0
    %2737 = vmatpush.xpose.msra.mxu0 0.0
    %2738 = vmatpush.xpose.msra.mxu0 0.0
    %2739 = vmatpush.xpose.msra.mxu0 0.0
    %2740 = vmatpush.xpose.msra.mxu0 0.0
    %2741 = vmatpush.xpose.msra.mxu0 0.0
    %2742 = vmatpush.xpose.msra.mxu0 0.0
    %2743 = vmatpush.xpose.msra.mxu0 0.0
    %2744 = vmatpush.xpose.msra.mxu0 0.0
    %2745 = vmatpush.xpose.msra.mxu0 0.0
    %2746 = vmatpush.xpose.msra.mxu0 0.0
    %2747 = vmatpush.xpose.msra.mxu0 0.0
    %2748 = vmatpush.xpose.msra.mxu0 0.0
    %2749 = vmatpush.xpose.msra.mxu0 0.0
    %2750 = vmatpush.xpose.msra.mxu0 %v2733
    %2751 = vmatmul.f32.gmra.mxu0 %v2730
    %v2752 = vpop.f32.mrf.mxu0
    %v2753 = vadd.f32 0.0, %v2752
    %2754 = vdwg.mxu0
    %v2755 = vsel %vm183, %v2753, -inf
    %2756 = vmax.xlane.f32.xlu0 %v2755
    %v2757 = vpop.xlane.xlu0 %2756
    %v2758 = vsub.f32 %v2753, %v2757
    %v2759 = vmul.f32 %v2758, 1.442695
    %v2760 = vpow.pop %v2759
    %v2761 = vsel %vm183, %v2760, 0.0
    %2762 = vadd.xlane.f32.xlu0 %v2761
    %v2763 = vpop.xlane.xlu0 %2762
    %v2764 = vrcp.pop %v2763
    %v2765 = vmul.f32 %v2760, %v2764
    %2766 = vrot.lane.b32.xlu0 %v2724, 96
    %v2767 = vpop.permute.xlu0 %2766
    %v2770 = vsel %vm183, %v2765, 0
    %2772 = vmatpush.msra.mxu0 0.0
    %2773 = vmatpush.msra.mxu0 0.0
    %2774 = vmatpush.msra.mxu0 0.0
    %2775 = vmatpush.msra.mxu0 0.0
    %2776 = vmatpush.msra.mxu0 0.0
    %2777 = vmatpush.msra.mxu0 0.0
    %2778 = vmatpush.msra.mxu0 0.0
    %2779 = vmatpush.msra.mxu0 0.0
    %2780 = vmatpush.msra.mxu0 0.0
    %2781 = vmatpush.msra.mxu0 0.0
    %2782 = vmatpush.msra.mxu0 0.0
    %2783 = vmatpush.msra.mxu0 0.0
    %2784 = vmatpush.msra.mxu0 0.0
    %2785 = vmatpush.msra.mxu0 0.0
    %2786 = vmatpush.msra.mxu0 0.0
    %2787 = vmatpush.msra.mxu0 %v2767
    %2788 = vmatmul.f32.gmra.mxu0 %v2770
    %v2789 = vpop.f32.mrf.mxu0
    %v2790 = vadd.f32 0.0, %v2789
    %2791 = vdwg.mxu0
    %2792 = vrot.lane.b32.xlu0 %v2692, 120
    %v2793 = vpop.permute.xlu0 %2792
    %2794 = vrot.lane.b32.xlu0 %v2724, 120
    %v2795 = vpop.permute.xlu0 %2794
    %v2796 = vsel %vm183, %v2793, 0
    %v2798 = vsel %vm183, %v2795, 0
    %2800 = vmatpush.xpose.msra.mxu0 0.0
    %2801 = vmatpush.xpose.msra.mxu0 0.0
    %2802 = vmatpush.xpose.msra.mxu0 0.0
    %2803 = vmatpush.xpose.msra.mxu0 0.0
    %2804 = vmatpush.xpose.msra.mxu0 0.0
    %2805 = vmatpush.xpose.msra.mxu0 0.0
    %2806 = vmatpush.xpose.msra.mxu0 0.0
    %2807 = vmatpush.xpose.msra.mxu0 0.0
    %2808 = vmatpush.xpose.msra.mxu0 0.0
    %2809 = vmatpush.xpose.msra.mxu0 0.0
    %2810 = vmatpush.xpose.msra.mxu0 0.0
    %2811 = vmatpush.xpose.msra.mxu0 0.0
    %2812 = vmatpush.xpose.msra.mxu0 0.0
    %2813 = vmatpush.xpose.msra.mxu0 0.0
    %2814 = vmatpush.xpose.msra.mxu0 0.0
    %2815 = vmatpush.xpose.msra.mxu0 %v2798
    %2816 = vmatmul.f32.gmra.mxu0 %v2796
    %v2817 = vpop.f32.mrf.mxu0
    %v2818 = vadd.f32 0.0, %v2817
    %2819 = vdwg.mxu0
    %v2820 = vsel %vm183, %v2818, -inf
    %2821 = vmax.xlane.f32.xlu0 %v2820
    %v2822 = vpop.xlane.xlu0 %2821
    %v2823 = vsub.f32 %v2818, %v2822
    %v2824 = vmul.f32 %v2823, 1.442695
    %v2825 = vpow.pop %v2824
    %v2826 = vsel %vm183, %v2825, 0.0
    %2827 = vadd.xlane.f32.xlu0 %v2826
    %v2828 = vpop.xlane.xlu0 %2827
    %v2829 = vrcp.pop %v2828
    %v2830 = vmul.f32 %v2825, %v2829
    %2831 = vrot.lane.b32.xlu0 %v2724, 88
    %v2832 = vpop.permute.xlu0 %2831
    %v2835 = vsel %vm183, %v2830, 0
    %2837 = vmatpush.msra.mxu0 0.0
    %2838 = vmatpush.msra.mxu0 0.0
    %2839 = vmatpush.msra.mxu0 0.0
    %2840 = vmatpush.msra.mxu0 0.0
    %2841 = vmatpush.msra.mxu0 0.0
    %2842 = vmatpush.msra.mxu0 0.0
    %2843 = vmatpush.msra.mxu0 0.0
    %2844 = vmatpush.msra.mxu0 0.0
    %2845 = vmatpush.msra.mxu0 0.0
    %2846 = vmatpush.msra.mxu0 0.0
    %2847 = vmatpush.msra.mxu0 0.0
    %2848 = vmatpush.msra.mxu0 0.0
    %2849 = vmatpush.msra.mxu0 0.0
    %2850 = vmatpush.msra.mxu0 0.0
    %2851 = vmatpush.msra.mxu0 0.0
    %2852 = vmatpush.msra.mxu0 %v2832
    %2853 = vmatmul.f32.gmra.mxu0 %v2835
    %v2854 = vpop.f32.mrf.mxu0
    %v2855 = vadd.f32 0.0, %v2854
    %2856 = vdwg.mxu0
    %2857 = vrot.lane.b32.xlu0 %v2692, 112
    %v2858 = vpop.permute.xlu0 %2857
    %2859 = vrot.lane.b32.xlu0 %v2724, 112
    %v2860 = vpop.permute.xlu0 %2859
    %v2861 = vsel %vm183, %v2858, 0
    %v2863 = vsel %vm183, %v2860, 0
    %2865 = vmatpush.xpose.msra.mxu0 0.0
    %2866 = vmatpush.xpose.msra.mxu0 0.0
    %2867 = vmatpush.xpose.msra.mxu0 0.0
    %2868 = vmatpush.xpose.msra.mxu0 0.0
    %2869 = vmatpush.xpose.msra.mxu0 0.0
    %2870 = vmatpush.xpose.msra.mxu0 0.0
    %2871 = vmatpush.xpose.msra.mxu0 0.0
    %2872 = vmatpush.xpose.msra.mxu0 0.0
    %2873 = vmatpush.xpose.msra.mxu0 0.0
    %2874 = vmatpush.xpose.msra.mxu0 0.0
    %2875 = vmatpush.xpose.msra.mxu0 0.0
    %2876 = vmatpush.xpose.msra.mxu0 0.0
    %2877 = vmatpush.xpose.msra.mxu0 0.0
    %2878 = vmatpush.xpose.msra.mxu0 0.0
    %2879 = vmatpush.xpose.msra.mxu0 0.0
    %2880 = vmatpush.xpose.msra.mxu0 %v2863
    %2881 = vmatmul.f32.gmra.mxu0 %v2861
    %v2882 = vpop.f32.mrf.mxu0
    %v2883 = vadd.f32 0.0, %v2882
    %2884 = vdwg.mxu0
    %v2885 = vsel %vm183, %v2883, -inf
    %2886 = vmax.xlane.f32.xlu0 %v2885
    %v2887 = vpop.xlane.xlu0 %2886
    %v2888 = vsub.f32 %v2883, %v2887
    %v2889 = vmul.f32 %v2888, 1.442695
    %v2890 = vpow.pop %v2889
    %v2891 = vsel %vm183, %v2890, 0.0
    %2892 = vadd.xlane.f32.xlu0 %v2891
    %v2893 = vpop.xlane.xlu0 %2892
    %v2894 = vrcp.pop %v2893
    %v2895 = vmul.f32 %v2890, %v2894
    %2896 = vrot.lane.b32.xlu0 %v2724, 80
    %v2897 = vpop.permute.xlu0 %2896
    %v2900 = vsel %vm183, %v2895, 0
    %2902 = vmatpush.msra.mxu0 0.0
    %2903 = vmatpush.msra.mxu0 0.0
    %2904 = vmatpush.msra.mxu0 0.0
    %2905 = vmatpush.msra.mxu0 0.0
    %2906 = vmatpush.msra.mxu0 0.0
    %2907 = vmatpush.msra.mxu0 0.0
    %2908 = vmatpush.msra.mxu0 0.0
    %2909 = vmatpush.msra.mxu0 0.0
    %2910 = vmatpush.msra.mxu0 0.0
    %2911 = vmatpush.msra.mxu0 0.0
    %2912 = vmatpush.msra.mxu0 0.0
    %2913 = vmatpush.msra.mxu0 0.0
    %2914 = vmatpush.msra.mxu0 0.0
    %2915 = vmatpush.msra.mxu0 0.0
    %2916 = vmatpush.msra.mxu0 0.0
    %2917 = vmatpush.msra.mxu0 %v2897
    %2918 = vmatmul.f32.gmra.mxu0 %v2900
    %v2919 = vpop.f32.mrf.mxu0
    %v2920 = vadd.f32 0.0, %v2919
    %2921 = vdwg.mxu0
    %2922 = vrot.lane.b32.xlu0 %v2692, 104
    %v2923 = vpop.permute.xlu0 %2922
    %2924 = vrot.lane.b32.xlu0 %v2724, 104
    %v2925 = vpop.permute.xlu0 %2924
    %v2926 = vsel %vm183, %v2923, 0
    %v2928 = vsel %vm183, %v2925, 0
    %2930 = vmatpush.xpose.msra.mxu0 0.0
    %2931 = vmatpush.xpose.msra.mxu0 0.0
    %2932 = vmatpush.xpose.msra.mxu0 0.0
    %2933 = vmatpush.xpose.msra.mxu0 0.0
    %2934 = vmatpush.xpose.msra.mxu0 0.0
    %2935 = vmatpush.xpose.msra.mxu0 0.0
    %2936 = vmatpush.xpose.msra.mxu0 0.0
    %2937 = vmatpush.xpose.msra.mxu0 0.0
    %2938 = vmatpush.xpose.msra.mxu0 0.0
    %2939 = vmatpush.xpose.msra.mxu0 0.0
    %2940 = vmatpush.xpose.msra.mxu0 0.0
    %2941 = vmatpush.xpose.msra.mxu0 0.0
    %2942 = vmatpush.xpose.msra.mxu0 0.0
    %2943 = vmatpush.xpose.msra.mxu0 0.0
    %2944 = vmatpush.xpose.msra.mxu0 0.0
    %2945 = vmatpush.xpose.msra.mxu0 %v2928
    %2946 = vmatmul.f32.gmra.mxu0 %v2926
    %v2947 = vpop.f32.mrf.mxu0
    %v2948 = vadd.f32 0.0, %v2947
    %2949 = vdwg.mxu0
    %v2950 = vsel %vm183, %v2948, -inf
    %2951 = vmax.xlane.f32.xlu0 %v2950
    %v2952 = vpop.xlane.xlu0 %2951
    %v2953 = vsub.f32 %v2948, %v2952
    %v2954 = vmul.f32 %v2953, 1.442695
    %v2955 = vpow.pop %v2954
    %v2956 = vsel %vm183, %v2955, 0.0
    %2957 = vadd.xlane.f32.xlu0 %v2956
    %v2958 = vpop.xlane.xlu0 %2957
    %v2959 = vrcp.pop %v2958
    %v2960 = vmul.f32 %v2955, %v2959
    %2961 = vrot.lane.b32.xlu0 %v2724, 72
    %v2962 = vpop.permute.xlu0 %2961
    %v2965 = vsel %vm183, %v2960, 0
    %2967 = vmatpush.msra.mxu0 0.0
    %2968 = vmatpush.msra.mxu0 0.0
    %2969 = vmatpush.msra.mxu0 0.0
    %2970 = vmatpush.msra.mxu0 0.0
    %2971 = vmatpush.msra.mxu0 0.0
    %2972 = vmatpush.msra.mxu0 0.0
    %2973 = vmatpush.msra.mxu0 0.0
    %2974 = vmatpush.msra.mxu0 0.0
    %2975 = vmatpush.msra.mxu0 0.0
    %2976 = vmatpush.msra.mxu0 0.0
    %2977 = vmatpush.msra.mxu0 0.0
    %2978 = vmatpush.msra.mxu0 0.0
    %2979 = vmatpush.msra.mxu0 0.0
    %2980 = vmatpush.msra.mxu0 0.0
    %2981 = vmatpush.msra.mxu0 0.0
    %2982 = vmatpush.msra.mxu0 %v2962
    %2983 = vmatmul.f32.gmra.mxu0 %v2965
    %v2984 = vpop.f32.mrf.mxu0
    %v2985 = vadd.f32 0.0, %v2984
    %2986 = vdwg.mxu0
    %2987 = vmatpush.msra.mxu0 0.0
    %2988 = vmatpush.msra.mxu0 0.0
    %2989 = vmatpush.msra.mxu0 0.0
    %2990 = vmatpush.msra.mxu0 0.0
    %2991 = vmatpush.msra.mxu0 0.0
    %2992 = vmatpush.msra.mxu0 0.0
    %2993 = vmatpush.msra.mxu0 0.0
    %2994 = vmatpush.msra.mxu0 0.0
    %2995 = vmatpush.msra.mxu0 0.0
    %2996 = vmatpush.msra.mxu0 0.0
    %2997 = vmatpush.msra.mxu0 0.0
    %2998 = vmatpush.msra.mxu0 0.0
    %2999 = vmatpush.msra.mxu0 %v2985
    %3000 = vmatpush.msra.mxu0 %v2920
    %3001 = vmatpush.msra.mxu0 %v2855
    %3002 = vmatpush.msra.mxu0 %v2790
    %3003 = vmatmul.f32.gmra.mxu0 %v441
    %v3004 = vpop.f32.mrf.mxu0
    %v3005 = vadd.f32 0.0, %v3004
    %3006 = vmatmul.f32.gmra.mxu0 %v444
    %v3007 = vpop.f32.mrf.mxu0
    %v3008 = vadd.f32 0.0, %v3007
    %3009 = vmatmul.f32.gmra.mxu0 %v447
    %v3010 = vpop.f32.mrf.mxu0
    %v3011 = vadd.f32 0.0, %v3010
    %3012 = vmatmul.f32.gmra.mxu0 %v450
    %v3013 = vpop.f32.mrf.mxu0
    %v3014 = vadd.f32 0.0, %v3013
    %3015 = vdwg.mxu0
    %3017 = vrot.lane.b32.xlu0 %v3008, 8
    %v3018 = vpop.permute.xlu0 %3017
    %3021 = vrot.lane.b32.xlu0 %v3011, 16
    %v3022 = vpop.permute.xlu0 %3021
    %3025 = vrot.lane.b32.xlu0 %v3014, 24
    %v3026 = vpop.permute.xlu0 %3025
    %v3028 = vsel %vm183, %v3005, %v3018
    %v3029 = vsel %vm494, %v3028, %v3022
    %v3030 = vsel %vm496, %v3029, %v3026
    %v3032 = vsel %vm183, %v2695, 0
    %v3035 = vsel %vm183, %v2727, 0
    %3037 = vmatpush.xpose.msra.mxu0 0.0
    %3038 = vmatpush.xpose.msra.mxu0 0.0
    %3039 = vmatpush.xpose.msra.mxu0 0.0
    %3040 = vmatpush.xpose.msra.mxu0 0.0
    %3041 = vmatpush.xpose.msra.mxu0 0.0
    %3042 = vmatpush.xpose.msra.mxu0 0.0
    %3043 = vmatpush.xpose.msra.mxu0 0.0
    %3044 = vmatpush.xpose.msra.mxu0 0.0
    %3045 = vmatpush.xpose.msra.mxu0 0.0
    %3046 = vmatpush.xpose.msra.mxu0 0.0
    %3047 = vmatpush.xpose.msra.mxu0 0.0
    %3048 = vmatpush.xpose.msra.mxu0 0.0
    %3049 = vmatpush.xpose.msra.mxu0 0.0
    %3050 = vmatpush.xpose.msra.mxu0 0.0
    %3051 = vmatpush.xpose.msra.mxu0 0.0
    %3052 = vmatpush.xpose.msra.mxu0 %v3035
    %3053 = vmatmul.f32.gmra.mxu0 %v3032
    %v3054 = vpop.f32.mrf.mxu0
    %v3055 = vadd.f32 0.0, %v3054
    %3056 = vdwg.mxu0
    %v3057 = vsel %vm183, %v3055, -inf
    %3058 = vmax.xlane.f32.xlu0 %v3057
    %v3059 = vpop.xlane.xlu0 %3058
    %v3060 = vsub.f32 %v3055, %v3059
    %v3061 = vmul.f32 %v3060, 1.442695
    %v3062 = vpow.pop %v3061
    %v3063 = vsel %vm183, %v3062, 0.0
    %3064 = vadd.xlane.f32.xlu0 %v3063
    %v3065 = vpop.xlane.xlu0 %3064
    %v3066 = vrcp.pop %v3065
    %v3067 = vmul.f32 %v3062, %v3066
    %3068 = vrot.lane.b32.xlu0 %v2727, 96
    %v3069 = vpop.permute.xlu0 %3068
    %v3072 = vsel %vm183, %v3067, 0
    %3074 = vmatpush.msra.mxu0 0.0
    %3075 = vmatpush.msra.mxu0 0.0
    %3076 = vmatpush.msra.mxu0 0.0
    %3077 = vmatpush.msra.mxu0 0.0
    %3078 = vmatpush.msra.mxu0 0.0
    %3079 = vmatpush.msra.mxu0 0.0
    %3080 = vmatpush.msra.mxu0 0.0
    %3081 = vmatpush.msra.mxu0 0.0
    %3082 = vmatpush.msra.mxu0 0.0
    %3083 = vmatpush.msra.mxu0 0.0
    %3084 = vmatpush.msra.mxu0 0.0
    %3085 = vmatpush.msra.mxu0 0.0
    %3086 = vmatpush.msra.mxu0 0.0
    %3087 = vmatpush.msra.mxu0 0.0
    %3088 = vmatpush.msra.mxu0 0.0
    %3089 = vmatpush.msra.mxu0 %v3069
    %3090 = vmatmul.f32.gmra.mxu0 %v3072
    %v3091 = vpop.f32.mrf.mxu0
    %v3092 = vadd.f32 0.0, %v3091
    %3093 = vdwg.mxu0
    %3094 = vrot.lane.b32.xlu0 %v2695, 120
    %v3095 = vpop.permute.xlu0 %3094
    %3096 = vrot.lane.b32.xlu0 %v2727, 120
    %v3097 = vpop.permute.xlu0 %3096
    %v3098 = vsel %vm183, %v3095, 0
    %v3100 = vsel %vm183, %v3097, 0
    %3102 = vmatpush.xpose.msra.mxu0 0.0
    %3103 = vmatpush.xpose.msra.mxu0 0.0
    %3104 = vmatpush.xpose.msra.mxu0 0.0
    %3105 = vmatpush.xpose.msra.mxu0 0.0
    %3106 = vmatpush.xpose.msra.mxu0 0.0
    %3107 = vmatpush.xpose.msra.mxu0 0.0
    %3108 = vmatpush.xpose.msra.mxu0 0.0
    %3109 = vmatpush.xpose.msra.mxu0 0.0
    %3110 = vmatpush.xpose.msra.mxu0 0.0
    %3111 = vmatpush.xpose.msra.mxu0 0.0
    %3112 = vmatpush.xpose.msra.mxu0 0.0
    %3113 = vmatpush.xpose.msra.mxu0 0.0
    %3114 = vmatpush.xpose.msra.mxu0 0.0
    %3115 = vmatpush.xpose.msra.mxu0 0.0
    %3116 = vmatpush.xpose.msra.mxu0 0.0
    %3117 = vmatpush.xpose.msra.mxu0 %v3100
    %3118 = vmatmul.f32.gmra.mxu0 %v3098
    %v3119 = vpop.f32.mrf.mxu0
    %v3120 = vadd.f32 0.0, %v3119
    %3121 = vdwg.mxu0
    %v3122 = vsel %vm183, %v3120, -inf
    %3123 = vmax.xlane.f32.xlu0 %v3122
    %v3124 = vpop.xlane.xlu0 %3123
    %v3125 = vsub.f32 %v3120, %v3124
    %v3126 = vmul.f32 %v3125, 1.442695
    %v3127 = vpow.pop %v3126
    %v3128 = vsel %vm183, %v3127, 0.0
    %3129 = vadd.xlane.f32.xlu0 %v3128
    %v3130 = vpop.xlane.xlu0 %3129
    %v3131 = vrcp.pop %v3130
    %v3132 = vmul.f32 %v3127, %v3131
    %3133 = vrot.lane.b32.xlu0 %v2727, 88
    %v3134 = vpop.permute.xlu0 %3133
    %v3137 = vsel %vm183, %v3132, 0
    %3139 = vmatpush.msra.mxu0 0.0
    %3140 = vmatpush.msra.mxu0 0.0
    %3141 = vmatpush.msra.mxu0 0.0
    %3142 = vmatpush.msra.mxu0 0.0
    %3143 = vmatpush.msra.mxu0 0.0
    %3144 = vmatpush.msra.mxu0 0.0
    %3145 = vmatpush.msra.mxu0 0.0
    %3146 = vmatpush.msra.mxu0 0.0
    %3147 = vmatpush.msra.mxu0 0.0
    %3148 = vmatpush.msra.mxu0 0.0
    %3149 = vmatpush.msra.mxu0 0.0
    %3150 = vmatpush.msra.mxu0 0.0
    %3151 = vmatpush.msra.mxu0 0.0
    %3152 = vmatpush.msra.mxu0 0.0
    %3153 = vmatpush.msra.mxu0 0.0
    %3154 = vmatpush.msra.mxu0 %v3134
    %3155 = vmatmul.f32.gmra.mxu0 %v3137
    %v3156 = vpop.f32.mrf.mxu0
    %v3157 = vadd.f32 0.0, %v3156
    %3158 = vdwg.mxu0
    %3159 = vrot.lane.b32.xlu0 %v2695, 112
    %v3160 = vpop.permute.xlu0 %3159
    %3161 = vrot.lane.b32.xlu0 %v2727, 112
    %v3162 = vpop.permute.xlu0 %3161
    %v3163 = vsel %vm183, %v3160, 0
    %v3165 = vsel %vm183, %v3162, 0
    %3167 = vmatpush.xpose.msra.mxu0 0.0
    %3168 = vmatpush.xpose.msra.mxu0 0.0
    %3169 = vmatpush.xpose.msra.mxu0 0.0
    %3170 = vmatpush.xpose.msra.mxu0 0.0
    %3171 = vmatpush.xpose.msra.mxu0 0.0
    %3172 = vmatpush.xpose.msra.mxu0 0.0
    %3173 = vmatpush.xpose.msra.mxu0 0.0
    %3174 = vmatpush.xpose.msra.mxu0 0.0
    %3175 = vmatpush.xpose.msra.mxu0 0.0
    %3176 = vmatpush.xpose.msra.mxu0 0.0
    %3177 = vmatpush.xpose.msra.mxu0 0.0
    %3178 = vmatpush.xpose.msra.mxu0 0.0
    %3179 = vmatpush.xpose.msra.mxu0 0.0
    %3180 = vmatpush.xpose.msra.mxu0 0.0
    %3181 = vmatpush.xpose.msra.mxu0 0.0
    %3182 = vmatpush.xpose.msra.mxu0 %v3165
    %3183 = vmatmul.f32.gmra.mxu0 %v3163
    %v3184 = vpop.f32.mrf.mxu0
    %v3185 = vadd.f32 0.0, %v3184
    %3186 = vdwg.mxu0
    %v3187 = vsel %vm183, %v3185, -inf
    %3188 = vmax.xlane.f32.xlu0 %v3187
    %v3189 = vpop.xlane.xlu0 %3188
    %v3190 = vsub.f32 %v3185, %v3189
    %v3191 = vmul.f32 %v3190, 1.442695
    %v3192 = vpow.pop %v3191
    %v3193 = vsel %vm183, %v3192, 0.0
    %3194 = vadd.xlane.f32.xlu0 %v3193
    %v3195 = vpop.xlane.xlu0 %3194
    %v3196 = vrcp.pop %v3195
    %v3197 = vmul.f32 %v3192, %v3196
    %3198 = vrot.lane.b32.xlu0 %v2727, 80
    %v3199 = vpop.permute.xlu0 %3198
    %v3202 = vsel %vm183, %v3197, 0
    %3204 = vmatpush.msra.mxu0 0.0
    %3205 = vmatpush.msra.mxu0 0.0
    %3206 = vmatpush.msra.mxu0 0.0
    %3207 = vmatpush.msra.mxu0 0.0
    %3208 = vmatpush.msra.mxu0 0.0
    %3209 = vmatpush.msra.mxu0 0.0
    %3210 = vmatpush.msra.mxu0 0.0
    %3211 = vmatpush.msra.mxu0 0.0
    %3212 = vmatpush.msra.mxu0 0.0
    %3213 = vmatpush.msra.mxu0 0.0
    %3214 = vmatpush.msra.mxu0 0.0
    %3215 = vmatpush.msra.mxu0 0.0
    %3216 = vmatpush.msra.mxu0 0.0
    %3217 = vmatpush.msra.mxu0 0.0
    %3218 = vmatpush.msra.mxu0 0.0
    %3219 = vmatpush.msra.mxu0 %v3199
    %3220 = vmatmul.f32.gmra.mxu0 %v3202
    %v3221 = vpop.f32.mrf.mxu0
    %v3222 = vadd.f32 0.0, %v3221
    %3223 = vdwg.mxu0
    %3224 = vrot.lane.b32.xlu0 %v2695, 104
    %v3225 = vpop.permute.xlu0 %3224
    %3226 = vrot.lane.b32.xlu0 %v2727, 104
    %v3227 = vpop.permute.xlu0 %3226
    %v3228 = vsel %vm183, %v3225, 0
    %v3230 = vsel %vm183, %v3227, 0
    %3232 = vmatpush.xpose.msra.mxu0 0.0
    %3233 = vmatpush.xpose.msra.mxu0 0.0
    %3234 = vmatpush.xpose.msra.mxu0 0.0
    %3235 = vmatpush.xpose.msra.mxu0 0.0
    %3236 = vmatpush.xpose.msra.mxu0 0.0
    %3237 = vmatpush.xpose.msra.mxu0 0.0
    %3238 = vmatpush.xpose.msra.mxu0 0.0
    %3239 = vmatpush.xpose.msra.mxu0 0.0
    %3240 = vmatpush.xpose.msra.mxu0 0.0
    %3241 = vmatpush.xpose.msra.mxu0 0.0
    %3242 = vmatpush.xpose.msra.mxu0 0.0
    %3243 = vmatpush.xpose.msra.mxu0 0.0
    %3244 = vmatpush.xpose.msra.mxu0 0.0
    %3245 = vmatpush.xpose.msra.mxu0 0.0
    %3246 = vmatpush.xpose.msra.mxu0 0.0
    %3247 = vmatpush.xpose.msra.mxu0 %v3230
    %3248 = vmatmul.f32.gmra.mxu0 %v3228
    %v3249 = vpop.f32.mrf.mxu0
    %v3250 = vadd.f32 0.0, %v3249
    %3251 = vdwg.mxu0
    %v3252 = vsel %vm183, %v3250, -inf
    %3253 = vmax.xlane.f32.xlu0 %v3252
    %v3254 = vpop.xlane.xlu0 %3253
    %v3255 = vsub.f32 %v3250, %v3254
    %v3256 = vmul.f32 %v3255, 1.442695
    %v3257 = vpow.pop %v3256
    %v3258 = vsel %vm183, %v3257, 0.0
    %3259 = vadd.xlane.f32.xlu0 %v3258
    %v3260 = vpop.xlane.xlu0 %3259
    %v3261 = vrcp.pop %v3260
    %v3262 = vmul.f32 %v3257, %v3261
    %3263 = vrot.lane.b32.xlu0 %v2727, 72
    %v3264 = vpop.permute.xlu0 %3263
    %v3267 = vsel %vm183, %v3262, 0
    %3269 = vmatpush.msra.mxu0 0.0
    %3270 = vmatpush.msra.mxu0 0.0
    %3271 = vmatpush.msra.mxu0 0.0
    %3272 = vmatpush.msra.mxu0 0.0
    %3273 = vmatpush.msra.mxu0 0.0
    %3274 = vmatpush.msra.mxu0 0.0
    %3275 = vmatpush.msra.mxu0 0.0
    %3276 = vmatpush.msra.mxu0 0.0
    %3277 = vmatpush.msra.mxu0 0.0
    %3278 = vmatpush.msra.mxu0 0.0
    %3279 = vmatpush.msra.mxu0 0.0
    %3280 = vmatpush.msra.mxu0 0.0
    %3281 = vmatpush.msra.mxu0 0.0
    %3282 = vmatpush.msra.mxu0 0.0
    %3283 = vmatpush.msra.mxu0 0.0
    %3284 = vmatpush.msra.mxu0 %v3264
    %3285 = vmatmul.f32.gmra.mxu0 %v3267
    %v3286 = vpop.f32.mrf.mxu0
    %v3287 = vadd.f32 0.0, %v3286
    %3288 = vdwg.mxu0
    %3289 = vmatpush.msra.mxu0 0.0
    %3290 = vmatpush.msra.mxu0 0.0
    %3291 = vmatpush.msra.mxu0 0.0
    %3292 = vmatpush.msra.mxu0 0.0
    %3293 = vmatpush.msra.mxu0 0.0
    %3294 = vmatpush.msra.mxu0 0.0
    %3295 = vmatpush.msra.mxu0 0.0
    %3296 = vmatpush.msra.mxu0 0.0
    %3297 = vmatpush.msra.mxu0 0.0
    %3298 = vmatpush.msra.mxu0 0.0
    %3299 = vmatpush.msra.mxu0 0.0
    %3300 = vmatpush.msra.mxu0 0.0
    %3301 = vmatpush.msra.mxu0 %v3287
    %3302 = vmatpush.msra.mxu0 %v3222
    %3303 = vmatpush.msra.mxu0 %v3157
    %3304 = vmatpush.msra.mxu0 %v3092
    %3305 = vmatmul.f32.gmra.mxu0 %v441
    %v3306 = vpop.f32.mrf.mxu0
    %v3307 = vadd.f32 0.0, %v3306
    %3308 = vmatmul.f32.gmra.mxu0 %v444
    %v3309 = vpop.f32.mrf.mxu0
    %v3310 = vadd.f32 0.0, %v3309
    %3311 = vmatmul.f32.gmra.mxu0 %v447
    %v3312 = vpop.f32.mrf.mxu0
    %v3313 = vadd.f32 0.0, %v3312
    %3314 = vmatmul.f32.gmra.mxu0 %v450
    %v3315 = vpop.f32.mrf.mxu0
    %v3316 = vadd.f32 0.0, %v3315
    %3317 = vdwg.mxu0
    %3319 = vrot.lane.b32.xlu0 %v3310, 8
    %v3320 = vpop.permute.xlu0 %3319
    %3323 = vrot.lane.b32.xlu0 %v3313, 16
    %v3324 = vpop.permute.xlu0 %3323
    %3327 = vrot.lane.b32.xlu0 %v3316, 24
    %v3328 = vpop.permute.xlu0 %3327
    %v3330 = vsel %vm183, %v3307, %v3320
    %v3331 = vsel %vm494, %v3330, %v3324
    %v3332 = vsel %vm496, %v3331, %v3328
    %v3334 = vperm.slane %v2664, 0
    %v3337 = vsel %vm150, %v3030, 0
    %v3340 = vsel %vm150, %v3332, 0
    %3342 = vmatpush.msra.mxu0 0.0
    %3343 = vmatpush.msra.mxu0 0.0
    %3344 = vmatpush.msra.mxu0 0.0
    %3345 = vmatpush.msra.mxu0 0.0
    %3346 = vmatpush.msra.mxu0 0.0
    %3347 = vmatpush.msra.mxu0 0.0
    %3348 = vmatpush.msra.mxu0 0.0
    %3349 = vmatpush.msra.mxu0 0.0
    %3350 = vmatpush.msra.mxu0 0.0
    %3351 = vmatpush.msra.mxu0 0.0
    %3352 = vmatpush.msra.mxu0 0.0
    %3353 = vmatpush.msra.mxu0 0.0
    %3354 = vmatpush.msra.mxu0 %v2663
    %3355 = vmatpush.msra.mxu0 %v2662
    %3356 = vmatpush.msra.mxu0 %v2661
    %3357 = vmatpush.msra.mxu0 %v2660
    %3358 = vmatmul.f32.gmra.mxu0 %v3337
    %v3359 = vpop.f32.mrf.mxu0
    %v3360 = vadd.f32 %v3334, %v3359
    %3361 = vmatmul.f32.gmra.mxu0 %v3340
    %v3362 = vpop.f32.mrf.mxu0
    %v3363 = vadd.f32 %v3334, %v3362
    %3364 = vdwg.mxu0
    %v3365 = vadd.f32 %v2648, %v3360
    %v3366 = vadd.f32 %v2649, %v3363
    %v3367 = vsel %vm150, %v3365, 0.0
    %3368 = vadd.xlane.f32.xlu0 %v3367
    %v3369 = vpop.xlane.xlu0 %3368
    %v3370 = vsel %vm150, %v3366, 0.0
    %3371 = vadd.xlane.f32.xlu0 %v3370
    %v3372 = vpop.xlane.xlu0 %3371
    %v3373 = vmul.f32 %v3369, %v849
    %v3374 = vmul.f32 %v3372, %v849
    %v3375 = vsub.f32 %v3365, %v3373
    %v3376 = vsub.f32 %v3366, %v3374
    %v3377 = vmul.f32 %v3375, %v3375
    %v3378 = vmul.f32 %v3376, %v3376
    %v3379 = vsel %vm150, %v3377, 0.0
    %3380 = vadd.xlane.f32.xlu0 %v3379
    %v3381 = vpop.xlane.xlu0 %3380
    %v3382 = vsel %vm150, %v3378, 0.0
    %3383 = vadd.xlane.f32.xlu0 %v3382
    %v3384 = vpop.xlane.xlu0 %3383
    %v3385 = vmul.f32 %v3381, %v849
    %v3386 = vmul.f32 %v3384, %v849
    %v3387 = vadd.f32 %v3385, 1e-05
    %v3388 = vadd.f32 %v3386, 1e-05
    %v3389 = vrsqrt.pop %v3387
    %v3390 = vmul.f32 %v3389, %v3387
    %v3391 = vmul.f32 %v3390, %v3389
    %v3392 = vmul.f32 0.5, %v3391
    %v3393 = vsub.f32 1.5, %v3392
    %v3394 = vmul.f32 %v3389, %v3393
    %vm3395 = vweird.f32 %v3387
    %vm3396 = vweird.f32 %v3389
    %vm3397 = vmor %vm3395, %vm3396
    %v3398 = vsel %vm3397, %v3389, %v3394
    %v3399 = vrsqrt.pop %v3388
    %v3400 = vmul.f32 %v3399, %v3388
    %v3401 = vmul.f32 %v3400, %v3399
    %v3402 = vmul.f32 0.5, %v3401
    %v3403 = vsub.f32 1.5, %v3402
    %v3404 = vmul.f32 %v3399, %v3403
    %vm3405 = vweird.f32 %v3388
    %vm3406 = vweird.f32 %v3399
    %vm3407 = vmor %vm3405, %vm3406
    %v3408 = vsel %vm3407, %v3399, %v3404
    %v3409 = vmul.f32 %v3375, %v3398
    %v3410 = vmul.f32 %v3376, %v3408
    %v3411 = vmul.f32 %v3409, %v2641
    %v3412 = vmul.f32 %v3410, %v2641
    %v3413 = vadd.f32 %v3411, %v2646
    %v3414 = vadd.f32 %v3412, %v2646
    %v3415 = vld [vmem:[%s51] sm:$0xff]
    %v3416 = vld [vmem:[%s51 + $0x8] sm:$0xff]
    %v3417 = vld [vmem:[%s51 + $0x10] sm:$0xff]
    %v3418 = vld [vmem:[%s51 + $0x18] sm:$0xff]
    %v3419 = vld [vmem:[%s53] sm:$0x1]
    %v3421 = vperm.slane %v3419, 0
    %v3424 = vsel %vm150, %v3413, 0
    %v3427 = vsel %vm150, %v3414, 0
    %3429 = vmatpush.msra.mxu0 0.0
    %3430 = vmatpush.msra.mxu0 0.0
    %3431 = vmatpush.msra.mxu0 0.0
    %3432 = vmatpush.msra.mxu0 0.0
    %3433 = vmatpush.msra.mxu0 0.0
    %3434 = vmatpush.msra.mxu0 0.0
    %3435 = vmatpush.msra.mxu0 0.0
    %3436 = vmatpush.msra.mxu0 0.0
    %3437 = vmatpush.msra.mxu0 0.0
    %3438 = vmatpush.msra.mxu0 0.0
    %3439 = vmatpush.msra.mxu0 0.0
    %3440 = vmatpush.msra.mxu0 0.0
    %3441 = vmatpush.msra.mxu0 %v3418
    %3442 = vmatpush.msra.mxu0 %v3417
    %3443 = vmatpush.msra.mxu0 %v3416
    %3444 = vmatpush.msra.mxu0 %v3415
    %3445 = vmatmul.f32.gmra.mxu0 %v3424
    %v3446 = vpop.f32.mrf.mxu0
    %v3447 = vadd.f32 %v3421, %v3446
    %3448 = vmatmul.f32.gmra.mxu0 %v3427
    %v3449 = vpop.f32.mrf.mxu0
    %v3450 = vadd.f32 %v3421, %v3449
    %3451 = vdwg.mxu0
    %v3452 = vmax.f32 %v3447, 0.0
    %v3453 = vmax.f32 %v3450, 0.0
    %v3454 = vld [vmem:[%s55] sm:$0xff]
    %v3455 = vld [vmem:[%s55 + $0x8] sm:$0xff]
    %v3456 = vld [vmem:[%s55 + $0x10] sm:$0xff]
    %v3457 = vld [vmem:[%s55 + $0x18] sm:$0xff]
    %v3458 = vld [vmem:[%s55 + $0x20] sm:$0xff]
    %v3459 = vld [vmem:[%s55 + $0x28] sm:$0xff]
    %v3460 = vld [vmem:[%s55 + $0x30] sm:$0xff]
    %v3461 = vld [vmem:[%s55 + $0x38] sm:$0xff]
    %v3462 = vld [vmem:[%s55 + $0x40] sm:$0xff]
    %v3463 = vld [vmem:[%s55 + $0x48] sm:$0xff]
    %v3464 = vld [vmem:[%s55 + $0x50] sm:$0xff]
    %v3465 = vld [vmem:[%s55 + $0x58] sm:$0xff]
    %v3466 = vld [vmem:[%s55 + $0x60] sm:$0xff]
    %v3467 = vld [vmem:[%s55 + $0x68] sm:$0xff]
    %v3468 = vld [vmem:[%s55 + $0x70] sm:$0xff]
    %v3469 = vld [vmem:[%s55 + $0x78] sm:$0xff]
    %v3470 = vld [vmem:[%s57] sm:$0x1]
    %v3472 = vperm.slane %v3470, 0
    %3474 = vmatpush.msra.mxu0 %v3469
    %3475 = vmatpush.msra.mxu0 %v3468
    %3476 = vmatpush.msra.mxu0 %v3467
    %3477 = vmatpush.msra.mxu0 %v3466
    %3478 = vmatpush.msra.mxu0 %v3465
    %3479 = vmatpush.msra.mxu0 %v3464
    %3480 = vmatpush.msra.mxu0 %v3463
    %3481 = vmatpush.msra.mxu0 %v3462
    %3482 = vmatpush.msra.mxu0 %v3461
    %3483 = vmatpush.msra.mxu0 %v3460
    %3484 = vmatpush.msra.mxu0 %v3459
    %3485 = vmatpush.msra.mxu0 %v3458
    %3486 = vmatpush.msra.mxu0 %v3457
    %3487 = vmatpush.msra.mxu0 %v3456
    %3488 = vmatpush.msra.mxu0 %v3455
    %3489 = vmatpush.msra.mxu0 %v3454
    %3490 = vmatmul.f32.gmra.mxu0 %v3452
    %v3491 = vpop.f32.mrf.mxu0
    %v3492 = vadd.f32 %v3472, %v3491
    %3493 = vmatmul.f32.gmra.mxu0 %v3453
    %v3494 = vpop.f32.mrf.mxu0
    %v3495 = vadd.f32 %v3472, %v3494
    %3496 = vdwg.mxu0
    %v3497 = vadd.f32 %v3413, %v3492
    %v3498 = vadd.f32 %v3414, %v3495
    %v3499 = vsel %vm150, %v3497, 0.0
    %3500 = vadd.xlane.f32.xlu0 %v3499
    %v3501 = vpop.xlane.xlu0 %3500
    %v3502 = vsel %vm150, %v3498, 0.0
    %3503 = vadd.xlane.f32.xlu0 %v3502
    %v3504 = vpop.xlane.xlu0 %3503
    %v3505 = vmul.f32 %v3501, %v849
    %v3506 = vmul.f32 %v3504, %v849
    %v3507 = vsub.f32 %v3497, %v3505
    %v3508 = vsub.f32 %v3498, %v3506
    %v3509 = vmul.f32 %v3507, %v3507
    %v3510 = vmul.f32 %v3508, %v3508
    %v3511 = vsel %vm150, %v3509, 0.0
    %3512 = vadd.xlane.f32.xlu0 %v3511
    %v3513 = vpop.xlane.xlu0 %3512
    %v3514 = vsel %vm150, %v3510, 0.0
    %3515 = vadd.xlane.f32.xlu0 %v3514
    %v3516 = vpop.xlane.xlu0 %3515
    %v3517 = vmul.f32 %v3513, %v849
    %v3518 = vmul.f32 %v3516, %v849
    %v3519 = vadd.f32 %v3517, 1e-05
    %v3520 = vadd.f32 %v3518, 1e-05
    %v3521 = vrsqrt.pop %v3519
    %v3522 = vmul.f32 %v3521, %v3519
    %v3523 = vmul.f32 %v3522, %v3521
    %v3524 = vmul.f32 0.5, %v3523
    %v3525 = vsub.f32 1.5, %v3524
    %v3526 = vmul.f32 %v3521, %v3525
    %vm3527 = vweird.f32 %v3519
    %vm3528 = vweird.f32 %v3521
    %vm3529 = vmor %vm3527, %vm3528
    %v3530 = vsel %vm3529, %v3521, %v3526
    %v3531 = vrsqrt.pop %v3520
    %v3532 = vmul.f32 %v3531, %v3520
    %v3533 = vmul.f32 %v3532, %v3531
    %v3534 = vmul.f32 0.5, %v3533
    %v3535 = vsub.f32 1.5, %v3534
    %v3536 = vmul.f32 %v3531, %v3535
    %vm3537 = vweird.f32 %v3520
    %vm3538 = vweird.f32 %v3531
    %vm3539 = vmor %vm3537, %vm3538
    %v3540 = vsel %vm3539, %v3531, %v3536
    %v3541 = vmul.f32 %v3507, %v3530
    %v3542 = vmul.f32 %v3508, %v3540
    %v3543 = vmul.f32 %v3541, %v2641
    %v3544 = vmul.f32 %v3542, %v2641
    %v3545 = vadd.f32 %v3543, %v2646
    %v3546 = vadd.f32 %v3544, %v2646
    %s3547 = scalar_lea.vmem %s27, 32
    %v3548 = vld [vmem:[%s3547] sm:$0xff]
    %v3549 = vld [vmem:[%s3547 + $0x8] sm:$0xff]
    %v3550 = vld [vmem:[%s3547 + $0x10] sm:$0xff]
    %v3551 = vld [vmem:[%s3547 + $0x18] sm:$0xff]
    %s3552 = scalar_lea.vmem %s29, 1
    %v3553 = vld [vmem:[%s3552] sm:$0x1]
    %s3554 = scalar_lea.vmem %s31, 32
    %v3555 = vld [vmem:[%s3554] sm:$0xff]
    %v3556 = vld [vmem:[%s3554 + $0x8] sm:$0xff]
    %v3557 = vld [vmem:[%s3554 + $0x10] sm:$0xff]
    %v3558 = vld [vmem:[%s3554 + $0x18] sm:$0xff]
    %s3559 = scalar_lea.vmem %s33, 1
    %v3560 = vld [vmem:[%s3559] sm:$0x1]
    %v3562 = vperm.slane %v3553, 0
    %v3565 = vsel %vm150, %v3545, 0
    %v3568 = vsel %vm150, %v3546, 0
    %3570 = vmatpush.msra.mxu0 0.0
    %3571 = vmatpush.msra.mxu0 0.0
    %3572 = vmatpush.msra.mxu0 0.0
    %3573 = vmatpush.msra.mxu0 0.0
    %3574 = vmatpush.msra.mxu0 0.0
    %3575 = vmatpush.msra.mxu0 0.0
    %3576 = vmatpush.msra.mxu0 0.0
    %3577 = vmatpush.msra.mxu0 0.0
    %3578 = vmatpush.msra.mxu0 0.0
    %3579 = vmatpush.msra.mxu0 0.0
    %3580 = vmatpush.msra.mxu0 0.0
    %3581 = vmatpush.msra.mxu0 0.0
    %3582 = vmatpush.msra.mxu0 %v3551
    %3583 = vmatpush.msra.mxu0 %v3550
    %3584 = vmatpush.msra.mxu0 %v3549
    %3585 = vmatpush.msra.mxu0 %v3548
    %3586 = vmatmul.f32.gmra.mxu0 %v3565
    %v3587 = vpop.f32.mrf.mxu0
    %v3588 = vadd.f32 %v3562, %v3587
    %3589 = vmatmul.f32.gmra.mxu0 %v3568
    %v3590 = vpop.f32.mrf.mxu0
    %v3591 = vadd.f32 %v3562, %v3590
    %3592 = vdwg.mxu0
    %3594 = vrot.lane.b32.xlu0 %v3588, 96
    %v3595 = vpop.permute.xlu0 %3594
    %v3596 = vsel %vm183, %v3588, 0
    %v3598 = vsel %vm183, %v3595, 0
    %3600 = vmatpush.xpose.msra.mxu0 0.0
    %3601 = vmatpush.xpose.msra.mxu0 0.0
    %3602 = vmatpush.xpose.msra.mxu0 0.0
    %3603 = vmatpush.xpose.msra.mxu0 0.0
    %3604 = vmatpush.xpose.msra.mxu0 0.0
    %3605 = vmatpush.xpose.msra.mxu0 0.0
    %3606 = vmatpush.xpose.msra.mxu0 0.0
    %3607 = vmatpush.xpose.msra.mxu0 0.0
    %3608 = vmatpush.xpose.msra.mxu0 0.0
    %3609 = vmatpush.xpose.msra.mxu0 0.0
    %3610 = vmatpush.xpose.msra.mxu0 0.0
    %3611 = vmatpush.xpose.msra.mxu0 0.0
    %3612 = vmatpush.xpose.msra.mxu0 0.0
    %3613 = vmatpush.xpose.msra.mxu0 0.0
    %3614 = vmatpush.xpose.msra.mxu0 0.0
    %3615 = vmatpush.xpose.msra.mxu0 %v3598
    %3616 = vmatmul.f32.gmra.mxu0 %v3596
    %v3617 = vpop.f32.mrf.mxu0
    %v3618 = vadd.f32 0.0, %v3617
    %3619 = vdwg.mxu0
    %v3620 = vsel %vm183, %v3618, -inf
    %3621 = vmax.xlane.f32.xlu0 %v3620
    %v3622 = vpop.xlane.xlu0 %3621
    %v3623 = vsub.f32 %v3618, %v3622
    %v3624 = vmul.f32 %v3623, 1.442695
    %v3625 = vpow.pop %v3624
    %v3626 = vsel %vm183, %v3625, 0.0
    %3627 = vadd.xlane.f32.xlu0 %v3626
    %v3628 = vpop.xlane.xlu0 %3627
    %v3629 = vrcp.pop %v3628
    %v3630 = vmul.f32 %v3625, %v3629
    %3631 = vrot.lane.b32.xlu0 %v3588, 64
    %v3632 = vpop.permute.xlu0 %3631
    %v3635 = vsel %vm183, %v3630, 0
    %3637 = vmatpush.msra.mxu0 0.0
    %3638 = vmatpush.msra.mxu0 0.0
    %3639 = vmatpush.msra.mxu0 0.0
    %3640 = vmatpush.msra.mxu0 0.0
    %3641 = vmatpush.msra.mxu0 0.0
    %3642 = vmatpush.msra.mxu0 0.0
    %3643 = vmatpush.msra.mxu0 0.0
    %3644 = vmatpush.msra.mxu0 0.0
    %3645 = vmatpush.msra.mxu0 0.0
    %3646 = vmatpush.msra.mxu0 0.0
    %3647 = vmatpush.msra.mxu0 0.0
    %3648 = vmatpush.msra.mxu0 0.0
    %3649 = vmatpush.msra.mxu0 0.0
    %3650 = vmatpush.msra.mxu0 0.0
    %3651 = vmatpush.msra.mxu0 0.0
    %3652 = vmatpush.msra.mxu0 %v3632
    %3653 = vmatmul.f32.gmra.mxu0 %v3635
    %v3654 = vpop.f32.mrf.mxu0
    %v3655 = vadd.f32 0.0, %v3654
    %3656 = vdwg.mxu0
    %3657 = vrot.lane.b32.xlu0 %v3588, 120
    %v3658 = vpop.permute.xlu0 %3657
    %3659 = vrot.lane.b32.xlu0 %v3588, 88
    %v3660 = vpop.permute.xlu0 %3659
    %v3661 = vsel %vm183, %v3658, 0
    %v3663 = vsel %vm183, %v3660, 0
    %3665 = vmatpush.xpose.msra.mxu0 0.0
    %3666 = vmatpush.xpose.msra.mxu0 0.0
    %3667 = vmatpush.xpose.msra.mxu0 0.0
    %3668 = vmatpush.xpose.msra.mxu0 0.0
    %3669 = vmatpush.xpose.msra.mxu0 0.0
    %3670 = vmatpush.xpose.msra.mxu0 0.0
    %3671 = vmatpush.xpose.msra.mxu0 0.0
    %3672 = vmatpush.xpose.msra.mxu0 0.0
    %3673 = vmatpush.xpose.msra.mxu0 0.0
    %3674 = vmatpush.xpose.msra.mxu0 0.0
    %3675 = vmatpush.xpose.msra.mxu0 0.0
    %3676 = vmatpush.xpose.msra.mxu0 0.0
    %3677 = vmatpush.xpose.msra.mxu0 0.0
    %3678 = vmatpush.xpose.msra.mxu0 0.0
    %3679 = vmatpush.xpose.msra.mxu0 0.0
    %3680 = vmatpush.xpose.msra.mxu0 %v3663
    %3681 = vmatmul.f32.gmra.mxu0 %v3661
    %v3682 = vpop.f32.mrf.mxu0
    %v3683 = vadd.f32 0.0, %v3682
    %3684 = vdwg.mxu0
    %v3685 = vsel %vm183, %v3683, -inf
    %3686 = vmax.xlane.f32.xlu0 %v3685
    %v3687 = vpop.xlane.xlu0 %3686
    %v3688 = vsub.f32 %v3683, %v3687
    %v3689 = vmul.f32 %v3688, 1.442695
    %v3690 = vpow.pop %v3689
    %v3691 = vsel %vm183, %v3690, 0.0
    %3692 = vadd.xlane.f32.xlu0 %v3691
    %v3693 = vpop.xlane.xlu0 %3692
    %v3694 = vrcp.pop %v3693
    %v3695 = vmul.f32 %v3690, %v3694
    %3696 = vrot.lane.b32.xlu0 %v3588, 56
    %v3697 = vpop.permute.xlu0 %3696
    %v3700 = vsel %vm183, %v3695, 0
    %3702 = vmatpush.msra.mxu0 0.0
    %3703 = vmatpush.msra.mxu0 0.0
    %3704 = vmatpush.msra.mxu0 0.0
    %3705 = vmatpush.msra.mxu0 0.0
    %3706 = vmatpush.msra.mxu0 0.0
    %3707 = vmatpush.msra.mxu0 0.0
    %3708 = vmatpush.msra.mxu0 0.0
    %3709 = vmatpush.msra.mxu0 0.0
    %3710 = vmatpush.msra.mxu0 0.0
    %3711 = vmatpush.msra.mxu0 0.0
    %3712 = vmatpush.msra.mxu0 0.0
    %3713 = vmatpush.msra.mxu0 0.0
    %3714 = vmatpush.msra.mxu0 0.0
    %3715 = vmatpush.msra.mxu0 0.0
    %3716 = vmatpush.msra.mxu0 0.0
    %3717 = vmatpush.msra.mxu0 %v3697
    %3718 = vmatmul.f32.gmra.mxu0 %v3700
    %v3719 = vpop.f32.mrf.mxu0
    %v3720 = vadd.f32 0.0, %v3719
    %3721 = vdwg.mxu0
    %3722 = vrot.lane.b32.xlu0 %v3588, 112
    %v3723 = vpop.permute.xlu0 %3722
    %3724 = vrot.lane.b32.xlu0 %v3588, 80
    %v3725 = vpop.permute.xlu0 %3724
    %v3726 = vsel %vm183, %v3723, 0
    %v3728 = vsel %vm183, %v3725, 0
    %3730 = vmatpush.xpose.msra.mxu0 0.0
    %3731 = vmatpush.xpose.msra.mxu0 0.0
    %3732 = vmatpush.xpose.msra.mxu0 0.0
    %3733 = vmatpush.xpose.msra.mxu0 0.0
    %3734 = vmatpush.xpose.msra.mxu0 0.0
    %3735 = vmatpush.xpose.msra.mxu0 0.0
    %3736 = vmatpush.xpose.msra.mxu0 0.0
    %3737 = vmatpush.xpose.msra.mxu0 0.0
    %3738 = vmatpush.xpose.msra.mxu0 0.0
    %3739 = vmatpush.xpose.msra.mxu0 0.0
    %3740 = vmatpush.xpose.msra.mxu0 0.0
    %3741 = vmatpush.xpose.msra.mxu0 0.0
    %3742 = vmatpush.xpose.msra.mxu0 0.0
    %3743 = vmatpush.xpose.msra.mxu0 0.0
    %3744 = vmatpush.xpose.msra.mxu0 0.0
    %3745 = vmatpush.xpose.msra.mxu0 %v3728
    %3746 = vmatmul.f32.gmra.mxu0 %v3726
    %v3747 = vpop.f32.mrf.mxu0
    %v3748 = vadd.f32 0.0, %v3747
    %3749 = vdwg.mxu0
    %v3750 = vsel %vm183, %v3748, -inf
    %3751 = vmax.xlane.f32.xlu0 %v3750
    %v3752 = vpop.xlane.xlu0 %3751
    %v3753 = vsub.f32 %v3748, %v3752
    %v3754 = vmul.f32 %v3753, 1.442695
    %v3755 = vpow.pop %v3754
    %v3756 = vsel %vm183, %v3755, 0.0
    %3757 = vadd.xlane.f32.xlu0 %v3756
    %v3758 = vpop.xlane.xlu0 %3757
    %v3759 = vrcp.pop %v3758
    %v3760 = vmul.f32 %v3755, %v3759
    %3761 = vrot.lane.b32.xlu0 %v3588, 48
    %v3762 = vpop.permute.xlu0 %3761
    %v3765 = vsel %vm183, %v3760, 0
    %3767 = vmatpush.msra.mxu0 0.0
    %3768 = vmatpush.msra.mxu0 0.0
    %3769 = vmatpush.msra.mxu0 0.0
    %3770 = vmatpush.msra.mxu0 0.0
    %3771 = vmatpush.msra.mxu0 0.0
    %3772 = vmatpush.msra.mxu0 0.0
    %3773 = vmatpush.msra.mxu0 0.0
    %3774 = vmatpush.msra.mxu0 0.0
    %3775 = vmatpush.msra.mxu0 0.0
    %3776 = vmatpush.msra.mxu0 0.0
    %3777 = vmatpush.msra.mxu0 0.0
    %3778 = vmatpush.msra.mxu0 0.0
    %3779 = vmatpush.msra.mxu0 0.0
    %3780 = vmatpush.msra.mxu0 0.0
    %3781 = vmatpush.msra.mxu0 0.0
    %3782 = vmatpush.msra.mxu0 %v3762
    %3783 = vmatmul.f32.gmra.mxu0 %v3765
    %v3784 = vpop.f32.mrf.mxu0
    %v3785 = vadd.f32 0.0, %v3784
    %3786 = vdwg.mxu0
    %3787 = vrot.lane.b32.xlu0 %v3588, 104
    %v3788 = vpop.permute.xlu0 %3787
    %3789 = vrot.lane.b32.xlu0 %v3588, 72
    %v3790 = vpop.permute.xlu0 %3789
    %v3791 = vsel %vm183, %v3788, 0
    %v3793 = vsel %vm183, %v3790, 0
    %3795 = vmatpush.xpose.msra.mxu0 0.0
    %3796 = vmatpush.xpose.msra.mxu0 0.0
    %3797 = vmatpush.xpose.msra.mxu0 0.0
    %3798 = vmatpush.xpose.msra.mxu0 0.0
    %3799 = vmatpush.xpose.msra.mxu0 0.0
    %3800 = vmatpush.xpose.msra.mxu0 0.0
    %3801 = vmatpush.xpose.msra.mxu0 0.0
    %3802 = vmatpush.xpose.msra.mxu0 0.0
    %3803 = vmatpush.xpose.msra.mxu0 0.0
    %3804 = vmatpush.xpose.msra.mxu0 0.0
    %3805 = vmatpush.xpose.msra.mxu0 0.0
    %3806 = vmatpush.xpose.msra.mxu0 0.0
    %3807 = vmatpush.xpose.msra.mxu0 0.0
    %3808 = vmatpush.xpose.msra.mxu0 0.0
    %3809 = vmatpush.xpose.msra.mxu0 0.0
    %3810 = vmatpush.xpose.msra.mxu0 %v3793
    %3811 = vmatmul.f32.gmra.mxu0 %v3791
    %v3812 = vpop.f32.mrf.mxu0
    %v3813 = vadd.f32 0.0, %v3812
    %3814 = vdwg.mxu0
    %v3815 = vsel %vm183, %v3813, -inf
    %3816 = vmax.xlane.f32.xlu0 %v3815
    %v3817 = vpop.xlane.xlu0 %3816
    %v3818 = vsub.f32 %v3813, %v3817
    %v3819 = vmul.f32 %v3818, 1.442695
    %v3820 = vpow.pop %v3819
    %v3821 = vsel %vm183, %v3820, 0.0
    %3822 = vadd.xlane.f32.xlu0 %v3821
    %v3823 = vpop.xlane.xlu0 %3822
    %v3824 = vrcp.pop %v3823
    %v3825 = vmul.f32 %v3820, %v3824
    %3826 = vrot.lane.b32.xlu0 %v3588, 40
    %v3827 = vpop.permute.xlu0 %3826
    %v3830 = vsel %vm183, %v3825, 0
    %3832 = vmatpush.msra.mxu0 0.0
    %3833 = vmatpush.msra.mxu0 0.0
    %3834 = vmatpush.msra.mxu0 0.0
    %3835 = vmatpush.msra.mxu0 0.0
    %3836 = vmatpush.msra.mxu0 0.0
    %3837 = vmatpush.msra.mxu0 0.0
    %3838 = vmatpush.msra.mxu0 0.0
    %3839 = vmatpush.msra.mxu0 0.0
    %3840 = vmatpush.msra.mxu0 0.0
    %3841 = vmatpush.msra.mxu0 0.0
    %3842 = vmatpush.msra.mxu0 0.0
    %3843 = vmatpush.msra.mxu0 0.0
    %3844 = vmatpush.msra.mxu0 0.0
    %3845 = vmatpush.msra.mxu0 0.0
    %3846 = vmatpush.msra.mxu0 0.0
    %3847 = vmatpush.msra.mxu0 %v3827
    %3848 = vmatmul.f32.gmra.mxu0 %v3830
    %v3849 = vpop.f32.mrf.mxu0
    %v3850 = vadd.f32 0.0, %v3849
    %3851 = vdwg.mxu0
    %3852 = vmatpush.msra.mxu0 0.0
    %3853 = vmatpush.msra.mxu0 0.0
    %3854 = vmatpush.msra.mxu0 0.0
    %3855 = vmatpush.msra.mxu0 0.0
    %3856 = vmatpush.msra.mxu0 0.0
    %3857 = vmatpush.msra.mxu0 0.0
    %3858 = vmatpush.msra.mxu0 0.0
    %3859 = vmatpush.msra.mxu0 0.0
    %3860 = vmatpush.msra.mxu0 0.0
    %3861 = vmatpush.msra.mxu0 0.0
    %3862 = vmatpush.msra.mxu0 0.0
    %3863 = vmatpush.msra.mxu0 0.0
    %3864 = vmatpush.msra.mxu0 %v3850
    %3865 = vmatpush.msra.mxu0 %v3785
    %3866 = vmatpush.msra.mxu0 %v3720
    %3867 = vmatpush.msra.mxu0 %v3655
    %3868 = vmatmul.f32.gmra.mxu0 %v441
    %v3869 = vpop.f32.mrf.mxu0
    %v3870 = vadd.f32 0.0, %v3869
    %3871 = vmatmul.f32.gmra.mxu0 %v444
    %v3872 = vpop.f32.mrf.mxu0
    %v3873 = vadd.f32 0.0, %v3872
    %3874 = vmatmul.f32.gmra.mxu0 %v447
    %v3875 = vpop.f32.mrf.mxu0
    %v3876 = vadd.f32 0.0, %v3875
    %3877 = vmatmul.f32.gmra.mxu0 %v450
    %v3878 = vpop.f32.mrf.mxu0
    %v3879 = vadd.f32 0.0, %v3878
    %3880 = vdwg.mxu0
    %3882 = vrot.lane.b32.xlu0 %v3873, 8
    %v3883 = vpop.permute.xlu0 %3882
    %3886 = vrot.lane.b32.xlu0 %v3876, 16
    %v3887 = vpop.permute.xlu0 %3886
    %3890 = vrot.lane.b32.xlu0 %v3879, 24
    %v3891 = vpop.permute.xlu0 %3890
    %v3893 = vsel %vm183, %v3870, %v3883
    %v3894 = vsel %vm494, %v3893, %v3887
    %v3895 = vsel %vm496, %v3894, %v3891
    %3897 = vrot.lane.b32.xlu0 %v3591, 96
    %v3898 = vpop.permute.xlu0 %3897
    %v3899 = vsel %vm183, %v3591, 0
    %v3901 = vsel %vm183, %v3898, 0
    %3903 = vmatpush.xpose.msra.mxu0 0.0
    %3904 = vmatpush.xpose.msra.mxu0 0.0
    %3905 = vmatpush.xpose.msra.mxu0 0.0
    %3906 = vmatpush.xpose.msra.mxu0 0.0
    %3907 = vmatpush.xpose.msra.mxu0 0.0
    %3908 = vmatpush.xpose.msra.mxu0 0.0
    %3909 = vmatpush.xpose.msra.mxu0 0.0
    %3910 = vmatpush.xpose.msra.mxu0 0.0
    %3911 = vmatpush.xpose.msra.mxu0 0.0
    %3912 = vmatpush.xpose.msra.mxu0 0.0
    %3913 = vmatpush.xpose.msra.mxu0 0.0
    %3914 = vmatpush.xpose.msra.mxu0 0.0
    %3915 = vmatpush.xpose.msra.mxu0 0.0
    %3916 = vmatpush.xpose.msra.mxu0 0.0
    %3917 = vmatpush.xpose.msra.mxu0 0.0
    %3918 = vmatpush.xpose.msra.mxu0 %v3901
    %3919 = vmatmul.f32.gmra.mxu0 %v3899
    %v3920 = vpop.f32.mrf.mxu0
    %v3921 = vadd.f32 0.0, %v3920
    %3922 = vdwg.mxu0
    %v3923 = vsel %vm183, %v3921, -inf
    %3924 = vmax.xlane.f32.xlu0 %v3923
    %v3925 = vpop.xlane.xlu0 %3924
    %v3926 = vsub.f32 %v3921, %v3925
    %v3927 = vmul.f32 %v3926, 1.442695
    %v3928 = vpow.pop %v3927
    %v3929 = vsel %vm183, %v3928, 0.0
    %3930 = vadd.xlane.f32.xlu0 %v3929
    %v3931 = vpop.xlane.xlu0 %3930
    %v3932 = vrcp.pop %v3931
    %v3933 = vmul.f32 %v3928, %v3932
    %3934 = vrot.lane.b32.xlu0 %v3591, 64
    %v3935 = vpop.permute.xlu0 %3934
    %v3938 = vsel %vm183, %v3933, 0
    %3940 = vmatpush.msra.mxu0 0.0
    %3941 = vmatpush.msra.mxu0 0.0
    %3942 = vmatpush.msra.mxu0 0.0
    %3943 = vmatpush.msra.mxu0 0.0
    %3944 = vmatpush.msra.mxu0 0.0
    %3945 = vmatpush.msra.mxu0 0.0
    %3946 = vmatpush.msra.mxu0 0.0
    %3947 = vmatpush.msra.mxu0 0.0
    %3948 = vmatpush.msra.mxu0 0.0
    %3949 = vmatpush.msra.mxu0 0.0
    %3950 = vmatpush.msra.mxu0 0.0
    %3951 = vmatpush.msra.mxu0 0.0
    %3952 = vmatpush.msra.mxu0 0.0
    %3953 = vmatpush.msra.mxu0 0.0
    %3954 = vmatpush.msra.mxu0 0.0
    %3955 = vmatpush.msra.mxu0 %v3935
    %3956 = vmatmul.f32.gmra.mxu0 %v3938
    %v3957 = vpop.f32.mrf.mxu0
    %v3958 = vadd.f32 0.0, %v3957
    %3959 = vdwg.mxu0
    %3960 = vrot.lane.b32.xlu0 %v3591, 120
    %v3961 = vpop.permute.xlu0 %3960
    %3962 = vrot.lane.b32.xlu0 %v3591, 88
    %v3963 = vpop.permute.xlu0 %3962
    %v3964 = vsel %vm183, %v3961, 0
    %v3966 = vsel %vm183, %v3963, 0
    %3968 = vmatpush.xpose.msra.mxu0 0.0
    %3969 = vmatpush.xpose.msra.mxu0 0.0
    %3970 = vmatpush.xpose.msra.mxu0 0.0
    %3971 = vmatpush.xpose.msra.mxu0 0.0
    %3972 = vmatpush.xpose.msra.mxu0 0.0
    %3973 = vmatpush.xpose.msra.mxu0 0.0
    %3974 = vmatpush.xpose.msra.mxu0 0.0
    %3975 = vmatpush.xpose.msra.mxu0 0.0
    %3976 = vmatpush.xpose.msra.mxu0 0.0
    %3977 = vmatpush.xpose.msra.mxu0 0.0
    %3978 = vmatpush.xpose.msra.mxu0 0.0
    %3979 = vmatpush.xpose.msra.mxu0 0.0
    %3980 = vmatpush.xpose.msra.mxu0 0.0
    %3981 = vmatpush.xpose.msra.mxu0 0.0
    %3982 = vmatpush.xpose.msra.mxu0 0.0
    %3983 = vmatpush.xpose.msra.mxu0 %v3966
    %3984 = vmatmul.f32.gmra.mxu0 %v3964
    %v3985 = vpop.f32.mrf.mxu0
    %v3986 = vadd.f32 0.0, %v3985
    %3987 = vdwg.mxu0
    %v3988 = vsel %vm183, %v3986, -inf
    %3989 = vmax.xlane.f32.xlu0 %v3988
    %v3990 = vpop.xlane.xlu0 %3989
    %v3991 = vsub.f32 %v3986, %v3990
    %v3992 = vmul.f32 %v3991, 1.442695
    %v3993 = vpow.pop %v3992
    %v3994 = vsel %vm183, %v3993, 0.0
    %3995 = vadd.xlane.f32.xlu0 %v3994
    %v3996 = vpop.xlane.xlu0 %3995
    %v3997 = vrcp.pop %v3996
    %v3998 = vmul.f32 %v3993, %v3997
    %3999 = vrot.lane.b32.xlu0 %v3591, 56
    %v4000 = vpop.permute.xlu0 %3999
    %v4003 = vsel %vm183, %v3998, 0
    %4005 = vmatpush.msra.mxu0 0.0
    %4006 = vmatpush.msra.mxu0 0.0
    %4007 = vmatpush.msra.mxu0 0.0
    %4008 = vmatpush.msra.mxu0 0.0
    %4009 = vmatpush.msra.mxu0 0.0
    %4010 = vmatpush.msra.mxu0 0.0
    %4011 = vmatpush.msra.mxu0 0.0
    %4012 = vmatpush.msra.mxu0 0.0
    %4013 = vmatpush.msra.mxu0 0.0
    %4014 = vmatpush.msra.mxu0 0.0
    %4015 = vmatpush.msra.mxu0 0.0
    %4016 = vmatpush.msra.mxu0 0.0
    %4017 = vmatpush.msra.mxu0 0.0
    %4018 = vmatpush.msra.mxu0 0.0
    %4019 = vmatpush.msra.mxu0 0.0
    %4020 = vmatpush.msra.mxu0 %v4000
    %4021 = vmatmul.f32.gmra.mxu0 %v4003
    %v4022 = vpop.f32.mrf.mxu0
    %v4023 = vadd.f32 0.0, %v4022
    %4024 = vdwg.mxu0
    %4025 = vrot.lane.b32.xlu0 %v3591, 112
    %v4026 = vpop.permute.xlu0 %4025
    %4027 = vrot.lane.b32.xlu0 %v3591, 80
    %v4028 = vpop.permute.xlu0 %4027
    %v4029 = vsel %vm183, %v4026, 0
    %v4031 = vsel %vm183, %v4028, 0
    %4033 = vmatpush.xpose.msra.mxu0 0.0
    %4034 = vmatpush.xpose.msra.mxu0 0.0
    %4035 = vmatpush.xpose.msra.mxu0 0.0
    %4036 = vmatpush.xpose.msra.mxu0 0.0
    %4037 = vmatpush.xpose.msra.mxu0 0.0
    %4038 = vmatpush.xpose.msra.mxu0 0.0
    %4039 = vmatpush.xpose.msra.mxu0 0.0
    %4040 = vmatpush.xpose.msra.mxu0 0.0
    %4041 = vmatpush.xpose.msra.mxu0 0.0
    %4042 = vmatpush.xpose.msra.mxu0 0.0
    %4043 = vmatpush.xpose.msra.mxu0 0.0
    %4044 = vmatpush.xpose.msra.mxu0 0.0
    %4045 = vmatpush.xpose.msra.mxu0 0.0
    %4046 = vmatpush.xpose.msra.mxu0 0.0
    %4047 = vmatpush.xpose.msra.mxu0 0.0
    %4048 = vmatpush.xpose.msra.mxu0 %v4031
    %4049 = vmatmul.f32.gmra.mxu0 %v4029
    %v4050 = vpop.f32.mrf.mxu0
    %v4051 = vadd.f32 0.0, %v4050
    %4052 = vdwg.mxu0
    %v4053 = vsel %vm183, %v4051, -inf
    %4054 = vmax.xlane.f32.xlu0 %v4053
    %v4055 = vpop.xlane.xlu0 %4054
    %v4056 = vsub.f32 %v4051, %v4055
    %v4057 = vmul.f32 %v4056, 1.442695
    %v4058 = vpow.pop %v4057
    %v4059 = vsel %vm183, %v4058, 0.0
    %4060 = vadd.xlane.f32.xlu0 %v4059
    %v4061 = vpop.xlane.xlu0 %4060
    %v4062 = vrcp.pop %v4061
    %v4063 = vmul.f32 %v4058, %v4062
    %4064 = vrot.lane.b32.xlu0 %v3591, 48
    %v4065 = vpop.permute.xlu0 %4064
    %v4068 = vsel %vm183, %v4063, 0
    %4070 = vmatpush.msra.mxu0 0.0
    %4071 = vmatpush.msra.mxu0 0.0
    %4072 = vmatpush.msra.mxu0 0.0
    %4073 = vmatpush.msra.mxu0 0.0
    %4074 = vmatpush.msra.mxu0 0.0
    %4075 = vmatpush.msra.mxu0 0.0
    %4076 = vmatpush.msra.mxu0 0.0
    %4077 = vmatpush.msra.mxu0 0.0
    %4078 = vmatpush.msra.mxu0 0.0
    %4079 = vmatpush.msra.mxu0 0.0
    %4080 = vmatpush.msra.mxu0 0.0
    %4081 = vmatpush.msra.mxu0 0.0
    %4082 = vmatpush.msra.mxu0 0.0
    %4083 = vmatpush.msra.mxu0 0.0
    %4084 = vmatpush.msra.mxu0 0.0
    %4085 = vmatpush.msra.mxu0 %v4065
    %4086 = vmatmul.f32.gmra.mxu0 %v4068
    %v4087 = vpop.f32.mrf.mxu0
    %v4088 = vadd.f32 0.0, %v4087
    %4089 = vdwg.mxu0
    %4090 = vrot.lane.b32.xlu0 %v3591, 104
    %v4091 = vpop.permute.xlu0 %4090
    %4092 = vrot.lane.b32.xlu0 %v3591, 72
    %v4093 = vpop.permute.xlu0 %4092
    %v4094 = vsel %vm183, %v4091, 0
    %v4096 = vsel %vm183, %v4093, 0
    %4098 = vmatpush.xpose.msra.mxu0 0.0
    %4099 = vmatpush.xpose.msra.mxu0 0.0
    %4100 = vmatpush.xpose.msra.mxu0 0.0
    %4101 = vmatpush.xpose.msra.mxu0 0.0
    %4102 = vmatpush.xpose.msra.mxu0 0.0
    %4103 = vmatpush.xpose.msra.mxu0 0.0
    %4104 = vmatpush.xpose.msra.mxu0 0.0
    %4105 = vmatpush.xpose.msra.mxu0 0.0
    %4106 = vmatpush.xpose.msra.mxu0 0.0
    %4107 = vmatpush.xpose.msra.mxu0 0.0
    %4108 = vmatpush.xpose.msra.mxu0 0.0
    %4109 = vmatpush.xpose.msra.mxu0 0.0
    %4110 = vmatpush.xpose.msra.mxu0 0.0
    %4111 = vmatpush.xpose.msra.mxu0 0.0
    %4112 = vmatpush.xpose.msra.mxu0 0.0
    %4113 = vmatpush.xpose.msra.mxu0 %v4096
    %4114 = vmatmul.f32.gmra.mxu0 %v4094
    %v4115 = vpop.f32.mrf.mxu0
    %v4116 = vadd.f32 0.0, %v4115
    %4117 = vdwg.mxu0
    %v4118 = vsel %vm183, %v4116, -inf
    %4119 = vmax.xlane.f32.xlu0 %v4118
    %v4120 = vpop.xlane.xlu0 %4119
    %v4121 = vsub.f32 %v4116, %v4120
    %v4122 = vmul.f32 %v4121, 1.442695
    %v4123 = vpow.pop %v4122
    %v4124 = vsel %vm183, %v4123, 0.0
    %4125 = vadd.xlane.f32.xlu0 %v4124
    %v4126 = vpop.xlane.xlu0 %4125
    %v4127 = vrcp.pop %v4126
    %v4128 = vmul.f32 %v4123, %v4127
    %4129 = vrot.lane.b32.xlu0 %v3591, 40
    %v4130 = vpop.permute.xlu0 %4129
    %v4133 = vsel %vm183, %v4128, 0
    %4135 = vmatpush.msra.mxu0 0.0
    %4136 = vmatpush.msra.mxu0 0.0
    %4137 = vmatpush.msra.mxu0 0.0
    %4138 = vmatpush.msra.mxu0 0.0
    %4139 = vmatpush.msra.mxu0 0.0
    %4140 = vmatpush.msra.mxu0 0.0
    %4141 = vmatpush.msra.mxu0 0.0
    %4142 = vmatpush.msra.mxu0 0.0
    %4143 = vmatpush.msra.mxu0 0.0
    %4144 = vmatpush.msra.mxu0 0.0
    %4145 = vmatpush.msra.mxu0 0.0
    %4146 = vmatpush.msra.mxu0 0.0
    %4147 = vmatpush.msra.mxu0 0.0
    %4148 = vmatpush.msra.mxu0 0.0
    %4149 = vmatpush.msra.mxu0 0.0
    %4150 = vmatpush.msra.mxu0 %v4130
    %4151 = vmatmul.f32.gmra.mxu0 %v4133
    %v4152 = vpop.f32.mrf.mxu0
    %v4153 = vadd.f32 0.0, %v4152
    %4154 = vdwg.mxu0
    %4155 = vmatpush.msra.mxu0 0.0
    %4156 = vmatpush.msra.mxu0 0.0
    %4157 = vmatpush.msra.mxu0 0.0
    %4158 = vmatpush.msra.mxu0 0.0
    %4159 = vmatpush.msra.mxu0 0.0
    %4160 = vmatpush.msra.mxu0 0.0
    %4161 = vmatpush.msra.mxu0 0.0
    %4162 = vmatpush.msra.mxu0 0.0
    %4163 = vmatpush.msra.mxu0 0.0
    %4164 = vmatpush.msra.mxu0 0.0
    %4165 = vmatpush.msra.mxu0 0.0
    %4166 = vmatpush.msra.mxu0 0.0
    %4167 = vmatpush.msra.mxu0 %v4153
    %4168 = vmatpush.msra.mxu0 %v4088
    %4169 = vmatpush.msra.mxu0 %v4023
    %4170 = vmatpush.msra.mxu0 %v3958
    %4171 = vmatmul.f32.gmra.mxu0 %v441
    %v4172 = vpop.f32.mrf.mxu0
    %v4173 = vadd.f32 0.0, %v4172
    %4174 = vmatmul.f32.gmra.mxu0 %v444
    %v4175 = vpop.f32.mrf.mxu0
    %v4176 = vadd.f32 0.0, %v4175
    %4177 = vmatmul.f32.gmra.mxu0 %v447
    %v4178 = vpop.f32.mrf.mxu0
    %v4179 = vadd.f32 0.0, %v4178
    %4180 = vmatmul.f32.gmra.mxu0 %v450
    %v4181 = vpop.f32.mrf.mxu0
    %v4182 = vadd.f32 0.0, %v4181
    %4183 = vdwg.mxu0
    %4185 = vrot.lane.b32.xlu0 %v4176, 8
    %v4186 = vpop.permute.xlu0 %4185
    %4189 = vrot.lane.b32.xlu0 %v4179, 16
    %v4190 = vpop.permute.xlu0 %4189
    %4193 = vrot.lane.b32.xlu0 %v4182, 24
    %v4194 = vpop.permute.xlu0 %4193
    %v4196 = vsel %vm183, %v4173, %v4186
    %v4197 = vsel %vm494, %v4196, %v4190
    %v4198 = vsel %vm496, %v4197, %v4194
    %v4200 = vperm.slane %v3560, 0
    %v4203 = vsel %vm150, %v3895, 0
    %v4206 = vsel %vm150, %v4198, 0
    %4208 = vmatpush.msra.mxu0 0.0
    %4209 = vmatpush.msra.mxu0 0.0
    %4210 = vmatpush.msra.mxu0 0.0
    %4211 = vmatpush.msra.mxu0 0.0
    %4212 = vmatpush.msra.mxu0 0.0
    %4213 = vmatpush.msra.mxu0 0.0
    %4214 = vmatpush.msra.mxu0 0.0
    %4215 = vmatpush.msra.mxu0 0.0
    %4216 = vmatpush.msra.mxu0 0.0
    %4217 = vmatpush.msra.mxu0 0.0
    %4218 = vmatpush.msra.mxu0 0.0
    %4219 = vmatpush.msra.mxu0 0.0
    %4220 = vmatpush.msra.mxu0 %v3558
    %4221 = vmatpush.msra.mxu0 %v3557
    %4222 = vmatpush.msra.mxu0 %v3556
    %4223 = vmatpush.msra.mxu0 %v3555
    %4224 = vmatmul.f32.gmra.mxu0 %v4203
    %v4225 = vpop.f32.mrf.mxu0
    %v4226 = vadd.f32 %v4200, %v4225
    %4227 = vmatmul.f32.gmra.mxu0 %v4206
    %v4228 = vpop.f32.mrf.mxu0
    %v4229 = vadd.f32 %v4200, %v4228
    %4230 = vdwg.mxu0
    %v4231 = vadd.f32 %v3545, %v4226
    %v4232 = vadd.f32 %v3546, %v4229
    %s4233 = scalar_lea.vmem %s47, 1
    %v4234 = vld [vmem:[%s4233] sm:$0x1]
    %s4235 = scalar_lea.vmem %s49, 1
    %v4236 = vld [vmem:[%s4235] sm:$0x1]
    %v4237 = vsel %vm150, %v4231, 0.0
    %4238 = vadd.xlane.f32.xlu0 %v4237
    %v4239 = vpop.xlane.xlu0 %4238
    %v4240 = vsel %vm150, %v4232, 0.0
    %4241 = vadd.xlane.f32.xlu0 %v4240
    %v4242 = vpop.xlane.xlu0 %4241
    %v4243 = vmul.f32 %v4239, %v849
    %v4244 = vmul.f32 %v4242, %v849
    %v4245 = vsub.f32 %v4231, %v4243
    %v4246 = vsub.f32 %v4232, %v4244
    %v4247 = vmul.f32 %v4245, %v4245
    %v4248 = vmul.f32 %v4246, %v4246
    %v4249 = vsel %vm150, %v4247, 0.0
    %4250 = vadd.xlane.f32.xlu0 %v4249
    %v4251 = vpop.xlane.xlu0 %4250
    %v4252 = vsel %vm150, %v4248, 0.0
    %4253 = vadd.xlane.f32.xlu0 %v4252
    %v4254 = vpop.xlane.xlu0 %4253
    %v4255 = vmul.f32 %v4251, %v849
    %v4256 = vmul.f32 %v4254, %v849
    %v4257 = vadd.f32 %v4255, 1e-05
    %v4258 = vadd.f32 %v4256, 1e-05
    %v4259 = vrsqrt.pop %v4257
    %v4260 = vmul.f32 %v4259, %v4257
    %v4261 = vmul.f32 %v4260, %v4259
    %v4262 = vmul.f32 0.5, %v4261
    %v4263 = vsub.f32 1.5, %v4262
    %v4264 = vmul.f32 %v4259, %v4263
    %vm4265 = vweird.f32 %v4257
    %vm4266 = vweird.f32 %v4259
    %vm4267 = vmor %vm4265, %vm4266
    %v4268 = vsel %vm4267, %v4259, %v4264
    %v4269 = vrsqrt.pop %v4258
    %v4270 = vmul.f32 %v4269, %v4258
    %v4271 = vmul.f32 %v4270, %v4269
    %v4272 = vmul.f32 0.5, %v4271
    %v4273 = vsub.f32 1.5, %v4272
    %v4274 = vmul.f32 %v4269, %v4273
    %vm4275 = vweird.f32 %v4258
    %vm4276 = vweird.f32 %v4269
    %vm4277 = vmor %vm4275, %vm4276
    %v4278 = vsel %vm4277, %v4269, %v4274
    %v4279 = vmul.f32 %v4245, %v4268
    %v4280 = vmul.f32 %v4246, %v4278
    %v4282 = vperm.slane %v4234, 0
    %v4284 = vmul.f32 %v4279, %v4282
    %v4285 = vmul.f32 %v4280, %v4282
    %v4287 = vperm.slane %v4236, 0
    %v4289 = vadd.f32 %v4284, %v4287
    %v4290 = vadd.f32 %v4285, %v4287
    %s4291 = scalar_lea.vmem %s35, 32
    %v4292 = vld [vmem:[%s4291] sm:$0xff]
    %v4293 = vld [vmem:[%s4291 + $0x8] sm:$0xff]
    %v4294 = vld [vmem:[%s4291 + $0x10] sm:$0xff]
    %v4295 = vld [vmem:[%s4291 + $0x18] sm:$0xff]
    %s4296 = scalar_lea.vmem %s37, 1
    %v4297 = vld [vmem:[%s4296] sm:$0x1]
    %s4298 = scalar_lea.vmem %s39, 32
    %v4299 = vld [vmem:[%s4298] sm:$0xff]
    %v4300 = vld [vmem:[%s4298 + $0x8] sm:$0xff]
    %v4301 = vld [vmem:[%s4298 + $0x10] sm:$0xff]
    %v4302 = vld [vmem:[%s4298 + $0x18] sm:$0xff]
    %s4303 = scalar_lea.vmem %s41, 1
    %v4304 = vld [vmem:[%s4303] sm:$0x1]
    %s4305 = scalar_lea.vmem %s43, 32
    %v4306 = vld [vmem:[%s4305] sm:$0xff]
    %v4307 = vld [vmem:[%s4305 + $0x8] sm:$0xff]
    %v4308 = vld [vmem:[%s4305 + $0x10] sm:$0xff]
    %v4309 = vld [vmem:[%s4305 + $0x18] sm:$0xff]
    %s4310 = scalar_lea.vmem %s45, 1
    %v4311 = vld [vmem:[%s4310] sm:$0x1]
    %v4313 = vperm.slane %v4297, 0
    %v4316 = vsel %vm150, %v4289, 0
    %v4319 = vsel %vm150, %v4290, 0
    %4321 = vmatpush.msra.mxu0 0.0
    %4322 = vmatpush.msra.mxu0 0.0
    %4323 = vmatpush.msra.mxu0 0.0
    %4324 = vmatpush.msra.mxu0 0.0
    %4325 = vmatpush.msra.mxu0 0.0
    %4326 = vmatpush.msra.mxu0 0.0
    %4327 = vmatpush.msra.mxu0 0.0
    %4328 = vmatpush.msra.mxu0 0.0
    %4329 = vmatpush.msra.mxu0 0.0
    %4330 = vmatpush.msra.mxu0 0.0
    %4331 = vmatpush.msra.mxu0 0.0
    %4332 = vmatpush.msra.mxu0 0.0
    %4333 = vmatpush.msra.mxu0 %v4295
    %4334 = vmatpush.msra.mxu0 %v4294
    %4335 = vmatpush.msra.mxu0 %v4293
    %4336 = vmatpush.msra.mxu0 %v4292
    %4337 = vmatmul.f32.gmra.mxu0 %v4316
    %v4338 = vpop.f32.mrf.mxu0
    %v4339 = vadd.f32 %v4313, %v4338
    %4340 = vmatmul.f32.gmra.mxu0 %v4319
    %v4341 = vpop.f32.mrf.mxu0
    %v4342 = vadd.f32 %v4313, %v4341
    %4343 = vdwg.mxu0
    %v4345 = vperm.slane %v4304, 0
    %4347 = vmatpush.msra.mxu0 0.0
    %4348 = vmatpush.msra.mxu0 0.0
    %4349 = vmatpush.msra.mxu0 0.0
    %4350 = vmatpush.msra.mxu0 0.0
    %4351 = vmatpush.msra.mxu0 0.0
    %4352 = vmatpush.msra.mxu0 0.0
    %4353 = vmatpush.msra.mxu0 0.0
    %4354 = vmatpush.msra.mxu0 0.0
    %4355 = vmatpush.msra.mxu0 0.0
    %4356 = vmatpush.msra.mxu0 0.0
    %4357 = vmatpush.msra.mxu0 0.0
    %4358 = vmatpush.msra.mxu0 0.0
    %4359 = vmatpush.msra.mxu0 %v4302
    %4360 = vmatpush.msra.mxu0 %v4301
    %4361 = vmatpush.msra.mxu0 %v4300
    %4362 = vmatpush.msra.mxu0 %v4299
    %4363 = vmatmul.f32.gmra.mxu0 %v2701
    %v4364 = vpop.f32.mrf.mxu0
    %v4365 = vadd.f32 %v4345, %v4364
    %4366 = vmatmul.f32.gmra.mxu0 %v2704
    %v4367 = vpop.f32.mrf.mxu0
    %v4368 = vadd.f32 %v4345, %v4367
    %4369 = vdwg.mxu0
    %v4371 = vsel %vm183, %v4339, 0
    %v4374 = vsel %vm183, %v4365, 0
    %4376 = vmatpush.xpose.msra.mxu0 0.0
    %4377 = vmatpush.xpose.msra.mxu0 0.0
    %4378 = vmatpush.xpose.msra.mxu0 0.0
    %4379 = vmatpush.xpose.msra.mxu0 0.0
    %4380 = vmatpush.xpose.msra.mxu0 0.0
    %4381 = vmatpush.xpose.msra.mxu0 0.0
    %4382 = vmatpush.xpose.msra.mxu0 0.0
    %4383 = vmatpush.xpose.msra.mxu0 0.0
    %4384 = vmatpush.xpose.msra.mxu0 0.0
    %4385 = vmatpush.xpose.msra.mxu0 0.0
    %4386 = vmatpush.xpose.msra.mxu0 0.0
    %4387 = vmatpush.xpose.msra.mxu0 0.0
    %4388 = vmatpush.xpose.msra.mxu0 0.0
    %4389 = vmatpush.xpose.msra.mxu0 0.0
    %4390 = vmatpush.xpose.msra.mxu0 0.0
    %4391 = vmatpush.xpose.msra.mxu0 %v4374
    %4392 = vmatmul.f32.gmra.mxu0 %v4371
    %v4393 = vpop.f32.mrf.mxu0
    %v4394 = vadd.f32 0.0, %v4393
    %4395 = vdwg.mxu0
    %v4396 = vsel %vm183, %v4394, -inf
    %4397 = vmax.xlane.f32.xlu0 %v4396
    %v4398 = vpop.xlane.xlu0 %4397
    %v4399 = vsub.f32 %v4394, %v4398
    %v4400 = vmul.f32 %v4399, 1.442695
    %v4401 = vpow.pop %v4400
    %v4402 = vsel %vm183, %v4401, 0.0
    %4403 = vadd.xlane.f32.xlu0 %v4402
    %v4404 = vpop.xlane.xlu0 %4403
    %v4405 = vrcp.pop %v4404
    %v4406 = vmul.f32 %v4401, %v4405
    %4407 = vrot.lane.b32.xlu0 %v4365, 96
    %v4408 = vpop.permute.xlu0 %4407
    %v4411 = vsel %vm183, %v4406, 0
    %4413 = vmatpush.msra.mxu0 0.0
    %4414 = vmatpush.msra.mxu0 0.0
    %4415 = vmatpush.msra.mxu0 0.0
    %4416 = vmatpush.msra.mxu0 0.0
    %4417 = vmatpush.msra.mxu0 0.0
    %4418 = vmatpush.msra.mxu0 0.0
    %4419 = vmatpush.msra.mxu0 0.0
    %4420 = vmatpush.msra.mxu0 0.0
    %4421 = vmatpush.msra.mxu0 0.0
    %4422 = vmatpush.msra.mxu0 0.0
    %4423 = vmatpush.msra.mxu0 0.0
    %4424 = vmatpush.msra.mxu0 0.0
    %4425 = vmatpush.msra.mxu0 0.0
    %4426 = vmatpush.msra.mxu0 0.0
    %4427 = vmatpush.msra.mxu0 0.0
    %4428 = vmatpush.msra.mxu0 %v4408
    %4429 = vmatmul.f32.gmra.mxu0 %v4411
    %v4430 = vpop.f32.mrf.mxu0
    %v4431 = vadd.f32 0.0, %v4430
    %4432 = vdwg.mxu0
    %4433 = vrot.lane.b32.xlu0 %v4339, 120
    %v4434 = vpop.permute.xlu0 %4433
    %4435 = vrot.lane.b32.xlu0 %v4365, 120
    %v4436 = vpop.permute.xlu0 %4435
    %v4437 = vsel %vm183, %v4434, 0
    %v4439 = vsel %vm183, %v4436, 0
    %4441 = vmatpush.xpose.msra.mxu0 0.0
    %4442 = vmatpush.xpose.msra.mxu0 0.0
    %4443 = vmatpush.xpose.msra.mxu0 0.0
    %4444 = vmatpush.xpose.msra.mxu0 0.0
    %4445 = vmatpush.xpose.msra.mxu0 0.0
    %4446 = vmatpush.xpose.msra.mxu0 0.0
    %4447 = vmatpush.xpose.msra.mxu0 0.0
    %4448 = vmatpush.xpose.msra.mxu0 0.0
    %4449 = vmatpush.xpose.msra.mxu0 0.0
    %4450 = vmatpush.xpose.msra.mxu0 0.0
    %4451 = vmatpush.xpose.msra.mxu0 0.0
    %4452 = vmatpush.xpose.msra.mxu0 0.0
    %4453 = vmatpush.xpose.msra.mxu0 0.0
    %4454 = vmatpush.xpose.msra.mxu0 0.0
    %4455 = vmatpush.xpose.msra.mxu0 0.0
    %4456 = vmatpush.xpose.msra.mxu0 %v4439
    %4457 = vmatmul.f32.gmra.mxu0 %v4437
    %v4458 = vpop.f32.mrf.mxu0
    %v4459 = vadd.f32 0.0, %v4458
    %4460 = vdwg.mxu0
    %v4461 = vsel %vm183, %v4459, -inf
    %4462 = vmax.xlane.f32.xlu0 %v4461
    %v4463 = vpop.xlane.xlu0 %4462
    %v4464 = vsub.f32 %v4459, %v4463
    %v4465 = vmul.f32 %v4464, 1.442695
    %v4466 = vpow.pop %v4465
    %v4467 = vsel %vm183, %v4466, 0.0
    %4468 = vadd.xlane.f32.xlu0 %v4467
    %v4469 = vpop.xlane.xlu0 %4468
    %v4470 = vrcp.pop %v4469
    %v4471 = vmul.f32 %v4466, %v4470
    %4472 = vrot.lane.b32.xlu0 %v4365, 88
    %v4473 = vpop.permute.xlu0 %4472
    %v4476 = vsel %vm183, %v4471, 0
    %4478 = vmatpush.msra.mxu0 0.0
    %4479 = vmatpush.msra.mxu0 0.0
    %4480 = vmatpush.msra.mxu0 0.0
    %4481 = vmatpush.msra.mxu0 0.0
    %4482 = vmatpush.msra.mxu0 0.0
    %4483 = vmatpush.msra.mxu0 0.0
    %4484 = vmatpush.msra.mxu0 0.0
    %4485 = vmatpush.msra.mxu0 0.0
    %4486 = vmatpush.msra.mxu0 0.0
    %4487 = vmatpush.msra.mxu0 0.0
    %4488 = vmatpush.msra.mxu0 0.0
    %4489 = vmatpush.msra.mxu0 0.0
    %4490 = vmatpush.msra.mxu0 0.0
    %4491 = vmatpush.msra.mxu0 0.0
    %4492 = vmatpush.msra.mxu0 0.0
    %4493 = vmatpush.msra.mxu0 %v4473
    %4494 = vmatmul.f32.gmra.mxu0 %v4476
    %v4495 = vpop.f32.mrf.mxu0
    %v4496 = vadd.f32 0.0, %v4495
    %4497 = vdwg.mxu0
    %4498 = vrot.lane.b32.xlu0 %v4339, 112
    %v4499 = vpop.permute.xlu0 %4498
    %4500 = vrot.lane.b32.xlu0 %v4365, 112
    %v4501 = vpop.permute.xlu0 %4500
    %v4502 = vsel %vm183, %v4499, 0
    %v4504 = vsel %vm183, %v4501, 0
    %4506 = vmatpush.xpose.msra.mxu0 0.0
    %4507 = vmatpush.xpose.msra.mxu0 0.0
    %4508 = vmatpush.xpose.msra.mxu0 0.0
    %4509 = vmatpush.xpose.msra.mxu0 0.0
    %4510 = vmatpush.xpose.msra.mxu0 0.0
    %4511 = vmatpush.xpose.msra.mxu0 0.0
    %4512 = vmatpush.xpose.msra.mxu0 0.0
    %4513 = vmatpush.xpose.msra.mxu0 0.0
    %4514 = vmatpush.xpose.msra.mxu0 0.0
    %4515 = vmatpush.xpose.msra.mxu0 0.0
    %4516 = vmatpush.xpose.msra.mxu0 0.0
    %4517 = vmatpush.xpose.msra.mxu0 0.0
    %4518 = vmatpush.xpose.msra.mxu0 0.0
    %4519 = vmatpush.xpose.msra.mxu0 0.0
    %4520 = vmatpush.xpose.msra.mxu0 0.0
    %4521 = vmatpush.xpose.msra.mxu0 %v4504
    %4522 = vmatmul.f32.gmra.mxu0 %v4502
    %v4523 = vpop.f32.mrf.mxu0
    %v4524 = vadd.f32 0.0, %v4523
    %4525 = vdwg.mxu0
    %v4526 = vsel %vm183, %v4524, -inf
    %4527 = vmax.xlane.f32.xlu0 %v4526
    %v4528 = vpop.xlane.xlu0 %4527
    %v4529 = vsub.f32 %v4524, %v4528
    %v4530 = vmul.f32 %v4529, 1.442695
    %v4531 = vpow.pop %v4530
    %v4532 = vsel %vm183, %v4531, 0.0
    %4533 = vadd.xlane.f32.xlu0 %v4532
    %v4534 = vpop.xlane.xlu0 %4533
    %v4535 = vrcp.pop %v4534
    %v4536 = vmul.f32 %v4531, %v4535
    %4537 = vrot.lane.b32.xlu0 %v4365, 80
    %v4538 = vpop.permute.xlu0 %4537
    %v4541 = vsel %vm183, %v4536, 0
    %4543 = vmatpush.msra.mxu0 0.0
    %4544 = vmatpush.msra.mxu0 0.0
    %4545 = vmatpush.msra.mxu0 0.0
    %4546 = vmatpush.msra.mxu0 0.0
    %4547 = vmatpush.msra.mxu0 0.0
    %4548 = vmatpush.msra.mxu0 0.0
    %4549 = vmatpush.msra.mxu0 0.0
    %4550 = vmatpush.msra.mxu0 0.0
    %4551 = vmatpush.msra.mxu0 0.0
    %4552 = vmatpush.msra.mxu0 0.0
    %4553 = vmatpush.msra.mxu0 0.0
    %4554 = vmatpush.msra.mxu0 0.0
    %4555 = vmatpush.msra.mxu0 0.0
    %4556 = vmatpush.msra.mxu0 0.0
    %4557 = vmatpush.msra.mxu0 0.0
    %4558 = vmatpush.msra.mxu0 %v4538
    %4559 = vmatmul.f32.gmra.mxu0 %v4541
    %v4560 = vpop.f32.mrf.mxu0
    %v4561 = vadd.f32 0.0, %v4560
    %4562 = vdwg.mxu0
    %4563 = vrot.lane.b32.xlu0 %v4339, 104
    %v4564 = vpop.permute.xlu0 %4563
    %4565 = vrot.lane.b32.xlu0 %v4365, 104
    %v4566 = vpop.permute.xlu0 %4565
    %v4567 = vsel %vm183, %v4564, 0
    %v4569 = vsel %vm183, %v4566, 0
    %4571 = vmatpush.xpose.msra.mxu0 0.0
    %4572 = vmatpush.xpose.msra.mxu0 0.0
    %4573 = vmatpush.xpose.msra.mxu0 0.0
    %4574 = vmatpush.xpose.msra.mxu0 0.0
    %4575 = vmatpush.xpose.msra.mxu0 0.0
    %4576 = vmatpush.xpose.msra.mxu0 0.0
    %4577 = vmatpush.xpose.msra.mxu0 0.0
    %4578 = vmatpush.xpose.msra.mxu0 0.0
    %4579 = vmatpush.xpose.msra.mxu0 0.0
    %4580 = vmatpush.xpose.msra.mxu0 0.0
    %4581 = vmatpush.xpose.msra.mxu0 0.0
    %4582 = vmatpush.xpose.msra.mxu0 0.0
    %4583 = vmatpush.xpose.msra.mxu0 0.0
    %4584 = vmatpush.xpose.msra.mxu0 0.0
    %4585 = vmatpush.xpose.msra.mxu0 0.0
    %4586 = vmatpush.xpose.msra.mxu0 %v4569
    %4587 = vmatmul.f32.gmra.mxu0 %v4567
    %v4588 = vpop.f32.mrf.mxu0
    %v4589 = vadd.f32 0.0, %v4588
    %4590 = vdwg.mxu0
    %v4591 = vsel %vm183, %v4589, -inf
    %4592 = vmax.xlane.f32.xlu0 %v4591
    %v4593 = vpop.xlane.xlu0 %4592
    %v4594 = vsub.f32 %v4589, %v4593
    %v4595 = vmul.f32 %v4594, 1.442695
    %v4596 = vpow.pop %v4595
    %v4597 = vsel %vm183, %v4596, 0.0
    %4598 = vadd.xlane.f32.xlu0 %v4597
    %v4599 = vpop.xlane.xlu0 %4598
    %v4600 = vrcp.pop %v4599
    %v4601 = vmul.f32 %v4596, %v4600
    %4602 = vrot.lane.b32.xlu0 %v4365, 72
    %v4603 = vpop.permute.xlu0 %4602
    %v4606 = vsel %vm183, %v4601, 0
    %4608 = vmatpush.msra.mxu0 0.0
    %4609 = vmatpush.msra.mxu0 0.0
    %4610 = vmatpush.msra.mxu0 0.0
    %4611 = vmatpush.msra.mxu0 0.0
    %4612 = vmatpush.msra.mxu0 0.0
    %4613 = vmatpush.msra.mxu0 0.0
    %4614 = vmatpush.msra.mxu0 0.0
    %4615 = vmatpush.msra.mxu0 0.0
    %4616 = vmatpush.msra.mxu0 0.0
    %4617 = vmatpush.msra.mxu0 0.0
    %4618 = vmatpush.msra.mxu0 0.0
    %4619 = vmatpush.msra.mxu0 0.0
    %4620 = vmatpush.msra.mxu0 0.0
    %4621 = vmatpush.msra.mxu0 0.0
    %4622 = vmatpush.msra.mxu0 0.0
    %4623 = vmatpush.msra.mxu0 %v4603
    %4624 = vmatmul.f32.gmra.mxu0 %v4606
    %v4625 = vpop.f32.mrf.mxu0
    %v4626 = vadd.f32 0.0, %v4625
    %4627 = vdwg.mxu0
    %4628 = vmatpush.msra.mxu0 0.0
    %4629 = vmatpush.msra.mxu0 0.0
    %4630 = vmatpush.msra.mxu0 0.0
    %4631 = vmatpush.msra.mxu0 0.0
    %4632 = vmatpush.msra.mxu0 0.0
    %4633 = vmatpush.msra.mxu0 0.0
    %4634 = vmatpush.msra.mxu0 0.0
    %4635 = vmatpush.msra.mxu0 0.0
    %4636 = vmatpush.msra.mxu0 0.0
    %4637 = vmatpush.msra.mxu0 0.0
    %4638 = vmatpush.msra.mxu0 0.0
    %4639 = vmatpush.msra.mxu0 0.0
    %4640 = vmatpush.msra.mxu0 %v4626
    %4641 = vmatpush.msra.mxu0 %v4561
    %4642 = vmatpush.msra.mxu0 %v4496
    %4643 = vmatpush.msra.mxu0 %v4431
    %4644 = vmatmul.f32.gmra.mxu0 %v441
    %v4645 = vpop.f32.mrf.mxu0
    %v4646 = vadd.f32 0.0, %v4645
    %4647 = vmatmul.f32.gmra.mxu0 %v444
    %v4648 = vpop.f32.mrf.mxu0
    %v4649 = vadd.f32 0.0, %v4648
    %4650 = vmatmul.f32.gmra.mxu0 %v447
    %v4651 = vpop.f32.mrf.mxu0
    %v4652 = vadd.f32 0.0, %v4651
    %4653 = vmatmul.f32.gmra.mxu0 %v450
    %v4654 = vpop.f32.mrf.mxu0
    %v4655 = vadd.f32 0.0, %v4654
    %4656 = vdwg.mxu0
    %4658 = vrot.lane.b32.xlu0 %v4649, 8
    %v4659 = vpop.permute.xlu0 %4658
    %4662 = vrot.lane.b32.xlu0 %v4652, 16
    %v4663 = vpop.permute.xlu0 %4662
    %4666 = vrot.lane.b32.xlu0 %v4655, 24
    %v4667 = vpop.permute.xlu0 %4666
    %v4669 = vsel %vm183, %v4646, %v4659
    %v4670 = vsel %vm494, %v4669, %v4663
    %v4671 = vsel %vm496, %v4670, %v4667
    %v4673 = vsel %vm183, %v4342, 0
    %v4676 = vsel %vm183, %v4368, 0
    %4678 = vmatpush.xpose.msra.mxu0 0.0
    %4679 = vmatpush.xpose.msra.mxu0 0.0
    %4680 = vmatpush.xpose.msra.mxu0 0.0
    %4681 = vmatpush.xpose.msra.mxu0 0.0
    %4682 = vmatpush.xpose.msra.mxu0 0.0
    %4683 = vmatpush.xpose.msra.mxu0 0.0
    %4684 = vmatpush.xpose.msra.mxu0 0.0
    %4685 = vmatpush.xpose.msra.mxu0 0.0
    %4686 = vmatpush.xpose.msra.mxu0 0.0
    %4687 = vmatpush.xpose.msra.mxu0 0.0
    %4688 = vmatpush.xpose.msra.mxu0 0.0
    %4689 = vmatpush.xpose.msra.mxu0 0.0
    %4690 = vmatpush.xpose.msra.mxu0 0.0
    %4691 = vmatpush.xpose.msra.mxu0 0.0
    %4692 = vmatpush.xpose.msra.mxu0 0.0
    %4693 = vmatpush.xpose.msra.mxu0 %v4676
    %4694 = vmatmul.f32.gmra.mxu0 %v4673
    %v4695 = vpop.f32.mrf.mxu0
    %v4696 = vadd.f32 0.0, %v4695
    %4697 = vdwg.mxu0
    %v4698 = vsel %vm183, %v4696, -inf
    %4699 = vmax.xlane.f32.xlu0 %v4698
    %v4700 = vpop.xlane.xlu0 %4699
    %v4701 = vsub.f32 %v4696, %v4700
    %v4702 = vmul.f32 %v4701, 1.442695
    %v4703 = vpow.pop %v4702
    %v4704 = vsel %vm183, %v4703, 0.0
    %4705 = vadd.xlane.f32.xlu0 %v4704
    %v4706 = vpop.xlane.xlu0 %4705
    %v4707 = vrcp.pop %v4706
    %v4708 = vmul.f32 %v4703, %v4707
    %4709 = vrot.lane.b32.xlu0 %v4368, 96
    %v4710 = vpop.permute.xlu0 %4709
    %v4713 = vsel %vm183, %v4708, 0
    %4715 = vmatpush.msra.mxu0 0.0
    %4716 = vmatpush.msra.mxu0 0.0
    %4717 = vmatpush.msra.mxu0 0.0
    %4718 = vmatpush.msra.mxu0 0.0
    %4719 = vmatpush.msra.mxu0 0.0
    %4720 = vmatpush.msra.mxu0 0.0
    %4721 = vmatpush.msra.mxu0 0.0
    %4722 = vmatpush.msra.mxu0 0.0
    %4723 = vmatpush.msra.mxu0 0.0
    %4724 = vmatpush.msra.mxu0 0.0
    %4725 = vmatpush.msra.mxu0 0.0
    %4726 = vmatpush.msra.mxu0 0.0
    %4727 = vmatpush.msra.mxu0 0.0
    %4728 = vmatpush.msra.mxu0 0.0
    %4729 = vmatpush.msra.mxu0 0.0
    %4730 = vmatpush.msra.mxu0 %v4710
    %4731 = vmatmul.f32.gmra.mxu0 %v4713
    %v4732 = vpop.f32.mrf.mxu0
    %v4733 = vadd.f32 0.0, %v4732
    %4734 = vdwg.mxu0
    %4735 = vrot.lane.b32.xlu0 %v4342, 120
    %v4736 = vpop.permute.xlu0 %4735
    %4737 = vrot.lane.b32.xlu0 %v4368, 120
    %v4738 = vpop.permute.xlu0 %4737
    %v4739 = vsel %vm183, %v4736, 0
    %v4741 = vsel %vm183, %v4738, 0
    %4743 = vmatpush.xpose.msra.mxu0 0.0
    %4744 = vmatpush.xpose.msra.mxu0 0.0
    %4745 = vmatpush.xpose.msra.mxu0 0.0
    %4746 = vmatpush.xpose.msra.mxu0 0.0
    %4747 = vmatpush.xpose.msra.mxu0 0.0
    %4748 = vmatpush.xpose.msra.mxu0 0.0
    %4749 = vmatpush.xpose.msra.mxu0 0.0
    %4750 = vmatpush.xpose.msra.mxu0 0.0
    %4751 = vmatpush.xpose.msra.mxu0 0.0
    %4752 = vmatpush.xpose.msra.mxu0 0.0
    %4753 = vmatpush.xpose.msra.mxu0 0.0
    %4754 = vmatpush.xpose.msra.mxu0 0.0
    %4755 = vmatpush.xpose.msra.mxu0 0.0
    %4756 = vmatpush.xpose.msra.mxu0 0.0
    %4757 = vmatpush.xpose.msra.mxu0 0.0
    %4758 = vmatpush.xpose.msra.mxu0 %v4741
    %4759 = vmatmul.f32.gmra.mxu0 %v4739
    %v4760 = vpop.f32.mrf.mxu0
    %v4761 = vadd.f32 0.0, %v4760
    %4762 = vdwg.mxu0
    %v4763 = vsel %vm183, %v4761, -inf
    %4764 = vmax.xlane.f32.xlu0 %v4763
    %v4765 = vpop.xlane.xlu0 %4764
    %v4766 = vsub.f32 %v4761, %v4765
    %v4767 = vmul.f32 %v4766, 1.442695
    %v4768 = vpow.pop %v4767
    %v4769 = vsel %vm183, %v4768, 0.0
    %4770 = vadd.xlane.f32.xlu0 %v4769
    %v4771 = vpop.xlane.xlu0 %4770
    %v4772 = vrcp.pop %v4771
    %v4773 = vmul.f32 %v4768, %v4772
    %4774 = vrot.lane.b32.xlu0 %v4368, 88
    %v4775 = vpop.permute.xlu0 %4774
    %v4778 = vsel %vm183, %v4773, 0
    %4780 = vmatpush.msra.mxu0 0.0
    %4781 = vmatpush.msra.mxu0 0.0
    %4782 = vmatpush.msra.mxu0 0.0
    %4783 = vmatpush.msra.mxu0 0.0
    %4784 = vmatpush.msra.mxu0 0.0
    %4785 = vmatpush.msra.mxu0 0.0
    %4786 = vmatpush.msra.mxu0 0.0
    %4787 = vmatpush.msra.mxu0 0.0
    %4788 = vmatpush.msra.mxu0 0.0
    %4789 = vmatpush.msra.mxu0 0.0
    %4790 = vmatpush.msra.mxu0 0.0
    %4791 = vmatpush.msra.mxu0 0.0
    %4792 = vmatpush.msra.mxu0 0.0
    %4793 = vmatpush.msra.mxu0 0.0
    %4794 = vmatpush.msra.mxu0 0.0
    %4795 = vmatpush.msra.mxu0 %v4775
    %4796 = vmatmul.f32.gmra.mxu0 %v4778
    %v4797 = vpop.f32.mrf.mxu0
    %v4798 = vadd.f32 0.0, %v4797
    %4799 = vdwg.mxu0
    %4800 = vrot.lane.b32.xlu0 %v4342, 112
    %v4801 = vpop.permute.xlu0 %4800
    %4802 = vrot.lane.b32.xlu0 %v4368, 112
    %v4803 = vpop.permute.xlu0 %4802
    %v4804 = vsel %vm183, %v4801, 0
    %v4806 = vsel %vm183, %v4803, 0
    %4808 = vmatpush.xpose.msra.mxu0 0.0
    %4809 = vmatpush.xpose.msra.mxu0 0.0
    %4810 = vmatpush.xpose.msra.mxu0 0.0
    %4811 = vmatpush.xpose.msra.mxu0 0.0
    %4812 = vmatpush.xpose.msra.mxu0 0.0
    %4813 = vmatpush.xpose.msra.mxu0 0.0
    %4814 = vmatpush.xpose.msra.mxu0 0.0
    %4815 = vmatpush.xpose.msra.mxu0 0.0
    %4816 = vmatpush.xpose.msra.mxu0 0.0
    %4817 = vmatpush.xpose.msra.mxu0 0.0
    %4818 = vmatpush.xpose.msra.mxu0 0.0
    %4819 = vmatpush.xpose.msra.mxu0 0.0
    %4820 = vmatpush.xpose.msra.mxu0 0.0
    %4821 = vmatpush.xpose.msra.mxu0 0.0
    %4822 = vmatpush.xpose.msra.mxu0 0.0
    %4823 = vmatpush.xpose.msra.mxu0 %v4806
    %4824 = vmatmul.f32.gmra.mxu0 %v4804
    %v4825 = vpop.f32.mrf.mxu0
    %v4826 = vadd.f32 0.0, %v4825
    %4827 = vdwg.mxu0
    %v4828 = vsel %vm183, %v4826, -inf
    %4829 = vmax.xlane.f32.xlu0 %v4828
    %v4830 = vpop.xlane.xlu0 %4829
    %v4831 = vsub.f32 %v4826, %v4830
    %v4832 = vmul.f32 %v4831, 1.442695
    %v4833 = vpow.pop %v4832
    %v4834 = vsel %vm183, %v4833, 0.0
    %4835 = vadd.xlane.f32.xlu0 %v4834
    %v4836 = vpop.xlane.xlu0 %4835
    %v4837 = vrcp.pop %v4836
    %v4838 = vmul.f32 %v4833, %v4837
    %4839 = vrot.lane.b32.xlu0 %v4368, 80
    %v4840 = vpop.permute.xlu0 %4839
    %v4843 = vsel %vm183, %v4838, 0
    %4845 = vmatpush.msra.mxu0 0.0
    %4846 = vmatpush.msra.mxu0 0.0
    %4847 = vmatpush.msra.mxu0 0.0
    %4848 = vmatpush.msra.mxu0 0.0
    %4849 = vmatpush.msra.mxu0 0.0
    %4850 = vmatpush.msra.mxu0 0.0
    %4851 = vmatpush.msra.mxu0 0.0
    %4852 = vmatpush.msra.mxu0 0.0
    %4853 = vmatpush.msra.mxu0 0.0
    %4854 = vmatpush.msra.mxu0 0.0
    %4855 = vmatpush.msra.mxu0 0.0
    %4856 = vmatpush.msra.mxu0 0.0
    %4857 = vmatpush.msra.mxu0 0.0
    %4858 = vmatpush.msra.mxu0 0.0
    %4859 = vmatpush.msra.mxu0 0.0
    %4860 = vmatpush.msra.mxu0 %v4840
    %4861 = vmatmul.f32.gmra.mxu0 %v4843
    %v4862 = vpop.f32.mrf.mxu0
    %v4863 = vadd.f32 0.0, %v4862
    %4864 = vdwg.mxu0
    %4865 = vrot.lane.b32.xlu0 %v4342, 104
    %v4866 = vpop.permute.xlu0 %4865
    %4867 = vrot.lane.b32.xlu0 %v4368, 104
    %v4868 = vpop.permute.xlu0 %4867
    %v4869 = vsel %vm183, %v4866, 0
    %v4871 = vsel %vm183, %v4868, 0
    %4873 = vmatpush.xpose.msra.mxu0 0.0
    %4874 = vmatpush.xpose.msra.mxu0 0.0
    %4875 = vmatpush.xpose.msra.mxu0 0.0
    %4876 = vmatpush.xpose.msra.mxu0 0.0
    %4877 = vmatpush.xpose.msra.mxu0 0.0
    %4878 = vmatpush.xpose.msra.mxu0 0.0
    %4879 = vmatpush.xpose.msra.mxu0 0.0
    %4880 = vmatpush.xpose.msra.mxu0 0.0
    %4881 = vmatpush.xpose.msra.mxu0 0.0
    %4882 = vmatpush.xpose.msra.mxu0 0.0
    %4883 = vmatpush.xpose.msra.mxu0 0.0
    %4884 = vmatpush.xpose.msra.mxu0 0.0
    %4885 = vmatpush.xpose.msra.mxu0 0.0
    %4886 = vmatpush.xpose.msra.mxu0 0.0
    %4887 = vmatpush.xpose.msra.mxu0 0.0
    %4888 = vmatpush.xpose.msra.mxu0 %v4871
    %4889 = vmatmul.f32.gmra.mxu0 %v4869
    %v4890 = vpop.f32.mrf.mxu0
    %v4891 = vadd.f32 0.0, %v4890
    %4892 = vdwg.mxu0
    %v4893 = vsel %vm183, %v4891, -inf
    %4894 = vmax.xlane.f32.xlu0 %v4893
    %v4895 = vpop.xlane.xlu0 %4894
    %v4896 = vsub.f32 %v4891, %v4895
    %v4897 = vmul.f32 %v4896, 1.442695
    %v4898 = vpow.pop %v4897
    %v4899 = vsel %vm183, %v4898, 0.0
    %4900 = vadd.xlane.f32.xlu0 %v4899
    %v4901 = vpop.xlane.xlu0 %4900
    %v4902 = vrcp.pop %v4901
    %v4903 = vmul.f32 %v4898, %v4902
    %4904 = vrot.lane.b32.xlu0 %v4368, 72
    %v4905 = vpop.permute.xlu0 %4904
    %v4908 = vsel %vm183, %v4903, 0
    %4910 = vmatpush.msra.mxu0 0.0
    %4911 = vmatpush.msra.mxu0 0.0
    %4912 = vmatpush.msra.mxu0 0.0
    %4913 = vmatpush.msra.mxu0 0.0
    %4914 = vmatpush.msra.mxu0 0.0
    %4915 = vmatpush.msra.mxu0 0.0
    %4916 = vmatpush.msra.mxu0 0.0
    %4917 = vmatpush.msra.mxu0 0.0
    %4918 = vmatpush.msra.mxu0 0.0
    %4919 = vmatpush.msra.mxu0 0.0
    %4920 = vmatpush.msra.mxu0 0.0
    %4921 = vmatpush.msra.mxu0 0.0
    %4922 = vmatpush.msra.mxu0 0.0
    %4923 = vmatpush.msra.mxu0 0.0
    %4924 = vmatpush.msra.mxu0 0.0
    %4925 = vmatpush.msra.mxu0 %v4905
    %4926 = vmatmul.f32.gmra.mxu0 %v4908
    %v4927 = vpop.f32.mrf.mxu0
    %v4928 = vadd.f32 0.0, %v4927
    %4929 = vdwg.mxu0
    %4930 = vmatpush.msra.mxu0 0.0
    %4931 = vmatpush.msra.mxu0 0.0
    %4932 = vmatpush.msra.mxu0 0.0
    %4933 = vmatpush.msra.mxu0 0.0
    %4934 = vmatpush.msra.mxu0 0.0
    %4935 = vmatpush.msra.mxu0 0.0
    %4936 = vmatpush.msra.mxu0 0.0
    %4937 = vmatpush.msra.mxu0 0.0
    %4938 = vmatpush.msra.mxu0 0.0
    %4939 = vmatpush.msra.mxu0 0.0
    %4940 = vmatpush.msra.mxu0 0.0
    %4941 = vmatpush.msra.mxu0 0.0
    %4942 = vmatpush.msra.mxu0 %v4928
    %4943 = vmatpush.msra.mxu0 %v4863
    %4944 = vmatpush.msra.mxu0 %v4798
    %4945 = vmatpush.msra.mxu0 %v4733
    %4946 = vmatmul.f32.gmra.mxu0 %v441
    %v4947 = vpop.f32.mrf.mxu0
    %v4948 = vadd.f32 0.0, %v4947
    %4949 = vmatmul.f32.gmra.mxu0 %v444
    %v4950 = vpop.f32.mrf.mxu0
    %v4951 = vadd.f32 0.0, %v4950
    %4952 = vmatmul.f32.gmra.mxu0 %v447
    %v4953 = vpop.f32.mrf.mxu0
    %v4954 = vadd.f32 0.0, %v4953
    %4955 = vmatmul.f32.gmra.mxu0 %v450
    %v4956 = vpop.f32.mrf.mxu0
    %v4957 = vadd.f32 0.0, %v4956
    %4958 = vdwg.mxu0
    %4960 = vrot.lane.b32.xlu0 %v4951, 8
    %v4961 = vpop.permute.xlu0 %4960
    %4964 = vrot.lane.b32.xlu0 %v4954, 16
    %v4965 = vpop.permute.xlu0 %4964
    %4968 = vrot.lane.b32.xlu0 %v4957, 24
    %v4969 = vpop.permute.xlu0 %4968
    %v4971 = vsel %vm183, %v4948, %v4961
    %v4972 = vsel %vm494, %v4971, %v4965
    %v4973 = vsel %vm496, %v4972, %v4969
    %v4975 = vperm.slane %v4311, 0
    %v4978 = vsel %vm150, %v4671, 0
    %v4981 = vsel %vm150, %v4973, 0
    %4983 = vmatpush.msra.mxu0 0.0
    %4984 = vmatpush.msra.mxu0 0.0
    %4985 = vmatpush.msra.mxu0 0.0
    %4986 = vmatpush.msra.mxu0 0.0
    %4987 = vmatpush.msra.mxu0 0.0
    %4988 = vmatpush.msra.mxu0 0.0
    %4989 = vmatpush.msra.mxu0 0.0
    %4990 = vmatpush.msra.mxu0 0.0
    %4991 = vmatpush.msra.mxu0 0.0
    %4992 = vmatpush.msra.mxu0 0.0
    %4993 = vmatpush.msra.mxu0 0.0
    %4994 = vmatpush.msra.mxu0 0.0
    %4995 = vmatpush.msra.mxu0 %v4309
    %4996 = vmatpush.msra.mxu0 %v4308
    %4997 = vmatpush.msra.mxu0 %v4307
    %4998 = vmatpush.msra.mxu0 %v4306
    %4999 = vmatmul.f32.gmra.mxu0 %v4978
    %v5000 = vpop.f32.mrf.mxu0
    %v5001 = vadd.f32 %v4975, %v5000
    %5002 = vmatmul.f32.gmra.mxu0 %v4981
    %v5003 = vpop.f32.mrf.mxu0
    %v5004 = vadd.f32 %v4975, %v5003
    %5005 = vdwg.mxu0
    %v5006 = vadd.f32 %v4289, %v5001
    %v5007 = vadd.f32 %v4290, %v5004
    %v5008 = vsel %vm150, %v5006, 0.0
    %5009 = vadd.xlane.f32.xlu0 %v5008
    %v5010 = vpop.xlane.xlu0 %5009
    %v5011 = vsel %vm150, %v5007, 0.0
    %5012 = vadd.xlane.f32.xlu0 %v5011
    %v5013 = vpop.xlane.xlu0 %5012
    %v5014 = vmul.f32 %v5010, %v849
    %v5015 = vmul.f32 %v5013, %v849
    %v5016 = vsub.f32 %v5006, %v5014
    %v5017 = vsub.f32 %v5007, %v5015
    %v5018 = vmul.f32 %v5016, %v5016
    %v5019 = vmul.f32 %v5017, %v5017
    %v5020 = vsel %vm150, %v5018, 0.0
    %5021 = vadd.xlane.f32.xlu0 %v5020
    %v5022 = vpop.xlane.xlu0 %5021
    %v5023 = vsel %vm150, %v5019, 0.0
    %5024 = vadd.xlane.f32.xlu0 %v5023
    %v5025 = vpop.xlane.xlu0 %5024
    %v5026 = vmul.f32 %v5022, %v849
    %v5027 = vmul.f32 %v5025, %v849
    %v5028 = vadd.f32 %v5026, 1e-05
    %v5029 = vadd.f32 %v5027, 1e-05
    %v5030 = vrsqrt.pop %v5028
    %v5031 = vmul.f32 %v5030, %v5028
    %v5032 = vmul.f32 %v5031, %v5030
    %v5033 = vmul.f32 0.5, %v5032
    %v5034 = vsub.f32 1.5, %v5033
    %v5035 = vmul.f32 %v5030, %v5034
    %vm5036 = vweird.f32 %v5028
    %vm5037 = vweird.f32 %v5030
    %vm5038 = vmor %vm5036, %vm5037
    %v5039 = vsel %vm5038, %v5030, %v5035
    %v5040 = vrsqrt.pop %v5029
    %v5041 = vmul.f32 %v5040, %v5029
    %v5042 = vmul.f32 %v5041, %v5040
    %v5043 = vmul.f32 0.5, %v5042
    %v5044 = vsub.f32 1.5, %v5043
    %v5045 = vmul.f32 %v5040, %v5044
    %vm5046 = vweird.f32 %v5029
    %vm5047 = vweird.f32 %v5040
    %vm5048 = vmor %vm5046, %vm5047
    %v5049 = vsel %vm5048, %v5040, %v5045
    %v5050 = vmul.f32 %v5016, %v5039
    %v5051 = vmul.f32 %v5017, %v5049
    %v5052 = vmul.f32 %v5050, %v4282
    %v5053 = vmul.f32 %v5051, %v4282
    %v5054 = vadd.f32 %v5052, %v4287
    %v5055 = vadd.f32 %v5053, %v4287
    %s5056 = scalar_lea.vmem %s51, 32
    %v5057 = vld [vmem:[%s5056] sm:$0xff]
    %v5058 = vld [vmem:[%s5056 + $0x8] sm:$0xff]
    %v5059 = vld [vmem:[%s5056 + $0x10] sm:$0xff]
    %v5060 = vld [vmem:[%s5056 + $0x18] sm:$0xff]
    %s5061 = scalar_lea.vmem %s53, 1
    %v5062 = vld [vmem:[%s5061] sm:$0x1]
    %v5064 = vperm.slane %v5062, 0
    %v5067 = vsel %vm150, %v5054, 0
    %v5070 = vsel %vm150, %v5055, 0
    %5072 = vmatpush.msra.mxu0 0.0
    %5073 = vmatpush.msra.mxu0 0.0
    %5074 = vmatpush.msra.mxu0 0.0
    %5075 = vmatpush.msra.mxu0 0.0
    %5076 = vmatpush.msra.mxu0 0.0
    %5077 = vmatpush.msra.mxu0 0.0
    %5078 = vmatpush.msra.mxu0 0.0
    %5079 = vmatpush.msra.mxu0 0.0
    %5080 = vmatpush.msra.mxu0 0.0
    %5081 = vmatpush.msra.mxu0 0.0
    %5082 = vmatpush.msra.mxu0 0.0
    %5083 = vmatpush.msra.mxu0 0.0
    %5084 = vmatpush.msra.mxu0 %v5060
    %5085 = vmatpush.msra.mxu0 %v5059
    %5086 = vmatpush.msra.mxu0 %v5058
    %5087 = vmatpush.msra.mxu0 %v5057
    %5088 = vmatmul.f32.gmra.mxu0 %v5067
    %v5089 = vpop.f32.mrf.mxu0
    %v5090 = vadd.f32 %v5064, %v5089
    %5091 = vmatmul.f32.gmra.mxu0 %v5070
    %v5092 = vpop.f32.mrf.mxu0
    %v5093 = vadd.f32 %v5064, %v5092
    %5094 = vdwg.mxu0
    %v5095 = vmax.f32 %v5090, 0.0
    %v5096 = vmax.f32 %v5093, 0.0
    %s5097 = scalar_lea.vmem %s55, 128
    %v5098 = vld [vmem:[%s5097] sm:$0xff]
    %v5099 = vld [vmem:[%s5097 + $0x8] sm:$0xff]
    %v5100 = vld [vmem:[%s5097 + $0x10] sm:$0xff]
    %v5101 = vld [vmem:[%s5097 + $0x18] sm:$0xff]
    %v5102 = vld [vmem:[%s5097 + $0x20] sm:$0xff]
    %v5103 = vld [vmem:[%s5097 + $0x28] sm:$0xff]
    %v5104 = vld [vmem:[%s5097 + $0x30] sm:$0xff]
    %v5105 = vld [vmem:[%s5097 + $0x38] sm:$0xff]
    %v5106 = vld [vmem:[%s5097 + $0x40] sm:$0xff]
    %v5107 = vld [vmem:[%s5097 + $0x48] sm:$0xff]
    %v5108 = vld [vmem:[%s5097 + $0x50] sm:$0xff]
    %v5109 = vld [vmem:[%s5097 + $0x58] sm:$0xff]
    %v5110 = vld [vmem:[%s5097 + $0x60] sm:$0xff]
    %v5111 = vld [vmem:[%s5097 + $0x68] sm:$0xff]
    %v5112 = vld [vmem:[%s5097 + $0x70] sm:$0xff]
    %v5113 = vld [vmem:[%s5097 + $0x78] sm:$0xff]
    %s5114 = scalar_lea.vmem %s57, 1
    %v5115 = vld [vmem:[%s5114] sm:$0x1]
    %v5117 = vperm.slane %v5115, 0
    %5119 = vmatpush.msra.mxu0 %v5113
    %5120 = vmatpush.msra.mxu0 %v5112
    %5121 = vmatpush.msra.mxu0 %v5111
    %5122 = vmatpush.msra.mxu0 %v5110
    %5123 = vmatpush.msra.mxu0 %v5109
    %5124 = vmatpush.msra.mxu0 %v5108
    %5125 = vmatpush.msra.mxu0 %v5107
    %5126 = vmatpush.msra.mxu0 %v5106
    %5127 = vmatpush.msra.mxu0 %v5105
    %5128 = vmatpush.msra.mxu0 %v5104
    %5129 = vmatpush.msra.mxu0 %v5103
    %5130 = vmatpush.msra.mxu0 %v5102
    %5131 = vmatpush.msra.mxu0 %v5101
    %5132 = vmatpush.msra.mxu0 %v5100
    %5133 = vmatpush.msra.mxu0 %v5099
    %5134 = vmatpush.msra.mxu0 %v5098
    %5135 = vmatmul.f32.gmra.mxu0 %v5095
    %v5136 = vpop.f32.mrf.mxu0
    %v5137 = vadd.f32 %v5117, %v5136
    %5138 = vmatmul.f32.gmra.mxu0 %v5096
    %v5139 = vpop.f32.mrf.mxu0
    %v5140 = vadd.f32 %v5117, %v5139
    %5141 = vdwg.mxu0
    %v5142 = vadd.f32 %v5054, %v5137
    %v5143 = vadd.f32 %v5055, %v5140
    %v5144 = vsel %vm150, %v5142, 0.0
    %5145 = vadd.xlane.f32.xlu0 %v5144
    %v5146 = vpop.xlane.xlu0 %5145
    %v5147 = vsel %vm150, %v5143, 0.0
    %5148 = vadd.xlane.f32.xlu0 %v5147
    %v5149 = vpop.xlane.xlu0 %5148
    %v5150 = vmul.f32 %v5146, %v849
    %v5151 = vmul.f32 %v5149, %v849
    %v5152 = vsub.f32 %v5142, %v5150
    %v5153 = vsub.f32 %v5143, %v5151
    %v5154 = vmul.f32 %v5152, %v5152
    %v5155 = vmul.f32 %v5153, %v5153
    %v5156 = vsel %vm150, %v5154, 0.0
    %5157 = vadd.xlane.f32.xlu0 %v5156
    %v5158 = vpop.xlane.xlu0 %5157
    %v5159 = vsel %vm150, %v5155, 0.0
    %5160 = vadd.xlane.f32.xlu0 %v5159
    %v5161 = vpop.xlane.xlu0 %5160
    %v5162 = vmul.f32 %v5158, %v849
    %v5163 = vmul.f32 %v5161, %v849
    %v5164 = vadd.f32 %v5162, 1e-05
    %v5165 = vadd.f32 %v5163, 1e-05
    %v5166 = vrsqrt.pop %v5164
    %v5167 = vmul.f32 %v5166, %v5164
    %v5168 = vmul.f32 %v5167, %v5166
    %v5169 = vmul.f32 0.5, %v5168
    %v5170 = vsub.f32 1.5, %v5169
    %v5171 = vmul.f32 %v5166, %v5170
    %vm5172 = vweird.f32 %v5164
    %vm5173 = vweird.f32 %v5166
    %vm5174 = vmor %vm5172, %vm5173
    %v5175 = vsel %vm5174, %v5166, %v5171
    %v5176 = vrsqrt.pop %v5165
    %v5177 = vmul.f32 %v5176, %v5165
    %v5178 = vmul.f32 %v5177, %v5176
    %v5179 = vmul.f32 0.5, %v5178
    %v5180 = vsub.f32 1.5, %v5179
    %v5181 = vmul.f32 %v5176, %v5180
    %vm5182 = vweird.f32 %v5165
    %vm5183 = vweird.f32 %v5176
    %vm5184 = vmor %vm5182, %vm5183
    %v5185 = vsel %vm5184, %v5176, %v5181
    %v5186 = vmul.f32 %v5152, %v5175
    %v5187 = vmul.f32 %v5153, %v5185
    %v5188 = vmul.f32 %v5186, %v4282
    %v5189 = vmul.f32 %v5187, %v4282
    %v5190 = vadd.f32 %v5188, %v4287
    %v5191 = vadd.f32 %v5189, %v4287
    %v5192 = vld [vmem:[%s59] sm:$0xff]
    %v5193 = vld [vmem:[%s59 + $0x8] sm:$0xff]
    %v5194 = vld [vmem:[%s59 + $0x10] sm:$0xff]
    %v5195 = vld [vmem:[%s59 + $0x18] sm:$0xff]
    %v5196 = vld [vmem:[%s61] sm:$0x1]
    %v5198 = vperm.slane %v5196, 0
    %v5201 = vsel %vm150, %v5190, 0
    %v5204 = vsel %vm150, %v5191, 0
    %5206 = vmatpush.msra.mxu0 0.0
    %5207 = vmatpush.msra.mxu0 0.0
    %5208 = vmatpush.msra.mxu0 0.0
    %5209 = vmatpush.msra.mxu0 0.0
    %5210 = vmatpush.msra.mxu0 0.0
    %5211 = vmatpush.msra.mxu0 0.0
    %5212 = vmatpush.msra.mxu0 0.0
    %5213 = vmatpush.msra.mxu0 0.0
    %5214 = vmatpush.msra.mxu0 0.0
    %5215 = vmatpush.msra.mxu0 0.0
    %5216 = vmatpush.msra.mxu0 0.0
    %5217 = vmatpush.msra.mxu0 0.0
    %5218 = vmatpush.msra.mxu0 %v5195
    %5219 = vmatpush.msra.mxu0 %v5194
    %5220 = vmatpush.msra.mxu0 %v5193
    %5221 = vmatpush.msra.mxu0 %v5192
    %5222 = vmatmul.f32.gmra.mxu0 %v5201
    %v5223 = vpop.f32.mrf.mxu0
    %v5224 = vadd.f32 %v5198, %v5223
    %5225 = vmatmul.f32.gmra.mxu0 %v5204
    %v5226 = vpop.f32.mrf.mxu0
    %v5227 = vadd.f32 %v5198, %v5226
    %5228 = vdwg.mxu0
    %vm5229 = vcmask 408576
    %v5230 = vsel %vm5229, %v5224, -inf
    %5231 = vmax.xlane.f32.xlu0 %v5230
    %v5232 = vpop.xlane.xlu0 %5231
    %v5233 = vsel %vm5229, %v5227, -inf
    %5234 = vmax.xlane.f32.xlu0 %v5233
    %v5235 = vpop.xlane.xlu0 %5234
    %v5236 = vsub.f32 %v5224, %v5232
    %v5237 = vsub.f32 %v5227, %v5235
    %v5238 = vmul.f32 %v5236, 1.442695
    %v5239 = vpow.pop %v5238
    %v5240 = vmul.f32 %v5237, 1.442695
    %v5241 = vpow.pop %v5240
    %v5242 = vsel %vm5229, %v5239, 0.0
    %5243 = vadd.xlane.f32.xlu0 %v5242
    %v5244 = vpop.xlane.xlu0 %5243
    %v5245 = vsel %vm5229, %v5241, 0.0
    %5246 = vadd.xlane.f32.xlu0 %v5245
    %v5247 = vpop.xlane.xlu0 %5246
    %v5248 = vrcp.pop %v5244
    %v5249 = vmul.f32 %v5244, %v5248
    %v5250 = vsub.f32 1.0, %v5249
    %v5251 = vmul.f32 %v5248, %v5250
    %v5252 = vadd.f32 %v5248, %v5251
    %vm5253 = vweird.f32 %v5244
    %vm5254 = vweird.f32 %v5248
    %vm5255 = vmor %vm5253, %vm5254
    %v5256 = vsel %vm5255, %v5248, %v5252
    %v5257 = vand.u32 2147483647, %v5244
    %vm5258 = vcmp.eq.f32.partialorder %v5257, 8.507059e+37
    %v5259 = vand.u32 %v5244, 2147483648
    %v5260 = vor.u32 1.1754944e-38, %v5259
    %v5261 = vsel %vm5258, %v5260, %v5256
    %v5262 = vmul.f32 %v5239, %v5261
    %v5263 = vrcp.pop %v5247
    %v5264 = vmul.f32 %v5247, %v5263
    %v5265 = vsub.f32 1.0, %v5264
    %v5266 = vmul.f32 %v5263, %v5265
    %v5267 = vadd.f32 %v5263, %v5266
    %vm5268 = vweird.f32 %v5247
    %vm5269 = vweird.f32 %v5263
    %vm5270 = vmor %vm5268, %vm5269
    %v5271 = vsel %vm5270, %v5263, %v5267
    %v5272 = vand.u32 2147483647, %v5247
    %vm5273 = vcmp.eq.f32.partialorder %v5272, 8.507059e+37
    %v5274 = vand.u32 %v5247, 2147483648
    %v5275 = vor.u32 1.1754944e-38, %v5274
    %v5276 = vsel %vm5273, %v5275, %v5271
    %v5277 = vmul.f32 %v5241, %v5276
    %5278 = vst.msk [vmem:[#allocation2] sm:$0xff] %vm5229, %v5262
    %5279 = vst.msk [vmem:[#allocation2 + $0x8] sm:$0xff] %vm5229, %v5277
    // Predicated region
    $region126: #{_transformer_forward.1} parent=1 // pred_check
      _
    $region127: #{_transformer_forward.1} parent=1 // pred_check_branch
      %5281 = sbr.rel (0) target = $region129
    $region128: #{_transformer_forward.1} parent=1 // pred_region
      %5283 = vsyncadd [#allocation3], 0
      %s5284 = sshll.u32 [#allocation2], 4
      %s5285 = int_to_ptr.vmem [resolvable:$true] %s5284
      %s5286 = sshll.u32 %s63, 4
      %s5287 = int_to_ptr.hbm [resolvable:$true] %s5286
      %5292 = dma.vmem_to_hbm [thread:$0]  %s5285, 256, %s5287, [#allocation3], 128, 128, 8
    $region129: #{_transformer_forward.1} parent=1 // pred_fallthru
      _
    // Predicated region
    $region130: #{_transformer_forward.1} parent=1 // pred_check
      _
    $region131: #{_transformer_forward.1} parent=1 // pred_check_branch
      %5294 = sbr.rel (0) target = $region133
    $region132: #{_transformer_forward.1} parent=1 // pred_region
      %5296 = dma.done [#allocation3], 256
    $region133: #{_transformer_forward.1} parent=1 // pred_fallthru
      _
    %5297 = vsyncpa [#allocation3], 1

</llo_original>
